<compile_context>
chip_gen: v7x
topology: tpu7x:2x2x1
jax: 0.10.0
libtpu: 0.0.40
codegen_flags: <defaults>
</compile_context>

<pallas_src>
import functools
import math

import jax
import jax.numpy as jnp
from jax.experimental import pallas as pl
from jax.experimental.pallas import tpu as pltpu

NUM_CLASSES = 14          # len(INDEX): 7 piece names x 2 colors
LEAKY_SLOPE = 0.2
BN_EPS = 1e-5

C1_IN_PAD = 8             # conv1 input channels 3 -> 8  (K = 16*8 = 128)
C1_OUT = 64
C2_OUT = 32
FC1_OUT = 64
OUT_PAD = 128             # lane-dense final output, sliced to 14 on the host
VMEM_LIMIT = 32 * 1024 * 1024   # safe on v5e/v6e (128 MiB) and v7x (64 MiB)


# ---------------------------------------------------------------------------
# Kernels
# ---------------------------------------------------------------------------
def _conv1_kernel(x_ref, w_ref, b_ref, o_ref):
    """o = LeakyReLU(x @ W + b); conv1 as an im2col matmul, BN1/bias folded."""
    y = jnp.dot(x_ref[...], w_ref[...], preferred_element_type=jnp.float32)
    y = y + b_ref[...]
    y = jnp.where(y > 0, y, LEAKY_SLOPE * y)
    o_ref[...] = y.astype(o_ref.dtype)


def _tail_kernel(hh, x_ref, w2_ref, b2_ref, w3_ref, b3_ref, w4_ref, b4_ref,
                 o_ref):
    """Fused conv2(+BN+LeakyReLU) -> fc1(+BN+LeakyReLU) -> fc2(+Sigmoid).

    x_ref : (hs*hs, tb, 4*C1)  space-to-depth of the zero-padded conv1 output,
            spatial-major leading dim -> every conv2 tap is a static
            leading-dim slice (no im2col duplication in HBM).
    w2_ref: (4, 4*C1, C2)      one matrix per (p, q) tap group, BN2 folded.
    w3_ref: (hh*hh, C2, F1)    one fc1 slice per conv2 spatial position
                               (PyTorch NCHW flatten order preserved).
    w4_ref: (F1, 128)          columns >= NUM_CLASSES are zero.
    All intermediates (conv2 output, fc1 hidden) live only in registers/VMEM.
    """
    hs = hh + 1
    tb = x_ref.shape[1]
    acc = jnp.zeros((tb, w3_ref.shape[2]), jnp.float32)     # fc1 accumulator
    for i2 in range(hh):
        for j2 in range(hh):
            h2 = jnp.zeros((tb, w2_ref.shape[2]), jnp.float32)
            for p in range(2):
                for q in range(2):
                    cell = (i2 + p) * hs + (j2 + q)          # static index
                    h2 = h2 + jnp.dot(x_ref[cell], w2_ref[2 * p + q],
                                      preferred_element_type=jnp.float32)
            h2 = h2 + b2_ref[...]
            h2 = jnp.where(h2 > 0, h2, LEAKY_SLOPE * h2)
            acc = acc + jnp.dot(h2.astype(w3_ref.dtype), w3_ref[i2 * hh + j2],
                                preferred_element_type=jnp.float32)
    h3 = acc + b3_ref[...]
    h3 = jnp.where(h3 > 0, h3, LEAKY_SLOPE * h3)
    y = jnp.dot(h3.astype(w4_ref.dtype), w4_ref[...],
                preferred_element_type=jnp.float32)
    y = y + b4_ref[...]
    y = pl.reciprocal(1.0 + jnp.exp(-y), approx=False)       # exact sigmoid
    o_ref[...] = y


# ---------------------------------------------------------------------------
# Pallas wrappers
# ---------------------------------------------------------------------------
def _pick_tile(m, target):
    """Largest multiple-of-8 tile dividing m, preferring >=2 grid steps
    (dual TensorCore on v7x) and closeness to `target`; falls back to m."""
    if m <= 8:
        return m
    best = None
    for t in range(8, m + 1, 8):
        if m % t:
            continue
        key = (0 if m // t >= 2 else 1, abs(t - target))
        if best is None or key < best[0]:
            best = (key, t)
    return m if best is None else best[1]


def conv1_matmul(patches, w1, b1):
    """patches: (M, 128), w1: (128, 64), b1: (1, 64) -> (M, 64)."""
    m, k = patches.shape
    n = w1.shape[1]
    tm = _pick_tile(m, target=512)
    return pl.pallas_call(
        _conv1_kernel,
        out_shape=jax.ShapeDtypeStruct((m, n), patches.dtype),
        grid=(m // tm,),
        in_specs=[
            pl.BlockSpec((tm, k), lambda i: (i, 0)),
            pl.BlockSpec((k, n), lambda i: (0, 0)),
            pl.BlockSpec((1, n), lambda i: (0, 0)),
        ],
        out_specs=pl.BlockSpec((tm, n), lambda i: (i, 0)),
        compiler_params=pltpu.CompilerParams(
            dimension_semantics=("parallel",),
            vmem_limit_bytes=VMEM_LIMIT),
    )(patches, w1, b1)


def fused_tail(x2, w2, b2, w3, b3, w4, b4):
    """x2: (hs*hs, N, 4*C1) -> (N, 128) f32 (conv2 + fc1 + fc2 fused)."""
    hs2, n, k2 = x2.shape
    hh = int(round(math.sqrt(hs2))) - 1          # conv2 output spatial size
    tb = _pick_tile(n, target=64)                # batch tile (divides N)
    nout = w4.shape[1]
    return pl.pallas_call(
        functools.partial(_tail_kernel, hh),
        out_shape=jax.ShapeDtypeStruct((n, nout), jnp.float32),
        grid=(n // tb,),
        in_specs=[
            pl.BlockSpec((hs2, tb, k2), lambda i: (0, i, 0)),
            pl.BlockSpec(w2.shape, lambda i: (0, 0, 0)),
            pl.BlockSpec(b2.shape, lambda i: (0, 0)),
            pl.BlockSpec(w3.shape, lambda i: (0, 0, 0)),
            pl.BlockSpec(b3.shape, lambda i: (0, 0)),
            pl.BlockSpec(w4.shape, lambda i: (0, 0)),
            pl.BlockSpec(b4.shape, lambda i: (0, 0)),
        ],
        out_specs=pl.BlockSpec((tb, nout), lambda i: (i, 0)),
        compiler_params=pltpu.CompilerParams(
            dimension_semantics=("parallel",),
            vmem_limit_bytes=VMEM_LIMIT),
    )(x2, w2, b2, w3, b3, w4, b4)


# ---------------------------------------------------------------------------
# Host-side layout helpers (cheap XLA ops inside the jitted forward)
# ---------------------------------------------------------------------------
def bn_affine(gamma, beta, rmean, rvar):
    scale = gamma / jnp.sqrt(rvar + BN_EPS)
    shift = beta - rmean * scale
    return scale, shift


def _pad_axis(a, axis, new_size):
    pads = [(0, 0)] * a.ndim
    pads[axis] = (0, new_size - a.shape[axis])
    return jnp.pad(a, pads)


def conv_patches(x):
    """NHWC x (N,H,W,C), H,W even -> im2col for a 4x4/stride-2/pad-1 conv.
    Returns ((N*Ho*Wo, 16*C), Ho, Wo); column order ((2p+q)*4C+(2u+v)*C+c)."""
    n, h, w, c = x.shape
    xp = jnp.pad(x, ((0, 0), (1, 1), (1, 1), (0, 0)))
    hs, ws = (h + 2) // 2, (w + 2) // 2
    y = xp.reshape(n, hs, 2, ws, 2, c)
    y = jnp.transpose(y, (0, 1, 3, 2, 4, 5)).reshape(n, hs, ws, 4 * c)
    ho, wo = hs - 1, ws - 1
    slabs = [y[:, p:p + ho, q:q + wo, :] for p in (0, 1) for q in (0, 1)]
    pat = jnp.concatenate(slabs, axis=-1)
    return pat.reshape(n * ho * wo, 16 * c), ho, wo


def s2d_spatial_major(x):
    """NHWC x (N,H,W,C) -> space-to-depth(2) of the zero-padded map laid out
    spatial-major: ((H/2+1)*(W/2+1), N, 4*C).  Channel order (2u+v)*C + c.
    No 4x duplication -- the conv2 taps are sliced from this in-kernel."""
    n, h, w, c = x.shape
    xp = jnp.pad(x, ((0, 0), (1, 1), (1, 1), (0, 0)))
    hs, ws = (h + 2) // 2, (w + 2) // 2
    y = xp.reshape(n, hs, 2, ws, 2, c)
    y = jnp.transpose(y, (0, 1, 3, 2, 4, 5)).reshape(n, hs, ws, 4 * c)
    y = jnp.transpose(y, (1, 2, 0, 3)).reshape(hs * ws, n, 4 * c)
    return y


def _conv_w_matrix(w):
    """torch conv weight (Cout, Cin, 4, 4) -> (16*Cin, Cout); row order
    matches conv_patches / s2d taps: row = (2p+q)*4Cin + (2u+v)*Cin + cin."""
    cout, cin = w.shape[:2]
    wr = w.reshape(cout, cin, 2, 2, 2, 2)          # (o, c, p, u, q, v)
    wr = jnp.transpose(wr, (2, 4, 3, 5, 1, 0))     # (p, q, u, v, c, o)
    return wr.reshape(16 * cin, cout)


def prepare_params(p, in_hw, compute_dtype=jnp.bfloat16):
    """One-time (model-load) prep: fold eval-mode BN + bias into the weights,
    remap to kernel layouts, cast to the compute dtype.  Runs OUTSIDE jit."""
    cd = compute_dtype
    h2s = (in_hw // 2) // 2                        # conv2 output spatial size
    out = {}

    # conv1: pad Cin 3->8 (K = 128), fold BN1, keep the real 64 out channels.
    s, sh = bn_affine(p["g1"], p["be1"], p["m1"], p["v1"])
    w = _pad_axis(p["w1"], 1, C1_IN_PAD)
    out["W1"] = (_conv_w_matrix(w) * s[None, :]).astype(cd)             # (128,64)
    out["b1"] = (p["b1"] * s + sh).reshape(1, -1).astype(jnp.float32)   # (1,64)

    # conv2: fold BN2; one (4*C1, C2) matrix per (p,q) tap group -> (4,256,32).
    s, sh = bn_affine(p["g2"], p["be2"], p["m2"], p["v2"])
    w = _conv_w_matrix(p["w2"]) * s[None, :]                            # (1024,32)
    out["W2"] = w.reshape(4, 4 * C1_OUT, C2_OUT).astype(cd)
    out["b2"] = (p["b2"] * s + sh).reshape(1, -1).astype(jnp.float32)   # (1,32)

    # fc1: fold BN3; one (C2, F1) slice per conv2 spatial position, preserving
    # the PyTorch NCHW flatten order exactly -> (16, 32, 64).
    s, sh = bn_affine(p["g3"], p["be3"], p["m3"], p["v3"])
    w = p["w3"].reshape(FC1_OUT, C2_OUT, h2s, h2s)                      # (o,c,i,j)
    w = jnp.transpose(w, (2, 3, 1, 0)).reshape(h2s * h2s, C2_OUT, FC1_OUT)
    out["W3"] = (w * s[None, None, :]).astype(cd)
    out["b3"] = (p["b3"] * s + sh).reshape(1, -1).astype(jnp.float32)   # (1,64)

    # fc2: pad the 14 outputs lane-dense to 128 (sliced back on the host).
    out["W4"] = _pad_axis(p["w4"].T, 1, OUT_PAD).astype(cd)             # (64,128)
    out["b4"] = _pad_axis(p["b4"], 0, OUT_PAD).reshape(1, -1).astype(jnp.float32)
    return out


def classifier_forward(prepared, x_nchw):
    """Jitted forward.  `prepared` comes from prepare_params (run once)."""
    pp = prepared
    cd = pp["W1"].dtype
    n = x_nchw.shape[0]

    x = jnp.transpose(x_nchw, (0, 2, 3, 1)).astype(cd)    # NCHW -> NHWC (once)
    x = _pad_axis(x, 3, C1_IN_PAD)                        # channels 3 -> 8

    # conv1 + BN1 + LeakyReLU: one M-parallel im2col matmul kernel.
    pat1, h1s, _ = conv_patches(x)                        # (N*h1s^2, 128)
    h1 = conv1_matmul(pat1, pp["W1"], pp["b1"])           # (N*h1s^2, 64)

    # Space-to-depth of the padded conv1 output, spatial-major (no 4x dup).
    h1 = h1.reshape(n, h1s, h1s, C1_OUT)
    x2 = s2d_spatial_major(h1)                            # (hs*hs, N, 256)

    # conv2 + BN2 + LeakyReLU -> fc1 + BN3 + LeakyReLU -> fc2 + Sigmoid, fused.
    y = fused_tail(x2, pp["W2"], pp["b2"], pp["W3"], pp["b3"],
                   pp["W4"], pp["b4"])                    # (N, 128) f32
    return y[:, :NUM_CLASSES]


# ---------------------------------------------------------------------------
# Parameter init (torch-like shapes) and pure-JAX reference for checking
# ---------------------------------------------------------------------------
def init_params(key, in_hw=16):
    ks = iter(jax.random.split(key, 32))

    def conv_w(shape):
        fan_in = shape[1] * shape[2] * shape[3]
        bound = 1.0 / jnp.sqrt(fan_in)
        return jax.random.uniform(next(ks), shape, jnp.float32, -bound, bound)

    def lin_w(shape):
        bound = 1.0 / jnp.sqrt(shape[1])
        return jax.random.uniform(next(ks), shape, jnp.float32, -bound, bound)

    def vec(n, lo, hi):
        return jax.random.uniform(next(ks), (n,), jnp.float32, lo, hi)

    h2 = (in_hw // 2) // 2
    flat = C2_OUT * h2 * h2

    p = {}
    p["w1"], p["b1"] = conv_w((64, 3, 4, 4)), vec(64, -0.1, 0.1)
    p["g1"], p["be1"] = vec(64, 0.8, 1.2), vec(64, -0.1, 0.1)
    p["m1"], p["v1"] = vec(64, -0.1, 0.1), vec(64, 0.5, 1.5)
    p["w2"], p["b2"] = conv_w((32, 64, 4, 4)), vec(32, -0.1, 0.1)
    p["g2"], p["be2"] = vec(32, 0.8, 1.2), vec(32, -0.1, 0.1)
    p["m2"], p["v2"] = vec(32, -0.1, 0.1), vec(32, 0.5, 1.5)
    p["w3"], p["b3"] = lin_w((64, flat)), vec(64, -0.1, 0.1)
    p["g3"], p["be3"] = vec(64, 0.8, 1.2), vec(64, -0.1, 0.1)
    p["m3"], p["v3"] = vec(64, -0.1, 0.1), vec(64, 0.5, 1.5)
    p["w4"], p["b4"] = lin_w((NUM_CLASSES, 64)), vec(NUM_CLASSES, -0.1, 0.1)
    return p


def reference_forward(params, x):
    p = params

    def conv(x, w, b):
        y = jax.lax.conv_general_dilated(
            x, w, (2, 2), ((1, 1), (1, 1)),
            dimension_numbers=("NCHW", "OIHW", "NCHW"))
        return y + b[None, :, None, None]

    def lrelu(y):
        return jnp.where(y > 0, y, LEAKY_SLOPE * y)

    s1, sh1 = bn_affine(p["g1"], p["be1"], p["m1"], p["v1"])
    s2, sh2 = bn_affine(p["g2"], p["be2"], p["m2"], p["v2"])
    s3, sh3 = bn_affine(p["g3"], p["be3"], p["m3"], p["v3"])

    y = lrelu(conv(x, p["w1"], p["b1"]) * s1[None, :, None, None]
              + sh1[None, :, None, None])
    y = lrelu(conv(y, p["w2"], p["b2"]) * s2[None, :, None, None]
              + sh2[None, :, None, None])
    y = y.reshape(y.shape[0], -1)
    y = lrelu((y @ p["w3"].T + p["b3"]) * s3[None, :] + sh3[None, :])
    y = jax.nn.sigmoid(y @ p["w4"].T + p["b4"])
    return y


if __name__ == "__main__":
    key = jax.random.PRNGKey(0)
    kx, kp = jax.random.split(key)
    x = jax.random.uniform(kx, (2, 3, 16, 16), jnp.float32)   # NCHW, like torch
    params = init_params(kp, in_hw=16)

    # Hoisted out of the forward pass: runs once at "model load".
    pp_bf16 = prepare_params(params, in_hw=16, compute_dtype=jnp.bfloat16)
    pp_f32 = prepare_params(params, in_hw=16, compute_dtype=jnp.float32)

    fwd = jax.jit(classifier_forward)

    out_bf16 = jax.block_until_ready(fwd(pp_bf16, x))   # default bf16 path
    out_f32 = jax.block_until_ready(fwd(pp_f32, x))     # exact f32 path
    ref = jax.block_until_ready(reference_forward(params, x))

    assert out_bf16.shape == (2, NUM_CLASSES), out_bf16.shape
    err_f32 = float(jnp.max(jnp.abs(out_f32 - ref)))
    assert err_f32 < 2e-4, f"f32 mismatch: {err_f32}"
    err_bf16 = float(jnp.max(jnp.abs(out_bf16 - ref)))
    assert err_bf16 < 3e-2, f"bf16 mismatch: {err_bf16}"

    print("KERNEL_OK")
</pallas_src>

<mosaic_0001>
module attributes {stable_mosaic.version = 11 : i64} {
  func.func @_conv1_kernel(%arg0: i32, %arg1: memref<64x128xbf16, #tpu.memory_space<vmem>>, %arg2: memref<128x64xbf16, #tpu.memory_space<vmem>>, %arg3: memref<1x64xf32, #tpu.memory_space<vmem>>, %arg4: memref<64x64xbf16, #tpu.memory_space<vmem>>) attributes {dimension_semantics = [#tpu.dimension_semantics<parallel>], iteration_bounds = array<i64: 2>, scalar_prefetch = 0 : i64, scratch_operands = 0 : i64, tpu.core_type = #tpu.core_type<tc>, window_params = [{transform_indices = @transform_0, window_bounds = array<i64: 64, 128>}, {pipeline_mode = #tpu.pipeline_mode<synchronous>, transform_indices = @transform_1, window_bounds = array<i64: 128, 64>}, {pipeline_mode = #tpu.pipeline_mode<synchronous>, transform_indices = @transform_2, window_bounds = array<i64: 1, 64>}, {transform_indices = @transform_3, window_bounds = array<i64: 64, 64>}]} {
    %c0 = arith.constant 0 : index
    %c0_0 = arith.constant 0 : index
    %0 = vector.load %arg1[%c0, %c0_0] : memref<64x128xbf16, #tpu.memory_space<vmem>>, vector<64x128xbf16>
    %c0_1 = arith.constant 0 : index
    %c0_2 = arith.constant 0 : index
    %1 = vector.load %arg2[%c0_1, %c0_2] : memref<128x64xbf16, #tpu.memory_space<vmem>>, vector<128x64xbf16>
    %cst = arith.constant dense<0.000000e+00> : vector<64x64xf32>
    %2 = tpu.matmul %0, %1, %cst {dimension_numbers = #tpu.dot_dimension_numbers<[1], [0], [0], [1], [0, 0, 1, 1], [], []>} : vector<64x128xbf16>, vector<128x64xbf16>, vector<64x64xf32> -> vector<64x64xf32>
    %c0_3 = arith.constant 0 : index
    %c0_4 = arith.constant 0 : index
    %3 = vector.load %arg3[%c0_3, %c0_4] : memref<1x64xf32, #tpu.memory_space<vmem>>, vector<1x64xf32>
    %4 = vector.broadcast %3 : vector<1x64xf32> to vector<64x64xf32>
    %5 = arith.addf %2, %4 : vector<64x64xf32>
    %cst_5 = arith.constant 0.000000e+00 : f32
    %6 = vector.broadcast %cst_5 : f32 to vector<64x64xf32>
    %7 = arith.cmpf ogt, %5, %6 : vector<64x64xf32>
    %cst_6 = arith.constant 2.000000e-01 : f32
    %8 = vector.broadcast %cst_6 : f32 to vector<64x64xf32>
    %9 = arith.mulf %8, %5 : vector<64x64xf32>
    %10 = arith.select %7, %5, %9 : vector<64x64xi1>, vector<64x64xf32>
    %11 = arith.truncf %10 : vector<64x64xf32> to vector<64x64xbf16>
    %c0_7 = arith.constant 0 : index
    %c0_8 = arith.constant 0 : index
    %12 = vector.load %arg4[%c0_7, %c0_8] : memref<64x64xbf16, #tpu.memory_space<vmem>>, vector<64x64xbf16>
    tpu.vector_store %arg4[%c0_7, %c0_8], %11 {strides = array<i32>} : memref<64x64xbf16, #tpu.memory_space<vmem>>, vector<64x64xbf16>,
    return
  }
  func.func @transform_0(%arg0: i32) -> (i32, i32) {
    %c0_i32 = arith.constant 0 : i32
    %c0_i32_0 = arith.constant 0 : i32
    return %arg0, %c0_i32 : i32, i32
  }
  func.func @transform_1(%arg0: i32) -> (i32, i32) {
    %c0_i32 = arith.constant 0 : i32
    %c0_i32_0 = arith.constant 0 : i32
    %c0_i32_1 = arith.constant 0 : i32
    return %c0_i32, %c0_i32_0 : i32, i32
  }
  func.func @transform_2(%arg0: i32) -> (i32, i32) {
    %c0_i32 = arith.constant 0 : i32
    %c0_i32_0 = arith.constant 0 : i32
    %c0_i32_1 = arith.constant 0 : i32
    return %c0_i32, %c0_i32_0 : i32, i32
  }
  func.func @transform_3(%arg0: i32) -> (i32, i32) {
    %c0_i32 = arith.constant 0 : i32
    %c0_i32_0 = arith.constant 0 : i32
    return %arg0, %c0_i32 : i32, i32
  }
}

module attributes {stable_mosaic.version = 11 : i64} {
  func.func @_tail_kernel(%arg0: i32, %arg1: memref<25x2x256xbf16, #tpu.memory_space<vmem>>, %arg2: memref<4x256x32xbf16, #tpu.memory_space<vmem>>, %arg3: memref<1x32xf32, #tpu.memory_space<vmem>>, %arg4: memref<16x32x64xbf16, #tpu.memory_space<vmem>>, %arg5: memref<1x64xf32, #tpu.memory_space<vmem>>, %arg6: memref<64x128xbf16, #tpu.memory_space<vmem>>, %arg7: memref<1x128xf32, #tpu.memory_space<vmem>>, %arg8: memref<2x128xf32, #tpu.memory_space<vmem>>) attributes {dimension_semantics = [#tpu.dimension_semantics<parallel>], iteration_bounds = array<i64: 1>, scalar_prefetch = 0 : i64, scratch_operands = 0 : i64, tpu.core_type = #tpu.core_type<tc>, window_params = [{transform_indices = @transform_0, window_bounds = array<i64: 25, 2, 256>}, {pipeline_mode = #tpu.pipeline_mode<synchronous>, transform_indices = @transform_1, window_bounds = array<i64: 4, 256, 32>}, {pipeline_mode = #tpu.pipeline_mode<synchronous>, transform_indices = @transform_2, window_bounds = array<i64: 1, 32>}, {pipeline_mode = #tpu.pipeline_mode<synchronous>, transform_indices = @transform_3, window_bounds = array<i64: 16, 32, 64>}, {pipeline_mode = #tpu.pipeline_mode<synchronous>, transform_indices = @transform_4, window_bounds = array<i64: 1, 64>}, {pipeline_mode = #tpu.pipeline_mode<synchronous>, transform_indices = @transform_5, window_bounds = array<i64: 64, 128>}, {pipeline_mode = #tpu.pipeline_mode<synchronous>, transform_indices = @transform_6, window_bounds = array<i64: 1, 128>}, {transform_indices = @transform_7, window_bounds = array<i64: 2, 128>}]} {
    %cst = arith.constant 0.000000e+00 : f32
    %0 = vector.broadcast %cst : f32 to vector<2x64xf32>
    %cst_0 = arith.constant 0.000000e+00 : f32
    %1 = vector.broadcast %cst_0 : f32 to vector<2x32xf32>
    %c0 = arith.constant 0 : index
    %c0_1 = arith.constant 0 : index
    %c0_2 = arith.constant 0 : index
    %2 = vector.load %arg1[%c0, %c0_1, %c0_2] : memref<25x2x256xbf16, #tpu.memory_space<vmem>>, vector<1x2x256xbf16>
    %3 = vector.shape_cast %2 : vector<1x2x256xbf16> to vector<2x256xbf16>
    %c0_3 = arith.constant 0 : index
    %c0_4 = arith.constant 0 : index
    %c0_5 = arith.constant 0 : index
    %4 = vector.load %arg2[%c0_3, %c0_4, %c0_5] : memref<4x256x32xbf16, #tpu.memory_space<vmem>>, vector<1x256x32xbf16>
    %5 = vector.shape_cast %4 : vector<1x256x32xbf16> to vector<256x32xbf16>
    %cst_6 = arith.constant dense<0.000000e+00> : vector<2x32xf32>
    %6 = tpu.matmul %3, %5, %cst_6 {dimension_numbers = #tpu.dot_dimension_numbers<[1], [0], [0], [1], [0, 0, 1, 1], [], []>} : vector<2x256xbf16>, vector<256x32xbf16>, vector<2x32xf32> -> vector<2x32xf32>
    %7 = arith.addf %1, %6 : vector<2x32xf32>
    %c1 = arith.constant 1 : index
    %c0_7 = arith.constant 0 : index
    %c0_8 = arith.constant 0 : index
    %8 = vector.load %arg1[%c1, %c0_7, %c0_8] : memref<25x2x256xbf16, #tpu.memory_space<vmem>>, vector<1x2x256xbf16>
    %9 = vector.shape_cast %8 : vector<1x2x256xbf16> to vector<2x256xbf16>
    %c1_9 = arith.constant 1 : index
    %c0_10 = arith.constant 0 : index
    %c0_11 = arith.constant 0 : index
    %10 = vector.load %arg2[%c1_9, %c0_10, %c0_11] : memref<4x256x32xbf16, #tpu.memory_space<vmem>>, vector<1x256x32xbf16>
    %11 = vector.shape_cast %10 : vector<1x256x32xbf16> to vector<256x32xbf16>
    %cst_12 = arith.constant dense<0.000000e+00> : vector<2x32xf32>
    %12 = tpu.matmul %9, %11, %cst_12 {dimension_numbers = #tpu.dot_dimension_numbers<[1], [0], [0], [1], [0, 0, 1, 1], [], []>} : vector<2x256xbf16>, vector<256x32xbf16>, vector<2x32xf32> -> vector<2x32xf32>
    %13 = arith.addf %7, %12 : vector<2x32xf32>
    %c5 = arith.constant 5 : index
    %c0_13 = arith.constant 0 : index
    %c0_14 = arith.constant 0 : index
    %14 = vector.load %arg1[%c5, %c0_13, %c0_14] : memref<25x2x256xbf16, #tpu.memory_space<vmem>>, vector<1x2x256xbf16>
    %15 = vector.shape_cast %14 : vector<1x2x256xbf16> to vector<2x256xbf16>
    %c2 = arith.constant 2 : index
    %c0_15 = arith.constant 0 : index
    %c0_16 = arith.constant 0 : index
    %16 = vector.load %arg2[%c2, %c0_15, %c0_16] : memref<4x256x32xbf16, #tpu.memory_space<vmem>>, vector<1x256x32xbf16>
    %17 = vector.shape_cast %16 : vector<1x256x32xbf16> to vector<256x32xbf16>
    %cst_17 = arith.constant dense<0.000000e+00> : vector<2x32xf32>
    %18 = tpu.matmul %15, %17, %cst_17 {dimension_numbers = #tpu.dot_dimension_numbers<[1], [0], [0], [1], [0, 0, 1, 1], [], []>} : vector<2x256xbf16>, vector<256x32xbf16>, vector<2x32xf32> -> vector<2x32xf32>
    %19 = arith.addf %13, %18 : vector<2x32xf32>
    %c6 = arith.constant 6 : index
    %c0_18 = arith.constant 0 : index
    %c0_19 = arith.constant 0 : index
    %20 = vector.load %arg1[%c6, %c0_18, %c0_19] : memref<25x2x256xbf16, #tpu.memory_space<vmem>>, vector<1x2x256xbf16>
    %21 = vector.shape_cast %20 : vector<1x2x256xbf16> to vector<2x256xbf16>
    %c3 = arith.constant 3 : index
    %c0_20 = arith.constant 0 : index
    %c0_21 = arith.constant 0 : index
    %22 = vector.load %arg2[%c3, %c0_20, %c0_21] : memref<4x256x32xbf16, #tpu.memory_space<vmem>>, vector<1x256x32xbf16>
    %23 = vector.shape_cast %22 : vector<1x256x32xbf16> to vector<256x32xbf16>
    %cst_22 = arith.constant dense<0.000000e+00> : vector<2x32xf32>
    %24 = tpu.matmul %21, %23, %cst_22 {dimension_numbers = #tpu.dot_dimension_numbers<[1], [0], [0], [1], [0, 0, 1, 1], [], []>} : vector<2x256xbf16>, vector<256x32xbf16>, vector<2x32xf32> -> vector<2x32xf32>
    %25 = arith.addf %19, %24 : vector<2x32xf32>
    %c0_23 = arith.constant 0 : index
    %c0_24 = arith.constant 0 : index
    %26 = vector.load %arg3[%c0_23, %c0_24] : memref<1x32xf32, #tpu.memory_space<vmem>>, vector<1x32xf32>
    %27 = vector.broadcast %26 : vector<1x32xf32> to vector<2x32xf32>
    %28 = arith.addf %25, %27 : vector<2x32xf32>
    %cst_25 = arith.constant 0.000000e+00 : f32
    %29 = vector.broadcast %cst_25 : f32 to vector<2x32xf32>
    %30 = arith.cmpf ogt, %28, %29 : vector<2x32xf32>
    %cst_26 = arith.constant 2.000000e-01 : f32
    %31 = vector.broadcast %cst_26 : f32 to vector<2x32xf32>
    %32 = arith.mulf %31, %28 : vector<2x32xf32>
    %33 = arith.select %30, %28, %32 : vector<2x32xi1>, vector<2x32xf32>
    %34 = arith.truncf %33 : vector<2x32xf32> to vector<2x32xbf16>
    %c0_27 = arith.constant 0 : index
    %c0_28 = arith.constant 0 : index
    %c0_29 = arith.constant 0 : index
    %35 = vector.load %arg4[%c0_27, %c0_28, %c0_29] : memref<16x32x64xbf16, #tpu.memory_space<vmem>>, vector<1x32x64xbf16>
    %36 = vector.shape_cast %35 : vector<1x32x64xbf16> to vector<32x64xbf16>
    %cst_30 = arith.constant dense<0.000000e+00> : vector<2x64xf32>
    %37 = tpu.matmul %34, %36, %cst_30 {dimension_numbers = #tpu.dot_dimension_numbers<[1], [0], [0], [1], [0, 0, 1, 1], [], []>} : vector<2x32xbf16>, vector<32x64xbf16>, vector<2x64xf32> -> vector<2x64xf32>
    %38 = arith.addf %0, %37 : vector<2x64xf32>
    %cst_31 = arith.constant 0.000000e+00 : f32
    %39 = vector.broadcast %cst_31 : f32 to vector<2x32xf32>
    %c1_32 = arith.constant 1 : index
    %c0_33 = arith.constant 0 : index
    %c0_34 = arith.constant 0 : index
    %40 = vector.load %arg1[%c1_32, %c0_33, %c0_34] : memref<25x2x256xbf16, #tpu.memory_space<vmem>>, vector<1x2x256xbf16>
    %41 = vector.shape_cast %40 : vector<1x2x256xbf16> to vector<2x256xbf16>
    %c0_35 = arith.constant 0 : index
    %c0_36 = arith.constant 0 : index
    %c0_37 = arith.constant 0 : index
    %42 = vector.load %arg2[%c0_35, %c0_36, %c0_37] : memref<4x256x32xbf16, #tpu.memory_space<vmem>>, vector<1x256x32xbf16>
    %43 = vector.shape_cast %42 : vector<1x256x32xbf16> to vector<256x32xbf16>
    %cst_38 = arith.constant dense<0.000000e+00> : vector<2x32xf32>
    %44 = tpu.matmul %41, %43, %cst_38 {dimension_numbers = #tpu.dot_dimension_numbers<[1], [0], [0], [1], [0, 0, 1, 1], [], []>} : vector<2x256xbf16>, vector<256x32xbf16>, vector<2x32xf32> -> vector<2x32xf32>
    %45 = arith.addf %39, %44 : vector<2x32xf32>
    %c2_39 = arith.constant 2 : index
    %c0_40 = arith.constant 0 : index
    %c0_41 = arith.constant 0 : index
    %46 = vector.load %arg1[%c2_39, %c0_40, %c0_41] : memref<25x2x256xbf16, #tpu.memory_space<vmem>>, vector<1x2x256xbf16>
    %47 = vector.shape_cast %46 : vector<1x2x256xbf16> to vector<2x256xbf16>
    %c1_42 = arith.constant 1 : index
    %c0_43 = arith.constant 0 : index
    %c0_44 = arith.constant 0 : index
    %48 = vector.load %arg2[%c1_42, %c0_43, %c0_44] : memref<4x256x32xbf16, #tpu.memory_space<vmem>>, vector<1x256x32xbf16>
    %49 = vector.shape_cast %48 : vector<1x256x32xbf16> to vector<256x32xbf16>
    %cst_45 = arith.constant dense<0.000000e+00> : vector<2x32xf32>
    %50 = tpu.matmul %47, %49, %cst_45 {dimension_numbers = #tpu.dot_dimension_numbers<[1], [0], [0], [1], [0, 0, 1, 1], [], []>} : vector<2x256xbf16>, vector<256x32xbf16>, vector<2x32xf32> -> vector<2x32xf32>
    %51 = arith.addf %45, %50 : vector<2x32xf32>
    %c6_46 = arith.constant 6 : index
    %c0_47 = arith.constant 0 : index
    %c0_48 = arith.constant 0 : index
    %52 = vector.load %arg1[%c6_46, %c0_47, %c0_48] : memref<25x2x256xbf16, #tpu.memory_space<vmem>>, vector<1x2x256xbf16>
    %53 = vector.shape_cast %52 : vector<1x2x256xbf16> to vector<2x256xbf16>
    %c2_49 = arith.constant 2 : index
    %c0_50 = arith.constant 0 : index
    %c0_51 = arith.constant 0 : index
    %54 = vector.load %arg2[%c2_49, %c0_50, %c0_51] : memref<4x256x32xbf16, #tpu.memory_space<vmem>>, vector<1x256x32xbf16>
    %55 = vector.shape_cast %54 : vector<1x256x32xbf16> to vector<256x32xbf16>
    %cst_52 = arith.constant dense<0.000000e+00> : vector<2x32xf32>
    %56 = tpu.matmul %53, %55, %cst_52 {dimension_numbers = #tpu.dot_dimension_numbers<[1], [0], [0], [1], [0, 0, 1, 1], [], []>} : vector<2x256xbf16>, vector<256x32xbf16>, vector<2x32xf32> -> vector<2x32xf32>
    %57 = arith.addf %51, %56 : vector<2x32xf32>
    %c7 = arith.constant 7 : index
    %c0_53 = arith.constant 0 : index
    %c0_54 = arith.constant 0 : index
    %58 = vector.load %arg1[%c7, %c0_53, %c0_54] : memref<25x2x256xbf16, #tpu.memory_space<vmem>>, vector<1x2x256xbf16>
    %59 = vector.shape_cast %58 : vector<1x2x256xbf16> to vector<2x256xbf16>
    %c3_55 = arith.constant 3 : index
    %c0_56 = arith.constant 0 : index
    %c0_57 = arith.constant 0 : index
    %60 = vector.load %arg2[%c3_55, %c0_56, %c0_57] : memref<4x256x32xbf16, #tpu.memory_space<vmem>>, vector<1x256x32xbf16>
    %61 = vector.shape_cast %60 : vector<1x256x32xbf16> to vector<256x32xbf16>
    %cst_58 = arith.constant dense<0.000000e+00> : vector<2x32xf32>
    %62 = tpu.matmul %59, %61, %cst_58 {dimension_numbers = #tpu.dot_dimension_numbers<[1], [0], [0], [1], [0, 0, 1, 1], [], []>} : vector<2x256xbf16>, vector<256x32xbf16>, vector<2x32xf32> -> vector<2x32xf32>
    %63 = arith.addf %57, %62 : vector<2x32xf32>
    %c0_59 = arith.constant 0 : index
    %c0_60 = arith.constant 0 : index
    %64 = vector.load %arg3[%c0_59, %c0_60] : memref<1x32xf32, #tpu.memory_space<vmem>>, vector<1x32xf32>
    %65 = vector.broadcast %64 : vector<1x32xf32> to vector<2x32xf32>
    %66 = arith.addf %63, %65 : vector<2x32xf32>
    %cst_61 = arith.constant 0.000000e+00 : f32
    %67 = vector.broadcast %cst_61 : f32 to vector<2x32xf32>
    %68 = arith.cmpf ogt, %66, %67 : vector<2x32xf32>
    %cst_62 = arith.constant 2.000000e-01 : f32
    %69 = vector.broadcast %cst_62 : f32 to vector<2x32xf32>
    %70 = arith.mulf %69, %66 : vector<2x32xf32>
    %71 = arith.select %68, %66, %70 : vector<2x32xi1>, vector<2x32xf32>
    %72 = arith.truncf %71 : vector<2x32xf32> to vector<2x32xbf16>
    %c1_63 = arith.constant 1 : index
    %c0_64 = arith.constant 0 : index
    %c0_65 = arith.constant 0 : index
    %73 = vector.load %arg4[%c1_63, %c0_64, %c0_65] : memref<16x32x64xbf16, #tpu.memory_space<vmem>>, vector<1x32x64xbf16>
    %74 = vector.shape_cast %73 : vector<1x32x64xbf16> to vector<32x64xbf16>
    %cst_66 = arith.constant dense<0.000000e+00> : vector<2x64xf32>
    %75 = tpu.matmul %72, %74, %cst_66 {dimension_numbers = #tpu.dot_dimension_numbers<[1], [0], [0], [1], [0, 0, 1, 1], [], []>} : vector<2x32xbf16>, vector<32x64xbf16>, vector<2x64xf32> -> vector<2x64xf32>
    %76 = arith.addf %38, %75 : vector<2x64xf32>
    %cst_67 = arith.constant 0.000000e+00 : f32
    %77 = vector.broadcast %cst_67 : f32 to vector<2x32xf32>
    %c2_68 = arith.constant 2 : index
    %c0_69 = arith.constant 0 : index
    %c0_70 = arith.constant 0 : index
    %78 = vector.load %arg1[%c2_68, %c0_69, %c0_70] : memref<25x2x256xbf16, #tpu.memory_space<vmem>>, vector<1x2x256xbf16>
    %79 = vector.shape_cast %78 : vector<1x2x256xbf16> to vector<2x256xbf16>
    %c0_71 = arith.constant 0 : index
    %c0_72 = arith.constant 0 : index
    %c0_73 = arith.constant 0 : index
    %80 = vector.load %arg2[%c0_71, %c0_72, %c0_73] : memref<4x256x32xbf16, #tpu.memory_space<vmem>>, vector<1x256x32xbf16>
    %81 = vector.shape_cast %80 : vector<1x256x32xbf16> to vector<256x32xbf16>
    %cst_74 = arith.constant dense<0.000000e+00> : vector<2x32xf32>
    %82 = tpu.matmul %79, %81, %cst_74 {dimension_numbers = #tpu.dot_dimension_numbers<[1], [0], [0], [1], [0, 0, 1, 1], [], []>} : vector<2x256xbf16>, vector<256x32xbf16>, vector<2x32xf32> -> vector<2x32xf32>
    %83 = arith.addf %77, %82 : vector<2x32xf32>
    %c3_75 = arith.constant 3 : index
    %c0_76 = arith.constant 0 : index
    %c0_77 = arith.constant 0 : index
    %84 = vector.load %arg1[%c3_75, %c0_76, %c0_77] : memref<25x2x256xbf16, #tpu.memory_space<vmem>>, vector<1x2x256xbf16>
    %85 = vector.shape_cast %84 : vector<1x2x256xbf16> to vector<2x256xbf16>
    %c1_78 = arith.constant 1 : index
    %c0_79 = arith.constant 0 : index
    %c0_80 = arith.constant 0 : index
    %86 = vector.load %arg2[%c1_78, %c0_79, %c0_80] : memref<4x256x32xbf16, #tpu.memory_space<vmem>>, vector<1x256x32xbf16>
    %87 = vector.shape_cast %86 : vector<1x256x32xbf16> to vector<256x32xbf16>
    %cst_81 = arith.constant dense<0.000000e+00> : vector<2x32xf32>
    %88 = tpu.matmul %85, %87, %cst_81 {dimension_numbers = #tpu.dot_dimension_numbers<[1], [0], [0], [1], [0, 0, 1, 1], [], []>} : vector<2x256xbf16>, vector<256x32xbf16>, vector<2x32xf32> -> vector<2x32xf32>
    %89 = arith.addf %83, %88 : vector<2x32xf32>
    %c7_82 = arith.constant 7 : index
    %c0_83 = arith.constant 0 : index
    %c0_84 = arith.constant 0 : index
    %90 = vector.load %arg1[%c7_82, %c0_83, %c0_84] : memref<25x2x256xbf16, #tpu.memory_space<vmem>>, vector<1x2x256xbf16>
    %91 = vector.shape_cast %90 : vector<1x2x256xbf16> to vector<2x256xbf16>
    %c2_85 = arith.constant 2 : index
    %c0_86 = arith.constant 0 : index
    %c0_87 = arith.constant 0 : index
    %92 = vector.load %arg2[%c2_85, %c0_86, %c0_87] : memref<4x256x32xbf16, #tpu.memory_space<vmem>>, vector<1x256x32xbf16>
    %93 = vector.shape_cast %92 : vector<1x256x32xbf16> to vector<256x32xbf16>
    %cst_88 = arith.constant dense<0.000000e+00> : vector<2x32xf32>
    %94 = tpu.matmul %91, %93, %cst_88 {dimension_numbers = #tpu.dot_dimension_numbers<[1], [0], [0], [1], [0, 0, 1, 1], [], []>} : vector<2x256xbf16>, vector<256x32xbf16>, vector<2x32xf32> -> vector<2x32xf32>
    %95 = arith.addf %89, %94 : vector<2x32xf32>
    %c8 = arith.constant 8 : index
    %c0_89 = arith.constant 0 : index
    %c0_90 = arith.constant 0 : index
    %96 = vector.load %arg1[%c8, %c0_89, %c0_90] : memref<25x2x256xbf16, #tpu.memory_space<vmem>>, vector<1x2x256xbf16>
    %97 = vector.shape_cast %96 : vector<1x2x256xbf16> to vector<2x256xbf16>
    %c3_91 = arith.constant 3 : index
    %c0_92 = arith.constant 0 : index
    %c0_93 = arith.constant 0 : index
    %98 = vector.load %arg2[%c3_91, %c0_92, %c0_93] : memref<4x256x32xbf16, #tpu.memory_space<vmem>>, vector<1x256x32xbf16>
    %99 = vector.shape_cast %98 : vector<1x256x32xbf16> to vector<256x32xbf16>
    %cst_94 = arith.constant dense<0.000000e+00> : vector<2x32xf32>
    %100 = tpu.matmul %97, %99, %cst_94 {dimension_numbers = #tpu.dot_dimension_numbers<[1], [0], [0], [1], [0, 0, 1, 1], [], []>} : vector<2x256xbf16>, vector<256x32xbf16>, vector<2x32xf32> -> vector<2x32xf32>
    %101 = arith.addf %95, %100 : vector<2x32xf32>
    %c0_95 = arith.constant 0 : index
    %c0_96 = arith.constant 0 : index
    %102 = vector.load %arg3[%c0_95, %c0_96] : memref<1x32xf32, #tpu.memory_space<vmem>>, vector<1x32xf32>
    %103 = vector.broadcast %102 : vector<1x32xf32> to vector<2x32xf32>
    %104 = arith.addf %101, %103 : vector<2x32xf32>
    %cst_97 = arith.constant 0.000000e+00 : f32
    %105 = vector.broadcast %cst_97 : f32 to vector<2x32xf32>
    %106 = arith.cmpf ogt, %104, %105 : vector<2x32xf32>
    %cst_98 = arith.constant 2.000000e-01 : f32
    %107 = vector.broadcast %cst_98 : f32 to vector<2x32xf32>
    %108 = arith.mulf %107, %104 : vector<2x32xf32>
    %109 = arith.select %106, %104, %108 : vector<2x32xi1>, vector<2x32xf32>
    %110 = arith.truncf %109 : vector<2x32xf32> to vector<2x32xbf16>
    %c2_99 = arith.constant 2 : index
    %c0_100 = arith.constant 0 : index
    %c0_101 = arith.constant 0 : index
    %111 = vector.load %arg4[%c2_99, %c0_100, %c0_101] : memref<16x32x64xbf16, #tpu.memory_space<vmem>>, vector<1x32x64xbf16>
    %112 = vector.shape_cast %111 : vector<1x32x64xbf16> to vector<32x64xbf16>
    %cst_102 = arith.constant dense<0.000000e+00> : vector<2x64xf32>
    %113 = tpu.matmul %110, %112, %cst_102 {dimension_numbers = #tpu.dot_dimension_numbers<[1], [0], [0], [1], [0, 0, 1, 1], [], []>} : vector<2x32xbf16>, vector<32x64xbf16>, vector<2x64xf32> -> vector<2x64xf32>
    %114 = arith.addf %76, %113 : vector<2x64xf32>
    %cst_103 = arith.constant 0.000000e+00 : f32
    %115 = vector.broadcast %cst_103 : f32 to vector<2x32xf32>
    %c3_104 = arith.constant 3 : index
    %c0_105 = arith.constant 0 : index
    %c0_106 = arith.constant 0 : index
    %116 = vector.load %arg1[%c3_104, %c0_105, %c0_106] : memref<25x2x256xbf16, #tpu.memory_space<vmem>>, vector<1x2x256xbf16>
    %117 = vector.shape_cast %116 : vector<1x2x256xbf16> to vector<2x256xbf16>
    %c0_107 = arith.constant 0 : index
    %c0_108 = arith.constant 0 : index
    %c0_109 = arith.constant 0 : index
    %118 = vector.load %arg2[%c0_107, %c0_108, %c0_109] : memref<4x256x32xbf16, #tpu.memory_space<vmem>>, vector<1x256x32xbf16>
    %119 = vector.shape_cast %118 : vector<1x256x32xbf16> to vector<256x32xbf16>
    %cst_110 = arith.constant dense<0.000000e+00> : vector<2x32xf32>
    %120 = tpu.matmul %117, %119, %cst_110 {dimension_numbers = #tpu.dot_dimension_numbers<[1], [0], [0], [1], [0, 0, 1, 1], [], []>} : vector<2x256xbf16>, vector<256x32xbf16>, vector<2x32xf32> -> vector<2x32xf32>
    %121 = arith.addf %115, %120 : vector<2x32xf32>
    %c4 = arith.constant 4 : index
    %c0_111 = arith.constant 0 : index
    %c0_112 = arith.constant 0 : index
    %122 = vector.load %arg1[%c4, %c0_111, %c0_112] : memref<25x2x256xbf16, #tpu.memory_space<vmem>>, vector<1x2x256xbf16>
    %123 = vector.shape_cast %122 : vector<1x2x256xbf16> to vector<2x256xbf16>
    %c1_113 = arith.constant 1 : index
    %c0_114 = arith.constant 0 : index
    %c0_115 = arith.constant 0 : index
    %124 = vector.load %arg2[%c1_113, %c0_114, %c0_115] : memref<4x256x32xbf16, #tpu.memory_space<vmem>>, vector<1x256x32xbf16>
    %125 = vector.shape_cast %124 : vector<1x256x32xbf16> to vector<256x32xbf16>
    %cst_116 = arith.constant dense<0.000000e+00> : vector<2x32xf32>
    %126 = tpu.matmul %123, %125, %cst_116 {dimension_numbers = #tpu.dot_dimension_numbers<[1], [0], [0], [1], [0, 0, 1, 1], [], []>} : vector<2x256xbf16>, vector<256x32xbf16>, vector<2x32xf32> -> vector<2x32xf32>
    %127 = arith.addf %121, %126 : vector<2x32xf32>
    %c8_117 = arith.constant 8 : index
    %c0_118 = arith.constant 0 : index
    %c0_119 = arith.constant 0 : index
    %128 = vector.load %arg1[%c8_117, %c0_118, %c0_119] : memref<25x2x256xbf16, #tpu.memory_space<vmem>>, vector<1x2x256xbf16>
    %129 = vector.shape_cast %128 : vector<1x2x256xbf16> to vector<2x256xbf16>
    %c2_120 = arith.constant 2 : index
    %c0_121 = arith.constant 0 : index
    %c0_122 = arith.constant 0 : index
    %130 = vector.load %arg2[%c2_120, %c0_121, %c0_122] : memref<4x256x32xbf16, #tpu.memory_space<vmem>>, vector<1x256x32xbf16>
    %131 = vector.shape_cast %130 : vector<1x256x32xbf16> to vector<256x32xbf16>
    %cst_123 = arith.constant dense<0.000000e+00> : vector<2x32xf32>
    %132 = tpu.matmul %129, %131, %cst_123 {dimension_numbers = #tpu.dot_dimension_numbers<[1], [0], [0], [1], [0, 0, 1, 1], [], []>} : vector<2x256xbf16>, vector<256x32xbf16>, vector<2x32xf32> -> vector<2x32xf32>
    %133 = arith.addf %127, %132 : vector<2x32xf32>
    %c9 = arith.constant 9 : index
    %c0_124 = arith.constant 0 : index
    %c0_125 = arith.constant 0 : index
    %134 = vector.load %arg1[%c9, %c0_124, %c0_125] : memref<25x2x256xbf16, #tpu.memory_space<vmem>>, vector<1x2x256xbf16>
    %135 = vector.shape_cast %134 : vector<1x2x256xbf16> to vector<2x256xbf16>
    %c3_126 = arith.constant 3 : index
    %c0_127 = arith.constant 0 : index
    %c0_128 = arith.constant 0 : index
    %136 = vector.load %arg2[%c3_126, %c0_127, %c0_128] : memref<4x256x32xbf16, #tpu.memory_space<vmem>>, vector<1x256x32xbf16>
    %137 = vector.shape_cast %136 : vector<1x256x32xbf16> to vector<256x32xbf16>
    %cst_129 = arith.constant dense<0.000000e+00> : vector<2x32xf32>
    %138 = tpu.matmul %135, %137, %cst_129 {dimension_numbers = #tpu.dot_dimension_numbers<[1], [0], [0], [1], [0, 0, 1, 1], [], []>} : vector<2x256xbf16>, vector<256x32xbf16>, vector<2x32xf32> -> vector<2x32xf32>
    %139 = arith.addf %133, %138 : vector<2x32xf32>
    %c0_130 = arith.constant 0 : index
    %c0_131 = arith.constant 0 : index
    %140 = vector.load %arg3[%c0_130, %c0_131] : memref<1x32xf32, #tpu.memory_space<vmem>>, vector<1x32xf32>
    %141 = vector.broadcast %140 : vector<1x32xf32> to vector<2x32xf32>
    %142 = arith.addf %139, %141 : vector<2x32xf32>
    %cst_132 = arith.constant 0.000000e+00 : f32
    %143 = vector.broadcast %cst_132 : f32 to vector<2x32xf32>
    %144 = arith.cmpf ogt, %142, %143 : vector<2x32xf32>
    %cst_133 = arith.constant 2.000000e-01 : f32
    %145 = vector.broadcast %cst_133 : f32 to vector<2x32xf32>
    %146 = arith.mulf %145, %142 : vector<2x32xf32>
    %147 = arith.select %144, %142, %146 : vector<2x32xi1>, vector<2x32xf32>
    %148 = arith.truncf %147 : vector<2x32xf32> to vector<2x32xbf16>
    %c3_134 = arith.constant 3 : index
    %c0_135 = arith.constant 0 : index
    %c0_136 = arith.constant 0 : index
    %149 = vector.load %arg4[%c3_134, %c0_135, %c0_136] : memref<16x32x64xbf16, #tpu.memory_space<vmem>>, vector<1x32x64xbf16>
    %150 = vector.shape_cast %149 : vector<1x32x64xbf16> to vector<32x64xbf16>
    %cst_137 = arith.constant dense<0.000000e+00> : vector<2x64xf32>
    %151 = tpu.matmul %148, %150, %cst_137 {dimension_numbers = #tpu.dot_dimension_numbers<[1], [0], [0], [1], [0, 0, 1, 1], [], []>} : vector<2x32xbf16>, vector<32x64xbf16>, vector<2x64xf32> -> vector<2x64xf32>
    %152 = arith.addf %114, %151 : vector<2x64xf32>
    %cst_138 = arith.constant 0.000000e+00 : f32
    %153 = vector.broadcast %cst_138 : f32 to vector<2x32xf32>
    %c5_139 = arith.constant 5 : index
    %c0_140 = arith.constant 0 : index
    %c0_141 = arith.constant 0 : index
    %154 = vector.load %arg1[%c5_139, %c0_140, %c0_141] : memref<25x2x256xbf16, #tpu.memory_space<vmem>>, vector<1x2x256xbf16>
    %155 = vector.shape_cast %154 : vector<1x2x256xbf16> to vector<2x256xbf16>
    %c0_142 = arith.constant 0 : index
    %c0_143 = arith.constant 0 : index
    %c0_144 = arith.constant 0 : index
    %156 = vector.load %arg2[%c0_142, %c0_143, %c0_144] : memref<4x256x32xbf16, #tpu.memory_space<vmem>>, vector<1x256x32xbf16>
    %157 = vector.shape_cast %156 : vector<1x256x32xbf16> to vector<256x32xbf16>
    %cst_145 = arith.constant dense<0.000000e+00> : vector<2x32xf32>
    %158 = tpu.matmul %155, %157, %cst_145 {dimension_numbers = #tpu.dot_dimension_numbers<[1], [0], [0], [1], [0, 0, 1, 1], [], []>} : vector<2x256xbf16>, vector<256x32xbf16>, vector<2x32xf32> -> vector<2x32xf32>
    %159 = arith.addf %153, %158 : vector<2x32xf32>
    %c6_146 = arith.constant 6 : index
    %c0_147 = arith.constant 0 : index
    %c0_148 = arith.constant 0 : index
    %160 = vector.load %arg1[%c6_146, %c0_147, %c0_148] : memref<25x2x256xbf16, #tpu.memory_space<vmem>>, vector<1x2x256xbf16>
    %161 = vector.shape_cast %160 : vector<1x2x256xbf16> to vector<2x256xbf16>
    %c1_149 = arith.constant 1 : index
    %c0_150 = arith.constant 0 : index
    %c0_151 = arith.constant 0 : index
    %162 = vector.load %arg2[%c1_149, %c0_150, %c0_151] : memref<4x256x32xbf16, #tpu.memory_space<vmem>>, vector<1x256x32xbf16>
    %163 = vector.shape_cast %162 : vector<1x256x32xbf16> to vector<256x32xbf16>
    %cst_152 = arith.constant dense<0.000000e+00> : vector<2x32xf32>
    %164 = tpu.matmul %161, %163, %cst_152 {dimension_numbers = #tpu.dot_dimension_numbers<[1], [0], [0], [1], [0, 0, 1, 1], [], []>} : vector<2x256xbf16>, vector<256x32xbf16>, vector<2x32xf32> -> vector<2x32xf32>
    %165 = arith.addf %159, %164 : vector<2x32xf32>
    %c10 = arith.constant 10 : index
    %c0_153 = arith.constant 0 : index
    %c0_154 = arith.constant 0 : index
    %166 = vector.load %arg1[%c10, %c0_153, %c0_154] : memref<25x2x256xbf16, #tpu.memory_space<vmem>>, vector<1x2x256xbf16>
    %167 = vector.shape_cast %166 : vector<1x2x256xbf16> to vector<2x256xbf16>
    %c2_155 = arith.constant 2 : index
    %c0_156 = arith.constant 0 : index
    %c0_157 = arith.constant 0 : index
    %168 = vector.load %arg2[%c2_155, %c0_156, %c0_157] : memref<4x256x32xbf16, #tpu.memory_space<vmem>>, vector<1x256x32xbf16>
    %169 = vector.shape_cast %168 : vector<1x256x32xbf16> to vector<256x32xbf16>
    %cst_158 = arith.constant dense<0.000000e+00> : vector<2x32xf32>
    %170 = tpu.matmul %167, %169, %cst_158 {dimension_numbers = #tpu.dot_dimension_numbers<[1], [0], [0], [1], [0, 0, 1, 1], [], []>} : vector<2x256xbf16>, vector<256x32xbf16>, vector<2x32xf32> -> vector<2x32xf32>
    %171 = arith.addf %165, %170 : vector<2x32xf32>
    %c11 = arith.constant 11 : index
    %c0_159 = arith.constant 0 : index
    %c0_160 = arith.constant 0 : index
    %172 = vector.load %arg1[%c11, %c0_159, %c0_160] : memref<25x2x256xbf16, #tpu.memory_space<vmem>>, vector<1x2x256xbf16>
    %173 = vector.shape_cast %172 : vector<1x2x256xbf16> to vector<2x256xbf16>
    %c3_161 = arith.constant 3 : index
    %c0_162 = arith.constant 0 : index
    %c0_163 = arith.constant 0 : index
    %174 = vector.load %arg2[%c3_161, %c0_162, %c0_163] : memref<4x256x32xbf16, #tpu.memory_space<vmem>>, vector<1x256x32xbf16>
    %175 = vector.shape_cast %174 : vector<1x256x32xbf16> to vector<256x32xbf16>
    %cst_164 = arith.constant dense<0.000000e+00> : vector<2x32xf32>
    %176 = tpu.matmul %173, %175, %cst_164 {dimension_numbers = #tpu.dot_dimension_numbers<[1], [0], [0], [1], [0, 0, 1, 1], [], []>} : vector<2x256xbf16>, vector<256x32xbf16>, vector<2x32xf32> -> vector<2x32xf32>
    %177 = arith.addf %171, %176 : vector<2x32xf32>
    %c0_165 = arith.constant 0 : index
    %c0_166 = arith.constant 0 : index
    %178 = vector.load %arg3[%c0_165, %c0_166] : memref<1x32xf32, #tpu.memory_space<vmem>>, vector<1x32xf32>
    %179 = vector.broadcast %178 : vector<1x32xf32> to vector<2x32xf32>
    %180 = arith.addf %177, %179 : vector<2x32xf32>
    %cst_167 = arith.constant 0.000000e+00 : f32
    %181 = vector.broadcast %cst_167 : f32 to vector<2x32xf32>
    %182 = arith.cmpf ogt, %180, %181 : vector<2x32xf32>
    %cst_168 = arith.constant 2.000000e-01 : f32
    %183 = vector.broadcast %cst_168 : f32 to vector<2x32xf32>
    %184 = arith.mulf %183, %180 : vector<2x32xf32>
    %185 = arith.select %182, %180, %184 : vector<2x32xi1>, vector<2x32xf32>
    %186 = arith.truncf %185 : vector<2x32xf32> to vector<2x32xbf16>
    %c4_169 = arith.constant 4 : index
    %c0_170 = arith.constant 0 : index
    %c0_171 = arith.constant 0 : index
    %187 = vector.load %arg4[%c4_169, %c0_170, %c0_171] : memref<16x32x64xbf16, #tpu.memory_space<vmem>>, vector<1x32x64xbf16>
    %188 = vector.shape_cast %187 : vector<1x32x64xbf16> to vector<32x64xbf16>
    %cst_172 = arith.constant dense<0.000000e+00> : vector<2x64xf32>
    %189 = tpu.matmul %186, %188, %cst_172 {dimension_numbers = #tpu.dot_dimension_numbers<[1], [0], [0], [1], [0, 0, 1, 1], [], []>} : vector<2x32xbf16>, vector<32x64xbf16>, vector<2x64xf32> -> vector<2x64xf32>
    %190 = arith.addf %152, %189 : vector<2x64xf32>
    %cst_173 = arith.constant 0.000000e+00 : f32
    %191 = vector.broadcast %cst_173 : f32 to vector<2x32xf32>
    %c6_174 = arith.constant 6 : index
    %c0_175 = arith.constant 0 : index
    %c0_176 = arith.constant 0 : index
    %192 = vector.load %arg1[%c6_174, %c0_175, %c0_176] : memref<25x2x256xbf16, #tpu.memory_space<vmem>>, vector<1x2x256xbf16>
    %193 = vector.shape_cast %192 : vector<1x2x256xbf16> to vector<2x256xbf16>
    %c0_177 = arith.constant 0 : index
    %c0_178 = arith.constant 0 : index
    %c0_179 = arith.constant 0 : index
    %194 = vector.load %arg2[%c0_177, %c0_178, %c0_179] : memref<4x256x32xbf16, #tpu.memory_space<vmem>>, vector<1x256x32xbf16>
    %195 = vector.shape_cast %194 : vector<1x256x32xbf16> to vector<256x32xbf16>
    %cst_180 = arith.constant dense<0.000000e+00> : vector<2x32xf32>
    %196 = tpu.matmul %193, %195, %cst_180 {dimension_numbers = #tpu.dot_dimension_numbers<[1], [0], [0], [1], [0, 0, 1, 1], [], []>} : vector<2x256xbf16>, vector<256x32xbf16>, vector<2x32xf32> -> vector<2x32xf32>
    %197 = arith.addf %191, %196 : vector<2x32xf32>
    %c7_181 = arith.constant 7 : index
    %c0_182 = arith.constant 0 : index
    %c0_183 = arith.constant 0 : index
    %198 = vector.load %arg1[%c7_181, %c0_182, %c0_183] : memref<25x2x256xbf16, #tpu.memory_space<vmem>>, vector<1x2x256xbf16>
    %199 = vector.shape_cast %198 : vector<1x2x256xbf16> to vector<2x256xbf16>
    %c1_184 = arith.constant 1 : index
    %c0_185 = arith.constant 0 : index
    %c0_186 = arith.constant 0 : index
    %200 = vector.load %arg2[%c1_184, %c0_185, %c0_186] : memref<4x256x32xbf16, #tpu.memory_space<vmem>>, vector<1x256x32xbf16>
    %201 = vector.shape_cast %200 : vector<1x256x32xbf16> to vector<256x32xbf16>
    %cst_187 = arith.constant dense<0.000000e+00> : vector<2x32xf32>
    %202 = tpu.matmul %199, %201, %cst_187 {dimension_numbers = #tpu.dot_dimension_numbers<[1], [0], [0], [1], [0, 0, 1, 1], [], []>} : vector<2x256xbf16>, vector<256x32xbf16>, vector<2x32xf32> -> vector<2x32xf32>
    %203 = arith.addf %197, %202 : vector<2x32xf32>
    %c11_188 = arith.constant 11 : index
    %c0_189 = arith.constant 0 : index
    %c0_190 = arith.constant 0 : index
    %204 = vector.load %arg1[%c11_188, %c0_189, %c0_190] : memref<25x2x256xbf16, #tpu.memory_space<vmem>>, vector<1x2x256xbf16>
    %205 = vector.shape_cast %204 : vector<1x2x256xbf16> to vector<2x256xbf16>
    %c2_191 = arith.constant 2 : index
    %c0_192 = arith.constant 0 : index
    %c0_193 = arith.constant 0 : index
    %206 = vector.load %arg2[%c2_191, %c0_192, %c0_193] : memref<4x256x32xbf16, #tpu.memory_space<vmem>>, vector<1x256x32xbf16>
    %207 = vector.shape_cast %206 : vector<1x256x32xbf16> to vector<256x32xbf16>
    %cst_194 = arith.constant dense<0.000000e+00> : vector<2x32xf32>
    %208 = tpu.matmul %205, %207, %cst_194 {dimension_numbers = #tpu.dot_dimension_numbers<[1], [0], [0], [1], [0, 0, 1, 1], [], []>} : vector<2x256xbf16>, vector<256x32xbf16>, vector<2x32xf32> -> vector<2x32xf32>
    %209 = arith.addf %203, %208 : vector<2x32xf32>
    %c12 = arith.constant 12 : index
    %c0_195 = arith.constant 0 : index
    %c0_196 = arith.constant 0 : index
    %210 = vector.load %arg1[%c12, %c0_195, %c0_196] : memref<25x2x256xbf16, #tpu.memory_space<vmem>>, vector<1x2x256xbf16>
    %211 = vector.shape_cast %210 : vector<1x2x256xbf16> to vector<2x256xbf16>
    %c3_197 = arith.constant 3 : index
    %c0_198 = arith.constant 0 : index
    %c0_199 = arith.constant 0 : index
    %212 = vector.load %arg2[%c3_197, %c0_198, %c0_199] : memref<4x256x32xbf16, #tpu.memory_space<vmem>>, vector<1x256x32xbf16>
    %213 = vector.shape_cast %212 : vector<1x256x32xbf16> to vector<256x32xbf16>
    %cst_200 = arith.constant dense<0.000000e+00> : vector<2x32xf32>
    %214 = tpu.matmul %211, %213, %cst_200 {dimension_numbers = #tpu.dot_dimension_numbers<[1], [0], [0], [1], [0, 0, 1, 1], [], []>} : vector<2x256xbf16>, vector<256x32xbf16>, vector<2x32xf32> -> vector<2x32xf32>
    %215 = arith.addf %209, %214 : vector<2x32xf32>
    %c0_201 = arith.constant 0 : index
    %c0_202 = arith.constant 0 : index
    %216 = vector.load %arg3[%c0_201, %c0_202] : memref<1x32xf32, #tpu.memory_space<vmem>>, vector<1x32xf32>
    %217 = vector.broadcast %216 : vector<1x32xf32> to vector<2x32xf32>
    %218 = arith.addf %215, %217 : vector<2x32xf32>
    %cst_203 = arith.constant 0.000000e+00 : f32
    %219 = vector.broadcast %cst_203 : f32 to vector<2x32xf32>
    %220 = arith.cmpf ogt, %218, %219 : vector<2x32xf32>
    %cst_204 = arith.constant 2.000000e-01 : f32
    %221 = vector.broadcast %cst_204 : f32 to vector<2x32xf32>
    %222 = arith.mulf %221, %218 : vector<2x32xf32>
    %223 = arith.select %220, %218, %222 : vector<2x32xi1>, vector<2x32xf32>
    %224 = arith.truncf %223 : vector<2x32xf32> to vector<2x32xbf16>
    %c5_205 = arith.constant 5 : index
    %c0_206 = arith.constant 0 : index
    %c0_207 = arith.constant 0 : index
    %225 = vector.load %arg4[%c5_205, %c0_206, %c0_207] : memref<16x32x64xbf16, #tpu.memory_space<vmem>>, vector<1x32x64xbf16>
    %226 = vector.shape_cast %225 : vector<1x32x64xbf16> to vector<32x64xbf16>
    %cst_208 = arith.constant dense<0.000000e+00> : vector<2x64xf32>
    %227 = tpu.matmul %224, %226, %cst_208 {dimension_numbers = #tpu.dot_dimension_numbers<[1], [0], [0], [1], [0, 0, 1, 1], [], []>} : vector<2x32xbf16>, vector<32x64xbf16>, vector<2x64xf32> -> vector<2x64xf32>
    %228 = arith.addf %190, %227 : vector<2x64xf32>
    %cst_209 = arith.constant 0.000000e+00 : f32
    %229 = vector.broadcast %cst_209 : f32 to vector<2x32xf32>
    %c7_210 = arith.constant 7 : index
    %c0_211 = arith.constant 0 : index
    %c0_212 = arith.constant 0 : index
    %230 = vector.load %arg1[%c7_210, %c0_211, %c0_212] : memref<25x2x256xbf16, #tpu.memory_space<vmem>>, vector<1x2x256xbf16>
    %231 = vector.shape_cast %230 : vector<1x2x256xbf16> to vector<2x256xbf16>
    %c0_213 = arith.constant 0 : index
    %c0_214 = arith.constant 0 : index
    %c0_215 = arith.constant 0 : index
    %232 = vector.load %arg2[%c0_213, %c0_214, %c0_215] : memref<4x256x32xbf16, #tpu.memory_space<vmem>>, vector<1x256x32xbf16>
    %233 = vector.shape_cast %232 : vector<1x256x32xbf16> to vector<256x32xbf16>
    %cst_216 = arith.constant dense<0.000000e+00> : vector<2x32xf32>
    %234 = tpu.matmul %231, %233, %cst_216 {dimension_numbers = #tpu.dot_dimension_numbers<[1], [0], [0], [1], [0, 0, 1, 1], [], []>} : vector<2x256xbf16>, vector<256x32xbf16>, vector<2x32xf32> -> vector<2x32xf32>
    %235 = arith.addf %229, %234 : vector<2x32xf32>
    %c8_217 = arith.constant 8 : index
    %c0_218 = arith.constant 0 : index
    %c0_219 = arith.constant 0 : index
    %236 = vector.load %arg1[%c8_217, %c0_218, %c0_219] : memref<25x2x256xbf16, #tpu.memory_space<vmem>>, vector<1x2x256xbf16>
    %237 = vector.shape_cast %236 : vector<1x2x256xbf16> to vector<2x256xbf16>
    %c1_220 = arith.constant 1 : index
    %c0_221 = arith.constant 0 : index
    %c0_222 = arith.constant 0 : index
    %238 = vector.load %arg2[%c1_220, %c0_221, %c0_222] : memref<4x256x32xbf16, #tpu.memory_space<vmem>>, vector<1x256x32xbf16>
    %239 = vector.shape_cast %238 : vector<1x256x32xbf16> to vector<256x32xbf16>
    %cst_223 = arith.constant dense<0.000000e+00> : vector<2x32xf32>
    %240 = tpu.matmul %237, %239, %cst_223 {dimension_numbers = #tpu.dot_dimension_numbers<[1], [0], [0], [1], [0, 0, 1, 1], [], []>} : vector<2x256xbf16>, vector<256x32xbf16>, vector<2x32xf32> -> vector<2x32xf32>
    %241 = arith.addf %235, %240 : vector<2x32xf32>
    %c12_224 = arith.constant 12 : index
    %c0_225 = arith.constant 0 : index
    %c0_226 = arith.constant 0 : index
    %242 = vector.load %arg1[%c12_224, %c0_225, %c0_226] : memref<25x2x256xbf16, #tpu.memory_space<vmem>>, vector<1x2x256xbf16>
    %243 = vector.shape_cast %242 : vector<1x2x256xbf16> to vector<2x256xbf16>
    %c2_227 = arith.constant 2 : index
    %c0_228 = arith.constant 0 : index
    %c0_229 = arith.constant 0 : index
    %244 = vector.load %arg2[%c2_227, %c0_228, %c0_229] : memref<4x256x32xbf16, #tpu.memory_space<vmem>>, vector<1x256x32xbf16>
    %245 = vector.shape_cast %244 : vector<1x256x32xbf16> to vector<256x32xbf16>
    %cst_230 = arith.constant dense<0.000000e+00> : vector<2x32xf32>
    %246 = tpu.matmul %243, %245, %cst_230 {dimension_numbers = #tpu.dot_dimension_numbers<[1], [0], [0], [1], [0, 0, 1, 1], [], []>} : vector<2x256xbf16>, vector<256x32xbf16>, vector<2x32xf32> -> vector<2x32xf32>
    %247 = arith.addf %241, %246 : vector<2x32xf32>
    %c13 = arith.constant 13 : index
    %c0_231 = arith.constant 0 : index
    %c0_232 = arith.constant 0 : index
    %248 = vector.load %arg1[%c13, %c0_231, %c0_232] : memref<25x2x256xbf16, #tpu.memory_space<vmem>>, vector<1x2x256xbf16>
    %249 = vector.shape_cast %248 : vector<1x2x256xbf16> to vector<2x256xbf16>
    %c3_233 = arith.constant 3 : index
    %c0_234 = arith.constant 0 : index
    %c0_235 = arith.constant 0 : index
    %250 = vector.load %arg2[%c3_233, %c0_234, %c0_235] : memref<4x256x32xbf16, #tpu.memory_space<vmem>>, vector<1x256x32xbf16>
    %251 = vector.shape_cast %250 : vector<1x256x32xbf16> to vector<256x32xbf16>
    %cst_236 = arith.constant dense<0.000000e+00> : vector<2x32xf32>
    %252 = tpu.matmul %249, %251, %cst_236 {dimension_numbers = #tpu.dot_dimension_numbers<[1], [0], [0], [1], [0, 0, 1, 1], [], []>} : vector<2x256xbf16>, vector<256x32xbf16>, vector<2x32xf32> -> vector<2x32xf32>
    %253 = arith.addf %247, %252 : vector<2x32xf32>
    %c0_237 = arith.constant 0 : index
    %c0_238 = arith.constant 0 : index
    %254 = vector.load %arg3[%c0_237, %c0_238] : memref<1x32xf32, #tpu.memory_space<vmem>>, vector<1x32xf32>
    %255 = vector.broadcast %254 : vector<1x32xf32> to vector<2x32xf32>
    %256 = arith.addf %253, %255 : vector<2x32xf32>
    %cst_239 = arith.constant 0.000000e+00 : f32
    %257 = vector.broadcast %cst_239 : f32 to vector<2x32xf32>
    %258 = arith.cmpf ogt, %256, %257 : vector<2x32xf32>
    %cst_240 = arith.constant 2.000000e-01 : f32
    %259 = vector.broadcast %cst_240 : f32 to vector<2x32xf32>
    %260 = arith.mulf %259, %256 : vector<2x32xf32>
    %261 = arith.select %258, %256, %260 : vector<2x32xi1>, vector<2x32xf32>
    %262 = arith.truncf %261 : vector<2x32xf32> to vector<2x32xbf16>
    %c6_241 = arith.constant 6 : index
    %c0_242 = arith.constant 0 : index
    %c0_243 = arith.constant 0 : index
    %263 = vector.load %arg4[%c6_241, %c0_242, %c0_243] : memref<16x32x64xbf16, #tpu.memory_space<vmem>>, vector<1x32x64xbf16>
    %264 = vector.shape_cast %263 : vector<1x32x64xbf16> to vector<32x64xbf16>
    %cst_244 = arith.constant dense<0.000000e+00> : vector<2x64xf32>
    %265 = tpu.matmul %262, %264, %cst_244 {dimension_numbers = #tpu.dot_dimension_numbers<[1], [0], [0], [1], [0, 0, 1, 1], [], []>} : vector<2x32xbf16>, vector<32x64xbf16>, vector<2x64xf32> -> vector<2x64xf32>
    %266 = arith.addf %228, %265 : vector<2x64xf32>
    %cst_245 = arith.constant 0.000000e+00 : f32
    %267 = vector.broadcast %cst_245 : f32 to vector<2x32xf32>
    %c8_246 = arith.constant 8 : index
    %c0_247 = arith.constant 0 : index
    %c0_248 = arith.constant 0 : index
    %268 = vector.load %arg1[%c8_246, %c0_247, %c0_248] : memref<25x2x256xbf16, #tpu.memory_space<vmem>>, vector<1x2x256xbf16>
    %269 = vector.shape_cast %268 : vector<1x2x256xbf16> to vector<2x256xbf16>
    %c0_249 = arith.constant 0 : index
    %c0_250 = arith.constant 0 : index
    %c0_251 = arith.constant 0 : index
    %270 = vector.load %arg2[%c0_249, %c0_250, %c0_251] : memref<4x256x32xbf16, #tpu.memory_space<vmem>>, vector<1x256x32xbf16>
    %271 = vector.shape_cast %270 : vector<1x256x32xbf16> to vector<256x32xbf16>
    %cst_252 = arith.constant dense<0.000000e+00> : vector<2x32xf32>
    %272 = tpu.matmul %269, %271, %cst_252 {dimension_numbers = #tpu.dot_dimension_numbers<[1], [0], [0], [1], [0, 0, 1, 1], [], []>} : vector<2x256xbf16>, vector<256x32xbf16>, vector<2x32xf32> -> vector<2x32xf32>
    %273 = arith.addf %267, %272 : vector<2x32xf32>
    %c9_253 = arith.constant 9 : index
    %c0_254 = arith.constant 0 : index
    %c0_255 = arith.constant 0 : index
    %274 = vector.load %arg1[%c9_253, %c0_254, %c0_255] : memref<25x2x256xbf16, #tpu.memory_space<vmem>>, vector<1x2x256xbf16>
    %275 = vector.shape_cast %274 : vector<1x2x256xbf16> to vector<2x256xbf16>
    %c1_256 = arith.constant 1 : index
    %c0_257 = arith.constant 0 : index
    %c0_258 = arith.constant 0 : index
    %276 = vector.load %arg2[%c1_256, %c0_257, %c0_258] : memref<4x256x32xbf16, #tpu.memory_space<vmem>>, vector<1x256x32xbf16>
    %277 = vector.shape_cast %276 : vector<1x256x32xbf16> to vector<256x32xbf16>
    %cst_259 = arith.constant dense<0.000000e+00> : vector<2x32xf32>
    %278 = tpu.matmul %275, %277, %cst_259 {dimension_numbers = #tpu.dot_dimension_numbers<[1], [0], [0], [1], [0, 0, 1, 1], [], []>} : vector<2x256xbf16>, vector<256x32xbf16>, vector<2x32xf32> -> vector<2x32xf32>
    %279 = arith.addf %273, %278 : vector<2x32xf32>
    %c13_260 = arith.constant 13 : index
    %c0_261 = arith.constant 0 : index
    %c0_262 = arith.constant 0 : index
    %280 = vector.load %arg1[%c13_260, %c0_261, %c0_262] : memref<25x2x256xbf16, #tpu.memory_space<vmem>>, vector<1x2x256xbf16>
    %281 = vector.shape_cast %280 : vector<1x2x256xbf16> to vector<2x256xbf16>
    %c2_263 = arith.constant 2 : index
    %c0_264 = arith.constant 0 : index
    %c0_265 = arith.constant 0 : index
    %282 = vector.load %arg2[%c2_263, %c0_264, %c0_265] : memref<4x256x32xbf16, #tpu.memory_space<vmem>>, vector<1x256x32xbf16>
    %283 = vector.shape_cast %282 : vector<1x256x32xbf16> to vector<256x32xbf16>
    %cst_266 = arith.constant dense<0.000000e+00> : vector<2x32xf32>
    %284 = tpu.matmul %281, %283, %cst_266 {dimension_numbers = #tpu.dot_dimension_numbers<[1], [0], [0], [1], [0, 0, 1, 1], [], []>} : vector<2x256xbf16>, vector<256x32xbf16>, vector<2x32xf32> -> vector<2x32xf32>
    %285 = arith.addf %279, %284 : vector<2x32xf32>
    %c14 = arith.constant 14 : index
    %c0_267 = arith.constant 0 : index
    %c0_268 = arith.constant 0 : index
    %286 = vector.load %arg1[%c14, %c0_267, %c0_268] : memref<25x2x256xbf16, #tpu.memory_space<vmem>>, vector<1x2x256xbf16>
    %287 = vector.shape_cast %286 : vector<1x2x256xbf16> to vector<2x256xbf16>
    %c3_269 = arith.constant 3 : index
    %c0_270 = arith.constant 0 : index
    %c0_271 = arith.constant 0 : index
    %288 = vector.load %arg2[%c3_269, %c0_270, %c0_271] : memref<4x256x32xbf16, #tpu.memory_space<vmem>>, vector<1x256x32xbf16>
    %289 = vector.shape_cast %288 : vector<1x256x32xbf16> to vector<256x32xbf16>
    %cst_272 = arith.constant dense<0.000000e+00> : vector<2x32xf32>
    %290 = tpu.matmul %287, %289, %cst_272 {dimension_numbers = #tpu.dot_dimension_numbers<[1], [0], [0], [1], [0, 0, 1, 1], [], []>} : vector<2x256xbf16>, vector<256x32xbf16>, vector<2x32xf32> -> vector<2x32xf32>
    %291 = arith.addf %285, %290 : vector<2x32xf32>
    %c0_273 = arith.constant 0 : index
    %c0_274 = arith.constant 0 : index
    %292 = vector.load %arg3[%c0_273, %c0_274] : memref<1x32xf32, #tpu.memory_space<vmem>>, vector<1x32xf32>
    %293 = vector.broadcast %292 : vector<1x32xf32> to vector<2x32xf32>
    %294 = arith.addf %291, %293 : vector<2x32xf32>
    %cst_275 = arith.constant 0.000000e+00 : f32
    %295 = vector.broadcast %cst_275 : f32 to vector<2x32xf32>
    %296 = arith.cmpf ogt, %294, %295 : vector<2x32xf32>
    %cst_276 = arith.constant 2.000000e-01 : f32
    %297 = vector.broadcast %cst_276 : f32 to vector<2x32xf32>
    %298 = arith.mulf %297, %294 : vector<2x32xf32>
    %299 = arith.select %296, %294, %298 : vector<2x32xi1>, vector<2x32xf32>
    %300 = arith.truncf %299 : vector<2x32xf32> to vector<2x32xbf16>
    %c7_277 = arith.constant 7 : index
    %c0_278 = arith.constant 0 : index
    %c0_279 = arith.constant 0 : index
    %301 = vector.load %arg4[%c7_277, %c0_278, %c0_279] : memref<16x32x64xbf16, #tpu.memory_space<vmem>>, vector<1x32x64xbf16>
    %302 = vector.shape_cast %301 : vector<1x32x64xbf16> to vector<32x64xbf16>
    %cst_280 = arith.constant dense<0.000000e+00> : vector<2x64xf32>
    %303 = tpu.matmul %300, %302, %cst_280 {dimension_numbers = #tpu.dot_dimension_numbers<[1], [0], [0], [1], [0, 0, 1, 1], [], []>} : vector<2x32xbf16>, vector<32x64xbf16>, vector<2x64xf32> -> vector<2x64xf32>
    %304 = arith.addf %266, %303 : vector<2x64xf32>
    %cst_281 = arith.constant 0.000000e+00 : f32
    %305 = vector.broadcast %cst_281 : f32 to vector<2x32xf32>
    %c10_282 = arith.constant 10 : index
    %c0_283 = arith.constant 0 : index
    %c0_284 = arith.constant 0 : index
    %306 = vector.load %arg1[%c10_282, %c0_283, %c0_284] : memref<25x2x256xbf16, #tpu.memory_space<vmem>>, vector<1x2x256xbf16>
    %307 = vector.shape_cast %306 : vector<1x2x256xbf16> to vector<2x256xbf16>
    %c0_285 = arith.constant 0 : index
    %c0_286 = arith.constant 0 : index
    %c0_287 = arith.constant 0 : index
    %308 = vector.load %arg2[%c0_285, %c0_286, %c0_287] : memref<4x256x32xbf16, #tpu.memory_space<vmem>>, vector<1x256x32xbf16>
    %309 = vector.shape_cast %308 : vector<1x256x32xbf16> to vector<256x32xbf16>
    %cst_288 = arith.constant dense<0.000000e+00> : vector<2x32xf32>
    %310 = tpu.matmul %307, %309, %cst_288 {dimension_numbers = #tpu.dot_dimension_numbers<[1], [0], [0], [1], [0, 0, 1, 1], [], []>} : vector<2x256xbf16>, vector<256x32xbf16>, vector<2x32xf32> -> vector<2x32xf32>
    %311 = arith.addf %305, %310 : vector<2x32xf32>
    %c11_289 = arith.constant 11 : index
    %c0_290 = arith.constant 0 : index
    %c0_291 = arith.constant 0 : index
    %312 = vector.load %arg1[%c11_289, %c0_290, %c0_291] : memref<25x2x256xbf16, #tpu.memory_space<vmem>>, vector<1x2x256xbf16>
    %313 = vector.shape_cast %312 : vector<1x2x256xbf16> to vector<2x256xbf16>
    %c1_292 = arith.constant 1 : index
    %c0_293 = arith.constant 0 : index
    %c0_294 = arith.constant 0 : index
    %314 = vector.load %arg2[%c1_292, %c0_293, %c0_294] : memref<4x256x32xbf16, #tpu.memory_space<vmem>>, vector<1x256x32xbf16>
    %315 = vector.shape_cast %314 : vector<1x256x32xbf16> to vector<256x32xbf16>
    %cst_295 = arith.constant dense<0.000000e+00> : vector<2x32xf32>
    %316 = tpu.matmul %313, %315, %cst_295 {dimension_numbers = #tpu.dot_dimension_numbers<[1], [0], [0], [1], [0, 0, 1, 1], [], []>} : vector<2x256xbf16>, vector<256x32xbf16>, vector<2x32xf32> -> vector<2x32xf32>
    %317 = arith.addf %311, %316 : vector<2x32xf32>
    %c15 = arith.constant 15 : index
    %c0_296 = arith.constant 0 : index
    %c0_297 = arith.constant 0 : index
    %318 = vector.load %arg1[%c15, %c0_296, %c0_297] : memref<25x2x256xbf16, #tpu.memory_space<vmem>>, vector<1x2x256xbf16>
    %319 = vector.shape_cast %318 : vector<1x2x256xbf16> to vector<2x256xbf16>
    %c2_298 = arith.constant 2 : index
    %c0_299 = arith.constant 0 : index
    %c0_300 = arith.constant 0 : index
    %320 = vector.load %arg2[%c2_298, %c0_299, %c0_300] : memref<4x256x32xbf16, #tpu.memory_space<vmem>>, vector<1x256x32xbf16>
    %321 = vector.shape_cast %320 : vector<1x256x32xbf16> to vector<256x32xbf16>
    %cst_301 = arith.constant dense<0.000000e+00> : vector<2x32xf32>
    %322 = tpu.matmul %319, %321, %cst_301 {dimension_numbers = #tpu.dot_dimension_numbers<[1], [0], [0], [1], [0, 0, 1, 1], [], []>} : vector<2x256xbf16>, vector<256x32xbf16>, vector<2x32xf32> -> vector<2x32xf32>
    %323 = arith.addf %317, %322 : vector<2x32xf32>
    %c16 = arith.constant 16 : index
    %c0_302 = arith.constant 0 : index
    %c0_303 = arith.constant 0 : index
    %324 = vector.load %arg1[%c16, %c0_302, %c0_303] : memref<25x2x256xbf16, #tpu.memory_space<vmem>>, vector<1x2x256xbf16>
    %325 = vector.shape_cast %324 : vector<1x2x256xbf16> to vector<2x256xbf16>
    %c3_304 = arith.constant 3 : index
    %c0_305 = arith.constant 0 : index
    %c0_306 = arith.constant 0 : index
    %326 = vector.load %arg2[%c3_304, %c0_305, %c0_306] : memref<4x256x32xbf16, #tpu.memory_space<vmem>>, vector<1x256x32xbf16>
    %327 = vector.shape_cast %326 : vector<1x256x32xbf16> to vector<256x32xbf16>
    %cst_307 = arith.constant dense<0.000000e+00> : vector<2x32xf32>
    %328 = tpu.matmul %325, %327, %cst_307 {dimension_numbers = #tpu.dot_dimension_numbers<[1], [0], [0], [1], [0, 0, 1, 1], [], []>} : vector<2x256xbf16>, vector<256x32xbf16>, vector<2x32xf32> -> vector<2x32xf32>
    %329 = arith.addf %323, %328 : vector<2x32xf32>
    %c0_308 = arith.constant 0 : index
    %c0_309 = arith.constant 0 : index
    %330 = vector.load %arg3[%c0_308, %c0_309] : memref<1x32xf32, #tpu.memory_space<vmem>>, vector<1x32xf32>
    %331 = vector.broadcast %330 : vector<1x32xf32> to vector<2x32xf32>
    %332 = arith.addf %329, %331 : vector<2x32xf32>
    %cst_310 = arith.constant 0.000000e+00 : f32
    %333 = vector.broadcast %cst_310 : f32 to vector<2x32xf32>
    %334 = arith.cmpf ogt, %332, %333 : vector<2x32xf32>
    %cst_311 = arith.constant 2.000000e-01 : f32
    %335 = vector.broadcast %cst_311 : f32 to vector<2x32xf32>
    %336 = arith.mulf %335, %332 : vector<2x32xf32>
    %337 = arith.select %334, %332, %336 : vector<2x32xi1>, vector<2x32xf32>
    %338 = arith.truncf %337 : vector<2x32xf32> to vector<2x32xbf16>
    %c8_312 = arith.constant 8 : index
    %c0_313 = arith.constant 0 : index
    %c0_314 = arith.constant 0 : index
    %339 = vector.load %arg4[%c8_312, %c0_313, %c0_314] : memref<16x32x64xbf16, #tpu.memory_space<vmem>>, vector<1x32x64xbf16>
    %340 = vector.shape_cast %339 : vector<1x32x64xbf16> to vector<32x64xbf16>
    %cst_315 = arith.constant dense<0.000000e+00> : vector<2x64xf32>
    %341 = tpu.matmul %338, %340, %cst_315 {dimension_numbers = #tpu.dot_dimension_numbers<[1], [0], [0], [1], [0, 0, 1, 1], [], []>} : vector<2x32xbf16>, vector<32x64xbf16>, vector<2x64xf32> -> vector<2x64xf32>
    %342 = arith.addf %304, %341 : vector<2x64xf32>
    %cst_316 = arith.constant 0.000000e+00 : f32
    %343 = vector.broadcast %cst_316 : f32 to vector<2x32xf32>
    %c11_317 = arith.constant 11 : index
    %c0_318 = arith.constant 0 : index
    %c0_319 = arith.constant 0 : index
    %344 = vector.load %arg1[%c11_317, %c0_318, %c0_319] : memref<25x2x256xbf16, #tpu.memory_space<vmem>>, vector<1x2x256xbf16>
    %345 = vector.shape_cast %344 : vector<1x2x256xbf16> to vector<2x256xbf16>
    %c0_320 = arith.constant 0 : index
    %c0_321 = arith.constant 0 : index
    %c0_322 = arith.constant 0 : index
    %346 = vector.load %arg2[%c0_320, %c0_321, %c0_322] : memref<4x256x32xbf16, #tpu.memory_space<vmem>>, vector<1x256x32xbf16>
    %347 = vector.shape_cast %346 : vector<1x256x32xbf16> to vector<256x32xbf16>
    %cst_323 = arith.constant dense<0.000000e+00> : vector<2x32xf32>
    %348 = tpu.matmul %345, %347, %cst_323 {dimension_numbers = #tpu.dot_dimension_numbers<[1], [0], [0], [1], [0, 0, 1, 1], [], []>} : vector<2x256xbf16>, vector<256x32xbf16>, vector<2x32xf32> -> vector<2x32xf32>
    %349 = arith.addf %343, %348 : vector<2x32xf32>
    %c12_324 = arith.constant 12 : index
    %c0_325 = arith.constant 0 : index
    %c0_326 = arith.constant 0 : index
    %350 = vector.load %arg1[%c12_324, %c0_325, %c0_326] : memref<25x2x256xbf16, #tpu.memory_space<vmem>>, vector<1x2x256xbf16>
    %351 = vector.shape_cast %350 : vector<1x2x256xbf16> to vector<2x256xbf16>
    %c1_327 = arith.constant 1 : index
    %c0_328 = arith.constant 0 : index
    %c0_329 = arith.constant 0 : index
    %352 = vector.load %arg2[%c1_327, %c0_328, %c0_329] : memref<4x256x32xbf16, #tpu.memory_space<vmem>>, vector<1x256x32xbf16>
    %353 = vector.shape_cast %352 : vector<1x256x32xbf16> to vector<256x32xbf16>
    %cst_330 = arith.constant dense<0.000000e+00> : vector<2x32xf32>
    %354 = tpu.matmul %351, %353, %cst_330 {dimension_numbers = #tpu.dot_dimension_numbers<[1], [0], [0], [1], [0, 0, 1, 1], [], []>} : vector<2x256xbf16>, vector<256x32xbf16>, vector<2x32xf32> -> vector<2x32xf32>
    %355 = arith.addf %349, %354 : vector<2x32xf32>
    %c16_331 = arith.constant 16 : index
    %c0_332 = arith.constant 0 : index
    %c0_333 = arith.constant 0 : index
    %356 = vector.load %arg1[%c16_331, %c0_332, %c0_333] : memref<25x2x256xbf16, #tpu.memory_space<vmem>>, vector<1x2x256xbf16>
    %357 = vector.shape_cast %356 : vector<1x2x256xbf16> to vector<2x256xbf16>
    %c2_334 = arith.constant 2 : index
    %c0_335 = arith.constant 0 : index
    %c0_336 = arith.constant 0 : index
    %358 = vector.load %arg2[%c2_334, %c0_335, %c0_336] : memref<4x256x32xbf16, #tpu.memory_space<vmem>>, vector<1x256x32xbf16>
    %359 = vector.shape_cast %358 : vector<1x256x32xbf16> to vector<256x32xbf16>
    %cst_337 = arith.constant dense<0.000000e+00> : vector<2x32xf32>
    %360 = tpu.matmul %357, %359, %cst_337 {dimension_numbers = #tpu.dot_dimension_numbers<[1], [0], [0], [1], [0, 0, 1, 1], [], []>} : vector<2x256xbf16>, vector<256x32xbf16>, vector<2x32xf32> -> vector<2x32xf32>
    %361 = arith.addf %355, %360 : vector<2x32xf32>
    %c17 = arith.constant 17 : index
    %c0_338 = arith.constant 0 : index
    %c0_339 = arith.constant 0 : index
    %362 = vector.load %arg1[%c17, %c0_338, %c0_339] : memref<25x2x256xbf16, #tpu.memory_space<vmem>>, vector<1x2x256xbf16>
    %363 = vector.shape_cast %362 : vector<1x2x256xbf16> to vector<2x256xbf16>
    %c3_340 = arith.constant 3 : index
    %c0_341 = arith.constant 0 : index
    %c0_342 = arith.constant 0 : index
    %364 = vector.load %arg2[%c3_340, %c0_341, %c0_342] : memref<4x256x32xbf16, #tpu.memory_space<vmem>>, vector<1x256x32xbf16>
    %365 = vector.shape_cast %364 : vector<1x256x32xbf16> to vector<256x32xbf16>
    %cst_343 = arith.constant dense<0.000000e+00> : vector<2x32xf32>
    %366 = tpu.matmul %363, %365, %cst_343 {dimension_numbers = #tpu.dot_dimension_numbers<[1], [0], [0], [1], [0, 0, 1, 1], [], []>} : vector<2x256xbf16>, vector<256x32xbf16>, vector<2x32xf32> -> vector<2x32xf32>
    %367 = arith.addf %361, %366 : vector<2x32xf32>
    %c0_344 = arith.constant 0 : index
    %c0_345 = arith.constant 0 : index
    %368 = vector.load %arg3[%c0_344, %c0_345] : memref<1x32xf32, #tpu.memory_space<vmem>>, vector<1x32xf32>
    %369 = vector.broadcast %368 : vector<1x32xf32> to vector<2x32xf32>
    %370 = arith.addf %367, %369 : vector<2x32xf32>
    %cst_346 = arith.constant 0.000000e+00 : f32
    %371 = vector.broadcast %cst_346 : f32 to vector<2x32xf32>
    %372 = arith.cmpf ogt, %370, %371 : vector<2x32xf32>
    %cst_347 = arith.constant 2.000000e-01 : f32
    %373 = vector.broadcast %cst_347 : f32 to vector<2x32xf32>
    %374 = arith.mulf %373, %370 : vector<2x32xf32>
    %375 = arith.select %372, %370, %374 : vector<2x32xi1>, vector<2x32xf32>
    %376 = arith.truncf %375 : vector<2x32xf32> to vector<2x32xbf16>
    %c9_348 = arith.constant 9 : index
    %c0_349 = arith.constant 0 : index
    %c0_350 = arith.constant 0 : index
    %377 = vector.load %arg4[%c9_348, %c0_349, %c0_350] : memref<16x32x64xbf16, #tpu.memory_space<vmem>>, vector<1x32x64xbf16>
    %378 = vector.shape_cast %377 : vector<1x32x64xbf16> to vector<32x64xbf16>
    %cst_351 = arith.constant dense<0.000000e+00> : vector<2x64xf32>
    %379 = tpu.matmul %376, %378, %cst_351 {dimension_numbers = #tpu.dot_dimension_numbers<[1], [0], [0], [1], [0, 0, 1, 1], [], []>} : vector<2x32xbf16>, vector<32x64xbf16>, vector<2x64xf32> -> vector<2x64xf32>
    %380 = arith.addf %342, %379 : vector<2x64xf32>
    %cst_352 = arith.constant 0.000000e+00 : f32
    %381 = vector.broadcast %cst_352 : f32 to vector<2x32xf32>
    %c12_353 = arith.constant 12 : index
    %c0_354 = arith.constant 0 : index
    %c0_355 = arith.constant 0 : index
    %382 = vector.load %arg1[%c12_353, %c0_354, %c0_355] : memref<25x2x256xbf16, #tpu.memory_space<vmem>>, vector<1x2x256xbf16>
    %383 = vector.shape_cast %382 : vector<1x2x256xbf16> to vector<2x256xbf16>
    %c0_356 = arith.constant 0 : index
    %c0_357 = arith.constant 0 : index
    %c0_358 = arith.constant 0 : index
    %384 = vector.load %arg2[%c0_356, %c0_357, %c0_358] : memref<4x256x32xbf16, #tpu.memory_space<vmem>>, vector<1x256x32xbf16>
    %385 = vector.shape_cast %384 : vector<1x256x32xbf16> to vector<256x32xbf16>
    %cst_359 = arith.constant dense<0.000000e+00> : vector<2x32xf32>
    %386 = tpu.matmul %383, %385, %cst_359 {dimension_numbers = #tpu.dot_dimension_numbers<[1], [0], [0], [1], [0, 0, 1, 1], [], []>} : vector<2x256xbf16>, vector<256x32xbf16>, vector<2x32xf32> -> vector<2x32xf32>
    %387 = arith.addf %381, %386 : vector<2x32xf32>
    %c13_360 = arith.constant 13 : index
    %c0_361 = arith.constant 0 : index
    %c0_362 = arith.constant 0 : index
    %388 = vector.load %arg1[%c13_360, %c0_361, %c0_362] : memref<25x2x256xbf16, #tpu.memory_space<vmem>>, vector<1x2x256xbf16>
    %389 = vector.shape_cast %388 : vector<1x2x256xbf16> to vector<2x256xbf16>
    %c1_363 = arith.constant 1 : index
    %c0_364 = arith.constant 0 : index
    %c0_365 = arith.constant 0 : index
    %390 = vector.load %arg2[%c1_363, %c0_364, %c0_365] : memref<4x256x32xbf16, #tpu.memory_space<vmem>>, vector<1x256x32xbf16>
    %391 = vector.shape_cast %390 : vector<1x256x32xbf16> to vector<256x32xbf16>
    %cst_366 = arith.constant dense<0.000000e+00> : vector<2x32xf32>
    %392 = tpu.matmul %389, %391, %cst_366 {dimension_numbers = #tpu.dot_dimension_numbers<[1], [0], [0], [1], [0, 0, 1, 1], [], []>} : vector<2x256xbf16>, vector<256x32xbf16>, vector<2x32xf32> -> vector<2x32xf32>
    %393 = arith.addf %387, %392 : vector<2x32xf32>
    %c17_367 = arith.constant 17 : index
    %c0_368 = arith.constant 0 : index
    %c0_369 = arith.constant 0 : index
    %394 = vector.load %arg1[%c17_367, %c0_368, %c0_369] : memref<25x2x256xbf16, #tpu.memory_space<vmem>>, vector<1x2x256xbf16>
    %395 = vector.shape_cast %394 : vector<1x2x256xbf16> to vector<2x256xbf16>
    %c2_370 = arith.constant 2 : index
    %c0_371 = arith.constant 0 : index
    %c0_372 = arith.constant 0 : index
    %396 = vector.load %arg2[%c2_370, %c0_371, %c0_372] : memref<4x256x32xbf16, #tpu.memory_space<vmem>>, vector<1x256x32xbf16>
    %397 = vector.shape_cast %396 : vector<1x256x32xbf16> to vector<256x32xbf16>
    %cst_373 = arith.constant dense<0.000000e+00> : vector<2x32xf32>
    %398 = tpu.matmul %395, %397, %cst_373 {dimension_numbers = #tpu.dot_dimension_numbers<[1], [0], [0], [1], [0, 0, 1, 1], [], []>} : vector<2x256xbf16>, vector<256x32xbf16>, vector<2x32xf32> -> vector<2x32xf32>
    %399 = arith.addf %393, %398 : vector<2x32xf32>
    %c18 = arith.constant 18 : index
    %c0_374 = arith.constant 0 : index
    %c0_375 = arith.constant 0 : index
    %400 = vector.load %arg1[%c18, %c0_374, %c0_375] : memref<25x2x256xbf16, #tpu.memory_space<vmem>>, vector<1x2x256xbf16>
    %401 = vector.shape_cast %400 : vector<1x2x256xbf16> to vector<2x256xbf16>
    %c3_376 = arith.constant 3 : index
    %c0_377 = arith.constant 0 : index
    %c0_378 = arith.constant 0 : index
    %402 = vector.load %arg2[%c3_376, %c0_377, %c0_378] : memref<4x256x32xbf16, #tpu.memory_space<vmem>>, vector<1x256x32xbf16>
    %403 = vector.shape_cast %402 : vector<1x256x32xbf16> to vector<256x32xbf16>
    %cst_379 = arith.constant dense<0.000000e+00> : vector<2x32xf32>
    %404 = tpu.matmul %401, %403, %cst_379 {dimension_numbers = #tpu.dot_dimension_numbers<[1], [0], [0], [1], [0, 0, 1, 1], [], []>} : vector<2x256xbf16>, vector<256x32xbf16>, vector<2x32xf32> -> vector<2x32xf32>
    %405 = arith.addf %399, %404 : vector<2x32xf32>
    %c0_380 = arith.constant 0 : index
    %c0_381 = arith.constant 0 : index
    %406 = vector.load %arg3[%c0_380, %c0_381] : memref<1x32xf32, #tpu.memory_space<vmem>>, vector<1x32xf32>
    %407 = vector.broadcast %406 : vector<1x32xf32> to vector<2x32xf32>
    %408 = arith.addf %405, %407 : vector<2x32xf32>
    %cst_382 = arith.constant 0.000000e+00 : f32
    %409 = vector.broadcast %cst_382 : f32 to vector<2x32xf32>
    %410 = arith.cmpf ogt, %408, %409 : vector<2x32xf32>
    %cst_383 = arith.constant 2.000000e-01 : f32
    %411 = vector.broadcast %cst_383 : f32 to vector<2x32xf32>
    %412 = arith.mulf %411, %408 : vector<2x32xf32>
    %413 = arith.select %410, %408, %412 : vector<2x32xi1>, vector<2x32xf32>
    %414 = arith.truncf %413 : vector<2x32xf32> to vector<2x32xbf16>
    %c10_384 = arith.constant 10 : index
    %c0_385 = arith.constant 0 : index
    %c0_386 = arith.constant 0 : index
    %415 = vector.load %arg4[%c10_384, %c0_385, %c0_386] : memref<16x32x64xbf16, #tpu.memory_space<vmem>>, vector<1x32x64xbf16>
    %416 = vector.shape_cast %415 : vector<1x32x64xbf16> to vector<32x64xbf16>
    %cst_387 = arith.constant dense<0.000000e+00> : vector<2x64xf32>
    %417 = tpu.matmul %414, %416, %cst_387 {dimension_numbers = #tpu.dot_dimension_numbers<[1], [0], [0], [1], [0, 0, 1, 1], [], []>} : vector<2x32xbf16>, vector<32x64xbf16>, vector<2x64xf32> -> vector<2x64xf32>
    %418 = arith.addf %380, %417 : vector<2x64xf32>
    %cst_388 = arith.constant 0.000000e+00 : f32
    %419 = vector.broadcast %cst_388 : f32 to vector<2x32xf32>
    %c13_389 = arith.constant 13 : index
    %c0_390 = arith.constant 0 : index
    %c0_391 = arith.constant 0 : index
    %420 = vector.load %arg1[%c13_389, %c0_390, %c0_391] : memref<25x2x256xbf16, #tpu.memory_space<vmem>>, vector<1x2x256xbf16>
    %421 = vector.shape_cast %420 : vector<1x2x256xbf16> to vector<2x256xbf16>
    %c0_392 = arith.constant 0 : index
    %c0_393 = arith.constant 0 : index
    %c0_394 = arith.constant 0 : index
    %422 = vector.load %arg2[%c0_392, %c0_393, %c0_394] : memref<4x256x32xbf16, #tpu.memory_space<vmem>>, vector<1x256x32xbf16>
    %423 = vector.shape_cast %422 : vector<1x256x32xbf16> to vector<256x32xbf16>
    %cst_395 = arith.constant dense<0.000000e+00> : vector<2x32xf32>
    %424 = tpu.matmul %421, %423, %cst_395 {dimension_numbers = #tpu.dot_dimension_numbers<[1], [0], [0], [1], [0, 0, 1, 1], [], []>} : vector<2x256xbf16>, vector<256x32xbf16>, vector<2x32xf32> -> vector<2x32xf32>
    %425 = arith.addf %419, %424 : vector<2x32xf32>
    %c14_396 = arith.constant 14 : index
    %c0_397 = arith.constant 0 : index
    %c0_398 = arith.constant 0 : index
    %426 = vector.load %arg1[%c14_396, %c0_397, %c0_398] : memref<25x2x256xbf16, #tpu.memory_space<vmem>>, vector<1x2x256xbf16>
    %427 = vector.shape_cast %426 : vector<1x2x256xbf16> to vector<2x256xbf16>
    %c1_399 = arith.constant 1 : index
    %c0_400 = arith.constant 0 : index
    %c0_401 = arith.constant 0 : index
    %428 = vector.load %arg2[%c1_399, %c0_400, %c0_401] : memref<4x256x32xbf16, #tpu.memory_space<vmem>>, vector<1x256x32xbf16>
    %429 = vector.shape_cast %428 : vector<1x256x32xbf16> to vector<256x32xbf16>
    %cst_402 = arith.constant dense<0.000000e+00> : vector<2x32xf32>
    %430 = tpu.matmul %427, %429, %cst_402 {dimension_numbers = #tpu.dot_dimension_numbers<[1], [0], [0], [1], [0, 0, 1, 1], [], []>} : vector<2x256xbf16>, vector<256x32xbf16>, vector<2x32xf32> -> vector<2x32xf32>
    %431 = arith.addf %425, %430 : vector<2x32xf32>
    %c18_403 = arith.constant 18 : index
    %c0_404 = arith.constant 0 : index
    %c0_405 = arith.constant 0 : index
    %432 = vector.load %arg1[%c18_403, %c0_404, %c0_405] : memref<25x2x256xbf16, #tpu.memory_space<vmem>>, vector<1x2x256xbf16>
    %433 = vector.shape_cast %432 : vector<1x2x256xbf16> to vector<2x256xbf16>
    %c2_406 = arith.constant 2 : index
    %c0_407 = arith.constant 0 : index
    %c0_408 = arith.constant 0 : index
    %434 = vector.load %arg2[%c2_406, %c0_407, %c0_408] : memref<4x256x32xbf16, #tpu.memory_space<vmem>>, vector<1x256x32xbf16>
    %435 = vector.shape_cast %434 : vector<1x256x32xbf16> to vector<256x32xbf16>
    %cst_409 = arith.constant dense<0.000000e+00> : vector<2x32xf32>
    %436 = tpu.matmul %433, %435, %cst_409 {dimension_numbers = #tpu.dot_dimension_numbers<[1], [0], [0], [1], [0, 0, 1, 1], [], []>} : vector<2x256xbf16>, vector<256x32xbf16>, vector<2x32xf32> -> vector<2x32xf32>
    %437 = arith.addf %431, %436 : vector<2x32xf32>
    %c19 = arith.constant 19 : index
    %c0_410 = arith.constant 0 : index
    %c0_411 = arith.constant 0 : index
    %438 = vector.load %arg1[%c19, %c0_410, %c0_411] : memref<25x2x256xbf16, #tpu.memory_space<vmem>>, vector<1x2x256xbf16>
    %439 = vector.shape_cast %438 : vector<1x2x256xbf16> to vector<2x256xbf16>
    %c3_412 = arith.constant 3 : index
    %c0_413 = arith.constant 0 : index
    %c0_414 = arith.constant 0 : index
    %440 = vector.load %arg2[%c3_412, %c0_413, %c0_414] : memref<4x256x32xbf16, #tpu.memory_space<vmem>>, vector<1x256x32xbf16>
    %441 = vector.shape_cast %440 : vector<1x256x32xbf16> to vector<256x32xbf16>
    %cst_415 = arith.constant dense<0.000000e+00> : vector<2x32xf32>
    %442 = tpu.matmul %439, %441, %cst_415 {dimension_numbers = #tpu.dot_dimension_numbers<[1], [0], [0], [1], [0, 0, 1, 1], [], []>} : vector<2x256xbf16>, vector<256x32xbf16>, vector<2x32xf32> -> vector<2x32xf32>
    %443 = arith.addf %437, %442 : vector<2x32xf32>
    %c0_416 = arith.constant 0 : index
    %c0_417 = arith.constant 0 : index
    %444 = vector.load %arg3[%c0_416, %c0_417] : memref<1x32xf32, #tpu.memory_space<vmem>>, vector<1x32xf32>
    %445 = vector.broadcast %444 : vector<1x32xf32> to vector<2x32xf32>
    %446 = arith.addf %443, %445 : vector<2x32xf32>
    %cst_418 = arith.constant 0.000000e+00 : f32
    %447 = vector.broadcast %cst_418 : f32 to vector<2x32xf32>
    %448 = arith.cmpf ogt, %446, %447 : vector<2x32xf32>
    %cst_419 = arith.constant 2.000000e-01 : f32
    %449 = vector.broadcast %cst_419 : f32 to vector<2x32xf32>
    %450 = arith.mulf %449, %446 : vector<2x32xf32>
    %451 = arith.select %448, %446, %450 : vector<2x32xi1>, vector<2x32xf32>
    %452 = arith.truncf %451 : vector<2x32xf32> to vector<2x32xbf16>
    %c11_420 = arith.constant 11 : index
    %c0_421 = arith.constant 0 : index
    %c0_422 = arith.constant 0 : index
    %453 = vector.load %arg4[%c11_420, %c0_421, %c0_422] : memref<16x32x64xbf16, #tpu.memory_space<vmem>>, vector<1x32x64xbf16>
    %454 = vector.shape_cast %453 : vector<1x32x64xbf16> to vector<32x64xbf16>
    %cst_423 = arith.constant dense<0.000000e+00> : vector<2x64xf32>
    %455 = tpu.matmul %452, %454, %cst_423 {dimension_numbers = #tpu.dot_dimension_numbers<[1], [0], [0], [1], [0, 0, 1, 1], [], []>} : vector<2x32xbf16>, vector<32x64xbf16>, vector<2x64xf32> -> vector<2x64xf32>
    %456 = arith.addf %418, %455 : vector<2x64xf32>
    %cst_424 = arith.constant 0.000000e+00 : f32
    %457 = vector.broadcast %cst_424 : f32 to vector<2x32xf32>
    %c15_425 = arith.constant 15 : index
    %c0_426 = arith.constant 0 : index
    %c0_427 = arith.constant 0 : index
    %458 = vector.load %arg1[%c15_425, %c0_426, %c0_427] : memref<25x2x256xbf16, #tpu.memory_space<vmem>>, vector<1x2x256xbf16>
    %459 = vector.shape_cast %458 : vector<1x2x256xbf16> to vector<2x256xbf16>
    %c0_428 = arith.constant 0 : index
    %c0_429 = arith.constant 0 : index
    %c0_430 = arith.constant 0 : index
    %460 = vector.load %arg2[%c0_428, %c0_429, %c0_430] : memref<4x256x32xbf16, #tpu.memory_space<vmem>>, vector<1x256x32xbf16>
    %461 = vector.shape_cast %460 : vector<1x256x32xbf16> to vector<256x32xbf16>
    %cst_431 = arith.constant dense<0.000000e+00> : vector<2x32xf32>
    %462 = tpu.matmul %459, %461, %cst_431 {dimension_numbers = #tpu.dot_dimension_numbers<[1], [0], [0], [1], [0, 0, 1, 1], [], []>} : vector<2x256xbf16>, vector<256x32xbf16>, vector<2x32xf32> -> vector<2x32xf32>
    %463 = arith.addf %457, %462 : vector<2x32xf32>
    %c16_432 = arith.constant 16 : index
    %c0_433 = arith.constant 0 : index
    %c0_434 = arith.constant 0 : index
    %464 = vector.load %arg1[%c16_432, %c0_433, %c0_434] : memref<25x2x256xbf16, #tpu.memory_space<vmem>>, vector<1x2x256xbf16>
    %465 = vector.shape_cast %464 : vector<1x2x256xbf16> to vector<2x256xbf16>
    %c1_435 = arith.constant 1 : index
    %c0_436 = arith.constant 0 : index
    %c0_437 = arith.constant 0 : index
    %466 = vector.load %arg2[%c1_435, %c0_436, %c0_437] : memref<4x256x32xbf16, #tpu.memory_space<vmem>>, vector<1x256x32xbf16>
    %467 = vector.shape_cast %466 : vector<1x256x32xbf16> to vector<256x32xbf16>
    %cst_438 = arith.constant dense<0.000000e+00> : vector<2x32xf32>
    %468 = tpu.matmul %465, %467, %cst_438 {dimension_numbers = #tpu.dot_dimension_numbers<[1], [0], [0], [1], [0, 0, 1, 1], [], []>} : vector<2x256xbf16>, vector<256x32xbf16>, vector<2x32xf32> -> vector<2x32xf32>
    %469 = arith.addf %463, %468 : vector<2x32xf32>
    %c20 = arith.constant 20 : index
    %c0_439 = arith.constant 0 : index
    %c0_440 = arith.constant 0 : index
    %470 = vector.load %arg1[%c20, %c0_439, %c0_440] : memref<25x2x256xbf16, #tpu.memory_space<vmem>>, vector<1x2x256xbf16>
    %471 = vector.shape_cast %470 : vector<1x2x256xbf16> to vector<2x256xbf16>
    %c2_441 = arith.constant 2 : index
    %c0_442 = arith.constant 0 : index
    %c0_443 = arith.constant 0 : index
    %472 = vector.load %arg2[%c2_441, %c0_442, %c0_443] : memref<4x256x32xbf16, #tpu.memory_space<vmem>>, vector<1x256x32xbf16>
    %473 = vector.shape_cast %472 : vector<1x256x32xbf16> to vector<256x32xbf16>
    %cst_444 = arith.constant dense<0.000000e+00> : vector<2x32xf32>
    %474 = tpu.matmul %471, %473, %cst_444 {dimension_numbers = #tpu.dot_dimension_numbers<[1], [0], [0], [1], [0, 0, 1, 1], [], []>} : vector<2x256xbf16>, vector<256x32xbf16>, vector<2x32xf32> -> vector<2x32xf32>
    %475 = arith.addf %469, %474 : vector<2x32xf32>
    %c21 = arith.constant 21 : index
    %c0_445 = arith.constant 0 : index
    %c0_446 = arith.constant 0 : index
    %476 = vector.load %arg1[%c21, %c0_445, %c0_446] : memref<25x2x256xbf16, #tpu.memory_space<vmem>>, vector<1x2x256xbf16>
    %477 = vector.shape_cast %476 : vector<1x2x256xbf16> to vector<2x256xbf16>
    %c3_447 = arith.constant 3 : index
    %c0_448 = arith.constant 0 : index
    %c0_449 = arith.constant 0 : index
    %478 = vector.load %arg2[%c3_447, %c0_448, %c0_449] : memref<4x256x32xbf16, #tpu.memory_space<vmem>>, vector<1x256x32xbf16>
    %479 = vector.shape_cast %478 : vector<1x256x32xbf16> to vector<256x32xbf16>
    %cst_450 = arith.constant dense<0.000000e+00> : vector<2x32xf32>
    %480 = tpu.matmul %477, %479, %cst_450 {dimension_numbers = #tpu.dot_dimension_numbers<[1], [0], [0], [1], [0, 0, 1, 1], [], []>} : vector<2x256xbf16>, vector<256x32xbf16>, vector<2x32xf32> -> vector<2x32xf32>
    %481 = arith.addf %475, %480 : vector<2x32xf32>
    %c0_451 = arith.constant 0 : index
    %c0_452 = arith.constant 0 : index
    %482 = vector.load %arg3[%c0_451, %c0_452] : memref<1x32xf32, #tpu.memory_space<vmem>>, vector<1x32xf32>
    %483 = vector.broadcast %482 : vector<1x32xf32> to vector<2x32xf32>
    %484 = arith.addf %481, %483 : vector<2x32xf32>
    %cst_453 = arith.constant 0.000000e+00 : f32
    %485 = vector.broadcast %cst_453 : f32 to vector<2x32xf32>
    %486 = arith.cmpf ogt, %484, %485 : vector<2x32xf32>
    %cst_454 = arith.constant 2.000000e-01 : f32
    %487 = vector.broadcast %cst_454 : f32 to vector<2x32xf32>
    %488 = arith.mulf %487, %484 : vector<2x32xf32>
    %489 = arith.select %486, %484, %488 : vector<2x32xi1>, vector<2x32xf32>
    %490 = arith.truncf %489 : vector<2x32xf32> to vector<2x32xbf16>
    %c12_455 = arith.constant 12 : index
    %c0_456 = arith.constant 0 : index
    %c0_457 = arith.constant 0 : index
    %491 = vector.load %arg4[%c12_455, %c0_456, %c0_457] : memref<16x32x64xbf16, #tpu.memory_space<vmem>>, vector<1x32x64xbf16>
    %492 = vector.shape_cast %491 : vector<1x32x64xbf16> to vector<32x64xbf16>
    %cst_458 = arith.constant dense<0.000000e+00> : vector<2x64xf32>
    %493 = tpu.matmul %490, %492, %cst_458 {dimension_numbers = #tpu.dot_dimension_numbers<[1], [0], [0], [1], [0, 0, 1, 1], [], []>} : vector<2x32xbf16>, vector<32x64xbf16>, vector<2x64xf32> -> vector<2x64xf32>
    %494 = arith.addf %456, %493 : vector<2x64xf32>
    %cst_459 = arith.constant 0.000000e+00 : f32
    %495 = vector.broadcast %cst_459 : f32 to vector<2x32xf32>
    %c16_460 = arith.constant 16 : index
    %c0_461 = arith.constant 0 : index
    %c0_462 = arith.constant 0 : index
    %496 = vector.load %arg1[%c16_460, %c0_461, %c0_462] : memref<25x2x256xbf16, #tpu.memory_space<vmem>>, vector<1x2x256xbf16>
    %497 = vector.shape_cast %496 : vector<1x2x256xbf16> to vector<2x256xbf16>
    %c0_463 = arith.constant 0 : index
    %c0_464 = arith.constant 0 : index
    %c0_465 = arith.constant 0 : index
    %498 = vector.load %arg2[%c0_463, %c0_464, %c0_465] : memref<4x256x32xbf16, #tpu.memory_space<vmem>>, vector<1x256x32xbf16>
    %499 = vector.shape_cast %498 : vector<1x256x32xbf16> to vector<256x32xbf16>
    %cst_466 = arith.constant dense<0.000000e+00> : vector<2x32xf32>
    %500 = tpu.matmul %497, %499, %cst_466 {dimension_numbers = #tpu.dot_dimension_numbers<[1], [0], [0], [1], [0, 0, 1, 1], [], []>} : vector<2x256xbf16>, vector<256x32xbf16>, vector<2x32xf32> -> vector<2x32xf32>
    %501 = arith.addf %495, %500 : vector<2x32xf32>
    %c17_467 = arith.constant 17 : index
    %c0_468 = arith.constant 0 : index
    %c0_469 = arith.constant 0 : index
    %502 = vector.load %arg1[%c17_467, %c0_468, %c0_469] : memref<25x2x256xbf16, #tpu.memory_space<vmem>>, vector<1x2x256xbf16>
    %503 = vector.shape_cast %502 : vector<1x2x256xbf16> to vector<2x256xbf16>
    %c1_470 = arith.constant 1 : index
    %c0_471 = arith.constant 0 : index
    %c0_472 = arith.constant 0 : index
    %504 = vector.load %arg2[%c1_470, %c0_471, %c0_472] : memref<4x256x32xbf16, #tpu.memory_space<vmem>>, vector<1x256x32xbf16>
    %505 = vector.shape_cast %504 : vector<1x256x32xbf16> to vector<256x32xbf16>
    %cst_473 = arith.constant dense<0.000000e+00> : vector<2x32xf32>
    %506 = tpu.matmul %503, %505, %cst_473 {dimension_numbers = #tpu.dot_dimension_numbers<[1], [0], [0], [1], [0, 0, 1, 1], [], []>} : vector<2x256xbf16>, vector<256x32xbf16>, vector<2x32xf32> -> vector<2x32xf32>
    %507 = arith.addf %501, %506 : vector<2x32xf32>
    %c21_474 = arith.constant 21 : index
    %c0_475 = arith.constant 0 : index
    %c0_476 = arith.constant 0 : index
    %508 = vector.load %arg1[%c21_474, %c0_475, %c0_476] : memref<25x2x256xbf16, #tpu.memory_space<vmem>>, vector<1x2x256xbf16>
    %509 = vector.shape_cast %508 : vector<1x2x256xbf16> to vector<2x256xbf16>
    %c2_477 = arith.constant 2 : index
    %c0_478 = arith.constant 0 : index
    %c0_479 = arith.constant 0 : index
    %510 = vector.load %arg2[%c2_477, %c0_478, %c0_479] : memref<4x256x32xbf16, #tpu.memory_space<vmem>>, vector<1x256x32xbf16>
    %511 = vector.shape_cast %510 : vector<1x256x32xbf16> to vector<256x32xbf16>
    %cst_480 = arith.constant dense<0.000000e+00> : vector<2x32xf32>
    %512 = tpu.matmul %509, %511, %cst_480 {dimension_numbers = #tpu.dot_dimension_numbers<[1], [0], [0], [1], [0, 0, 1, 1], [], []>} : vector<2x256xbf16>, vector<256x32xbf16>, vector<2x32xf32> -> vector<2x32xf32>
    %513 = arith.addf %507, %512 : vector<2x32xf32>
    %c22 = arith.constant 22 : index
    %c0_481 = arith.constant 0 : index
    %c0_482 = arith.constant 0 : index
    %514 = vector.load %arg1[%c22, %c0_481, %c0_482] : memref<25x2x256xbf16, #tpu.memory_space<vmem>>, vector<1x2x256xbf16>
    %515 = vector.shape_cast %514 : vector<1x2x256xbf16> to vector<2x256xbf16>
    %c3_483 = arith.constant 3 : index
    %c0_484 = arith.constant 0 : index
    %c0_485 = arith.constant 0 : index
    %516 = vector.load %arg2[%c3_483, %c0_484, %c0_485] : memref<4x256x32xbf16, #tpu.memory_space<vmem>>, vector<1x256x32xbf16>
    %517 = vector.shape_cast %516 : vector<1x256x32xbf16> to vector<256x32xbf16>
    %cst_486 = arith.constant dense<0.000000e+00> : vector<2x32xf32>
    %518 = tpu.matmul %515, %517, %cst_486 {dimension_numbers = #tpu.dot_dimension_numbers<[1], [0], [0], [1], [0, 0, 1, 1], [], []>} : vector<2x256xbf16>, vector<256x32xbf16>, vector<2x32xf32> -> vector<2x32xf32>
    %519 = arith.addf %513, %518 : vector<2x32xf32>
    %c0_487 = arith.constant 0 : index
    %c0_488 = arith.constant 0 : index
    %520 = vector.load %arg3[%c0_487, %c0_488] : memref<1x32xf32, #tpu.memory_space<vmem>>, vector<1x32xf32>
    %521 = vector.broadcast %520 : vector<1x32xf32> to vector<2x32xf32>
    %522 = arith.addf %519, %521 : vector<2x32xf32>
    %cst_489 = arith.constant 0.000000e+00 : f32
    %523 = vector.broadcast %cst_489 : f32 to vector<2x32xf32>
    %524 = arith.cmpf ogt, %522, %523 : vector<2x32xf32>
    %cst_490 = arith.constant 2.000000e-01 : f32
    %525 = vector.broadcast %cst_490 : f32 to vector<2x32xf32>
    %526 = arith.mulf %525, %522 : vector<2x32xf32>
    %527 = arith.select %524, %522, %526 : vector<2x32xi1>, vector<2x32xf32>
    %528 = arith.truncf %527 : vector<2x32xf32> to vector<2x32xbf16>
    %c13_491 = arith.constant 13 : index
    %c0_492 = arith.constant 0 : index
    %c0_493 = arith.constant 0 : index
    %529 = vector.load %arg4[%c13_491, %c0_492, %c0_493] : memref<16x32x64xbf16, #tpu.memory_space<vmem>>, vector<1x32x64xbf16>
    %530 = vector.shape_cast %529 : vector<1x32x64xbf16> to vector<32x64xbf16>
    %cst_494 = arith.constant dense<0.000000e+00> : vector<2x64xf32>
    %531 = tpu.matmul %528, %530, %cst_494 {dimension_numbers = #tpu.dot_dimension_numbers<[1], [0], [0], [1], [0, 0, 1, 1], [], []>} : vector<2x32xbf16>, vector<32x64xbf16>, vector<2x64xf32> -> vector<2x64xf32>
    %532 = arith.addf %494, %531 : vector<2x64xf32>
    %cst_495 = arith.constant 0.000000e+00 : f32
    %533 = vector.broadcast %cst_495 : f32 to vector<2x32xf32>
    %c17_496 = arith.constant 17 : index
    %c0_497 = arith.constant 0 : index
    %c0_498 = arith.constant 0 : index
    %534 = vector.load %arg1[%c17_496, %c0_497, %c0_498] : memref<25x2x256xbf16, #tpu.memory_space<vmem>>, vector<1x2x256xbf16>
    %535 = vector.shape_cast %534 : vector<1x2x256xbf16> to vector<2x256xbf16>
    %c0_499 = arith.constant 0 : index
    %c0_500 = arith.constant 0 : index
    %c0_501 = arith.constant 0 : index
    %536 = vector.load %arg2[%c0_499, %c0_500, %c0_501] : memref<4x256x32xbf16, #tpu.memory_space<vmem>>, vector<1x256x32xbf16>
    %537 = vector.shape_cast %536 : vector<1x256x32xbf16> to vector<256x32xbf16>
    %cst_502 = arith.constant dense<0.000000e+00> : vector<2x32xf32>
    %538 = tpu.matmul %535, %537, %cst_502 {dimension_numbers = #tpu.dot_dimension_numbers<[1], [0], [0], [1], [0, 0, 1, 1], [], []>} : vector<2x256xbf16>, vector<256x32xbf16>, vector<2x32xf32> -> vector<2x32xf32>
    %539 = arith.addf %533, %538 : vector<2x32xf32>
    %c18_503 = arith.constant 18 : index
    %c0_504 = arith.constant 0 : index
    %c0_505 = arith.constant 0 : index
    %540 = vector.load %arg1[%c18_503, %c0_504, %c0_505] : memref<25x2x256xbf16, #tpu.memory_space<vmem>>, vector<1x2x256xbf16>
    %541 = vector.shape_cast %540 : vector<1x2x256xbf16> to vector<2x256xbf16>
    %c1_506 = arith.constant 1 : index
    %c0_507 = arith.constant 0 : index
    %c0_508 = arith.constant 0 : index
    %542 = vector.load %arg2[%c1_506, %c0_507, %c0_508] : memref<4x256x32xbf16, #tpu.memory_space<vmem>>, vector<1x256x32xbf16>
    %543 = vector.shape_cast %542 : vector<1x256x32xbf16> to vector<256x32xbf16>
    %cst_509 = arith.constant dense<0.000000e+00> : vector<2x32xf32>
    %544 = tpu.matmul %541, %543, %cst_509 {dimension_numbers = #tpu.dot_dimension_numbers<[1], [0], [0], [1], [0, 0, 1, 1], [], []>} : vector<2x256xbf16>, vector<256x32xbf16>, vector<2x32xf32> -> vector<2x32xf32>
    %545 = arith.addf %539, %544 : vector<2x32xf32>
    %c22_510 = arith.constant 22 : index
    %c0_511 = arith.constant 0 : index
    %c0_512 = arith.constant 0 : index
    %546 = vector.load %arg1[%c22_510, %c0_511, %c0_512] : memref<25x2x256xbf16, #tpu.memory_space<vmem>>, vector<1x2x256xbf16>
    %547 = vector.shape_cast %546 : vector<1x2x256xbf16> to vector<2x256xbf16>
    %c2_513 = arith.constant 2 : index
    %c0_514 = arith.constant 0 : index
    %c0_515 = arith.constant 0 : index
    %548 = vector.load %arg2[%c2_513, %c0_514, %c0_515] : memref<4x256x32xbf16, #tpu.memory_space<vmem>>, vector<1x256x32xbf16>
    %549 = vector.shape_cast %548 : vector<1x256x32xbf16> to vector<256x32xbf16>
    %cst_516 = arith.constant dense<0.000000e+00> : vector<2x32xf32>
    %550 = tpu.matmul %547, %549, %cst_516 {dimension_numbers = #tpu.dot_dimension_numbers<[1], [0], [0], [1], [0, 0, 1, 1], [], []>} : vector<2x256xbf16>, vector<256x32xbf16>, vector<2x32xf32> -> vector<2x32xf32>
    %551 = arith.addf %545, %550 : vector<2x32xf32>
    %c23 = arith.constant 23 : index
    %c0_517 = arith.constant 0 : index
    %c0_518 = arith.constant 0 : index
    %552 = vector.load %arg1[%c23, %c0_517, %c0_518] : memref<25x2x256xbf16, #tpu.memory_space<vmem>>, vector<1x2x256xbf16>
    %553 = vector.shape_cast %552 : vector<1x2x256xbf16> to vector<2x256xbf16>
    %c3_519 = arith.constant 3 : index
    %c0_520 = arith.constant 0 : index
    %c0_521 = arith.constant 0 : index
    %554 = vector.load %arg2[%c3_519, %c0_520, %c0_521] : memref<4x256x32xbf16, #tpu.memory_space<vmem>>, vector<1x256x32xbf16>
    %555 = vector.shape_cast %554 : vector<1x256x32xbf16> to vector<256x32xbf16>
    %cst_522 = arith.constant dense<0.000000e+00> : vector<2x32xf32>
    %556 = tpu.matmul %553, %555, %cst_522 {dimension_numbers = #tpu.dot_dimension_numbers<[1], [0], [0], [1], [0, 0, 1, 1], [], []>} : vector<2x256xbf16>, vector<256x32xbf16>, vector<2x32xf32> -> vector<2x32xf32>
    %557 = arith.addf %551, %556 : vector<2x32xf32>
    %c0_523 = arith.constant 0 : index
    %c0_524 = arith.constant 0 : index
    %558 = vector.load %arg3[%c0_523, %c0_524] : memref<1x32xf32, #tpu.memory_space<vmem>>, vector<1x32xf32>
    %559 = vector.broadcast %558 : vector<1x32xf32> to vector<2x32xf32>
    %560 = arith.addf %557, %559 : vector<2x32xf32>
    %cst_525 = arith.constant 0.000000e+00 : f32
    %561 = vector.broadcast %cst_525 : f32 to vector<2x32xf32>
    %562 = arith.cmpf ogt, %560, %561 : vector<2x32xf32>
    %cst_526 = arith.constant 2.000000e-01 : f32
    %563 = vector.broadcast %cst_526 : f32 to vector<2x32xf32>
    %564 = arith.mulf %563, %560 : vector<2x32xf32>
    %565 = arith.select %562, %560, %564 : vector<2x32xi1>, vector<2x32xf32>
    %566 = arith.truncf %565 : vector<2x32xf32> to vector<2x32xbf16>
    %c14_527 = arith.constant 14 : index
    %c0_528 = arith.constant 0 : index
    %c0_529 = arith.constant 0 : index
    %567 = vector.load %arg4[%c14_527, %c0_528, %c0_529] : memref<16x32x64xbf16, #tpu.memory_space<vmem>>, vector<1x32x64xbf16>
    %568 = vector.shape_cast %567 : vector<1x32x64xbf16> to vector<32x64xbf16>
    %cst_530 = arith.constant dense<0.000000e+00> : vector<2x64xf32>
    %569 = tpu.matmul %566, %568, %cst_530 {dimension_numbers = #tpu.dot_dimension_numbers<[1], [0], [0], [1], [0, 0, 1, 1], [], []>} : vector<2x32xbf16>, vector<32x64xbf16>, vector<2x64xf32> -> vector<2x64xf32>
    %570 = arith.addf %532, %569 : vector<2x64xf32>
    %cst_531 = arith.constant 0.000000e+00 : f32
    %571 = vector.broadcast %cst_531 : f32 to vector<2x32xf32>
    %c18_532 = arith.constant 18 : index
    %c0_533 = arith.constant 0 : index
    %c0_534 = arith.constant 0 : index
    %572 = vector.load %arg1[%c18_532, %c0_533, %c0_534] : memref<25x2x256xbf16, #tpu.memory_space<vmem>>, vector<1x2x256xbf16>
    %573 = vector.shape_cast %572 : vector<1x2x256xbf16> to vector<2x256xbf16>
    %c0_535 = arith.constant 0 : index
    %c0_536 = arith.constant 0 : index
    %c0_537 = arith.constant 0 : index
    %574 = vector.load %arg2[%c0_535, %c0_536, %c0_537] : memref<4x256x32xbf16, #tpu.memory_space<vmem>>, vector<1x256x32xbf16>
    %575 = vector.shape_cast %574 : vector<1x256x32xbf16> to vector<256x32xbf16>
    %cst_538 = arith.constant dense<0.000000e+00> : vector<2x32xf32>
    %576 = tpu.matmul %573, %575, %cst_538 {dimension_numbers = #tpu.dot_dimension_numbers<[1], [0], [0], [1], [0, 0, 1, 1], [], []>} : vector<2x256xbf16>, vector<256x32xbf16>, vector<2x32xf32> -> vector<2x32xf32>
    %577 = arith.addf %571, %576 : vector<2x32xf32>
    %c19_539 = arith.constant 19 : index
    %c0_540 = arith.constant 0 : index
    %c0_541 = arith.constant 0 : index
    %578 = vector.load %arg1[%c19_539, %c0_540, %c0_541] : memref<25x2x256xbf16, #tpu.memory_space<vmem>>, vector<1x2x256xbf16>
    %579 = vector.shape_cast %578 : vector<1x2x256xbf16> to vector<2x256xbf16>
    %c1_542 = arith.constant 1 : index
    %c0_543 = arith.constant 0 : index
    %c0_544 = arith.constant 0 : index
    %580 = vector.load %arg2[%c1_542, %c0_543, %c0_544] : memref<4x256x32xbf16, #tpu.memory_space<vmem>>, vector<1x256x32xbf16>
    %581 = vector.shape_cast %580 : vector<1x256x32xbf16> to vector<256x32xbf16>
    %cst_545 = arith.constant dense<0.000000e+00> : vector<2x32xf32>
    %582 = tpu.matmul %579, %581, %cst_545 {dimension_numbers = #tpu.dot_dimension_numbers<[1], [0], [0], [1], [0, 0, 1, 1], [], []>} : vector<2x256xbf16>, vector<256x32xbf16>, vector<2x32xf32> -> vector<2x32xf32>
    %583 = arith.addf %577, %582 : vector<2x32xf32>
    %c23_546 = arith.constant 23 : index
    %c0_547 = arith.constant 0 : index
    %c0_548 = arith.constant 0 : index
    %584 = vector.load %arg1[%c23_546, %c0_547, %c0_548] : memref<25x2x256xbf16, #tpu.memory_space<vmem>>, vector<1x2x256xbf16>
    %585 = vector.shape_cast %584 : vector<1x2x256xbf16> to vector<2x256xbf16>
    %c2_549 = arith.constant 2 : index
    %c0_550 = arith.constant 0 : index
    %c0_551 = arith.constant 0 : index
    %586 = vector.load %arg2[%c2_549, %c0_550, %c0_551] : memref<4x256x32xbf16, #tpu.memory_space<vmem>>, vector<1x256x32xbf16>
    %587 = vector.shape_cast %586 : vector<1x256x32xbf16> to vector<256x32xbf16>
    %cst_552 = arith.constant dense<0.000000e+00> : vector<2x32xf32>
    %588 = tpu.matmul %585, %587, %cst_552 {dimension_numbers = #tpu.dot_dimension_numbers<[1], [0], [0], [1], [0, 0, 1, 1], [], []>} : vector<2x256xbf16>, vector<256x32xbf16>, vector<2x32xf32> -> vector<2x32xf32>
    %589 = arith.addf %583, %588 : vector<2x32xf32>
    %c24 = arith.constant 24 : index
    %c0_553 = arith.constant 0 : index
    %c0_554 = arith.constant 0 : index
    %590 = vector.load %arg1[%c24, %c0_553, %c0_554] : memref<25x2x256xbf16, #tpu.memory_space<vmem>>, vector<1x2x256xbf16>
    %591 = vector.shape_cast %590 : vector<1x2x256xbf16> to vector<2x256xbf16>
    %c3_555 = arith.constant 3 : index
    %c0_556 = arith.constant 0 : index
    %c0_557 = arith.constant 0 : index
    %592 = vector.load %arg2[%c3_555, %c0_556, %c0_557] : memref<4x256x32xbf16, #tpu.memory_space<vmem>>, vector<1x256x32xbf16>
    %593 = vector.shape_cast %592 : vector<1x256x32xbf16> to vector<256x32xbf16>
    %cst_558 = arith.constant dense<0.000000e+00> : vector<2x32xf32>
    %594 = tpu.matmul %591, %593, %cst_558 {dimension_numbers = #tpu.dot_dimension_numbers<[1], [0], [0], [1], [0, 0, 1, 1], [], []>} : vector<2x256xbf16>, vector<256x32xbf16>, vector<2x32xf32> -> vector<2x32xf32>
    %595 = arith.addf %589, %594 : vector<2x32xf32>
    %c0_559 = arith.constant 0 : index
    %c0_560 = arith.constant 0 : index
    %596 = vector.load %arg3[%c0_559, %c0_560] : memref<1x32xf32, #tpu.memory_space<vmem>>, vector<1x32xf32>
    %597 = vector.broadcast %596 : vector<1x32xf32> to vector<2x32xf32>
    %598 = arith.addf %595, %597 : vector<2x32xf32>
    %cst_561 = arith.constant 0.000000e+00 : f32
    %599 = vector.broadcast %cst_561 : f32 to vector<2x32xf32>
    %600 = arith.cmpf ogt, %598, %599 : vector<2x32xf32>
    %cst_562 = arith.constant 2.000000e-01 : f32
    %601 = vector.broadcast %cst_562 : f32 to vector<2x32xf32>
    %602 = arith.mulf %601, %598 : vector<2x32xf32>
    %603 = arith.select %600, %598, %602 : vector<2x32xi1>, vector<2x32xf32>
    %604 = arith.truncf %603 : vector<2x32xf32> to vector<2x32xbf16>
    %c15_563 = arith.constant 15 : index
    %c0_564 = arith.constant 0 : index
    %c0_565 = arith.constant 0 : index
    %605 = vector.load %arg4[%c15_563, %c0_564, %c0_565] : memref<16x32x64xbf16, #tpu.memory_space<vmem>>, vector<1x32x64xbf16>
    %606 = vector.shape_cast %605 : vector<1x32x64xbf16> to vector<32x64xbf16>
    %cst_566 = arith.constant dense<0.000000e+00> : vector<2x64xf32>
    %607 = tpu.matmul %604, %606, %cst_566 {dimension_numbers = #tpu.dot_dimension_numbers<[1], [0], [0], [1], [0, 0, 1, 1], [], []>} : vector<2x32xbf16>, vector<32x64xbf16>, vector<2x64xf32> -> vector<2x64xf32>
    %608 = arith.addf %570, %607 : vector<2x64xf32>
    %c0_567 = arith.constant 0 : index
    %c0_568 = arith.constant 0 : index
    %609 = vector.load %arg5[%c0_567, %c0_568] : memref<1x64xf32, #tpu.memory_space<vmem>>, vector<1x64xf32>
    %610 = vector.broadcast %609 : vector<1x64xf32> to vector<2x64xf32>
    %611 = arith.addf %608, %610 : vector<2x64xf32>
    %cst_569 = arith.constant 0.000000e+00 : f32
    %612 = vector.broadcast %cst_569 : f32 to vector<2x64xf32>
    %613 = arith.cmpf ogt, %611, %612 : vector<2x64xf32>
    %cst_570 = arith.constant 2.000000e-01 : f32
    %614 = vector.broadcast %cst_570 : f32 to vector<2x64xf32>
    %615 = arith.mulf %614, %611 : vector<2x64xf32>
    %616 = arith.select %613, %611, %615 : vector<2x64xi1>, vector<2x64xf32>
    %617 = arith.truncf %616 : vector<2x64xf32> to vector<2x64xbf16>
    %c0_571 = arith.constant 0 : index
    %c0_572 = arith.constant 0 : index
    %618 = vector.load %arg6[%c0_571, %c0_572] : memref<64x128xbf16, #tpu.memory_space<vmem>>, vector<64x128xbf16>
    %cst_573 = arith.constant dense<0.000000e+00> : vector<2x128xf32>
    %619 = tpu.matmul %617, %618, %cst_573 {dimension_numbers = #tpu.dot_dimension_numbers<[1], [0], [0], [1], [0, 0, 1, 1], [], []>} : vector<2x64xbf16>, vector<64x128xbf16>, vector<2x128xf32> -> vector<2x128xf32>
    %c0_574 = arith.constant 0 : index
    %c0_575 = arith.constant 0 : index
    %620 = vector.load %arg7[%c0_574, %c0_575] : memref<1x128xf32, #tpu.memory_space<vmem>>, vector<1x128xf32>
    %621 = vector.broadcast %620 : vector<1x128xf32> to vector<2x128xf32>
    %622 = arith.addf %619, %621 : vector<2x128xf32>
    %cst_576 = arith.constant 0.000000e+00 : f32
    %623 = vector.broadcast %cst_576 : f32 to vector<2x128xf32>
    %624 = arith.subf %623, %622 : vector<2x128xf32>
    %625 = math.exp %624 : vector<2x128xf32>
    %cst_577 = arith.constant 1.000000e+00 : f32
    %626 = vector.broadcast %cst_577 : f32 to vector<2x128xf32>
    %627 = arith.addf %626, %625 : vector<2x128xf32>
    %628 = tpu.reciprocal %627 : vector<2x128xf32> -> vector<2x128xf32>
    %c0_578 = arith.constant 0 : index
    %c0_579 = arith.constant 0 : index
    %629 = vector.load %arg8[%c0_578, %c0_579] : memref<2x128xf32, #tpu.memory_space<vmem>>, vector<2x128xf32>
    tpu.vector_store %arg8[%c0_578, %c0_579], %628 {strides = array<i32>} : memref<2x128xf32, #tpu.memory_space<vmem>>, vector<2x128xf32>,
    return
  }
  func.func @transform_0(%arg0: i32) -> (i32, i32, i32) {
    %c0_i32 = arith.constant 0 : i32
    %c0_i32_0 = arith.constant 0 : i32
    %c0_i32_1 = arith.constant 0 : i32
    return %c0_i32, %arg0, %c0_i32_0 : i32, i32, i32
  }
  func.func @transform_1(%arg0: i32) -> (i32, i32, i32) {
    %c0_i32 = arith.constant 0 : i32
    %c0_i32_0 = arith.constant 0 : i32
    %c0_i32_1 = arith.constant 0 : i32
    %c0_i32_2 = arith.constant 0 : i32
    return %c0_i32, %c0_i32_0, %c0_i32_1 : i32, i32, i32
  }
  func.func @transform_2(%arg0: i32) -> (i32, i32) {
    %c0_i32 = arith.constant 0 : i32
    %c0_i32_0 = arith.constant 0 : i32
    %c0_i32_1 = arith.constant 0 : i32
    return %c0_i32, %c0_i32_0 : i32, i32
  }
  func.func @transform_3(%arg0: i32) -> (i32, i32, i32) {
    %c0_i32 = arith.constant 0 : i32
    %c0_i32_0 = arith.constant 0 : i32
    %c0_i32_1 = arith.constant 0 : i32
    %c0_i32_2 = arith.constant 0 : i32
    return %c0_i32, %c0_i32_0, %c0_i32_1 : i32, i32, i32
  }
  func.func @transform_4(%arg0: i32) -> (i32, i32) {
    %c0_i32 = arith.constant 0 : i32
    %c0_i32_0 = arith.constant 0 : i32
    %c0_i32_1 = arith.constant 0 : i32
    return %c0_i32, %c0_i32_0 : i32, i32
  }
  func.func @transform_5(%arg0: i32) -> (i32, i32) {
    %c0_i32 = arith.constant 0 : i32
    %c0_i32_0 = arith.constant 0 : i32
    %c0_i32_1 = arith.constant 0 : i32
    return %c0_i32, %c0_i32_0 : i32, i32
  }
  func.func @transform_6(%arg0: i32) -> (i32, i32) {
    %c0_i32 = arith.constant 0 : i32
    %c0_i32_0 = arith.constant 0 : i32
    %c0_i32_1 = arith.constant 0 : i32
    return %c0_i32, %c0_i32_0 : i32, i32
  }
  func.func @transform_7(%arg0: i32) -> (i32, i32) {
    %c0_i32 = arith.constant 0 : i32
    %c0_i32_0 = arith.constant 0 : i32
    return %arg0, %c0_i32 : i32, i32
  }
}

</mosaic_0001>

<llo_original>
// kernel: classifier_forward.2
$region0: #{classifier_forward.2}
  #allocation0 [shape = 'u32[]', space=smem, size = 0x4, offset = 0x4, fixed_abs, tag = 'smem constant byte address 0x4 - core index']
  #allocation1 [shape = 'u32[144,128]{1,0:T(1,128)}', space=vmem, size = 0x12000, scoped, tag = 'internal scratch']
  %s0 = inlined_call_operand.vmem [shape: bf16[128,128], index: 0, kind: input, shape index: {}]
  %s1 = inlined_call_operand.vmem [shape: bf16[128,64], index: 1, kind: input, shape index: {}]
  %s2 = inlined_call_operand.vmem [shape: f32[1,64], index: 2, kind: input, shape index: {}]
  %s3 = inlined_call_operand.vmem [shape: bf16[128,64], index: 3, kind: output, shape index: {}]
  %s4 = sld [smem:[#allocation0]]
  $region45: #{classifier_forward.2} parent=0
    _
  %s6 = ssub.s32 1, %s4
  %s7 = scalar_select 0, %s6, %s4
  loop: start=0, step=1, limit=4
  $region2: #{classifier_forward.2} parent=0 // loop_pre_header
    _
  $region3: #{classifier_forward.2} parent=0 // loop_header
    %s9 = sphi 0, %s13
    %p10 = scmp.ge.s32.totalorder %s9, 4
    %s19 = sphi 0, %s21
    %s22 = sphi 0, %s19
    %s23 = sphi 0, %s22
    %s39 = sphi 0, %s23
    %s43 = sphi 0, %s43
    %s45 = sphi 0, %s43
    %s46 = sphi 0, %s45
    %s60 = sphi 0, %s46
    %s64 = sphi 0, %s64
    %s66 = sphi 0, %s64
    %s67 = sphi 0, %s66
    %s81 = sphi 0, %s67
    %s87 = sphi 0, %s89
    %s90 = sphi 0, %s87
    %s91 = sphi 0, %s90
    %s107 = sphi 0, %s91
  $region4: #{classifier_forward.2} parent=0 // loop_header_branch
    %12 = sbr.rel (%p10) target = $region8
  $region5: #{classifier_forward.2} parent=0 // loop_body
    %s14 = ssub.s32 %s9, 1
    %s15 = ssub.s32 %s9, 2
    %s16 = sadd.s32 %s9, 1
    %s17 = ssub.s32 %s9, %s16
    %p18 = scmp.eq.s32.totalorder %s17, 0
    %s20 = sadd.s32 %s19, 1
    %s21 = scalar_select %p18, %s19, %s20
    %p24 = pneg %p18
    %p25 = scmp.eq.s32.totalorder %s9, 1
    %p26 = por %p24, %p25
    %p27 = scmp.ne.s32.totalorder %s19, %s22
    %p28 = scmp.eq.s32.totalorder %s9, 0
    %p29 = por %p27, %p28
    %p30 = scmp.ne.s32.totalorder %s19, %s22
    %p31 = scmp.eq.s32.totalorder %s14, 1
    %p32 = por %p30, %p31
    %p33 = scmp.ne.s32.totalorder %s22, %s23
    %p34 = scmp.eq.s32.totalorder %s14, 0
    %p35 = por %p33, %p34
    %p36 = scmp.ne.s32.totalorder %s22, %s23
    %p37 = scmp.eq.s32.totalorder %s15, 1
    %p38 = por %p36, %p37
    %p40 = scmp.ne.s32.totalorder %s23, %s39
    %p41 = scmp.eq.s32.totalorder %s15, 0
    %p42 = por %p40, %p41
    %s44 = sadd.s32 %s43, 1
    %p47 = scmp.eq.s32.totalorder %s9, 1
    %p48 = scmp.ne.s32.totalorder %s43, %s45
    %p49 = scmp.eq.s32.totalorder %s9, 0
    %p50 = por %p48, %p49
    %p51 = scmp.ne.s32.totalorder %s43, %s45
    %p52 = scmp.eq.s32.totalorder %s14, 1
    %p53 = por %p51, %p52
    %p54 = scmp.ne.s32.totalorder %s45, %s46
    %p55 = scmp.eq.s32.totalorder %s14, 0
    %p56 = por %p54, %p55
    %p57 = scmp.ne.s32.totalorder %s45, %s46
    %p58 = scmp.eq.s32.totalorder %s15, 1
    %p59 = por %p57, %p58
    %p61 = scmp.ne.s32.totalorder %s46, %s60
    %p62 = scmp.eq.s32.totalorder %s15, 0
    %p63 = por %p61, %p62
    %s65 = sadd.s32 %s64, 1
    %p68 = scmp.eq.s32.totalorder %s9, 1
    %p69 = scmp.ne.s32.totalorder %s64, %s66
    %p70 = scmp.eq.s32.totalorder %s9, 0
    %p71 = por %p69, %p70
    %p72 = scmp.ne.s32.totalorder %s64, %s66
    %p73 = scmp.eq.s32.totalorder %s14, 1
    %p74 = por %p72, %p73
    %p75 = scmp.ne.s32.totalorder %s66, %s67
    %p76 = scmp.eq.s32.totalorder %s14, 0
    %p77 = por %p75, %p76
    %p78 = scmp.ne.s32.totalorder %s66, %s67
    %p79 = scmp.eq.s32.totalorder %s15, 1
    %p80 = por %p78, %p79
    %p82 = scmp.ne.s32.totalorder %s67, %s81
    %p83 = scmp.eq.s32.totalorder %s15, 0
    %p84 = por %p82, %p83
    %s85 = ssub.s32 %s9, %s16
    %p86 = scmp.eq.s32.totalorder %s85, 0
    %s88 = sadd.s32 %s87, 1
    %s89 = scalar_select %p86, %s87, %s88
    %p92 = pneg %p86
    %p93 = scmp.eq.s32.totalorder %s9, 1
    %p94 = por %p92, %p93
    %p95 = scmp.ne.s32.totalorder %s87, %s90
    %p96 = scmp.eq.s32.totalorder %s9, 0
    %p97 = por %p95, %p96
    %p98 = scmp.ne.s32.totalorder %s87, %s90
    %p99 = scmp.eq.s32.totalorder %s14, 1
    %p100 = por %p98, %p99
    %p101 = scmp.ne.s32.totalorder %s90, %s91
    %p102 = scmp.eq.s32.totalorder %s14, 0
    %p103 = por %p101, %p102
    %p104 = scmp.ne.s32.totalorder %s90, %s91
    %p105 = scmp.eq.s32.totalorder %s15, 1
    %p106 = por %p104, %p105
    %p108 = scmp.ne.s32.totalorder %s91, %s107
    %p109 = scmp.eq.s32.totalorder %s15, 0
    %p110 = por %p108, %p109
    %p111 = scmp.le.s32.totalorder 1, %s9
    %p112 = scmp.lt.s32.totalorder %s9, 3
    %p113 = pnand %p111, %p112
    %p114 = pneg %p113
    // Predicated region
    $region9: #{classifier_forward.2} parent=5 // pred_check
      _
    $region10: #{classifier_forward.2} parent=5 // pred_check_branch
      %116 = sbr.rel (%p113) target = $region12
    $region11: #{classifier_forward.2} parent=5 // pred_region
      %s117 = ssub.s32 %s9, 1
      // Predicated region
      $region13: #{classifier_forward.2} parent=11 // pred_check
        %p118 = pneg %p56
      $region14: #{classifier_forward.2} parent=11 // pred_check_branch
        %120 = sbr.rel (%p118) target = $region16
      $region15: #{classifier_forward.2} parent=11 // pred_region
        _
      $region16: #{classifier_forward.2} parent=11 // pred_fallthru
        _
      // Predicated region
      $region17: #{classifier_forward.2} parent=11 // pred_check
        %p121 = pneg %p77
      $region18: #{classifier_forward.2} parent=11 // pred_check_branch
        %123 = sbr.rel (%p121) target = $region20
      $region19: #{classifier_forward.2} parent=11 // pred_region
        _
      $region20: #{classifier_forward.2} parent=11 // pred_fallthru
        _
    $region12: #{classifier_forward.2} parent=5 // pred_fallthru
      _
    %p124 = scmp.lt.s32.totalorder %s9, 2
    // Predicated region
    $region21: #{classifier_forward.2} parent=5 // pred_check
      %p125 = pneg %p124
    $region22: #{classifier_forward.2} parent=5 // pred_check_branch
      %127 = sbr.rel (%p125) target = $region24
    $region23: #{classifier_forward.2} parent=5 // pred_region
      // Predicated region
      $region25: #{classifier_forward.2} parent=23 // pred_check
        %p128 = pneg %p29
      $region26: #{classifier_forward.2} parent=23 // pred_check_branch
        %130 = sbr.rel (%p128) target = $region28
      $region27: #{classifier_forward.2} parent=23 // pred_region
        %s131 = smul.u32 8, %s9
        %p132 = scmp.lt.s32.totalorder %s131, 15
        %s133 = scalar_select %p132, %s131, 15
        %s134 = smul.addr %s133, 4
        %s135 = scalar_lea.vmem %s0, %s134
        %s136 = smul.u32 8, %s9
      $region28: #{classifier_forward.2} parent=23 // pred_fallthru
        _
    $region24: #{classifier_forward.2} parent=5 // pred_fallthru
      _
    %p137 = scmp.le.s32.totalorder 1, %s9
    %p138 = scmp.lt.s32.totalorder %s9, 3
    %p139 = pnand %p137, %p138
    %p140 = pneg %p139
    // Predicated region
    $region29: #{classifier_forward.2} parent=5 // pred_check
      _
    $region30: #{classifier_forward.2} parent=5 // pred_check_branch
      %142 = sbr.rel (%p139) target = $region32
    $region31: #{classifier_forward.2} parent=5 // pred_region
      %s143 = ssub.s32 %s9, 1
      %s144 = smul.u32 8, %s14
      %p145 = scmp.lt.s32.totalorder %s144, 15
      %s146 = scalar_select %p145, %s144, 15
      %s147 = smul.addr %s146, 4
      %s148 = scalar_lea.vmem %s0, %s147
      %p149 = pneg %p35
      %p150 = pneg %p32
      %p151 = pneg %p56
      %p152 = pneg %p53
      %p153 = pneg %p77
      %p154 = pneg %p74
      %p155 = pneg %p103
      %p156 = pneg %p100
      %s157 = smul.u32 8, %s14
      %p158 = scmp.lt.s32.totalorder %s157, 15
      %s159 = scalar_select %p158, %s157, 15
      %s160 = smul.addr %s159, 4
      %s161 = scalar_lea.vmem %s3, %s160
      %s162 = smul.u32 8, %s14
      %p163 = scmp.lt.s32.totalorder %s162, 15
      %s164 = scalar_select %p163, %s162, 15
      %s165 = smul.addr %s164, 4
      %s166 = scalar_lea.vmem %s0, %s165
      %s167 = smul.u32 8, %s14
      %s168 = smul.u32 8, %s14
      %p169 = scmp.lt.s32.totalorder %s168, 15
      %s170 = scalar_select %p169, %s168, 15
      %s171 = smul.addr %s170, 4
      %s172 = scalar_lea.vmem %s3, %s171
      %s173 = smul.u32 8, %s14
      %v175 = vld [vmem:[%s166] sm:$0xf]
      %v176 = vld [vmem:[%s166 + $0x4] sm:$0xf]
      %v177 = vld [vmem:[%s166 + $0x8] sm:$0xf]
      %v178 = vld [vmem:[%s166 + $0xc] sm:$0xf]
      %v179 = vld [vmem:[%s166 + $0x10] sm:$0xf]
      %v180 = vld [vmem:[%s166 + $0x14] sm:$0xf]
      %v181 = vld [vmem:[%s166 + $0x18] sm:$0xf]
      %v182 = vld [vmem:[%s166 + $0x1c] sm:$0xf]
      %v183 = vld [vmem:[%s1] sm:$0xf]
      %v184 = vld [vmem:[%s1 + $0x4] sm:$0xf]
      %v185 = vld [vmem:[%s1 + $0x8] sm:$0xf]
      %v186 = vld [vmem:[%s1 + $0xc] sm:$0xf]
      %v187 = vld [vmem:[%s1 + $0x10] sm:$0xf]
      %v188 = vld [vmem:[%s1 + $0x14] sm:$0xf]
      %v189 = vld [vmem:[%s1 + $0x18] sm:$0xf]
      %v190 = vld [vmem:[%s1 + $0x1c] sm:$0xf]
      %v191 = vld [vmem:[%s1 + $0x20] sm:$0xf]
      %v192 = vld [vmem:[%s1 + $0x24] sm:$0xf]
      %v193 = vld [vmem:[%s1 + $0x28] sm:$0xf]
      %v194 = vld [vmem:[%s1 + $0x2c] sm:$0xf]
      %v195 = vld [vmem:[%s1 + $0x30] sm:$0xf]
      %v196 = vld [vmem:[%s1 + $0x34] sm:$0xf]
      %v197 = vld [vmem:[%s1 + $0x38] sm:$0xf]
      %v198 = vld [vmem:[%s1 + $0x3c] sm:$0xf]
      %v199 = vld [vmem:[%s2] sm:$0x1]
      %v201 = vlaneseq
      %v202 = vshrl.u32 %v201, 7
      %v203 = vsub.s32 0, %v202
      %v204 = vrot.slane %v199, %v203
      %v214 = vunpack.c.l.b16 %v175
      %v215 = vunpack.c.l.b16 %v176
      %v216 = vunpack.c.l.b16 %v177
      %v217 = vunpack.c.l.b16 %v178
      %v218 = vunpack.c.l.b16 %v179
      %v219 = vunpack.c.l.b16 %v180
      %v220 = vunpack.c.l.b16 %v181
      %v221 = vunpack.c.l.b16 %v182
      %v222 = vpack.c.b16 %v215, %v214
      %v223 = vpack.c.b16 %v217, %v216
      %v224 = vpack.c.b16 %v219, %v218
      %v225 = vpack.c.b16 %v221, %v220
      %v246 = vunpack.c.l.b16 %v183
      %v247 = vunpack.c.l.b16 %v184
      %v248 = vunpack.c.l.b16 %v185
      %v249 = vunpack.c.l.b16 %v186
      %v250 = vunpack.c.l.b16 %v187
      %v251 = vunpack.c.l.b16 %v188
      %v252 = vunpack.c.l.b16 %v189
      %v253 = vunpack.c.l.b16 %v190
      %v254 = vunpack.c.l.b16 %v191
      %v255 = vunpack.c.l.b16 %v192
      %v256 = vunpack.c.l.b16 %v193
      %v257 = vunpack.c.l.b16 %v194
      %v258 = vunpack.c.l.b16 %v195
      %v259 = vunpack.c.l.b16 %v196
      %v260 = vunpack.c.l.b16 %v197
      %v261 = vunpack.c.l.b16 %v198
      %v262 = vpack.c.b16 %v247, %v246
      %v263 = vpack.c.b16 %v249, %v248
      %v264 = vpack.c.b16 %v251, %v250
      %v265 = vpack.c.b16 %v253, %v252
      %v266 = vpack.c.b16 %v255, %v254
      %v267 = vpack.c.b16 %v257, %v256
      %v268 = vpack.c.b16 %v259, %v258
      %v269 = vpack.c.b16 %v261, %v260
      %278 = vmatprep.subr.bf16.mxu0 0
      %279 = vmatpush1.bf16.msra.mxu0 %v262
      %280 = vmatprep.subr.bf16.mxu0 0
      %281 = vmatpush1.bf16.msra.mxu0 %v263
      %282 = vmatprep.subr.bf16.mxu0 0
      %283 = vmatpush1.bf16.msra.mxu0 %v264
      %284 = vmatprep.subr.bf16.mxu0 0
      %285 = vmatpush1.bf16.msra.mxu0 %v265
      %286 = vmatprep.subr.bf16.mxu0 0
      %287 = vmatpush1.bf16.msra.mxu0 %v266
      %288 = vmatprep.subr.bf16.mxu0 0
      %289 = vmatpush1.bf16.msra.mxu0 %v267
      %290 = vmatprep.subr.bf16.mxu0 0
      %291 = vmatpush1.bf16.msra.mxu0 %v268
      %292 = vmatprep.subr.bf16.mxu0 0
      %293 = vmatpush1.bf16.msra.mxu0 %v269
      %294 = vmatprep.subr.bf16.mxu0 0
      %295 = vmatpush1.bf16.msra.mxu0 0
      %296 = vmatprep.subr.bf16.mxu0 0
      %297 = vmatpush1.bf16.msra.mxu0 0
      %298 = vmatprep.subr.bf16.mxu0 0
      %299 = vmatpush1.bf16.msra.mxu0 0
      %300 = vmatprep.subr.bf16.mxu0 0
      %301 = vmatpush1.bf16.msra.mxu0 0
      %302 = vmatprep.subr.bf16.mxu0 0
      %303 = vmatpush1.bf16.msra.mxu0 0
      %304 = vmatprep.subr.bf16.mxu0 0
      %305 = vmatpush1.bf16.msra.mxu0 0
      %306 = vmatprep.subr.bf16.mxu0 0
      %307 = vmatpush1.bf16.msra.mxu0 0
      %308 = vmatprep.subr.bf16.mxu0 0
      %309 = vmatpush1.bf16.msra.mxu0 0
      %310 = vmatprep.mubr.bf16.mxu0 0
      %311 = vmatmul.mubr.bf16.gmra.mrb[0].mxu0 %v222
      %v312 = vpop.f32.mrb[0].mxu0
      %v313 = vadd.f32 %v204, %v312
      %v314 = vpop.f32.mrb[0].mxu0
      %v315 = vpop.f32.mrb[0].mxu0
      %v316 = vadd.f32 %v204, %v315
      %v317 = vpop.f32.mrb[0].mxu0
      %318 = vmatprep.mubr.bf16.mxu0 0
      %319 = vmatmul.mubr.bf16.gmra.mrb[0].mxu0 %v223
      %v320 = vpop.f32.mrb[0].mxu0
      %v321 = vadd.f32 %v204, %v320
      %v322 = vpop.f32.mrb[0].mxu0
      %v323 = vpop.f32.mrb[0].mxu0
      %v324 = vadd.f32 %v204, %v323
      %v325 = vpop.f32.mrb[0].mxu0
      %326 = vmatprep.mubr.bf16.mxu0 0
      %327 = vmatmul.mubr.bf16.gmra.mrb[0].mxu0 %v224
      %v328 = vpop.f32.mrb[0].mxu0
      %v329 = vadd.f32 %v204, %v328
      %v330 = vpop.f32.mrb[0].mxu0
      %v331 = vpop.f32.mrb[0].mxu0
      %v332 = vadd.f32 %v204, %v331
      %v333 = vpop.f32.mrb[0].mxu0
      %334 = vmatprep.mubr.bf16.mxu0 0
      %335 = vmatmul.mubr.bf16.gmra.mrb[0].mxu0 %v225
      %v336 = vpop.f32.mrb[0].mxu0
      %v337 = vadd.f32 %v204, %v336
      %v338 = vpop.f32.mrb[0].mxu0
      %v339 = vpop.f32.mrb[0].mxu0
      %v340 = vadd.f32 %v204, %v339
      %v341 = vpop.f32.mrb[0].mxu0
      %342 = vdwg.mxu0
      %vm343 = vcmp.gt.f32.partialorder %v313, 0.0
      %vm344 = vcmp.gt.f32.partialorder %v316, 0.0
      %vm345 = vcmp.gt.f32.partialorder %v321, 0.0
      %vm346 = vcmp.gt.f32.partialorder %v324, 0.0
      %vm347 = vcmp.gt.f32.partialorder %v329, 0.0
      %vm348 = vcmp.gt.f32.partialorder %v332, 0.0
      %vm349 = vcmp.gt.f32.partialorder %v337, 0.0
      %vm350 = vcmp.gt.f32.partialorder %v340, 0.0
      %v351 = vmul.f32 %v313, 0.2
      %v352 = vmul.f32 %v316, 0.2
      %v353 = vmul.f32 %v321, 0.2
      %v354 = vmul.f32 %v324, 0.2
      %v355 = vmul.f32 %v329, 0.2
      %v356 = vmul.f32 %v332, 0.2
      %v357 = vmul.f32 %v337, 0.2
      %v358 = vmul.f32 %v340, 0.2
      %v359 = vsel %vm343, %v313, %v351
      %v360 = vsel %vm344, %v316, %v352
      %v361 = vsel %vm345, %v321, %v353
      %v362 = vsel %vm346, %v324, %v354
      %v363 = vsel %vm347, %v329, %v355
      %v364 = vsel %vm348, %v332, %v356
      %v365 = vsel %vm349, %v337, %v357
      %v366 = vsel %vm350, %v340, %v358
      %v367 = vpack.c.bf16 %v360, %v359
      %v368 = vpack.c.bf16 %v362, %v361
      %v369 = vpack.c.bf16 %v364, %v363
      %v370 = vpack.c.bf16 %v366, %v365
      %v375 = vunpack.c.l.b16 %v367
      %v376 = vunpack.c.h.b16 %v367
      %v377 = vunpack.c.l.b16 %v368
      %v378 = vunpack.c.h.b16 %v368
      %v379 = vunpack.c.l.b16 %v369
      %v380 = vunpack.c.h.b16 %v369
      %v381 = vunpack.c.l.b16 %v370
      %v382 = vunpack.c.h.b16 %v370
      %v383 = vpack.c.b16 %v375, %v375
      %v384 = vpack.c.b16 %v376, %v376
      %v385 = vpack.c.b16 %v377, %v377
      %v386 = vpack.c.b16 %v378, %v378
      %v387 = vpack.c.b16 %v379, %v379
      %v388 = vpack.c.b16 %v380, %v380
      %v389 = vpack.c.b16 %v381, %v381
      %v390 = vpack.c.b16 %v382, %v382
      %vm399 = vcmask 519168
      %400 = vst.msk [vmem:[%s172] sm:$0xf] %vm399, %v383
      %401 = vst.msk [vmem:[%s172 + $0x4] sm:$0xf] %vm399, %v384
      %402 = vst.msk [vmem:[%s172 + $0x8] sm:$0xf] %vm399, %v385
      %403 = vst.msk [vmem:[%s172 + $0xc] sm:$0xf] %vm399, %v386
      %404 = vst.msk [vmem:[%s172 + $0x10] sm:$0xf] %vm399, %v387
      %405 = vst.msk [vmem:[%s172 + $0x14] sm:$0xf] %vm399, %v388
      %406 = vst.msk [vmem:[%s172 + $0x18] sm:$0xf] %vm399, %v389
      %407 = vst.msk [vmem:[%s172 + $0x1c] sm:$0xf] %vm399, %v390
      %s408 = smul.u32 8, %s14
      %p409 = scmp.lt.s32.totalorder %s408, 15
      %s410 = scalar_select %p409, %s408, 15
      %s411 = smul.addr %s410, 4
      %s412 = scalar_lea.vmem %s3, %s411
      // Predicated region
      $region33: #{classifier_forward.2} parent=31 // pred_check
        %p413 = pneg %p100
      $region34: #{classifier_forward.2} parent=31 // pred_check_branch
        %415 = sbr.rel (%p413) target = $region36
      $region35: #{classifier_forward.2} parent=31 // pred_region
        %s416 = smul.u32 8, %s14
      $region36: #{classifier_forward.2} parent=31 // pred_fallthru
        _
    $region32: #{classifier_forward.2} parent=5 // pred_fallthru
      _
    %p417 = scmp.le.s32.totalorder 2, %s9
    // Predicated region
    $region37: #{classifier_forward.2} parent=5 // pred_check
      %p418 = pneg %p417
    $region38: #{classifier_forward.2} parent=5 // pred_check_branch
      %420 = sbr.rel (%p418) target = $region40
    $region39: #{classifier_forward.2} parent=5 // pred_region
      %s421 = ssub.s32 %s9, 2
      // Predicated region
      $region41: #{classifier_forward.2} parent=39 // pred_check
        %p422 = pneg %p106
      $region42: #{classifier_forward.2} parent=39 // pred_check_branch
        %424 = sbr.rel (%p422) target = $region44
      $region43: #{classifier_forward.2} parent=39 // pred_region
        %s425 = smul.u32 8, %s15
        %p426 = scmp.lt.s32.totalorder %s425, 15
        %s427 = scalar_select %p426, %s425, 15
        %s428 = smul.addr %s427, 4
        %s429 = scalar_lea.vmem %s3, %s428
      $region44: #{classifier_forward.2} parent=39 // pred_fallthru
        _
    $region40: #{classifier_forward.2} parent=5 // pred_fallthru
      _
  $region6: #{classifier_forward.2} parent=0 // loop_footer
    %s13 = sadd.s32 1, %s9
  $region7: #{classifier_forward.2} parent=0 // loop_footer_branch
    %8 = sbr.rel target = $region3
  $region8: #{classifier_forward.2} parent=0 // loop_exit
    _

// kernel: classifier_forward.3
$region0: #{classifier_forward.3}
  #allocation0 [shape = 'u32[]', space=smem, size = 0x4, offset = 0x4, fixed_abs, tag = 'smem constant byte address 0x4 - core index']
  #allocation1 [shape = 'u32[144,128]{1,0:T(1,128)}', space=vmem, size = 0x12000, scoped, tag = 'internal scratch']
  %s0 = inlined_call_operand.vmem [shape: bf16[25,2,256], index: 0, kind: input, shape index: {}]
  %s1 = inlined_call_operand.vmem [shape: bf16[4,256,32], index: 1, kind: input, shape index: {}]
  %s2 = inlined_call_operand.vmem [shape: f32[1,32], index: 2, kind: input, shape index: {}]
  %s3 = inlined_call_operand.vmem [shape: bf16[16,32,64], index: 3, kind: input, shape index: {}]
  %s4 = inlined_call_operand.vmem [shape: f32[1,64], index: 4, kind: input, shape index: {}]
  %s5 = inlined_call_operand.vmem [shape: bf16[64,128], index: 5, kind: input, shape index: {}]
  %s6 = inlined_call_operand.vmem [shape: f32[1,128], index: 6, kind: input, shape index: {}]
  %s7 = inlined_call_operand.hbm [shape: f32[2,128], index: 7, kind: output, shape index: {}]
  %s8 = sld [smem:[#allocation0]]
  $region38: #{classifier_forward.3} parent=0
    _
  %s10 = ssub.s32 1, %s8
  %s11 = scalar_select 0, %s10, %s8
  $region1: #{classifier_forward.3} parent=0
    #allocation2 [shape = 'u8[1024]{0}', space=vmem, size = 0x400, scoped, tag = 'output window, operand 0, single buffered']
    #allocation3 [shape = 's32[1]{0}', space=sflag, size = 0x4, scoped, tag = 'scoped memory for classifier_forward.3']
    %12 = vsyncpa [#allocation3], 0
    // Predicated region
    $region2: #{classifier_forward.3} parent=1 // pred_check
      _
    $region3: #{classifier_forward.3} parent=1 // pred_check_branch
      %14 = sbr.rel (0) target = $region5
    $region4: #{classifier_forward.3} parent=1 // pred_region
      _
    $region5: #{classifier_forward.3} parent=1 // pred_fallthru
      _
    // Predicated region
    $region6: #{classifier_forward.3} parent=1 // pred_check
      _
    $region7: #{classifier_forward.3} parent=1 // pred_check_branch
      %16 = sbr.rel (0) target = $region9
    $region8: #{classifier_forward.3} parent=1 // pred_region
      _
    $region9: #{classifier_forward.3} parent=1 // pred_fallthru
      _
    // Predicated region
    $region10: #{classifier_forward.3} parent=1 // pred_check
      _
    $region11: #{classifier_forward.3} parent=1 // pred_check_branch
      %18 = sbr.rel (0) target = $region13
    $region12: #{classifier_forward.3} parent=1 // pred_region
      _
    $region13: #{classifier_forward.3} parent=1 // pred_fallthru
      _
    // Predicated region
    $region14: #{classifier_forward.3} parent=1 // pred_check
      _
    $region15: #{classifier_forward.3} parent=1 // pred_check_branch
      %20 = sbr.rel (0) target = $region17
    $region16: #{classifier_forward.3} parent=1 // pred_region
      _
    $region17: #{classifier_forward.3} parent=1 // pred_fallthru
      _
    // Predicated region
    $region18: #{classifier_forward.3} parent=1 // pred_check
      _
    $region19: #{classifier_forward.3} parent=1 // pred_check_branch
      %22 = sbr.rel (0) target = $region21
    $region20: #{classifier_forward.3} parent=1 // pred_region
      _
    $region21: #{classifier_forward.3} parent=1 // pred_fallthru
      _
    // Predicated region
    $region22: #{classifier_forward.3} parent=1 // pred_check
      _
    $region23: #{classifier_forward.3} parent=1 // pred_check_branch
      %24 = sbr.rel (0) target = $region25
    $region24: #{classifier_forward.3} parent=1 // pred_region
      _
    $region25: #{classifier_forward.3} parent=1 // pred_fallthru
      _
    // Predicated region
    $region26: #{classifier_forward.3} parent=1 // pred_check
      _
    $region27: #{classifier_forward.3} parent=1 // pred_check_branch
      %26 = sbr.rel (0) target = $region29
    $region28: #{classifier_forward.3} parent=1 // pred_region
      _
    $region29: #{classifier_forward.3} parent=1 // pred_fallthru
      _
    %v28 = vld [vmem:[%s0] sm:$0x3]
    %v29 = vld [vmem:[%s1] sm:$0xf]
    %v30 = vld [vmem:[%s1 + $0x4] sm:$0xf]
    %v31 = vld [vmem:[%s1 + $0x8] sm:$0xf]
    %v32 = vld [vmem:[%s1 + $0xc] sm:$0xf]
    %v33 = vld [vmem:[%s1 + $0x10] sm:$0xf]
    %v34 = vld [vmem:[%s1 + $0x14] sm:$0xf]
    %v35 = vld [vmem:[%s1 + $0x18] sm:$0xf]
    %v36 = vld [vmem:[%s1 + $0x1c] sm:$0xf]
    %v37 = vld [vmem:[%s1 + $0x20] sm:$0xf]
    %v38 = vld [vmem:[%s1 + $0x24] sm:$0xf]
    %v39 = vld [vmem:[%s1 + $0x28] sm:$0xf]
    %v40 = vld [vmem:[%s1 + $0x2c] sm:$0xf]
    %v41 = vld [vmem:[%s1 + $0x30] sm:$0xf]
    %v42 = vld [vmem:[%s1 + $0x34] sm:$0xf]
    %v43 = vld [vmem:[%s1 + $0x38] sm:$0xf]
    %v44 = vld [vmem:[%s1 + $0x3c] sm:$0xf]
    %v45 = vld [vmem:[%s1 + $0x40] sm:$0xf]
    %v46 = vld [vmem:[%s1 + $0x44] sm:$0xf]
    %v47 = vld [vmem:[%s1 + $0x48] sm:$0xf]
    %v48 = vld [vmem:[%s1 + $0x4c] sm:$0xf]
    %v49 = vld [vmem:[%s1 + $0x50] sm:$0xf]
    %v50 = vld [vmem:[%s1 + $0x54] sm:$0xf]
    %v51 = vld [vmem:[%s1 + $0x58] sm:$0xf]
    %v52 = vld [vmem:[%s1 + $0x5c] sm:$0xf]
    %v53 = vld [vmem:[%s1 + $0x60] sm:$0xf]
    %v54 = vld [vmem:[%s1 + $0x64] sm:$0xf]
    %v55 = vld [vmem:[%s1 + $0x68] sm:$0xf]
    %v56 = vld [vmem:[%s1 + $0x6c] sm:$0xf]
    %v57 = vld [vmem:[%s1 + $0x70] sm:$0xf]
    %v58 = vld [vmem:[%s1 + $0x74] sm:$0xf]
    %v59 = vld [vmem:[%s1 + $0x78] sm:$0xf]
    %v60 = vld [vmem:[%s1 + $0x7c] sm:$0xf]
    %s61 = scalar_lea.vmem %s0, 2
    %v62 = vld [vmem:[%s61] sm:$0x3]
    %s63 = scalar_lea.vmem %s1, 128
    %v64 = vld [vmem:[%s63] sm:$0xf]
    %v65 = vld [vmem:[%s63 + $0x4] sm:$0xf]
    %v66 = vld [vmem:[%s63 + $0x8] sm:$0xf]
    %v67 = vld [vmem:[%s63 + $0xc] sm:$0xf]
    %v68 = vld [vmem:[%s63 + $0x10] sm:$0xf]
    %v69 = vld [vmem:[%s63 + $0x14] sm:$0xf]
    %v70 = vld [vmem:[%s63 + $0x18] sm:$0xf]
    %v71 = vld [vmem:[%s63 + $0x1c] sm:$0xf]
    %v72 = vld [vmem:[%s63 + $0x20] sm:$0xf]
    %v73 = vld [vmem:[%s63 + $0x24] sm:$0xf]
    %v74 = vld [vmem:[%s63 + $0x28] sm:$0xf]
    %v75 = vld [vmem:[%s63 + $0x2c] sm:$0xf]
    %v76 = vld [vmem:[%s63 + $0x30] sm:$0xf]
    %v77 = vld [vmem:[%s63 + $0x34] sm:$0xf]
    %v78 = vld [vmem:[%s63 + $0x38] sm:$0xf]
    %v79 = vld [vmem:[%s63 + $0x3c] sm:$0xf]
    %v80 = vld [vmem:[%s63 + $0x40] sm:$0xf]
    %v81 = vld [vmem:[%s63 + $0x44] sm:$0xf]
    %v82 = vld [vmem:[%s63 + $0x48] sm:$0xf]
    %v83 = vld [vmem:[%s63 + $0x4c] sm:$0xf]
    %v84 = vld [vmem:[%s63 + $0x50] sm:$0xf]
    %v85 = vld [vmem:[%s63 + $0x54] sm:$0xf]
    %v86 = vld [vmem:[%s63 + $0x58] sm:$0xf]
    %v87 = vld [vmem:[%s63 + $0x5c] sm:$0xf]
    %v88 = vld [vmem:[%s63 + $0x60] sm:$0xf]
    %v89 = vld [vmem:[%s63 + $0x64] sm:$0xf]
    %v90 = vld [vmem:[%s63 + $0x68] sm:$0xf]
    %v91 = vld [vmem:[%s63 + $0x6c] sm:$0xf]
    %v92 = vld [vmem:[%s63 + $0x70] sm:$0xf]
    %v93 = vld [vmem:[%s63 + $0x74] sm:$0xf]
    %v94 = vld [vmem:[%s63 + $0x78] sm:$0xf]
    %v95 = vld [vmem:[%s63 + $0x7c] sm:$0xf]
    %v98 = vunpack.c.l.s4 1966171168
    %v99 = vunpack.c.0.s8 %v98
    %v100 = vlaneseq
    %v101 = vshrl.u32 %v100, 7
    %v102 = vsub.s32 %v99, %v101
    %v103 = vrot.slane %v62, %v102
    %v104 = vcombine.high %v103, %v103
    %v106 = vunpack.c.l.s4 1966171168
    %v107 = vunpack.c.0.s8 %v106
    %v108 = vlaneseq
    %v109 = vshrl.u32 %v108, 7
    %v110 = vsub.s32 %v107, %v109
    %v111 = vrot.slane %v103, %v110
    %v113 = vunpack.c.l.s4 1966171168
    %v114 = vunpack.c.0.s8 %v113
    %v115 = vlaneseq
    %v116 = vshrl.u32 %v115, 7
    %v117 = vsub.s32 %v114, %v116
    %v118 = vrot.slane %v104, %v117
    %v153 = vunpack.c.l.b16 %v64
    %v154 = vunpack.c.l.b16 %v65
    %v155 = vunpack.c.l.b16 %v66
    %v156 = vunpack.c.l.b16 %v67
    %v157 = vunpack.c.l.b16 %v68
    %v158 = vunpack.c.l.b16 %v69
    %v159 = vunpack.c.l.b16 %v70
    %v160 = vunpack.c.l.b16 %v71
    %v161 = vunpack.c.l.b16 %v72
    %v162 = vunpack.c.l.b16 %v73
    %v163 = vunpack.c.l.b16 %v74
    %v164 = vunpack.c.l.b16 %v75
    %v165 = vunpack.c.l.b16 %v76
    %v166 = vunpack.c.l.b16 %v77
    %v167 = vunpack.c.l.b16 %v78
    %v168 = vunpack.c.l.b16 %v79
    %v169 = vunpack.c.l.b16 %v80
    %v170 = vunpack.c.l.b16 %v81
    %v171 = vunpack.c.l.b16 %v82
    %v172 = vunpack.c.l.b16 %v83
    %v173 = vunpack.c.l.b16 %v84
    %v174 = vunpack.c.l.b16 %v85
    %v175 = vunpack.c.l.b16 %v86
    %v176 = vunpack.c.l.b16 %v87
    %v177 = vunpack.c.l.b16 %v88
    %v178 = vunpack.c.l.b16 %v89
    %v179 = vunpack.c.l.b16 %v90
    %v180 = vunpack.c.l.b16 %v91
    %v181 = vunpack.c.l.b16 %v92
    %v182 = vunpack.c.l.b16 %v93
    %v183 = vunpack.c.l.b16 %v94
    %v184 = vunpack.c.l.b16 %v95
    %v185 = vpack.c.b16 %v154, %v153
    %v186 = vpack.c.b16 %v156, %v155
    %v187 = vpack.c.b16 %v158, %v157
    %v188 = vpack.c.b16 %v160, %v159
    %v189 = vpack.c.b16 %v162, %v161
    %v190 = vpack.c.b16 %v164, %v163
    %v191 = vpack.c.b16 %v166, %v165
    %v192 = vpack.c.b16 %v168, %v167
    %v193 = vpack.c.b16 %v170, %v169
    %v194 = vpack.c.b16 %v172, %v171
    %v195 = vpack.c.b16 %v174, %v173
    %v196 = vpack.c.b16 %v176, %v175
    %v197 = vpack.c.b16 %v178, %v177
    %v198 = vpack.c.b16 %v180, %v179
    %v199 = vpack.c.b16 %v182, %v181
    %v200 = vpack.c.b16 %v184, %v183
    %217 = vmatprep.subr.bf16.mxu0 0
    %218 = vmatpush1.bf16.msra.mxu0 %v185
    %219 = vmatprep.subr.bf16.mxu0 0
    %220 = vmatpush1.bf16.msra.mxu0 %v186
    %221 = vmatprep.subr.bf16.mxu0 0
    %222 = vmatpush1.bf16.msra.mxu0 %v187
    %223 = vmatprep.subr.bf16.mxu0 0
    %224 = vmatpush1.bf16.msra.mxu0 %v188
    %225 = vmatprep.subr.bf16.mxu0 0
    %226 = vmatpush1.bf16.msra.mxu0 %v189
    %227 = vmatprep.subr.bf16.mxu0 0
    %228 = vmatpush1.bf16.msra.mxu0 %v190
    %229 = vmatprep.subr.bf16.mxu0 0
    %230 = vmatpush1.bf16.msra.mxu0 %v191
    %231 = vmatprep.subr.bf16.mxu0 0
    %232 = vmatpush1.bf16.msra.mxu0 %v192
    %233 = vmatprep.subr.bf16.mxu0 0
    %234 = vmatpush1.bf16.msra.mxu0 %v193
    %235 = vmatprep.subr.bf16.mxu0 0
    %236 = vmatpush1.bf16.msra.mxu0 %v194
    %237 = vmatprep.subr.bf16.mxu0 0
    %238 = vmatpush1.bf16.msra.mxu0 %v195
    %239 = vmatprep.subr.bf16.mxu0 0
    %240 = vmatpush1.bf16.msra.mxu0 %v196
    %241 = vmatprep.subr.bf16.mxu0 0
    %242 = vmatpush1.bf16.msra.mxu0 %v197
    %243 = vmatprep.subr.bf16.mxu0 0
    %244 = vmatpush1.bf16.msra.mxu0 %v198
    %245 = vmatprep.subr.bf16.mxu0 0
    %246 = vmatpush1.bf16.msra.mxu0 %v199
    %247 = vmatprep.subr.bf16.mxu0 0
    %248 = vmatpush1.bf16.msra.mxu0 %v200
    %249 = vmatprep.mubr.bf16.mxu0 %v118
    %250 = vmatmul.mubr.bf16.gmra.mrb[0].mxu0 %v111
    %v251 = vpop.f32.mrb[0].mxu0
    %v252 = vadd.f32 0.0, %v251
    %v253 = vpop.f32.mrb[0].mxu0
    %v254 = vpop.f32.mrb[0].mxu0
    %v255 = vpop.f32.mrb[0].mxu0
    %256 = vdwg.mxu0
    %v259 = vunpack.c.l.s4 1966171168
    %v260 = vunpack.c.0.s8 %v259
    %v261 = vlaneseq
    %v262 = vshrl.u32 %v261, 7
    %v263 = vsub.s32 %v260, %v262
    %v264 = vrot.slane %v28, %v263
    %v265 = vcombine.high %v264, %v264
    %v267 = vunpack.c.l.s4 1966171168
    %v268 = vunpack.c.0.s8 %v267
    %v269 = vlaneseq
    %v270 = vshrl.u32 %v269, 7
    %v271 = vsub.s32 %v268, %v270
    %v272 = vrot.slane %v264, %v271
    %v274 = vunpack.c.l.s4 1966171168
    %v275 = vunpack.c.0.s8 %v274
    %v276 = vlaneseq
    %v277 = vshrl.u32 %v276, 7
    %v278 = vsub.s32 %v275, %v277
    %v279 = vrot.slane %v265, %v278
    %v314 = vunpack.c.l.b16 %v29
    %v315 = vunpack.c.l.b16 %v30
    %v316 = vunpack.c.l.b16 %v31
    %v317 = vunpack.c.l.b16 %v32
    %v318 = vunpack.c.l.b16 %v33
    %v319 = vunpack.c.l.b16 %v34
    %v320 = vunpack.c.l.b16 %v35
    %v321 = vunpack.c.l.b16 %v36
    %v322 = vunpack.c.l.b16 %v37
    %v323 = vunpack.c.l.b16 %v38
    %v324 = vunpack.c.l.b16 %v39
    %v325 = vunpack.c.l.b16 %v40
    %v326 = vunpack.c.l.b16 %v41
    %v327 = vunpack.c.l.b16 %v42
    %v328 = vunpack.c.l.b16 %v43
    %v329 = vunpack.c.l.b16 %v44
    %v330 = vunpack.c.l.b16 %v45
    %v331 = vunpack.c.l.b16 %v46
    %v332 = vunpack.c.l.b16 %v47
    %v333 = vunpack.c.l.b16 %v48
    %v334 = vunpack.c.l.b16 %v49
    %v335 = vunpack.c.l.b16 %v50
    %v336 = vunpack.c.l.b16 %v51
    %v337 = vunpack.c.l.b16 %v52
    %v338 = vunpack.c.l.b16 %v53
    %v339 = vunpack.c.l.b16 %v54
    %v340 = vunpack.c.l.b16 %v55
    %v341 = vunpack.c.l.b16 %v56
    %v342 = vunpack.c.l.b16 %v57
    %v343 = vunpack.c.l.b16 %v58
    %v344 = vunpack.c.l.b16 %v59
    %v345 = vunpack.c.l.b16 %v60
    %v346 = vpack.c.b16 %v315, %v314
    %v347 = vpack.c.b16 %v317, %v316
    %v348 = vpack.c.b16 %v319, %v318
    %v349 = vpack.c.b16 %v321, %v320
    %v350 = vpack.c.b16 %v323, %v322
    %v351 = vpack.c.b16 %v325, %v324
    %v352 = vpack.c.b16 %v327, %v326
    %v353 = vpack.c.b16 %v329, %v328
    %v354 = vpack.c.b16 %v331, %v330
    %v355 = vpack.c.b16 %v333, %v332
    %v356 = vpack.c.b16 %v335, %v334
    %v357 = vpack.c.b16 %v337, %v336
    %v358 = vpack.c.b16 %v339, %v338
    %v359 = vpack.c.b16 %v341, %v340
    %v360 = vpack.c.b16 %v343, %v342
    %v361 = vpack.c.b16 %v345, %v344
    %378 = vmatprep.subr.bf16.mxu0 0
    %379 = vmatpush1.bf16.msra.mxu0 %v346
    %380 = vmatprep.subr.bf16.mxu0 0
    %381 = vmatpush1.bf16.msra.mxu0 %v347
    %382 = vmatprep.subr.bf16.mxu0 0
    %383 = vmatpush1.bf16.msra.mxu0 %v348
    %384 = vmatprep.subr.bf16.mxu0 0
    %385 = vmatpush1.bf16.msra.mxu0 %v349
    %386 = vmatprep.subr.bf16.mxu0 0
    %387 = vmatpush1.bf16.msra.mxu0 %v350
    %388 = vmatprep.subr.bf16.mxu0 0
    %389 = vmatpush1.bf16.msra.mxu0 %v351
    %390 = vmatprep.subr.bf16.mxu0 0
    %391 = vmatpush1.bf16.msra.mxu0 %v352
    %392 = vmatprep.subr.bf16.mxu0 0
    %393 = vmatpush1.bf16.msra.mxu0 %v353
    %394 = vmatprep.subr.bf16.mxu0 0
    %395 = vmatpush1.bf16.msra.mxu0 %v354
    %396 = vmatprep.subr.bf16.mxu0 0
    %397 = vmatpush1.bf16.msra.mxu0 %v355
    %398 = vmatprep.subr.bf16.mxu0 0
    %399 = vmatpush1.bf16.msra.mxu0 %v356
    %400 = vmatprep.subr.bf16.mxu0 0
    %401 = vmatpush1.bf16.msra.mxu0 %v357
    %402 = vmatprep.subr.bf16.mxu0 0
    %403 = vmatpush1.bf16.msra.mxu0 %v358
    %404 = vmatprep.subr.bf16.mxu0 0
    %405 = vmatpush1.bf16.msra.mxu0 %v359
    %406 = vmatprep.subr.bf16.mxu0 0
    %407 = vmatpush1.bf16.msra.mxu0 %v360
    %408 = vmatprep.subr.bf16.mxu0 0
    %409 = vmatpush1.bf16.msra.mxu0 %v361
    %410 = vmatprep.mubr.bf16.mxu0 %v279
    %411 = vmatmul.mubr.bf16.gmra.mrb[0].mxu0 %v272
    %v412 = vpop.f32.mrb[0].mxu0
    %v413 = vadd.f32 %v252, %v412
    %v414 = vpop.f32.mrb[0].mxu0
    %v415 = vpop.f32.mrb[0].mxu0
    %v416 = vpop.f32.mrb[0].mxu0
    %417 = vdwg.mxu0
    %s418 = scalar_lea.vmem %s0, 10
    %v419 = vld [vmem:[%s418] sm:$0x3]
    %s420 = scalar_lea.vmem %s1, 256
    %v421 = vld [vmem:[%s420] sm:$0xf]
    %v422 = vld [vmem:[%s420 + $0x4] sm:$0xf]
    %v423 = vld [vmem:[%s420 + $0x8] sm:$0xf]
    %v424 = vld [vmem:[%s420 + $0xc] sm:$0xf]
    %v425 = vld [vmem:[%s420 + $0x10] sm:$0xf]
    %v426 = vld [vmem:[%s420 + $0x14] sm:$0xf]
    %v427 = vld [vmem:[%s420 + $0x18] sm:$0xf]
    %v428 = vld [vmem:[%s420 + $0x1c] sm:$0xf]
    %v429 = vld [vmem:[%s420 + $0x20] sm:$0xf]
    %v430 = vld [vmem:[%s420 + $0x24] sm:$0xf]
    %v431 = vld [vmem:[%s420 + $0x28] sm:$0xf]
    %v432 = vld [vmem:[%s420 + $0x2c] sm:$0xf]
    %v433 = vld [vmem:[%s420 + $0x30] sm:$0xf]
    %v434 = vld [vmem:[%s420 + $0x34] sm:$0xf]
    %v435 = vld [vmem:[%s420 + $0x38] sm:$0xf]
    %v436 = vld [vmem:[%s420 + $0x3c] sm:$0xf]
    %v437 = vld [vmem:[%s420 + $0x40] sm:$0xf]
    %v438 = vld [vmem:[%s420 + $0x44] sm:$0xf]
    %v439 = vld [vmem:[%s420 + $0x48] sm:$0xf]
    %v440 = vld [vmem:[%s420 + $0x4c] sm:$0xf]
    %v441 = vld [vmem:[%s420 + $0x50] sm:$0xf]
    %v442 = vld [vmem:[%s420 + $0x54] sm:$0xf]
    %v443 = vld [vmem:[%s420 + $0x58] sm:$0xf]
    %v444 = vld [vmem:[%s420 + $0x5c] sm:$0xf]
    %v445 = vld [vmem:[%s420 + $0x60] sm:$0xf]
    %v446 = vld [vmem:[%s420 + $0x64] sm:$0xf]
    %v447 = vld [vmem:[%s420 + $0x68] sm:$0xf]
    %v448 = vld [vmem:[%s420 + $0x6c] sm:$0xf]
    %v449 = vld [vmem:[%s420 + $0x70] sm:$0xf]
    %v450 = vld [vmem:[%s420 + $0x74] sm:$0xf]
    %v451 = vld [vmem:[%s420 + $0x78] sm:$0xf]
    %v452 = vld [vmem:[%s420 + $0x7c] sm:$0xf]
    %v455 = vunpack.c.l.s4 1966171168
    %v456 = vunpack.c.0.s8 %v455
    %v457 = vlaneseq
    %v458 = vshrl.u32 %v457, 7
    %v459 = vsub.s32 %v456, %v458
    %v460 = vrot.slane %v419, %v459
    %v461 = vcombine.high %v460, %v460
    %v463 = vunpack.c.l.s4 1966171168
    %v464 = vunpack.c.0.s8 %v463
    %v465 = vlaneseq
    %v466 = vshrl.u32 %v465, 7
    %v467 = vsub.s32 %v464, %v466
    %v468 = vrot.slane %v460, %v467
    %v470 = vunpack.c.l.s4 1966171168
    %v471 = vunpack.c.0.s8 %v470
    %v472 = vlaneseq
    %v473 = vshrl.u32 %v472, 7
    %v474 = vsub.s32 %v471, %v473
    %v475 = vrot.slane %v461, %v474
    %v510 = vunpack.c.l.b16 %v421
    %v511 = vunpack.c.l.b16 %v422
    %v512 = vunpack.c.l.b16 %v423
    %v513 = vunpack.c.l.b16 %v424
    %v514 = vunpack.c.l.b16 %v425
    %v515 = vunpack.c.l.b16 %v426
    %v516 = vunpack.c.l.b16 %v427
    %v517 = vunpack.c.l.b16 %v428
    %v518 = vunpack.c.l.b16 %v429
    %v519 = vunpack.c.l.b16 %v430
    %v520 = vunpack.c.l.b16 %v431
    %v521 = vunpack.c.l.b16 %v432
    %v522 = vunpack.c.l.b16 %v433
    %v523 = vunpack.c.l.b16 %v434
    %v524 = vunpack.c.l.b16 %v435
    %v525 = vunpack.c.l.b16 %v436
    %v526 = vunpack.c.l.b16 %v437
    %v527 = vunpack.c.l.b16 %v438
    %v528 = vunpack.c.l.b16 %v439
    %v529 = vunpack.c.l.b16 %v440
    %v530 = vunpack.c.l.b16 %v441
    %v531 = vunpack.c.l.b16 %v442
    %v532 = vunpack.c.l.b16 %v443
    %v533 = vunpack.c.l.b16 %v444
    %v534 = vunpack.c.l.b16 %v445
    %v535 = vunpack.c.l.b16 %v446
    %v536 = vunpack.c.l.b16 %v447
    %v537 = vunpack.c.l.b16 %v448
    %v538 = vunpack.c.l.b16 %v449
    %v539 = vunpack.c.l.b16 %v450
    %v540 = vunpack.c.l.b16 %v451
    %v541 = vunpack.c.l.b16 %v452
    %v542 = vpack.c.b16 %v511, %v510
    %v543 = vpack.c.b16 %v513, %v512
    %v544 = vpack.c.b16 %v515, %v514
    %v545 = vpack.c.b16 %v517, %v516
    %v546 = vpack.c.b16 %v519, %v518
    %v547 = vpack.c.b16 %v521, %v520
    %v548 = vpack.c.b16 %v523, %v522
    %v549 = vpack.c.b16 %v525, %v524
    %v550 = vpack.c.b16 %v527, %v526
    %v551 = vpack.c.b16 %v529, %v528
    %v552 = vpack.c.b16 %v531, %v530
    %v553 = vpack.c.b16 %v533, %v532
    %v554 = vpack.c.b16 %v535, %v534
    %v555 = vpack.c.b16 %v537, %v536
    %v556 = vpack.c.b16 %v539, %v538
    %v557 = vpack.c.b16 %v541, %v540
    %574 = vmatprep.subr.bf16.mxu0 0
    %575 = vmatpush1.bf16.msra.mxu0 %v542
    %576 = vmatprep.subr.bf16.mxu0 0
    %577 = vmatpush1.bf16.msra.mxu0 %v543
    %578 = vmatprep.subr.bf16.mxu0 0
    %579 = vmatpush1.bf16.msra.mxu0 %v544
    %580 = vmatprep.subr.bf16.mxu0 0
    %581 = vmatpush1.bf16.msra.mxu0 %v545
    %582 = vmatprep.subr.bf16.mxu0 0
    %583 = vmatpush1.bf16.msra.mxu0 %v546
    %584 = vmatprep.subr.bf16.mxu0 0
    %585 = vmatpush1.bf16.msra.mxu0 %v547
    %586 = vmatprep.subr.bf16.mxu0 0
    %587 = vmatpush1.bf16.msra.mxu0 %v548
    %588 = vmatprep.subr.bf16.mxu0 0
    %589 = vmatpush1.bf16.msra.mxu0 %v549
    %590 = vmatprep.subr.bf16.mxu0 0
    %591 = vmatpush1.bf16.msra.mxu0 %v550
    %592 = vmatprep.subr.bf16.mxu0 0
    %593 = vmatpush1.bf16.msra.mxu0 %v551
    %594 = vmatprep.subr.bf16.mxu0 0
    %595 = vmatpush1.bf16.msra.mxu0 %v552
    %596 = vmatprep.subr.bf16.mxu0 0
    %597 = vmatpush1.bf16.msra.mxu0 %v553
    %598 = vmatprep.subr.bf16.mxu0 0
    %599 = vmatpush1.bf16.msra.mxu0 %v554
    %600 = vmatprep.subr.bf16.mxu0 0
    %601 = vmatpush1.bf16.msra.mxu0 %v555
    %602 = vmatprep.subr.bf16.mxu0 0
    %603 = vmatpush1.bf16.msra.mxu0 %v556
    %604 = vmatprep.subr.bf16.mxu0 0
    %605 = vmatpush1.bf16.msra.mxu0 %v557
    %606 = vmatprep.mubr.bf16.mxu0 %v475
    %607 = vmatmul.mubr.bf16.gmra.mrb[0].mxu0 %v468
    %v608 = vpop.f32.mrb[0].mxu0
    %v609 = vadd.f32 0.0, %v608
    %v610 = vpop.f32.mrb[0].mxu0
    %v611 = vpop.f32.mrb[0].mxu0
    %v612 = vpop.f32.mrb[0].mxu0
    %613 = vdwg.mxu0
    %v614 = vadd.f32 %v413, %v609
    %s615 = scalar_lea.vmem %s0, 12
    %v616 = vld [vmem:[%s615] sm:$0x3]
    %s617 = scalar_lea.vmem %s1, 384
    %v618 = vld [vmem:[%s617] sm:$0xf]
    %v619 = vld [vmem:[%s617 + $0x4] sm:$0xf]
    %v620 = vld [vmem:[%s617 + $0x8] sm:$0xf]
    %v621 = vld [vmem:[%s617 + $0xc] sm:$0xf]
    %v622 = vld [vmem:[%s617 + $0x10] sm:$0xf]
    %v623 = vld [vmem:[%s617 + $0x14] sm:$0xf]
    %v624 = vld [vmem:[%s617 + $0x18] sm:$0xf]
    %v625 = vld [vmem:[%s617 + $0x1c] sm:$0xf]
    %v626 = vld [vmem:[%s617 + $0x20] sm:$0xf]
    %v627 = vld [vmem:[%s617 + $0x24] sm:$0xf]
    %v628 = vld [vmem:[%s617 + $0x28] sm:$0xf]
    %v629 = vld [vmem:[%s617 + $0x2c] sm:$0xf]
    %v630 = vld [vmem:[%s617 + $0x30] sm:$0xf]
    %v631 = vld [vmem:[%s617 + $0x34] sm:$0xf]
    %v632 = vld [vmem:[%s617 + $0x38] sm:$0xf]
    %v633 = vld [vmem:[%s617 + $0x3c] sm:$0xf]
    %v634 = vld [vmem:[%s617 + $0x40] sm:$0xf]
    %v635 = vld [vmem:[%s617 + $0x44] sm:$0xf]
    %v636 = vld [vmem:[%s617 + $0x48] sm:$0xf]
    %v637 = vld [vmem:[%s617 + $0x4c] sm:$0xf]
    %v638 = vld [vmem:[%s617 + $0x50] sm:$0xf]
    %v639 = vld [vmem:[%s617 + $0x54] sm:$0xf]
    %v640 = vld [vmem:[%s617 + $0x58] sm:$0xf]
    %v641 = vld [vmem:[%s617 + $0x5c] sm:$0xf]
    %v642 = vld [vmem:[%s617 + $0x60] sm:$0xf]
    %v643 = vld [vmem:[%s617 + $0x64] sm:$0xf]
    %v644 = vld [vmem:[%s617 + $0x68] sm:$0xf]
    %v645 = vld [vmem:[%s617 + $0x6c] sm:$0xf]
    %v646 = vld [vmem:[%s617 + $0x70] sm:$0xf]
    %v647 = vld [vmem:[%s617 + $0x74] sm:$0xf]
    %v648 = vld [vmem:[%s617 + $0x78] sm:$0xf]
    %v649 = vld [vmem:[%s617 + $0x7c] sm:$0xf]
    %v652 = vunpack.c.l.s4 1966171168
    %v653 = vunpack.c.0.s8 %v652
    %v654 = vlaneseq
    %v655 = vshrl.u32 %v654, 7
    %v656 = vsub.s32 %v653, %v655
    %v657 = vrot.slane %v616, %v656
    %v658 = vcombine.high %v657, %v657
    %v660 = vunpack.c.l.s4 1966171168
    %v661 = vunpack.c.0.s8 %v660
    %v662 = vlaneseq
    %v663 = vshrl.u32 %v662, 7
    %v664 = vsub.s32 %v661, %v663
    %v665 = vrot.slane %v657, %v664
    %v667 = vunpack.c.l.s4 1966171168
    %v668 = vunpack.c.0.s8 %v667
    %v669 = vlaneseq
    %v670 = vshrl.u32 %v669, 7
    %v671 = vsub.s32 %v668, %v670
    %v672 = vrot.slane %v658, %v671
    %v707 = vunpack.c.l.b16 %v618
    %v708 = vunpack.c.l.b16 %v619
    %v709 = vunpack.c.l.b16 %v620
    %v710 = vunpack.c.l.b16 %v621
    %v711 = vunpack.c.l.b16 %v622
    %v712 = vunpack.c.l.b16 %v623
    %v713 = vunpack.c.l.b16 %v624
    %v714 = vunpack.c.l.b16 %v625
    %v715 = vunpack.c.l.b16 %v626
    %v716 = vunpack.c.l.b16 %v627
    %v717 = vunpack.c.l.b16 %v628
    %v718 = vunpack.c.l.b16 %v629
    %v719 = vunpack.c.l.b16 %v630
    %v720 = vunpack.c.l.b16 %v631
    %v721 = vunpack.c.l.b16 %v632
    %v722 = vunpack.c.l.b16 %v633
    %v723 = vunpack.c.l.b16 %v634
    %v724 = vunpack.c.l.b16 %v635
    %v725 = vunpack.c.l.b16 %v636
    %v726 = vunpack.c.l.b16 %v637
    %v727 = vunpack.c.l.b16 %v638
    %v728 = vunpack.c.l.b16 %v639
    %v729 = vunpack.c.l.b16 %v640
    %v730 = vunpack.c.l.b16 %v641
    %v731 = vunpack.c.l.b16 %v642
    %v732 = vunpack.c.l.b16 %v643
    %v733 = vunpack.c.l.b16 %v644
    %v734 = vunpack.c.l.b16 %v645
    %v735 = vunpack.c.l.b16 %v646
    %v736 = vunpack.c.l.b16 %v647
    %v737 = vunpack.c.l.b16 %v648
    %v738 = vunpack.c.l.b16 %v649
    %v739 = vpack.c.b16 %v708, %v707
    %v740 = vpack.c.b16 %v710, %v709
    %v741 = vpack.c.b16 %v712, %v711
    %v742 = vpack.c.b16 %v714, %v713
    %v743 = vpack.c.b16 %v716, %v715
    %v744 = vpack.c.b16 %v718, %v717
    %v745 = vpack.c.b16 %v720, %v719
    %v746 = vpack.c.b16 %v722, %v721
    %v747 = vpack.c.b16 %v724, %v723
    %v748 = vpack.c.b16 %v726, %v725
    %v749 = vpack.c.b16 %v728, %v727
    %v750 = vpack.c.b16 %v730, %v729
    %v751 = vpack.c.b16 %v732, %v731
    %v752 = vpack.c.b16 %v734, %v733
    %v753 = vpack.c.b16 %v736, %v735
    %v754 = vpack.c.b16 %v738, %v737
    %771 = vmatprep.subr.bf16.mxu0 0
    %772 = vmatpush1.bf16.msra.mxu0 %v739
    %773 = vmatprep.subr.bf16.mxu0 0
    %774 = vmatpush1.bf16.msra.mxu0 %v740
    %775 = vmatprep.subr.bf16.mxu0 0
    %776 = vmatpush1.bf16.msra.mxu0 %v741
    %777 = vmatprep.subr.bf16.mxu0 0
    %778 = vmatpush1.bf16.msra.mxu0 %v742
    %779 = vmatprep.subr.bf16.mxu0 0
    %780 = vmatpush1.bf16.msra.mxu0 %v743
    %781 = vmatprep.subr.bf16.mxu0 0
    %782 = vmatpush1.bf16.msra.mxu0 %v744
    %783 = vmatprep.subr.bf16.mxu0 0
    %784 = vmatpush1.bf16.msra.mxu0 %v745
    %785 = vmatprep.subr.bf16.mxu0 0
    %786 = vmatpush1.bf16.msra.mxu0 %v746
    %787 = vmatprep.subr.bf16.mxu0 0
    %788 = vmatpush1.bf16.msra.mxu0 %v747
    %789 = vmatprep.subr.bf16.mxu0 0
    %790 = vmatpush1.bf16.msra.mxu0 %v748
    %791 = vmatprep.subr.bf16.mxu0 0
    %792 = vmatpush1.bf16.msra.mxu0 %v749
    %793 = vmatprep.subr.bf16.mxu0 0
    %794 = vmatpush1.bf16.msra.mxu0 %v750
    %795 = vmatprep.subr.bf16.mxu0 0
    %796 = vmatpush1.bf16.msra.mxu0 %v751
    %797 = vmatprep.subr.bf16.mxu0 0
    %798 = vmatpush1.bf16.msra.mxu0 %v752
    %799 = vmatprep.subr.bf16.mxu0 0
    %800 = vmatpush1.bf16.msra.mxu0 %v753
    %801 = vmatprep.subr.bf16.mxu0 0
    %802 = vmatpush1.bf16.msra.mxu0 %v754
    %803 = vmatprep.mubr.bf16.mxu0 %v672
    %804 = vmatmul.mubr.bf16.gmra.mrb[0].mxu0 %v665
    %v805 = vpop.f32.mrb[0].mxu0
    %v806 = vadd.f32 0.0, %v805
    %v807 = vpop.f32.mrb[0].mxu0
    %v808 = vpop.f32.mrb[0].mxu0
    %v809 = vpop.f32.mrb[0].mxu0
    %810 = vdwg.mxu0
    %v811 = vadd.f32 %v614, %v806
    %v812 = vld [vmem:[%s2] sm:$0x1]
    %v814 = vlaneseq
    %v815 = vshrl.u32 %v814, 7
    %v816 = vsub.s32 0, %v815
    %v817 = vrot.slane %v812, %v816
    %v819 = vadd.f32 %v811, %v817
    %vm820 = vcmp.gt.f32.partialorder %v819, 0.0
    %v821 = vmul.f32 %v819, 0.2
    %v822 = vsel %vm820, %v819, %v821
    %v823 = vpack.c.bf16 %v822, %v822
    %v824 = vld [vmem:[%s3] sm:$0xf]
    %v825 = vld [vmem:[%s3 + $0x4] sm:$0xf]
    %v826 = vld [vmem:[%s3 + $0x8] sm:$0xf]
    %v827 = vld [vmem:[%s3 + $0xc] sm:$0xf]
    %s828 = scalar_lea.vmem %s0, 4
    %v829 = vld [vmem:[%s828] sm:$0x3]
    %v832 = vunpack.c.l.s4 1966171168
    %v833 = vunpack.c.0.s8 %v832
    %v834 = vlaneseq
    %v835 = vshrl.u32 %v834, 7
    %v836 = vsub.s32 %v833, %v835
    %v837 = vrot.slane %v829, %v836
    %v838 = vcombine.high %v837, %v837
    %v840 = vunpack.c.l.s4 1966171168
    %v841 = vunpack.c.0.s8 %v840
    %v842 = vlaneseq
    %v843 = vshrl.u32 %v842, 7
    %v844 = vsub.s32 %v841, %v843
    %v845 = vrot.slane %v837, %v844
    %v847 = vunpack.c.l.s4 1966171168
    %v848 = vunpack.c.0.s8 %v847
    %v849 = vlaneseq
    %v850 = vshrl.u32 %v849, 7
    %v851 = vsub.s32 %v848, %v850
    %v852 = vrot.slane %v838, %v851
    %855 = vmatprep.subr.bf16.mxu0 0
    %856 = vmatpush1.bf16.msra.mxu0 %v185
    %857 = vmatprep.subr.bf16.mxu0 0
    %858 = vmatpush1.bf16.msra.mxu0 %v186
    %859 = vmatprep.subr.bf16.mxu0 0
    %860 = vmatpush1.bf16.msra.mxu0 %v187
    %861 = vmatprep.subr.bf16.mxu0 0
    %862 = vmatpush1.bf16.msra.mxu0 %v188
    %863 = vmatprep.subr.bf16.mxu0 0
    %864 = vmatpush1.bf16.msra.mxu0 %v189
    %865 = vmatprep.subr.bf16.mxu0 0
    %866 = vmatpush1.bf16.msra.mxu0 %v190
    %867 = vmatprep.subr.bf16.mxu0 0
    %868 = vmatpush1.bf16.msra.mxu0 %v191
    %869 = vmatprep.subr.bf16.mxu0 0
    %870 = vmatpush1.bf16.msra.mxu0 %v192
    %871 = vmatprep.subr.bf16.mxu0 0
    %872 = vmatpush1.bf16.msra.mxu0 %v193
    %873 = vmatprep.subr.bf16.mxu0 0
    %874 = vmatpush1.bf16.msra.mxu0 %v194
    %875 = vmatprep.subr.bf16.mxu0 0
    %876 = vmatpush1.bf16.msra.mxu0 %v195
    %877 = vmatprep.subr.bf16.mxu0 0
    %878 = vmatpush1.bf16.msra.mxu0 %v196
    %879 = vmatprep.subr.bf16.mxu0 0
    %880 = vmatpush1.bf16.msra.mxu0 %v197
    %881 = vmatprep.subr.bf16.mxu0 0
    %882 = vmatpush1.bf16.msra.mxu0 %v198
    %883 = vmatprep.subr.bf16.mxu0 0
    %884 = vmatpush1.bf16.msra.mxu0 %v199
    %885 = vmatprep.subr.bf16.mxu0 0
    %886 = vmatpush1.bf16.msra.mxu0 %v200
    %887 = vmatprep.mubr.bf16.mxu0 %v852
    %888 = vmatmul.mubr.bf16.gmra.mrb[0].mxu0 %v845
    %v889 = vpop.f32.mrb[0].mxu0
    %v890 = vadd.f32 0.0, %v889
    %v891 = vpop.f32.mrb[0].mxu0
    %v892 = vpop.f32.mrb[0].mxu0
    %v893 = vpop.f32.mrb[0].mxu0
    %894 = vdwg.mxu0
    %895 = vmatprep.subr.bf16.mxu0 0
    %896 = vmatpush1.bf16.msra.mxu0 %v346
    %897 = vmatprep.subr.bf16.mxu0 0
    %898 = vmatpush1.bf16.msra.mxu0 %v347
    %899 = vmatprep.subr.bf16.mxu0 0
    %900 = vmatpush1.bf16.msra.mxu0 %v348
    %901 = vmatprep.subr.bf16.mxu0 0
    %902 = vmatpush1.bf16.msra.mxu0 %v349
    %903 = vmatprep.subr.bf16.mxu0 0
    %904 = vmatpush1.bf16.msra.mxu0 %v350
    %905 = vmatprep.subr.bf16.mxu0 0
    %906 = vmatpush1.bf16.msra.mxu0 %v351
    %907 = vmatprep.subr.bf16.mxu0 0
    %908 = vmatpush1.bf16.msra.mxu0 %v352
    %909 = vmatprep.subr.bf16.mxu0 0
    %910 = vmatpush1.bf16.msra.mxu0 %v353
    %911 = vmatprep.subr.bf16.mxu0 0
    %912 = vmatpush1.bf16.msra.mxu0 %v354
    %913 = vmatprep.subr.bf16.mxu0 0
    %914 = vmatpush1.bf16.msra.mxu0 %v355
    %915 = vmatprep.subr.bf16.mxu0 0
    %916 = vmatpush1.bf16.msra.mxu0 %v356
    %917 = vmatprep.subr.bf16.mxu0 0
    %918 = vmatpush1.bf16.msra.mxu0 %v357
    %919 = vmatprep.subr.bf16.mxu0 0
    %920 = vmatpush1.bf16.msra.mxu0 %v358
    %921 = vmatprep.subr.bf16.mxu0 0
    %922 = vmatpush1.bf16.msra.mxu0 %v359
    %923 = vmatprep.subr.bf16.mxu0 0
    %924 = vmatpush1.bf16.msra.mxu0 %v360
    %925 = vmatprep.subr.bf16.mxu0 0
    %926 = vmatpush1.bf16.msra.mxu0 %v361
    %927 = vmatprep.mubr.bf16.mxu0 %v118
    %928 = vmatmul.mubr.bf16.gmra.mrb[0].mxu0 %v111
    %v929 = vpop.f32.mrb[0].mxu0
    %v930 = vadd.f32 %v890, %v929
    %v931 = vpop.f32.mrb[0].mxu0
    %v932 = vpop.f32.mrb[0].mxu0
    %v933 = vpop.f32.mrb[0].mxu0
    %934 = vdwg.mxu0
    %935 = vmatprep.subr.bf16.mxu0 0
    %936 = vmatpush1.bf16.msra.mxu0 %v542
    %937 = vmatprep.subr.bf16.mxu0 0
    %938 = vmatpush1.bf16.msra.mxu0 %v543
    %939 = vmatprep.subr.bf16.mxu0 0
    %940 = vmatpush1.bf16.msra.mxu0 %v544
    %941 = vmatprep.subr.bf16.mxu0 0
    %942 = vmatpush1.bf16.msra.mxu0 %v545
    %943 = vmatprep.subr.bf16.mxu0 0
    %944 = vmatpush1.bf16.msra.mxu0 %v546
    %945 = vmatprep.subr.bf16.mxu0 0
    %946 = vmatpush1.bf16.msra.mxu0 %v547
    %947 = vmatprep.subr.bf16.mxu0 0
    %948 = vmatpush1.bf16.msra.mxu0 %v548
    %949 = vmatprep.subr.bf16.mxu0 0
    %950 = vmatpush1.bf16.msra.mxu0 %v549
    %951 = vmatprep.subr.bf16.mxu0 0
    %952 = vmatpush1.bf16.msra.mxu0 %v550
    %953 = vmatprep.subr.bf16.mxu0 0
    %954 = vmatpush1.bf16.msra.mxu0 %v551
    %955 = vmatprep.subr.bf16.mxu0 0
    %956 = vmatpush1.bf16.msra.mxu0 %v552
    %957 = vmatprep.subr.bf16.mxu0 0
    %958 = vmatpush1.bf16.msra.mxu0 %v553
    %959 = vmatprep.subr.bf16.mxu0 0
    %960 = vmatpush1.bf16.msra.mxu0 %v554
    %961 = vmatprep.subr.bf16.mxu0 0
    %962 = vmatpush1.bf16.msra.mxu0 %v555
    %963 = vmatprep.subr.bf16.mxu0 0
    %964 = vmatpush1.bf16.msra.mxu0 %v556
    %965 = vmatprep.subr.bf16.mxu0 0
    %966 = vmatpush1.bf16.msra.mxu0 %v557
    %967 = vmatprep.mubr.bf16.mxu0 %v672
    %968 = vmatmul.mubr.bf16.gmra.mrb[0].mxu0 %v665
    %v969 = vpop.f32.mrb[0].mxu0
    %v970 = vadd.f32 0.0, %v969
    %v971 = vpop.f32.mrb[0].mxu0
    %v972 = vpop.f32.mrb[0].mxu0
    %v973 = vpop.f32.mrb[0].mxu0
    %974 = vdwg.mxu0
    %v975 = vadd.f32 %v930, %v970
    %s976 = scalar_lea.vmem %s0, 14
    %v977 = vld [vmem:[%s976] sm:$0x3]
    %v980 = vunpack.c.l.s4 1966171168
    %v981 = vunpack.c.0.s8 %v980
    %v982 = vlaneseq
    %v983 = vshrl.u32 %v982, 7
    %v984 = vsub.s32 %v981, %v983
    %v985 = vrot.slane %v977, %v984
    %v986 = vcombine.high %v985, %v985
    %v988 = vunpack.c.l.s4 1966171168
    %v989 = vunpack.c.0.s8 %v988
    %v990 = vlaneseq
    %v991 = vshrl.u32 %v990, 7
    %v992 = vsub.s32 %v989, %v991
    %v993 = vrot.slane %v985, %v992
    %v995 = vunpack.c.l.s4 1966171168
    %v996 = vunpack.c.0.s8 %v995
    %v997 = vlaneseq
    %v998 = vshrl.u32 %v997, 7
    %v999 = vsub.s32 %v996, %v998
    %v1000 = vrot.slane %v986, %v999
    %1003 = vmatprep.subr.bf16.mxu0 0
    %1004 = vmatpush1.bf16.msra.mxu0 %v739
    %1005 = vmatprep.subr.bf16.mxu0 0
    %1006 = vmatpush1.bf16.msra.mxu0 %v740
    %1007 = vmatprep.subr.bf16.mxu0 0
    %1008 = vmatpush1.bf16.msra.mxu0 %v741
    %1009 = vmatprep.subr.bf16.mxu0 0
    %1010 = vmatpush1.bf16.msra.mxu0 %v742
    %1011 = vmatprep.subr.bf16.mxu0 0
    %1012 = vmatpush1.bf16.msra.mxu0 %v743
    %1013 = vmatprep.subr.bf16.mxu0 0
    %1014 = vmatpush1.bf16.msra.mxu0 %v744
    %1015 = vmatprep.subr.bf16.mxu0 0
    %1016 = vmatpush1.bf16.msra.mxu0 %v745
    %1017 = vmatprep.subr.bf16.mxu0 0
    %1018 = vmatpush1.bf16.msra.mxu0 %v746
    %1019 = vmatprep.subr.bf16.mxu0 0
    %1020 = vmatpush1.bf16.msra.mxu0 %v747
    %1021 = vmatprep.subr.bf16.mxu0 0
    %1022 = vmatpush1.bf16.msra.mxu0 %v748
    %1023 = vmatprep.subr.bf16.mxu0 0
    %1024 = vmatpush1.bf16.msra.mxu0 %v749
    %1025 = vmatprep.subr.bf16.mxu0 0
    %1026 = vmatpush1.bf16.msra.mxu0 %v750
    %1027 = vmatprep.subr.bf16.mxu0 0
    %1028 = vmatpush1.bf16.msra.mxu0 %v751
    %1029 = vmatprep.subr.bf16.mxu0 0
    %1030 = vmatpush1.bf16.msra.mxu0 %v752
    %1031 = vmatprep.subr.bf16.mxu0 0
    %1032 = vmatpush1.bf16.msra.mxu0 %v753
    %1033 = vmatprep.subr.bf16.mxu0 0
    %1034 = vmatpush1.bf16.msra.mxu0 %v754
    %1035 = vmatprep.mubr.bf16.mxu0 %v1000
    %1036 = vmatmul.mubr.bf16.gmra.mrb[0].mxu0 %v993
    %v1037 = vpop.f32.mrb[0].mxu0
    %v1038 = vadd.f32 0.0, %v1037
    %v1039 = vpop.f32.mrb[0].mxu0
    %v1040 = vpop.f32.mrb[0].mxu0
    %v1041 = vpop.f32.mrb[0].mxu0
    %1042 = vdwg.mxu0
    %v1043 = vadd.f32 %v975, %v1038
    %v1044 = vadd.f32 %v1043, %v817
    %vm1045 = vcmp.gt.f32.partialorder %v1044, 0.0
    %v1046 = vmul.f32 %v1044, 0.2
    %v1047 = vsel %vm1045, %v1044, %v1046
    %v1048 = vpack.c.bf16 %v1047, %v1047
    %s1049 = scalar_lea.vmem %s3, 16
    %v1050 = vld [vmem:[%s1049] sm:$0xf]
    %v1051 = vld [vmem:[%s1049 + $0x4] sm:$0xf]
    %v1052 = vld [vmem:[%s1049 + $0x8] sm:$0xf]
    %v1053 = vld [vmem:[%s1049 + $0xc] sm:$0xf]
    %v1058 = vunpack.c.l.b16 %v1050
    %v1059 = vunpack.c.l.b16 %v1051
    %v1060 = vunpack.c.l.b16 %v1052
    %v1061 = vunpack.c.l.b16 %v1053
    %v1062 = vpack.c.b16 %v1059, %v1058
    %v1063 = vpack.c.b16 %v1061, %v1060
    %vm1066 = vcmask 261120
    %v1068 = vsel %vm1066, %v1048, 0
    %1070 = vmatprep.subr.bf16.mxu0 0
    %1071 = vmatpush1.bf16.msra.mxu0 %v1062
    %1072 = vmatprep.subr.bf16.mxu0 0
    %1073 = vmatpush1.bf16.msra.mxu0 %v1063
    %1074 = vmatprep.subr.bf16.mxu0 0
    %1075 = vmatpush1.bf16.msra.mxu0 0
    %1076 = vmatprep.subr.bf16.mxu0 0
    %1077 = vmatpush1.bf16.msra.mxu0 0
    %1078 = vmatprep.subr.bf16.mxu0 0
    %1079 = vmatpush1.bf16.msra.mxu0 0
    %1080 = vmatprep.subr.bf16.mxu0 0
    %1081 = vmatpush1.bf16.msra.mxu0 0
    %1082 = vmatprep.subr.bf16.mxu0 0
    %1083 = vmatpush1.bf16.msra.mxu0 0
    %1084 = vmatprep.subr.bf16.mxu0 0
    %1085 = vmatpush1.bf16.msra.mxu0 0
    %1086 = vmatprep.subr.bf16.mxu0 0
    %1087 = vmatpush1.bf16.msra.mxu0 0
    %1088 = vmatprep.subr.bf16.mxu0 0
    %1089 = vmatpush1.bf16.msra.mxu0 0
    %1090 = vmatprep.subr.bf16.mxu0 0
    %1091 = vmatpush1.bf16.msra.mxu0 0
    %1092 = vmatprep.subr.bf16.mxu0 0
    %1093 = vmatpush1.bf16.msra.mxu0 0
    %1094 = vmatprep.subr.bf16.mxu0 0
    %1095 = vmatpush1.bf16.msra.mxu0 0
    %1096 = vmatprep.subr.bf16.mxu0 0
    %1097 = vmatpush1.bf16.msra.mxu0 0
    %1098 = vmatprep.subr.bf16.mxu0 0
    %1099 = vmatpush1.bf16.msra.mxu0 0
    %1100 = vmatprep.subr.bf16.mxu0 0
    %1101 = vmatpush1.bf16.msra.mxu0 0
    %1102 = vmatprep.mubr.bf16.mxu0 0
    %1103 = vmatmul.mubr.bf16.gmra.mrb[0].mxu0 %v1068
    %v1104 = vpop.f32.mrb[0].mxu0
    %v1105 = vadd.f32 0.0, %v1104
    %v1106 = vpop.f32.mrb[0].mxu0
    %v1107 = vpop.f32.mrb[0].mxu0
    %v1108 = vpop.f32.mrb[0].mxu0
    %1109 = vdwg.mxu0
    %v1114 = vunpack.c.l.b16 %v824
    %v1115 = vunpack.c.l.b16 %v825
    %v1116 = vunpack.c.l.b16 %v826
    %v1117 = vunpack.c.l.b16 %v827
    %v1118 = vpack.c.b16 %v1115, %v1114
    %v1119 = vpack.c.b16 %v1117, %v1116
    %v1123 = vsel %vm1066, %v823, 0
    %1125 = vmatprep.subr.bf16.mxu0 0
    %1126 = vmatpush1.bf16.msra.mxu0 %v1118
    %1127 = vmatprep.subr.bf16.mxu0 0
    %1128 = vmatpush1.bf16.msra.mxu0 %v1119
    %1129 = vmatprep.subr.bf16.mxu0 0
    %1130 = vmatpush1.bf16.msra.mxu0 0
    %1131 = vmatprep.subr.bf16.mxu0 0
    %1132 = vmatpush1.bf16.msra.mxu0 0
    %1133 = vmatprep.subr.bf16.mxu0 0
    %1134 = vmatpush1.bf16.msra.mxu0 0
    %1135 = vmatprep.subr.bf16.mxu0 0
    %1136 = vmatpush1.bf16.msra.mxu0 0
    %1137 = vmatprep.subr.bf16.mxu0 0
    %1138 = vmatpush1.bf16.msra.mxu0 0
    %1139 = vmatprep.subr.bf16.mxu0 0
    %1140 = vmatpush1.bf16.msra.mxu0 0
    %1141 = vmatprep.subr.bf16.mxu0 0
    %1142 = vmatpush1.bf16.msra.mxu0 0
    %1143 = vmatprep.subr.bf16.mxu0 0
    %1144 = vmatpush1.bf16.msra.mxu0 0
    %1145 = vmatprep.subr.bf16.mxu0 0
    %1146 = vmatpush1.bf16.msra.mxu0 0
    %1147 = vmatprep.subr.bf16.mxu0 0
    %1148 = vmatpush1.bf16.msra.mxu0 0
    %1149 = vmatprep.subr.bf16.mxu0 0
    %1150 = vmatpush1.bf16.msra.mxu0 0
    %1151 = vmatprep.subr.bf16.mxu0 0
    %1152 = vmatpush1.bf16.msra.mxu0 0
    %1153 = vmatprep.subr.bf16.mxu0 0
    %1154 = vmatpush1.bf16.msra.mxu0 0
    %1155 = vmatprep.subr.bf16.mxu0 0
    %1156 = vmatpush1.bf16.msra.mxu0 0
    %1157 = vmatprep.mubr.bf16.mxu0 0
    %1158 = vmatmul.mubr.bf16.gmra.mrb[0].mxu0 %v1123
    %v1159 = vpop.f32.mrb[0].mxu0
    %v1160 = vadd.f32 %v1105, %v1159
    %v1161 = vpop.f32.mrb[0].mxu0
    %v1162 = vpop.f32.mrb[0].mxu0
    %v1163 = vpop.f32.mrb[0].mxu0
    %1164 = vdwg.mxu0
    %s1165 = scalar_lea.vmem %s0, 6
    %v1166 = vld [vmem:[%s1165] sm:$0x3]
    %v1169 = vunpack.c.l.s4 1966171168
    %v1170 = vunpack.c.0.s8 %v1169
    %v1171 = vlaneseq
    %v1172 = vshrl.u32 %v1171, 7
    %v1173 = vsub.s32 %v1170, %v1172
    %v1174 = vrot.slane %v1166, %v1173
    %v1175 = vcombine.high %v1174, %v1174
    %v1177 = vunpack.c.l.s4 1966171168
    %v1178 = vunpack.c.0.s8 %v1177
    %v1179 = vlaneseq
    %v1180 = vshrl.u32 %v1179, 7
    %v1181 = vsub.s32 %v1178, %v1180
    %v1182 = vrot.slane %v1174, %v1181
    %v1184 = vunpack.c.l.s4 1966171168
    %v1185 = vunpack.c.0.s8 %v1184
    %v1186 = vlaneseq
    %v1187 = vshrl.u32 %v1186, 7
    %v1188 = vsub.s32 %v1185, %v1187
    %v1189 = vrot.slane %v1175, %v1188
    %1192 = vmatprep.subr.bf16.mxu0 0
    %1193 = vmatpush1.bf16.msra.mxu0 %v185
    %1194 = vmatprep.subr.bf16.mxu0 0
    %1195 = vmatpush1.bf16.msra.mxu0 %v186
    %1196 = vmatprep.subr.bf16.mxu0 0
    %1197 = vmatpush1.bf16.msra.mxu0 %v187
    %1198 = vmatprep.subr.bf16.mxu0 0
    %1199 = vmatpush1.bf16.msra.mxu0 %v188
    %1200 = vmatprep.subr.bf16.mxu0 0
    %1201 = vmatpush1.bf16.msra.mxu0 %v189
    %1202 = vmatprep.subr.bf16.mxu0 0
    %1203 = vmatpush1.bf16.msra.mxu0 %v190
    %1204 = vmatprep.subr.bf16.mxu0 0
    %1205 = vmatpush1.bf16.msra.mxu0 %v191
    %1206 = vmatprep.subr.bf16.mxu0 0
    %1207 = vmatpush1.bf16.msra.mxu0 %v192
    %1208 = vmatprep.subr.bf16.mxu0 0
    %1209 = vmatpush1.bf16.msra.mxu0 %v193
    %1210 = vmatprep.subr.bf16.mxu0 0
    %1211 = vmatpush1.bf16.msra.mxu0 %v194
    %1212 = vmatprep.subr.bf16.mxu0 0
    %1213 = vmatpush1.bf16.msra.mxu0 %v195
    %1214 = vmatprep.subr.bf16.mxu0 0
    %1215 = vmatpush1.bf16.msra.mxu0 %v196
    %1216 = vmatprep.subr.bf16.mxu0 0
    %1217 = vmatpush1.bf16.msra.mxu0 %v197
    %1218 = vmatprep.subr.bf16.mxu0 0
    %1219 = vmatpush1.bf16.msra.mxu0 %v198
    %1220 = vmatprep.subr.bf16.mxu0 0
    %1221 = vmatpush1.bf16.msra.mxu0 %v199
    %1222 = vmatprep.subr.bf16.mxu0 0
    %1223 = vmatpush1.bf16.msra.mxu0 %v200
    %1224 = vmatprep.mubr.bf16.mxu0 %v1189
    %1225 = vmatmul.mubr.bf16.gmra.mrb[0].mxu0 %v1182
    %v1226 = vpop.f32.mrb[0].mxu0
    %v1227 = vadd.f32 0.0, %v1226
    %v1228 = vpop.f32.mrb[0].mxu0
    %v1229 = vpop.f32.mrb[0].mxu0
    %v1230 = vpop.f32.mrb[0].mxu0
    %1231 = vdwg.mxu0
    %1232 = vmatprep.subr.bf16.mxu0 0
    %1233 = vmatpush1.bf16.msra.mxu0 %v346
    %1234 = vmatprep.subr.bf16.mxu0 0
    %1235 = vmatpush1.bf16.msra.mxu0 %v347
    %1236 = vmatprep.subr.bf16.mxu0 0
    %1237 = vmatpush1.bf16.msra.mxu0 %v348
    %1238 = vmatprep.subr.bf16.mxu0 0
    %1239 = vmatpush1.bf16.msra.mxu0 %v349
    %1240 = vmatprep.subr.bf16.mxu0 0
    %1241 = vmatpush1.bf16.msra.mxu0 %v350
    %1242 = vmatprep.subr.bf16.mxu0 0
    %1243 = vmatpush1.bf16.msra.mxu0 %v351
    %1244 = vmatprep.subr.bf16.mxu0 0
    %1245 = vmatpush1.bf16.msra.mxu0 %v352
    %1246 = vmatprep.subr.bf16.mxu0 0
    %1247 = vmatpush1.bf16.msra.mxu0 %v353
    %1248 = vmatprep.subr.bf16.mxu0 0
    %1249 = vmatpush1.bf16.msra.mxu0 %v354
    %1250 = vmatprep.subr.bf16.mxu0 0
    %1251 = vmatpush1.bf16.msra.mxu0 %v355
    %1252 = vmatprep.subr.bf16.mxu0 0
    %1253 = vmatpush1.bf16.msra.mxu0 %v356
    %1254 = vmatprep.subr.bf16.mxu0 0
    %1255 = vmatpush1.bf16.msra.mxu0 %v357
    %1256 = vmatprep.subr.bf16.mxu0 0
    %1257 = vmatpush1.bf16.msra.mxu0 %v358
    %1258 = vmatprep.subr.bf16.mxu0 0
    %1259 = vmatpush1.bf16.msra.mxu0 %v359
    %1260 = vmatprep.subr.bf16.mxu0 0
    %1261 = vmatpush1.bf16.msra.mxu0 %v360
    %1262 = vmatprep.subr.bf16.mxu0 0
    %1263 = vmatpush1.bf16.msra.mxu0 %v361
    %1264 = vmatprep.mubr.bf16.mxu0 %v852
    %1265 = vmatmul.mubr.bf16.gmra.mrb[0].mxu0 %v845
    %v1266 = vpop.f32.mrb[0].mxu0
    %v1267 = vadd.f32 %v1227, %v1266
    %v1268 = vpop.f32.mrb[0].mxu0
    %v1269 = vpop.f32.mrb[0].mxu0
    %v1270 = vpop.f32.mrb[0].mxu0
    %1271 = vdwg.mxu0
    %1272 = vmatprep.subr.bf16.mxu0 0
    %1273 = vmatpush1.bf16.msra.mxu0 %v542
    %1274 = vmatprep.subr.bf16.mxu0 0
    %1275 = vmatpush1.bf16.msra.mxu0 %v543
    %1276 = vmatprep.subr.bf16.mxu0 0
    %1277 = vmatpush1.bf16.msra.mxu0 %v544
    %1278 = vmatprep.subr.bf16.mxu0 0
    %1279 = vmatpush1.bf16.msra.mxu0 %v545
    %1280 = vmatprep.subr.bf16.mxu0 0
    %1281 = vmatpush1.bf16.msra.mxu0 %v546
    %1282 = vmatprep.subr.bf16.mxu0 0
    %1283 = vmatpush1.bf16.msra.mxu0 %v547
    %1284 = vmatprep.subr.bf16.mxu0 0
    %1285 = vmatpush1.bf16.msra.mxu0 %v548
    %1286 = vmatprep.subr.bf16.mxu0 0
    %1287 = vmatpush1.bf16.msra.mxu0 %v549
    %1288 = vmatprep.subr.bf16.mxu0 0
    %1289 = vmatpush1.bf16.msra.mxu0 %v550
    %1290 = vmatprep.subr.bf16.mxu0 0
    %1291 = vmatpush1.bf16.msra.mxu0 %v551
    %1292 = vmatprep.subr.bf16.mxu0 0
    %1293 = vmatpush1.bf16.msra.mxu0 %v552
    %1294 = vmatprep.subr.bf16.mxu0 0
    %1295 = vmatpush1.bf16.msra.mxu0 %v553
    %1296 = vmatprep.subr.bf16.mxu0 0
    %1297 = vmatpush1.bf16.msra.mxu0 %v554
    %1298 = vmatprep.subr.bf16.mxu0 0
    %1299 = vmatpush1.bf16.msra.mxu0 %v555
    %1300 = vmatprep.subr.bf16.mxu0 0
    %1301 = vmatpush1.bf16.msra.mxu0 %v556
    %1302 = vmatprep.subr.bf16.mxu0 0
    %1303 = vmatpush1.bf16.msra.mxu0 %v557
    %1304 = vmatprep.mubr.bf16.mxu0 %v1000
    %1305 = vmatmul.mubr.bf16.gmra.mrb[0].mxu0 %v993
    %v1306 = vpop.f32.mrb[0].mxu0
    %v1307 = vadd.f32 0.0, %v1306
    %v1308 = vpop.f32.mrb[0].mxu0
    %v1309 = vpop.f32.mrb[0].mxu0
    %v1310 = vpop.f32.mrb[0].mxu0
    %1311 = vdwg.mxu0
    %v1312 = vadd.f32 %v1267, %v1307
    %s1313 = scalar_lea.vmem %s0, 16
    %v1314 = vld [vmem:[%s1313] sm:$0x3]
    %v1317 = vunpack.c.l.s4 1966171168
    %v1318 = vunpack.c.0.s8 %v1317
    %v1319 = vlaneseq
    %v1320 = vshrl.u32 %v1319, 7
    %v1321 = vsub.s32 %v1318, %v1320
    %v1322 = vrot.slane %v1314, %v1321
    %v1323 = vcombine.high %v1322, %v1322
    %v1325 = vunpack.c.l.s4 1966171168
    %v1326 = vunpack.c.0.s8 %v1325
    %v1327 = vlaneseq
    %v1328 = vshrl.u32 %v1327, 7
    %v1329 = vsub.s32 %v1326, %v1328
    %v1330 = vrot.slane %v1322, %v1329
    %v1332 = vunpack.c.l.s4 1966171168
    %v1333 = vunpack.c.0.s8 %v1332
    %v1334 = vlaneseq
    %v1335 = vshrl.u32 %v1334, 7
    %v1336 = vsub.s32 %v1333, %v1335
    %v1337 = vrot.slane %v1323, %v1336
    %1340 = vmatprep.subr.bf16.mxu0 0
    %1341 = vmatpush1.bf16.msra.mxu0 %v739
    %1342 = vmatprep.subr.bf16.mxu0 0
    %1343 = vmatpush1.bf16.msra.mxu0 %v740
    %1344 = vmatprep.subr.bf16.mxu0 0
    %1345 = vmatpush1.bf16.msra.mxu0 %v741
    %1346 = vmatprep.subr.bf16.mxu0 0
    %1347 = vmatpush1.bf16.msra.mxu0 %v742
    %1348 = vmatprep.subr.bf16.mxu0 0
    %1349 = vmatpush1.bf16.msra.mxu0 %v743
    %1350 = vmatprep.subr.bf16.mxu0 0
    %1351 = vmatpush1.bf16.msra.mxu0 %v744
    %1352 = vmatprep.subr.bf16.mxu0 0
    %1353 = vmatpush1.bf16.msra.mxu0 %v745
    %1354 = vmatprep.subr.bf16.mxu0 0
    %1355 = vmatpush1.bf16.msra.mxu0 %v746
    %1356 = vmatprep.subr.bf16.mxu0 0
    %1357 = vmatpush1.bf16.msra.mxu0 %v747
    %1358 = vmatprep.subr.bf16.mxu0 0
    %1359 = vmatpush1.bf16.msra.mxu0 %v748
    %1360 = vmatprep.subr.bf16.mxu0 0
    %1361 = vmatpush1.bf16.msra.mxu0 %v749
    %1362 = vmatprep.subr.bf16.mxu0 0
    %1363 = vmatpush1.bf16.msra.mxu0 %v750
    %1364 = vmatprep.subr.bf16.mxu0 0
    %1365 = vmatpush1.bf16.msra.mxu0 %v751
    %1366 = vmatprep.subr.bf16.mxu0 0
    %1367 = vmatpush1.bf16.msra.mxu0 %v752
    %1368 = vmatprep.subr.bf16.mxu0 0
    %1369 = vmatpush1.bf16.msra.mxu0 %v753
    %1370 = vmatprep.subr.bf16.mxu0 0
    %1371 = vmatpush1.bf16.msra.mxu0 %v754
    %1372 = vmatprep.mubr.bf16.mxu0 %v1337
    %1373 = vmatmul.mubr.bf16.gmra.mrb[0].mxu0 %v1330
    %v1374 = vpop.f32.mrb[0].mxu0
    %v1375 = vadd.f32 0.0, %v1374
    %v1376 = vpop.f32.mrb[0].mxu0
    %v1377 = vpop.f32.mrb[0].mxu0
    %v1378 = vpop.f32.mrb[0].mxu0
    %1379 = vdwg.mxu0
    %v1380 = vadd.f32 %v1312, %v1375
    %v1381 = vadd.f32 %v1380, %v817
    %vm1382 = vcmp.gt.f32.partialorder %v1381, 0.0
    %v1383 = vmul.f32 %v1381, 0.2
    %v1384 = vsel %vm1382, %v1381, %v1383
    %v1385 = vpack.c.bf16 %v1384, %v1384
    %s1386 = scalar_lea.vmem %s3, 32
    %v1387 = vld [vmem:[%s1386] sm:$0xf]
    %v1388 = vld [vmem:[%s1386 + $0x4] sm:$0xf]
    %v1389 = vld [vmem:[%s1386 + $0x8] sm:$0xf]
    %v1390 = vld [vmem:[%s1386 + $0xc] sm:$0xf]
    %v1395 = vunpack.c.l.b16 %v1387
    %v1396 = vunpack.c.l.b16 %v1388
    %v1397 = vunpack.c.l.b16 %v1389
    %v1398 = vunpack.c.l.b16 %v1390
    %v1399 = vpack.c.b16 %v1396, %v1395
    %v1400 = vpack.c.b16 %v1398, %v1397
    %v1404 = vsel %vm1066, %v1385, 0
    %1406 = vmatprep.subr.bf16.mxu0 0
    %1407 = vmatpush1.bf16.msra.mxu0 %v1399
    %1408 = vmatprep.subr.bf16.mxu0 0
    %1409 = vmatpush1.bf16.msra.mxu0 %v1400
    %1410 = vmatprep.subr.bf16.mxu0 0
    %1411 = vmatpush1.bf16.msra.mxu0 0
    %1412 = vmatprep.subr.bf16.mxu0 0
    %1413 = vmatpush1.bf16.msra.mxu0 0
    %1414 = vmatprep.subr.bf16.mxu0 0
    %1415 = vmatpush1.bf16.msra.mxu0 0
    %1416 = vmatprep.subr.bf16.mxu0 0
    %1417 = vmatpush1.bf16.msra.mxu0 0
    %1418 = vmatprep.subr.bf16.mxu0 0
    %1419 = vmatpush1.bf16.msra.mxu0 0
    %1420 = vmatprep.subr.bf16.mxu0 0
    %1421 = vmatpush1.bf16.msra.mxu0 0
    %1422 = vmatprep.subr.bf16.mxu0 0
    %1423 = vmatpush1.bf16.msra.mxu0 0
    %1424 = vmatprep.subr.bf16.mxu0 0
    %1425 = vmatpush1.bf16.msra.mxu0 0
    %1426 = vmatprep.subr.bf16.mxu0 0
    %1427 = vmatpush1.bf16.msra.mxu0 0
    %1428 = vmatprep.subr.bf16.mxu0 0
    %1429 = vmatpush1.bf16.msra.mxu0 0
    %1430 = vmatprep.subr.bf16.mxu0 0
    %1431 = vmatpush1.bf16.msra.mxu0 0
    %1432 = vmatprep.subr.bf16.mxu0 0
    %1433 = vmatpush1.bf16.msra.mxu0 0
    %1434 = vmatprep.subr.bf16.mxu0 0
    %1435 = vmatpush1.bf16.msra.mxu0 0
    %1436 = vmatprep.subr.bf16.mxu0 0
    %1437 = vmatpush1.bf16.msra.mxu0 0
    %1438 = vmatprep.mubr.bf16.mxu0 0
    %1439 = vmatmul.mubr.bf16.gmra.mrb[0].mxu0 %v1404
    %v1440 = vpop.f32.mrb[0].mxu0
    %v1441 = vadd.f32 0.0, %v1440
    %v1442 = vpop.f32.mrb[0].mxu0
    %v1443 = vpop.f32.mrb[0].mxu0
    %v1444 = vpop.f32.mrb[0].mxu0
    %1445 = vdwg.mxu0
    %v1446 = vadd.f32 %v1160, %v1441
    %s1447 = scalar_lea.vmem %s0, 8
    %v1448 = vld [vmem:[%s1447] sm:$0x3]
    %v1451 = vunpack.c.l.s4 1966171168
    %v1452 = vunpack.c.0.s8 %v1451
    %v1453 = vlaneseq
    %v1454 = vshrl.u32 %v1453, 7
    %v1455 = vsub.s32 %v1452, %v1454
    %v1456 = vrot.slane %v1448, %v1455
    %v1457 = vcombine.high %v1456, %v1456
    %v1459 = vunpack.c.l.s4 1966171168
    %v1460 = vunpack.c.0.s8 %v1459
    %v1461 = vlaneseq
    %v1462 = vshrl.u32 %v1461, 7
    %v1463 = vsub.s32 %v1460, %v1462
    %v1464 = vrot.slane %v1456, %v1463
    %v1466 = vunpack.c.l.s4 1966171168
    %v1467 = vunpack.c.0.s8 %v1466
    %v1468 = vlaneseq
    %v1469 = vshrl.u32 %v1468, 7
    %v1470 = vsub.s32 %v1467, %v1469
    %v1471 = vrot.slane %v1457, %v1470
    %1474 = vmatprep.subr.bf16.mxu0 0
    %1475 = vmatpush1.bf16.msra.mxu0 %v185
    %1476 = vmatprep.subr.bf16.mxu0 0
    %1477 = vmatpush1.bf16.msra.mxu0 %v186
    %1478 = vmatprep.subr.bf16.mxu0 0
    %1479 = vmatpush1.bf16.msra.mxu0 %v187
    %1480 = vmatprep.subr.bf16.mxu0 0
    %1481 = vmatpush1.bf16.msra.mxu0 %v188
    %1482 = vmatprep.subr.bf16.mxu0 0
    %1483 = vmatpush1.bf16.msra.mxu0 %v189
    %1484 = vmatprep.subr.bf16.mxu0 0
    %1485 = vmatpush1.bf16.msra.mxu0 %v190
    %1486 = vmatprep.subr.bf16.mxu0 0
    %1487 = vmatpush1.bf16.msra.mxu0 %v191
    %1488 = vmatprep.subr.bf16.mxu0 0
    %1489 = vmatpush1.bf16.msra.mxu0 %v192
    %1490 = vmatprep.subr.bf16.mxu0 0
    %1491 = vmatpush1.bf16.msra.mxu0 %v193
    %1492 = vmatprep.subr.bf16.mxu0 0
    %1493 = vmatpush1.bf16.msra.mxu0 %v194
    %1494 = vmatprep.subr.bf16.mxu0 0
    %1495 = vmatpush1.bf16.msra.mxu0 %v195
    %1496 = vmatprep.subr.bf16.mxu0 0
    %1497 = vmatpush1.bf16.msra.mxu0 %v196
    %1498 = vmatprep.subr.bf16.mxu0 0
    %1499 = vmatpush1.bf16.msra.mxu0 %v197
    %1500 = vmatprep.subr.bf16.mxu0 0
    %1501 = vmatpush1.bf16.msra.mxu0 %v198
    %1502 = vmatprep.subr.bf16.mxu0 0
    %1503 = vmatpush1.bf16.msra.mxu0 %v199
    %1504 = vmatprep.subr.bf16.mxu0 0
    %1505 = vmatpush1.bf16.msra.mxu0 %v200
    %1506 = vmatprep.mubr.bf16.mxu0 %v1471
    %1507 = vmatmul.mubr.bf16.gmra.mrb[0].mxu0 %v1464
    %v1508 = vpop.f32.mrb[0].mxu0
    %v1509 = vadd.f32 0.0, %v1508
    %v1510 = vpop.f32.mrb[0].mxu0
    %v1511 = vpop.f32.mrb[0].mxu0
    %v1512 = vpop.f32.mrb[0].mxu0
    %1513 = vdwg.mxu0
    %1514 = vmatprep.subr.bf16.mxu0 0
    %1515 = vmatpush1.bf16.msra.mxu0 %v346
    %1516 = vmatprep.subr.bf16.mxu0 0
    %1517 = vmatpush1.bf16.msra.mxu0 %v347
    %1518 = vmatprep.subr.bf16.mxu0 0
    %1519 = vmatpush1.bf16.msra.mxu0 %v348
    %1520 = vmatprep.subr.bf16.mxu0 0
    %1521 = vmatpush1.bf16.msra.mxu0 %v349
    %1522 = vmatprep.subr.bf16.mxu0 0
    %1523 = vmatpush1.bf16.msra.mxu0 %v350
    %1524 = vmatprep.subr.bf16.mxu0 0
    %1525 = vmatpush1.bf16.msra.mxu0 %v351
    %1526 = vmatprep.subr.bf16.mxu0 0
    %1527 = vmatpush1.bf16.msra.mxu0 %v352
    %1528 = vmatprep.subr.bf16.mxu0 0
    %1529 = vmatpush1.bf16.msra.mxu0 %v353
    %1530 = vmatprep.subr.bf16.mxu0 0
    %1531 = vmatpush1.bf16.msra.mxu0 %v354
    %1532 = vmatprep.subr.bf16.mxu0 0
    %1533 = vmatpush1.bf16.msra.mxu0 %v355
    %1534 = vmatprep.subr.bf16.mxu0 0
    %1535 = vmatpush1.bf16.msra.mxu0 %v356
    %1536 = vmatprep.subr.bf16.mxu0 0
    %1537 = vmatpush1.bf16.msra.mxu0 %v357
    %1538 = vmatprep.subr.bf16.mxu0 0
    %1539 = vmatpush1.bf16.msra.mxu0 %v358
    %1540 = vmatprep.subr.bf16.mxu0 0
    %1541 = vmatpush1.bf16.msra.mxu0 %v359
    %1542 = vmatprep.subr.bf16.mxu0 0
    %1543 = vmatpush1.bf16.msra.mxu0 %v360
    %1544 = vmatprep.subr.bf16.mxu0 0
    %1545 = vmatpush1.bf16.msra.mxu0 %v361
    %1546 = vmatprep.mubr.bf16.mxu0 %v1189
    %1547 = vmatmul.mubr.bf16.gmra.mrb[0].mxu0 %v1182
    %v1548 = vpop.f32.mrb[0].mxu0
    %v1549 = vadd.f32 %v1509, %v1548
    %v1550 = vpop.f32.mrb[0].mxu0
    %v1551 = vpop.f32.mrb[0].mxu0
    %v1552 = vpop.f32.mrb[0].mxu0
    %1553 = vdwg.mxu0
    %1554 = vmatprep.subr.bf16.mxu0 0
    %1555 = vmatpush1.bf16.msra.mxu0 %v542
    %1556 = vmatprep.subr.bf16.mxu0 0
    %1557 = vmatpush1.bf16.msra.mxu0 %v543
    %1558 = vmatprep.subr.bf16.mxu0 0
    %1559 = vmatpush1.bf16.msra.mxu0 %v544
    %1560 = vmatprep.subr.bf16.mxu0 0
    %1561 = vmatpush1.bf16.msra.mxu0 %v545
    %1562 = vmatprep.subr.bf16.mxu0 0
    %1563 = vmatpush1.bf16.msra.mxu0 %v546
    %1564 = vmatprep.subr.bf16.mxu0 0
    %1565 = vmatpush1.bf16.msra.mxu0 %v547
    %1566 = vmatprep.subr.bf16.mxu0 0
    %1567 = vmatpush1.bf16.msra.mxu0 %v548
    %1568 = vmatprep.subr.bf16.mxu0 0
    %1569 = vmatpush1.bf16.msra.mxu0 %v549
    %1570 = vmatprep.subr.bf16.mxu0 0
    %1571 = vmatpush1.bf16.msra.mxu0 %v550
    %1572 = vmatprep.subr.bf16.mxu0 0
    %1573 = vmatpush1.bf16.msra.mxu0 %v551
    %1574 = vmatprep.subr.bf16.mxu0 0
    %1575 = vmatpush1.bf16.msra.mxu0 %v552
    %1576 = vmatprep.subr.bf16.mxu0 0
    %1577 = vmatpush1.bf16.msra.mxu0 %v553
    %1578 = vmatprep.subr.bf16.mxu0 0
    %1579 = vmatpush1.bf16.msra.mxu0 %v554
    %1580 = vmatprep.subr.bf16.mxu0 0
    %1581 = vmatpush1.bf16.msra.mxu0 %v555
    %1582 = vmatprep.subr.bf16.mxu0 0
    %1583 = vmatpush1.bf16.msra.mxu0 %v556
    %1584 = vmatprep.subr.bf16.mxu0 0
    %1585 = vmatpush1.bf16.msra.mxu0 %v557
    %1586 = vmatprep.mubr.bf16.mxu0 %v1337
    %1587 = vmatmul.mubr.bf16.gmra.mrb[0].mxu0 %v1330
    %v1588 = vpop.f32.mrb[0].mxu0
    %v1589 = vadd.f32 0.0, %v1588
    %v1590 = vpop.f32.mrb[0].mxu0
    %v1591 = vpop.f32.mrb[0].mxu0
    %v1592 = vpop.f32.mrb[0].mxu0
    %1593 = vdwg.mxu0
    %v1594 = vadd.f32 %v1549, %v1589
    %s1595 = scalar_lea.vmem %s0, 18
    %v1596 = vld [vmem:[%s1595] sm:$0x3]
    %v1599 = vunpack.c.l.s4 1966171168
    %v1600 = vunpack.c.0.s8 %v1599
    %v1601 = vlaneseq
    %v1602 = vshrl.u32 %v1601, 7
    %v1603 = vsub.s32 %v1600, %v1602
    %v1604 = vrot.slane %v1596, %v1603
    %v1605 = vcombine.high %v1604, %v1604
    %v1607 = vunpack.c.l.s4 1966171168
    %v1608 = vunpack.c.0.s8 %v1607
    %v1609 = vlaneseq
    %v1610 = vshrl.u32 %v1609, 7
    %v1611 = vsub.s32 %v1608, %v1610
    %v1612 = vrot.slane %v1604, %v1611
    %v1614 = vunpack.c.l.s4 1966171168
    %v1615 = vunpack.c.0.s8 %v1614
    %v1616 = vlaneseq
    %v1617 = vshrl.u32 %v1616, 7
    %v1618 = vsub.s32 %v1615, %v1617
    %v1619 = vrot.slane %v1605, %v1618
    %1622 = vmatprep.subr.bf16.mxu0 0
    %1623 = vmatpush1.bf16.msra.mxu0 %v739
    %1624 = vmatprep.subr.bf16.mxu0 0
    %1625 = vmatpush1.bf16.msra.mxu0 %v740
    %1626 = vmatprep.subr.bf16.mxu0 0
    %1627 = vmatpush1.bf16.msra.mxu0 %v741
    %1628 = vmatprep.subr.bf16.mxu0 0
    %1629 = vmatpush1.bf16.msra.mxu0 %v742
    %1630 = vmatprep.subr.bf16.mxu0 0
    %1631 = vmatpush1.bf16.msra.mxu0 %v743
    %1632 = vmatprep.subr.bf16.mxu0 0
    %1633 = vmatpush1.bf16.msra.mxu0 %v744
    %1634 = vmatprep.subr.bf16.mxu0 0
    %1635 = vmatpush1.bf16.msra.mxu0 %v745
    %1636 = vmatprep.subr.bf16.mxu0 0
    %1637 = vmatpush1.bf16.msra.mxu0 %v746
    %1638 = vmatprep.subr.bf16.mxu0 0
    %1639 = vmatpush1.bf16.msra.mxu0 %v747
    %1640 = vmatprep.subr.bf16.mxu0 0
    %1641 = vmatpush1.bf16.msra.mxu0 %v748
    %1642 = vmatprep.subr.bf16.mxu0 0
    %1643 = vmatpush1.bf16.msra.mxu0 %v749
    %1644 = vmatprep.subr.bf16.mxu0 0
    %1645 = vmatpush1.bf16.msra.mxu0 %v750
    %1646 = vmatprep.subr.bf16.mxu0 0
    %1647 = vmatpush1.bf16.msra.mxu0 %v751
    %1648 = vmatprep.subr.bf16.mxu0 0
    %1649 = vmatpush1.bf16.msra.mxu0 %v752
    %1650 = vmatprep.subr.bf16.mxu0 0
    %1651 = vmatpush1.bf16.msra.mxu0 %v753
    %1652 = vmatprep.subr.bf16.mxu0 0
    %1653 = vmatpush1.bf16.msra.mxu0 %v754
    %1654 = vmatprep.mubr.bf16.mxu0 %v1619
    %1655 = vmatmul.mubr.bf16.gmra.mrb[0].mxu0 %v1612
    %v1656 = vpop.f32.mrb[0].mxu0
    %v1657 = vadd.f32 0.0, %v1656
    %v1658 = vpop.f32.mrb[0].mxu0
    %v1659 = vpop.f32.mrb[0].mxu0
    %v1660 = vpop.f32.mrb[0].mxu0
    %1661 = vdwg.mxu0
    %v1662 = vadd.f32 %v1594, %v1657
    %v1663 = vadd.f32 %v1662, %v817
    %vm1664 = vcmp.gt.f32.partialorder %v1663, 0.0
    %v1665 = vmul.f32 %v1663, 0.2
    %v1666 = vsel %vm1664, %v1663, %v1665
    %v1667 = vpack.c.bf16 %v1666, %v1666
    %s1668 = scalar_lea.vmem %s3, 48
    %v1669 = vld [vmem:[%s1668] sm:$0xf]
    %v1670 = vld [vmem:[%s1668 + $0x4] sm:$0xf]
    %v1671 = vld [vmem:[%s1668 + $0x8] sm:$0xf]
    %v1672 = vld [vmem:[%s1668 + $0xc] sm:$0xf]
    %v1677 = vunpack.c.l.b16 %v1669
    %v1678 = vunpack.c.l.b16 %v1670
    %v1679 = vunpack.c.l.b16 %v1671
    %v1680 = vunpack.c.l.b16 %v1672
    %v1681 = vpack.c.b16 %v1678, %v1677
    %v1682 = vpack.c.b16 %v1680, %v1679
    %v1686 = vsel %vm1066, %v1667, 0
    %1688 = vmatprep.subr.bf16.mxu0 0
    %1689 = vmatpush1.bf16.msra.mxu0 %v1681
    %1690 = vmatprep.subr.bf16.mxu0 0
    %1691 = vmatpush1.bf16.msra.mxu0 %v1682
    %1692 = vmatprep.subr.bf16.mxu0 0
    %1693 = vmatpush1.bf16.msra.mxu0 0
    %1694 = vmatprep.subr.bf16.mxu0 0
    %1695 = vmatpush1.bf16.msra.mxu0 0
    %1696 = vmatprep.subr.bf16.mxu0 0
    %1697 = vmatpush1.bf16.msra.mxu0 0
    %1698 = vmatprep.subr.bf16.mxu0 0
    %1699 = vmatpush1.bf16.msra.mxu0 0
    %1700 = vmatprep.subr.bf16.mxu0 0
    %1701 = vmatpush1.bf16.msra.mxu0 0
    %1702 = vmatprep.subr.bf16.mxu0 0
    %1703 = vmatpush1.bf16.msra.mxu0 0
    %1704 = vmatprep.subr.bf16.mxu0 0
    %1705 = vmatpush1.bf16.msra.mxu0 0
    %1706 = vmatprep.subr.bf16.mxu0 0
    %1707 = vmatpush1.bf16.msra.mxu0 0
    %1708 = vmatprep.subr.bf16.mxu0 0
    %1709 = vmatpush1.bf16.msra.mxu0 0
    %1710 = vmatprep.subr.bf16.mxu0 0
    %1711 = vmatpush1.bf16.msra.mxu0 0
    %1712 = vmatprep.subr.bf16.mxu0 0
    %1713 = vmatpush1.bf16.msra.mxu0 0
    %1714 = vmatprep.subr.bf16.mxu0 0
    %1715 = vmatpush1.bf16.msra.mxu0 0
    %1716 = vmatprep.subr.bf16.mxu0 0
    %1717 = vmatpush1.bf16.msra.mxu0 0
    %1718 = vmatprep.subr.bf16.mxu0 0
    %1719 = vmatpush1.bf16.msra.mxu0 0
    %1720 = vmatprep.mubr.bf16.mxu0 0
    %1721 = vmatmul.mubr.bf16.gmra.mrb[0].mxu0 %v1686
    %v1722 = vpop.f32.mrb[0].mxu0
    %v1723 = vadd.f32 0.0, %v1722
    %v1724 = vpop.f32.mrb[0].mxu0
    %v1725 = vpop.f32.mrb[0].mxu0
    %v1726 = vpop.f32.mrb[0].mxu0
    %1727 = vdwg.mxu0
    %v1728 = vadd.f32 %v1446, %v1723
    %1729 = vmatprep.subr.bf16.mxu0 0
    %1730 = vmatpush1.bf16.msra.mxu0 %v185
    %1731 = vmatprep.subr.bf16.mxu0 0
    %1732 = vmatpush1.bf16.msra.mxu0 %v186
    %1733 = vmatprep.subr.bf16.mxu0 0
    %1734 = vmatpush1.bf16.msra.mxu0 %v187
    %1735 = vmatprep.subr.bf16.mxu0 0
    %1736 = vmatpush1.bf16.msra.mxu0 %v188
    %1737 = vmatprep.subr.bf16.mxu0 0
    %1738 = vmatpush1.bf16.msra.mxu0 %v189
    %1739 = vmatprep.subr.bf16.mxu0 0
    %1740 = vmatpush1.bf16.msra.mxu0 %v190
    %1741 = vmatprep.subr.bf16.mxu0 0
    %1742 = vmatpush1.bf16.msra.mxu0 %v191
    %1743 = vmatprep.subr.bf16.mxu0 0
    %1744 = vmatpush1.bf16.msra.mxu0 %v192
    %1745 = vmatprep.subr.bf16.mxu0 0
    %1746 = vmatpush1.bf16.msra.mxu0 %v193
    %1747 = vmatprep.subr.bf16.mxu0 0
    %1748 = vmatpush1.bf16.msra.mxu0 %v194
    %1749 = vmatprep.subr.bf16.mxu0 0
    %1750 = vmatpush1.bf16.msra.mxu0 %v195
    %1751 = vmatprep.subr.bf16.mxu0 0
    %1752 = vmatpush1.bf16.msra.mxu0 %v196
    %1753 = vmatprep.subr.bf16.mxu0 0
    %1754 = vmatpush1.bf16.msra.mxu0 %v197
    %1755 = vmatprep.subr.bf16.mxu0 0
    %1756 = vmatpush1.bf16.msra.mxu0 %v198
    %1757 = vmatprep.subr.bf16.mxu0 0
    %1758 = vmatpush1.bf16.msra.mxu0 %v199
    %1759 = vmatprep.subr.bf16.mxu0 0
    %1760 = vmatpush1.bf16.msra.mxu0 %v200
    %1761 = vmatprep.mubr.bf16.mxu0 %v672
    %1762 = vmatmul.mubr.bf16.gmra.mrb[0].mxu0 %v665
    %v1763 = vpop.f32.mrb[0].mxu0
    %v1764 = vadd.f32 0.0, %v1763
    %v1765 = vpop.f32.mrb[0].mxu0
    %v1766 = vpop.f32.mrb[0].mxu0
    %v1767 = vpop.f32.mrb[0].mxu0
    %1768 = vdwg.mxu0
    %1769 = vmatprep.subr.bf16.mxu0 0
    %1770 = vmatpush1.bf16.msra.mxu0 %v346
    %1771 = vmatprep.subr.bf16.mxu0 0
    %1772 = vmatpush1.bf16.msra.mxu0 %v347
    %1773 = vmatprep.subr.bf16.mxu0 0
    %1774 = vmatpush1.bf16.msra.mxu0 %v348
    %1775 = vmatprep.subr.bf16.mxu0 0
    %1776 = vmatpush1.bf16.msra.mxu0 %v349
    %1777 = vmatprep.subr.bf16.mxu0 0
    %1778 = vmatpush1.bf16.msra.mxu0 %v350
    %1779 = vmatprep.subr.bf16.mxu0 0
    %1780 = vmatpush1.bf16.msra.mxu0 %v351
    %1781 = vmatprep.subr.bf16.mxu0 0
    %1782 = vmatpush1.bf16.msra.mxu0 %v352
    %1783 = vmatprep.subr.bf16.mxu0 0
    %1784 = vmatpush1.bf16.msra.mxu0 %v353
    %1785 = vmatprep.subr.bf16.mxu0 0
    %1786 = vmatpush1.bf16.msra.mxu0 %v354
    %1787 = vmatprep.subr.bf16.mxu0 0
    %1788 = vmatpush1.bf16.msra.mxu0 %v355
    %1789 = vmatprep.subr.bf16.mxu0 0
    %1790 = vmatpush1.bf16.msra.mxu0 %v356
    %1791 = vmatprep.subr.bf16.mxu0 0
    %1792 = vmatpush1.bf16.msra.mxu0 %v357
    %1793 = vmatprep.subr.bf16.mxu0 0
    %1794 = vmatpush1.bf16.msra.mxu0 %v358
    %1795 = vmatprep.subr.bf16.mxu0 0
    %1796 = vmatpush1.bf16.msra.mxu0 %v359
    %1797 = vmatprep.subr.bf16.mxu0 0
    %1798 = vmatpush1.bf16.msra.mxu0 %v360
    %1799 = vmatprep.subr.bf16.mxu0 0
    %1800 = vmatpush1.bf16.msra.mxu0 %v361
    %1801 = vmatprep.mubr.bf16.mxu0 %v475
    %1802 = vmatmul.mubr.bf16.gmra.mrb[0].mxu0 %v468
    %v1803 = vpop.f32.mrb[0].mxu0
    %v1804 = vadd.f32 %v1764, %v1803
    %v1805 = vpop.f32.mrb[0].mxu0
    %v1806 = vpop.f32.mrb[0].mxu0
    %v1807 = vpop.f32.mrb[0].mxu0
    %1808 = vdwg.mxu0
    %s1809 = scalar_lea.vmem %s0, 20
    %v1810 = vld [vmem:[%s1809] sm:$0x3]
    %v1813 = vunpack.c.l.s4 1966171168
    %v1814 = vunpack.c.0.s8 %v1813
    %v1815 = vlaneseq
    %v1816 = vshrl.u32 %v1815, 7
    %v1817 = vsub.s32 %v1814, %v1816
    %v1818 = vrot.slane %v1810, %v1817
    %v1819 = vcombine.high %v1818, %v1818
    %v1821 = vunpack.c.l.s4 1966171168
    %v1822 = vunpack.c.0.s8 %v1821
    %v1823 = vlaneseq
    %v1824 = vshrl.u32 %v1823, 7
    %v1825 = vsub.s32 %v1822, %v1824
    %v1826 = vrot.slane %v1818, %v1825
    %v1828 = vunpack.c.l.s4 1966171168
    %v1829 = vunpack.c.0.s8 %v1828
    %v1830 = vlaneseq
    %v1831 = vshrl.u32 %v1830, 7
    %v1832 = vsub.s32 %v1829, %v1831
    %v1833 = vrot.slane %v1819, %v1832
    %1836 = vmatprep.subr.bf16.mxu0 0
    %1837 = vmatpush1.bf16.msra.mxu0 %v542
    %1838 = vmatprep.subr.bf16.mxu0 0
    %1839 = vmatpush1.bf16.msra.mxu0 %v543
    %1840 = vmatprep.subr.bf16.mxu0 0
    %1841 = vmatpush1.bf16.msra.mxu0 %v544
    %1842 = vmatprep.subr.bf16.mxu0 0
    %1843 = vmatpush1.bf16.msra.mxu0 %v545
    %1844 = vmatprep.subr.bf16.mxu0 0
    %1845 = vmatpush1.bf16.msra.mxu0 %v546
    %1846 = vmatprep.subr.bf16.mxu0 0
    %1847 = vmatpush1.bf16.msra.mxu0 %v547
    %1848 = vmatprep.subr.bf16.mxu0 0
    %1849 = vmatpush1.bf16.msra.mxu0 %v548
    %1850 = vmatprep.subr.bf16.mxu0 0
    %1851 = vmatpush1.bf16.msra.mxu0 %v549
    %1852 = vmatprep.subr.bf16.mxu0 0
    %1853 = vmatpush1.bf16.msra.mxu0 %v550
    %1854 = vmatprep.subr.bf16.mxu0 0
    %1855 = vmatpush1.bf16.msra.mxu0 %v551
    %1856 = vmatprep.subr.bf16.mxu0 0
    %1857 = vmatpush1.bf16.msra.mxu0 %v552
    %1858 = vmatprep.subr.bf16.mxu0 0
    %1859 = vmatpush1.bf16.msra.mxu0 %v553
    %1860 = vmatprep.subr.bf16.mxu0 0
    %1861 = vmatpush1.bf16.msra.mxu0 %v554
    %1862 = vmatprep.subr.bf16.mxu0 0
    %1863 = vmatpush1.bf16.msra.mxu0 %v555
    %1864 = vmatprep.subr.bf16.mxu0 0
    %1865 = vmatpush1.bf16.msra.mxu0 %v556
    %1866 = vmatprep.subr.bf16.mxu0 0
    %1867 = vmatpush1.bf16.msra.mxu0 %v557
    %1868 = vmatprep.mubr.bf16.mxu0 %v1833
    %1869 = vmatmul.mubr.bf16.gmra.mrb[0].mxu0 %v1826
    %v1870 = vpop.f32.mrb[0].mxu0
    %v1871 = vadd.f32 0.0, %v1870
    %v1872 = vpop.f32.mrb[0].mxu0
    %v1873 = vpop.f32.mrb[0].mxu0
    %v1874 = vpop.f32.mrb[0].mxu0
    %1875 = vdwg.mxu0
    %v1876 = vadd.f32 %v1804, %v1871
    %s1877 = scalar_lea.vmem %s0, 22
    %v1878 = vld [vmem:[%s1877] sm:$0x3]
    %v1881 = vunpack.c.l.s4 1966171168
    %v1882 = vunpack.c.0.s8 %v1881
    %v1883 = vlaneseq
    %v1884 = vshrl.u32 %v1883, 7
    %v1885 = vsub.s32 %v1882, %v1884
    %v1886 = vrot.slane %v1878, %v1885
    %v1887 = vcombine.high %v1886, %v1886
    %v1889 = vunpack.c.l.s4 1966171168
    %v1890 = vunpack.c.0.s8 %v1889
    %v1891 = vlaneseq
    %v1892 = vshrl.u32 %v1891, 7
    %v1893 = vsub.s32 %v1890, %v1892
    %v1894 = vrot.slane %v1886, %v1893
    %v1896 = vunpack.c.l.s4 1966171168
    %v1897 = vunpack.c.0.s8 %v1896
    %v1898 = vlaneseq
    %v1899 = vshrl.u32 %v1898, 7
    %v1900 = vsub.s32 %v1897, %v1899
    %v1901 = vrot.slane %v1887, %v1900
    %1904 = vmatprep.subr.bf16.mxu0 0
    %1905 = vmatpush1.bf16.msra.mxu0 %v739
    %1906 = vmatprep.subr.bf16.mxu0 0
    %1907 = vmatpush1.bf16.msra.mxu0 %v740
    %1908 = vmatprep.subr.bf16.mxu0 0
    %1909 = vmatpush1.bf16.msra.mxu0 %v741
    %1910 = vmatprep.subr.bf16.mxu0 0
    %1911 = vmatpush1.bf16.msra.mxu0 %v742
    %1912 = vmatprep.subr.bf16.mxu0 0
    %1913 = vmatpush1.bf16.msra.mxu0 %v743
    %1914 = vmatprep.subr.bf16.mxu0 0
    %1915 = vmatpush1.bf16.msra.mxu0 %v744
    %1916 = vmatprep.subr.bf16.mxu0 0
    %1917 = vmatpush1.bf16.msra.mxu0 %v745
    %1918 = vmatprep.subr.bf16.mxu0 0
    %1919 = vmatpush1.bf16.msra.mxu0 %v746
    %1920 = vmatprep.subr.bf16.mxu0 0
    %1921 = vmatpush1.bf16.msra.mxu0 %v747
    %1922 = vmatprep.subr.bf16.mxu0 0
    %1923 = vmatpush1.bf16.msra.mxu0 %v748
    %1924 = vmatprep.subr.bf16.mxu0 0
    %1925 = vmatpush1.bf16.msra.mxu0 %v749
    %1926 = vmatprep.subr.bf16.mxu0 0
    %1927 = vmatpush1.bf16.msra.mxu0 %v750
    %1928 = vmatprep.subr.bf16.mxu0 0
    %1929 = vmatpush1.bf16.msra.mxu0 %v751
    %1930 = vmatprep.subr.bf16.mxu0 0
    %1931 = vmatpush1.bf16.msra.mxu0 %v752
    %1932 = vmatprep.subr.bf16.mxu0 0
    %1933 = vmatpush1.bf16.msra.mxu0 %v753
    %1934 = vmatprep.subr.bf16.mxu0 0
    %1935 = vmatpush1.bf16.msra.mxu0 %v754
    %1936 = vmatprep.mubr.bf16.mxu0 %v1901
    %1937 = vmatmul.mubr.bf16.gmra.mrb[0].mxu0 %v1894
    %v1938 = vpop.f32.mrb[0].mxu0
    %v1939 = vadd.f32 0.0, %v1938
    %v1940 = vpop.f32.mrb[0].mxu0
    %v1941 = vpop.f32.mrb[0].mxu0
    %v1942 = vpop.f32.mrb[0].mxu0
    %1943 = vdwg.mxu0
    %v1944 = vadd.f32 %v1876, %v1939
    %v1945 = vadd.f32 %v1944, %v817
    %vm1946 = vcmp.gt.f32.partialorder %v1945, 0.0
    %v1947 = vmul.f32 %v1945, 0.2
    %v1948 = vsel %vm1946, %v1945, %v1947
    %v1949 = vpack.c.bf16 %v1948, %v1948
    %s1950 = scalar_lea.vmem %s3, 64
    %v1951 = vld [vmem:[%s1950] sm:$0xf]
    %v1952 = vld [vmem:[%s1950 + $0x4] sm:$0xf]
    %v1953 = vld [vmem:[%s1950 + $0x8] sm:$0xf]
    %v1954 = vld [vmem:[%s1950 + $0xc] sm:$0xf]
    %v1959 = vunpack.c.l.b16 %v1951
    %v1960 = vunpack.c.l.b16 %v1952
    %v1961 = vunpack.c.l.b16 %v1953
    %v1962 = vunpack.c.l.b16 %v1954
    %v1963 = vpack.c.b16 %v1960, %v1959
    %v1964 = vpack.c.b16 %v1962, %v1961
    %v1968 = vsel %vm1066, %v1949, 0
    %1970 = vmatprep.subr.bf16.mxu0 0
    %1971 = vmatpush1.bf16.msra.mxu0 %v1963
    %1972 = vmatprep.subr.bf16.mxu0 0
    %1973 = vmatpush1.bf16.msra.mxu0 %v1964
    %1974 = vmatprep.subr.bf16.mxu0 0
    %1975 = vmatpush1.bf16.msra.mxu0 0
    %1976 = vmatprep.subr.bf16.mxu0 0
    %1977 = vmatpush1.bf16.msra.mxu0 0
    %1978 = vmatprep.subr.bf16.mxu0 0
    %1979 = vmatpush1.bf16.msra.mxu0 0
    %1980 = vmatprep.subr.bf16.mxu0 0
    %1981 = vmatpush1.bf16.msra.mxu0 0
    %1982 = vmatprep.subr.bf16.mxu0 0
    %1983 = vmatpush1.bf16.msra.mxu0 0
    %1984 = vmatprep.subr.bf16.mxu0 0
    %1985 = vmatpush1.bf16.msra.mxu0 0
    %1986 = vmatprep.subr.bf16.mxu0 0
    %1987 = vmatpush1.bf16.msra.mxu0 0
    %1988 = vmatprep.subr.bf16.mxu0 0
    %1989 = vmatpush1.bf16.msra.mxu0 0
    %1990 = vmatprep.subr.bf16.mxu0 0
    %1991 = vmatpush1.bf16.msra.mxu0 0
    %1992 = vmatprep.subr.bf16.mxu0 0
    %1993 = vmatpush1.bf16.msra.mxu0 0
    %1994 = vmatprep.subr.bf16.mxu0 0
    %1995 = vmatpush1.bf16.msra.mxu0 0
    %1996 = vmatprep.subr.bf16.mxu0 0
    %1997 = vmatpush1.bf16.msra.mxu0 0
    %1998 = vmatprep.subr.bf16.mxu0 0
    %1999 = vmatpush1.bf16.msra.mxu0 0
    %2000 = vmatprep.subr.bf16.mxu0 0
    %2001 = vmatpush1.bf16.msra.mxu0 0
    %2002 = vmatprep.mubr.bf16.mxu0 0
    %2003 = vmatmul.mubr.bf16.gmra.mrb[0].mxu0 %v1968
    %v2004 = vpop.f32.mrb[0].mxu0
    %v2005 = vadd.f32 0.0, %v2004
    %v2006 = vpop.f32.mrb[0].mxu0
    %v2007 = vpop.f32.mrb[0].mxu0
    %v2008 = vpop.f32.mrb[0].mxu0
    %2009 = vdwg.mxu0
    %v2010 = vadd.f32 %v1728, %v2005
    %2011 = vmatprep.subr.bf16.mxu0 0
    %2012 = vmatpush1.bf16.msra.mxu0 %v185
    %2013 = vmatprep.subr.bf16.mxu0 0
    %2014 = vmatpush1.bf16.msra.mxu0 %v186
    %2015 = vmatprep.subr.bf16.mxu0 0
    %2016 = vmatpush1.bf16.msra.mxu0 %v187
    %2017 = vmatprep.subr.bf16.mxu0 0
    %2018 = vmatpush1.bf16.msra.mxu0 %v188
    %2019 = vmatprep.subr.bf16.mxu0 0
    %2020 = vmatpush1.bf16.msra.mxu0 %v189
    %2021 = vmatprep.subr.bf16.mxu0 0
    %2022 = vmatpush1.bf16.msra.mxu0 %v190
    %2023 = vmatprep.subr.bf16.mxu0 0
    %2024 = vmatpush1.bf16.msra.mxu0 %v191
    %2025 = vmatprep.subr.bf16.mxu0 0
    %2026 = vmatpush1.bf16.msra.mxu0 %v192
    %2027 = vmatprep.subr.bf16.mxu0 0
    %2028 = vmatpush1.bf16.msra.mxu0 %v193
    %2029 = vmatprep.subr.bf16.mxu0 0
    %2030 = vmatpush1.bf16.msra.mxu0 %v194
    %2031 = vmatprep.subr.bf16.mxu0 0
    %2032 = vmatpush1.bf16.msra.mxu0 %v195
    %2033 = vmatprep.subr.bf16.mxu0 0
    %2034 = vmatpush1.bf16.msra.mxu0 %v196
    %2035 = vmatprep.subr.bf16.mxu0 0
    %2036 = vmatpush1.bf16.msra.mxu0 %v197
    %2037 = vmatprep.subr.bf16.mxu0 0
    %2038 = vmatpush1.bf16.msra.mxu0 %v198
    %2039 = vmatprep.subr.bf16.mxu0 0
    %2040 = vmatpush1.bf16.msra.mxu0 %v199
    %2041 = vmatprep.subr.bf16.mxu0 0
    %2042 = vmatpush1.bf16.msra.mxu0 %v200
    %2043 = vmatprep.mubr.bf16.mxu0 %v1000
    %2044 = vmatmul.mubr.bf16.gmra.mrb[0].mxu0 %v993
    %v2045 = vpop.f32.mrb[0].mxu0
    %v2046 = vadd.f32 0.0, %v2045
    %v2047 = vpop.f32.mrb[0].mxu0
    %v2048 = vpop.f32.mrb[0].mxu0
    %v2049 = vpop.f32.mrb[0].mxu0
    %2050 = vdwg.mxu0
    %2051 = vmatprep.subr.bf16.mxu0 0
    %2052 = vmatpush1.bf16.msra.mxu0 %v346
    %2053 = vmatprep.subr.bf16.mxu0 0
    %2054 = vmatpush1.bf16.msra.mxu0 %v347
    %2055 = vmatprep.subr.bf16.mxu0 0
    %2056 = vmatpush1.bf16.msra.mxu0 %v348
    %2057 = vmatprep.subr.bf16.mxu0 0
    %2058 = vmatpush1.bf16.msra.mxu0 %v349
    %2059 = vmatprep.subr.bf16.mxu0 0
    %2060 = vmatpush1.bf16.msra.mxu0 %v350
    %2061 = vmatprep.subr.bf16.mxu0 0
    %2062 = vmatpush1.bf16.msra.mxu0 %v351
    %2063 = vmatprep.subr.bf16.mxu0 0
    %2064 = vmatpush1.bf16.msra.mxu0 %v352
    %2065 = vmatprep.subr.bf16.mxu0 0
    %2066 = vmatpush1.bf16.msra.mxu0 %v353
    %2067 = vmatprep.subr.bf16.mxu0 0
    %2068 = vmatpush1.bf16.msra.mxu0 %v354
    %2069 = vmatprep.subr.bf16.mxu0 0
    %2070 = vmatpush1.bf16.msra.mxu0 %v355
    %2071 = vmatprep.subr.bf16.mxu0 0
    %2072 = vmatpush1.bf16.msra.mxu0 %v356
    %2073 = vmatprep.subr.bf16.mxu0 0
    %2074 = vmatpush1.bf16.msra.mxu0 %v357
    %2075 = vmatprep.subr.bf16.mxu0 0
    %2076 = vmatpush1.bf16.msra.mxu0 %v358
    %2077 = vmatprep.subr.bf16.mxu0 0
    %2078 = vmatpush1.bf16.msra.mxu0 %v359
    %2079 = vmatprep.subr.bf16.mxu0 0
    %2080 = vmatpush1.bf16.msra.mxu0 %v360
    %2081 = vmatprep.subr.bf16.mxu0 0
    %2082 = vmatpush1.bf16.msra.mxu0 %v361
    %2083 = vmatprep.mubr.bf16.mxu0 %v672
    %2084 = vmatmul.mubr.bf16.gmra.mrb[0].mxu0 %v665
    %v2085 = vpop.f32.mrb[0].mxu0
    %v2086 = vadd.f32 %v2046, %v2085
    %v2087 = vpop.f32.mrb[0].mxu0
    %v2088 = vpop.f32.mrb[0].mxu0
    %v2089 = vpop.f32.mrb[0].mxu0
    %2090 = vdwg.mxu0
    %2091 = vmatprep.subr.bf16.mxu0 0
    %2092 = vmatpush1.bf16.msra.mxu0 %v542
    %2093 = vmatprep.subr.bf16.mxu0 0
    %2094 = vmatpush1.bf16.msra.mxu0 %v543
    %2095 = vmatprep.subr.bf16.mxu0 0
    %2096 = vmatpush1.bf16.msra.mxu0 %v544
    %2097 = vmatprep.subr.bf16.mxu0 0
    %2098 = vmatpush1.bf16.msra.mxu0 %v545
    %2099 = vmatprep.subr.bf16.mxu0 0
    %2100 = vmatpush1.bf16.msra.mxu0 %v546
    %2101 = vmatprep.subr.bf16.mxu0 0
    %2102 = vmatpush1.bf16.msra.mxu0 %v547
    %2103 = vmatprep.subr.bf16.mxu0 0
    %2104 = vmatpush1.bf16.msra.mxu0 %v548
    %2105 = vmatprep.subr.bf16.mxu0 0
    %2106 = vmatpush1.bf16.msra.mxu0 %v549
    %2107 = vmatprep.subr.bf16.mxu0 0
    %2108 = vmatpush1.bf16.msra.mxu0 %v550
    %2109 = vmatprep.subr.bf16.mxu0 0
    %2110 = vmatpush1.bf16.msra.mxu0 %v551
    %2111 = vmatprep.subr.bf16.mxu0 0
    %2112 = vmatpush1.bf16.msra.mxu0 %v552
    %2113 = vmatprep.subr.bf16.mxu0 0
    %2114 = vmatpush1.bf16.msra.mxu0 %v553
    %2115 = vmatprep.subr.bf16.mxu0 0
    %2116 = vmatpush1.bf16.msra.mxu0 %v554
    %2117 = vmatprep.subr.bf16.mxu0 0
    %2118 = vmatpush1.bf16.msra.mxu0 %v555
    %2119 = vmatprep.subr.bf16.mxu0 0
    %2120 = vmatpush1.bf16.msra.mxu0 %v556
    %2121 = vmatprep.subr.bf16.mxu0 0
    %2122 = vmatpush1.bf16.msra.mxu0 %v557
    %2123 = vmatprep.mubr.bf16.mxu0 %v1901
    %2124 = vmatmul.mubr.bf16.gmra.mrb[0].mxu0 %v1894
    %v2125 = vpop.f32.mrb[0].mxu0
    %v2126 = vadd.f32 0.0, %v2125
    %v2127 = vpop.f32.mrb[0].mxu0
    %v2128 = vpop.f32.mrb[0].mxu0
    %v2129 = vpop.f32.mrb[0].mxu0
    %2130 = vdwg.mxu0
    %v2131 = vadd.f32 %v2086, %v2126
    %s2132 = scalar_lea.vmem %s0, 24
    %v2133 = vld [vmem:[%s2132] sm:$0x3]
    %v2136 = vunpack.c.l.s4 1966171168
    %v2137 = vunpack.c.0.s8 %v2136
    %v2138 = vlaneseq
    %v2139 = vshrl.u32 %v2138, 7
    %v2140 = vsub.s32 %v2137, %v2139
    %v2141 = vrot.slane %v2133, %v2140
    %v2142 = vcombine.high %v2141, %v2141
    %v2144 = vunpack.c.l.s4 1966171168
    %v2145 = vunpack.c.0.s8 %v2144
    %v2146 = vlaneseq
    %v2147 = vshrl.u32 %v2146, 7
    %v2148 = vsub.s32 %v2145, %v2147
    %v2149 = vrot.slane %v2141, %v2148
    %v2151 = vunpack.c.l.s4 1966171168
    %v2152 = vunpack.c.0.s8 %v2151
    %v2153 = vlaneseq
    %v2154 = vshrl.u32 %v2153, 7
    %v2155 = vsub.s32 %v2152, %v2154
    %v2156 = vrot.slane %v2142, %v2155
    %2159 = vmatprep.subr.bf16.mxu0 0
    %2160 = vmatpush1.bf16.msra.mxu0 %v739
    %2161 = vmatprep.subr.bf16.mxu0 0
    %2162 = vmatpush1.bf16.msra.mxu0 %v740
    %2163 = vmatprep.subr.bf16.mxu0 0
    %2164 = vmatpush1.bf16.msra.mxu0 %v741
    %2165 = vmatprep.subr.bf16.mxu0 0
    %2166 = vmatpush1.bf16.msra.mxu0 %v742
    %2167 = vmatprep.subr.bf16.mxu0 0
    %2168 = vmatpush1.bf16.msra.mxu0 %v743
    %2169 = vmatprep.subr.bf16.mxu0 0
    %2170 = vmatpush1.bf16.msra.mxu0 %v744
    %2171 = vmatprep.subr.bf16.mxu0 0
    %2172 = vmatpush1.bf16.msra.mxu0 %v745
    %2173 = vmatprep.subr.bf16.mxu0 0
    %2174 = vmatpush1.bf16.msra.mxu0 %v746
    %2175 = vmatprep.subr.bf16.mxu0 0
    %2176 = vmatpush1.bf16.msra.mxu0 %v747
    %2177 = vmatprep.subr.bf16.mxu0 0
    %2178 = vmatpush1.bf16.msra.mxu0 %v748
    %2179 = vmatprep.subr.bf16.mxu0 0
    %2180 = vmatpush1.bf16.msra.mxu0 %v749
    %2181 = vmatprep.subr.bf16.mxu0 0
    %2182 = vmatpush1.bf16.msra.mxu0 %v750
    %2183 = vmatprep.subr.bf16.mxu0 0
    %2184 = vmatpush1.bf16.msra.mxu0 %v751
    %2185 = vmatprep.subr.bf16.mxu0 0
    %2186 = vmatpush1.bf16.msra.mxu0 %v752
    %2187 = vmatprep.subr.bf16.mxu0 0
    %2188 = vmatpush1.bf16.msra.mxu0 %v753
    %2189 = vmatprep.subr.bf16.mxu0 0
    %2190 = vmatpush1.bf16.msra.mxu0 %v754
    %2191 = vmatprep.mubr.bf16.mxu0 %v2156
    %2192 = vmatmul.mubr.bf16.gmra.mrb[0].mxu0 %v2149
    %v2193 = vpop.f32.mrb[0].mxu0
    %v2194 = vadd.f32 0.0, %v2193
    %v2195 = vpop.f32.mrb[0].mxu0
    %v2196 = vpop.f32.mrb[0].mxu0
    %v2197 = vpop.f32.mrb[0].mxu0
    %2198 = vdwg.mxu0
    %v2199 = vadd.f32 %v2131, %v2194
    %v2200 = vadd.f32 %v2199, %v817
    %vm2201 = vcmp.gt.f32.partialorder %v2200, 0.0
    %v2202 = vmul.f32 %v2200, 0.2
    %v2203 = vsel %vm2201, %v2200, %v2202
    %v2204 = vpack.c.bf16 %v2203, %v2203
    %s2205 = scalar_lea.vmem %s3, 80
    %v2206 = vld [vmem:[%s2205] sm:$0xf]
    %v2207 = vld [vmem:[%s2205 + $0x4] sm:$0xf]
    %v2208 = vld [vmem:[%s2205 + $0x8] sm:$0xf]
    %v2209 = vld [vmem:[%s2205 + $0xc] sm:$0xf]
    %v2214 = vunpack.c.l.b16 %v2206
    %v2215 = vunpack.c.l.b16 %v2207
    %v2216 = vunpack.c.l.b16 %v2208
    %v2217 = vunpack.c.l.b16 %v2209
    %v2218 = vpack.c.b16 %v2215, %v2214
    %v2219 = vpack.c.b16 %v2217, %v2216
    %v2223 = vsel %vm1066, %v2204, 0
    %2225 = vmatprep.subr.bf16.mxu0 0
    %2226 = vmatpush1.bf16.msra.mxu0 %v2218
    %2227 = vmatprep.subr.bf16.mxu0 0
    %2228 = vmatpush1.bf16.msra.mxu0 %v2219
    %2229 = vmatprep.subr.bf16.mxu0 0
    %2230 = vmatpush1.bf16.msra.mxu0 0
    %2231 = vmatprep.subr.bf16.mxu0 0
    %2232 = vmatpush1.bf16.msra.mxu0 0
    %2233 = vmatprep.subr.bf16.mxu0 0
    %2234 = vmatpush1.bf16.msra.mxu0 0
    %2235 = vmatprep.subr.bf16.mxu0 0
    %2236 = vmatpush1.bf16.msra.mxu0 0
    %2237 = vmatprep.subr.bf16.mxu0 0
    %2238 = vmatpush1.bf16.msra.mxu0 0
    %2239 = vmatprep.subr.bf16.mxu0 0
    %2240 = vmatpush1.bf16.msra.mxu0 0
    %2241 = vmatprep.subr.bf16.mxu0 0
    %2242 = vmatpush1.bf16.msra.mxu0 0
    %2243 = vmatprep.subr.bf16.mxu0 0
    %2244 = vmatpush1.bf16.msra.mxu0 0
    %2245 = vmatprep.subr.bf16.mxu0 0
    %2246 = vmatpush1.bf16.msra.mxu0 0
    %2247 = vmatprep.subr.bf16.mxu0 0
    %2248 = vmatpush1.bf16.msra.mxu0 0
    %2249 = vmatprep.subr.bf16.mxu0 0
    %2250 = vmatpush1.bf16.msra.mxu0 0
    %2251 = vmatprep.subr.bf16.mxu0 0
    %2252 = vmatpush1.bf16.msra.mxu0 0
    %2253 = vmatprep.subr.bf16.mxu0 0
    %2254 = vmatpush1.bf16.msra.mxu0 0
    %2255 = vmatprep.subr.bf16.mxu0 0
    %2256 = vmatpush1.bf16.msra.mxu0 0
    %2257 = vmatprep.mubr.bf16.mxu0 0
    %2258 = vmatmul.mubr.bf16.gmra.mrb[0].mxu0 %v2223
    %v2259 = vpop.f32.mrb[0].mxu0
    %v2260 = vadd.f32 0.0, %v2259
    %v2261 = vpop.f32.mrb[0].mxu0
    %v2262 = vpop.f32.mrb[0].mxu0
    %v2263 = vpop.f32.mrb[0].mxu0
    %2264 = vdwg.mxu0
    %v2265 = vadd.f32 %v2010, %v2260
    %2266 = vmatprep.subr.bf16.mxu0 0
    %2267 = vmatpush1.bf16.msra.mxu0 %v185
    %2268 = vmatprep.subr.bf16.mxu0 0
    %2269 = vmatpush1.bf16.msra.mxu0 %v186
    %2270 = vmatprep.subr.bf16.mxu0 0
    %2271 = vmatpush1.bf16.msra.mxu0 %v187
    %2272 = vmatprep.subr.bf16.mxu0 0
    %2273 = vmatpush1.bf16.msra.mxu0 %v188
    %2274 = vmatprep.subr.bf16.mxu0 0
    %2275 = vmatpush1.bf16.msra.mxu0 %v189
    %2276 = vmatprep.subr.bf16.mxu0 0
    %2277 = vmatpush1.bf16.msra.mxu0 %v190
    %2278 = vmatprep.subr.bf16.mxu0 0
    %2279 = vmatpush1.bf16.msra.mxu0 %v191
    %2280 = vmatprep.subr.bf16.mxu0 0
    %2281 = vmatpush1.bf16.msra.mxu0 %v192
    %2282 = vmatprep.subr.bf16.mxu0 0
    %2283 = vmatpush1.bf16.msra.mxu0 %v193
    %2284 = vmatprep.subr.bf16.mxu0 0
    %2285 = vmatpush1.bf16.msra.mxu0 %v194
    %2286 = vmatprep.subr.bf16.mxu0 0
    %2287 = vmatpush1.bf16.msra.mxu0 %v195
    %2288 = vmatprep.subr.bf16.mxu0 0
    %2289 = vmatpush1.bf16.msra.mxu0 %v196
    %2290 = vmatprep.subr.bf16.mxu0 0
    %2291 = vmatpush1.bf16.msra.mxu0 %v197
    %2292 = vmatprep.subr.bf16.mxu0 0
    %2293 = vmatpush1.bf16.msra.mxu0 %v198
    %2294 = vmatprep.subr.bf16.mxu0 0
    %2295 = vmatpush1.bf16.msra.mxu0 %v199
    %2296 = vmatprep.subr.bf16.mxu0 0
    %2297 = vmatpush1.bf16.msra.mxu0 %v200
    %2298 = vmatprep.mubr.bf16.mxu0 %v1337
    %2299 = vmatmul.mubr.bf16.gmra.mrb[0].mxu0 %v1330
    %v2300 = vpop.f32.mrb[0].mxu0
    %v2301 = vadd.f32 0.0, %v2300
    %v2302 = vpop.f32.mrb[0].mxu0
    %v2303 = vpop.f32.mrb[0].mxu0
    %v2304 = vpop.f32.mrb[0].mxu0
    %2305 = vdwg.mxu0
    %2306 = vmatprep.subr.bf16.mxu0 0
    %2307 = vmatpush1.bf16.msra.mxu0 %v346
    %2308 = vmatprep.subr.bf16.mxu0 0
    %2309 = vmatpush1.bf16.msra.mxu0 %v347
    %2310 = vmatprep.subr.bf16.mxu0 0
    %2311 = vmatpush1.bf16.msra.mxu0 %v348
    %2312 = vmatprep.subr.bf16.mxu0 0
    %2313 = vmatpush1.bf16.msra.mxu0 %v349
    %2314 = vmatprep.subr.bf16.mxu0 0
    %2315 = vmatpush1.bf16.msra.mxu0 %v350
    %2316 = vmatprep.subr.bf16.mxu0 0
    %2317 = vmatpush1.bf16.msra.mxu0 %v351
    %2318 = vmatprep.subr.bf16.mxu0 0
    %2319 = vmatpush1.bf16.msra.mxu0 %v352
    %2320 = vmatprep.subr.bf16.mxu0 0
    %2321 = vmatpush1.bf16.msra.mxu0 %v353
    %2322 = vmatprep.subr.bf16.mxu0 0
    %2323 = vmatpush1.bf16.msra.mxu0 %v354
    %2324 = vmatprep.subr.bf16.mxu0 0
    %2325 = vmatpush1.bf16.msra.mxu0 %v355
    %2326 = vmatprep.subr.bf16.mxu0 0
    %2327 = vmatpush1.bf16.msra.mxu0 %v356
    %2328 = vmatprep.subr.bf16.mxu0 0
    %2329 = vmatpush1.bf16.msra.mxu0 %v357
    %2330 = vmatprep.subr.bf16.mxu0 0
    %2331 = vmatpush1.bf16.msra.mxu0 %v358
    %2332 = vmatprep.subr.bf16.mxu0 0
    %2333 = vmatpush1.bf16.msra.mxu0 %v359
    %2334 = vmatprep.subr.bf16.mxu0 0
    %2335 = vmatpush1.bf16.msra.mxu0 %v360
    %2336 = vmatprep.subr.bf16.mxu0 0
    %2337 = vmatpush1.bf16.msra.mxu0 %v361
    %2338 = vmatprep.mubr.bf16.mxu0 %v1000
    %2339 = vmatmul.mubr.bf16.gmra.mrb[0].mxu0 %v993
    %v2340 = vpop.f32.mrb[0].mxu0
    %v2341 = vadd.f32 %v2301, %v2340
    %v2342 = vpop.f32.mrb[0].mxu0
    %v2343 = vpop.f32.mrb[0].mxu0
    %v2344 = vpop.f32.mrb[0].mxu0
    %2345 = vdwg.mxu0
    %2346 = vmatprep.subr.bf16.mxu0 0
    %2347 = vmatpush1.bf16.msra.mxu0 %v542
    %2348 = vmatprep.subr.bf16.mxu0 0
    %2349 = vmatpush1.bf16.msra.mxu0 %v543
    %2350 = vmatprep.subr.bf16.mxu0 0
    %2351 = vmatpush1.bf16.msra.mxu0 %v544
    %2352 = vmatprep.subr.bf16.mxu0 0
    %2353 = vmatpush1.bf16.msra.mxu0 %v545
    %2354 = vmatprep.subr.bf16.mxu0 0
    %2355 = vmatpush1.bf16.msra.mxu0 %v546
    %2356 = vmatprep.subr.bf16.mxu0 0
    %2357 = vmatpush1.bf16.msra.mxu0 %v547
    %2358 = vmatprep.subr.bf16.mxu0 0
    %2359 = vmatpush1.bf16.msra.mxu0 %v548
    %2360 = vmatprep.subr.bf16.mxu0 0
    %2361 = vmatpush1.bf16.msra.mxu0 %v549
    %2362 = vmatprep.subr.bf16.mxu0 0
    %2363 = vmatpush1.bf16.msra.mxu0 %v550
    %2364 = vmatprep.subr.bf16.mxu0 0
    %2365 = vmatpush1.bf16.msra.mxu0 %v551
    %2366 = vmatprep.subr.bf16.mxu0 0
    %2367 = vmatpush1.bf16.msra.mxu0 %v552
    %2368 = vmatprep.subr.bf16.mxu0 0
    %2369 = vmatpush1.bf16.msra.mxu0 %v553
    %2370 = vmatprep.subr.bf16.mxu0 0
    %2371 = vmatpush1.bf16.msra.mxu0 %v554
    %2372 = vmatprep.subr.bf16.mxu0 0
    %2373 = vmatpush1.bf16.msra.mxu0 %v555
    %2374 = vmatprep.subr.bf16.mxu0 0
    %2375 = vmatpush1.bf16.msra.mxu0 %v556
    %2376 = vmatprep.subr.bf16.mxu0 0
    %2377 = vmatpush1.bf16.msra.mxu0 %v557
    %2378 = vmatprep.mubr.bf16.mxu0 %v2156
    %2379 = vmatmul.mubr.bf16.gmra.mrb[0].mxu0 %v2149
    %v2380 = vpop.f32.mrb[0].mxu0
    %v2381 = vadd.f32 0.0, %v2380
    %v2382 = vpop.f32.mrb[0].mxu0
    %v2383 = vpop.f32.mrb[0].mxu0
    %v2384 = vpop.f32.mrb[0].mxu0
    %2385 = vdwg.mxu0
    %v2386 = vadd.f32 %v2341, %v2381
    %s2387 = scalar_lea.vmem %s0, 26
    %v2388 = vld [vmem:[%s2387] sm:$0x3]
    %v2391 = vunpack.c.l.s4 1966171168
    %v2392 = vunpack.c.0.s8 %v2391
    %v2393 = vlaneseq
    %v2394 = vshrl.u32 %v2393, 7
    %v2395 = vsub.s32 %v2392, %v2394
    %v2396 = vrot.slane %v2388, %v2395
    %v2397 = vcombine.high %v2396, %v2396
    %v2399 = vunpack.c.l.s4 1966171168
    %v2400 = vunpack.c.0.s8 %v2399
    %v2401 = vlaneseq
    %v2402 = vshrl.u32 %v2401, 7
    %v2403 = vsub.s32 %v2400, %v2402
    %v2404 = vrot.slane %v2396, %v2403
    %v2406 = vunpack.c.l.s4 1966171168
    %v2407 = vunpack.c.0.s8 %v2406
    %v2408 = vlaneseq
    %v2409 = vshrl.u32 %v2408, 7
    %v2410 = vsub.s32 %v2407, %v2409
    %v2411 = vrot.slane %v2397, %v2410
    %2414 = vmatprep.subr.bf16.mxu0 0
    %2415 = vmatpush1.bf16.msra.mxu0 %v739
    %2416 = vmatprep.subr.bf16.mxu0 0
    %2417 = vmatpush1.bf16.msra.mxu0 %v740
    %2418 = vmatprep.subr.bf16.mxu0 0
    %2419 = vmatpush1.bf16.msra.mxu0 %v741
    %2420 = vmatprep.subr.bf16.mxu0 0
    %2421 = vmatpush1.bf16.msra.mxu0 %v742
    %2422 = vmatprep.subr.bf16.mxu0 0
    %2423 = vmatpush1.bf16.msra.mxu0 %v743
    %2424 = vmatprep.subr.bf16.mxu0 0
    %2425 = vmatpush1.bf16.msra.mxu0 %v744
    %2426 = vmatprep.subr.bf16.mxu0 0
    %2427 = vmatpush1.bf16.msra.mxu0 %v745
    %2428 = vmatprep.subr.bf16.mxu0 0
    %2429 = vmatpush1.bf16.msra.mxu0 %v746
    %2430 = vmatprep.subr.bf16.mxu0 0
    %2431 = vmatpush1.bf16.msra.mxu0 %v747
    %2432 = vmatprep.subr.bf16.mxu0 0
    %2433 = vmatpush1.bf16.msra.mxu0 %v748
    %2434 = vmatprep.subr.bf16.mxu0 0
    %2435 = vmatpush1.bf16.msra.mxu0 %v749
    %2436 = vmatprep.subr.bf16.mxu0 0
    %2437 = vmatpush1.bf16.msra.mxu0 %v750
    %2438 = vmatprep.subr.bf16.mxu0 0
    %2439 = vmatpush1.bf16.msra.mxu0 %v751
    %2440 = vmatprep.subr.bf16.mxu0 0
    %2441 = vmatpush1.bf16.msra.mxu0 %v752
    %2442 = vmatprep.subr.bf16.mxu0 0
    %2443 = vmatpush1.bf16.msra.mxu0 %v753
    %2444 = vmatprep.subr.bf16.mxu0 0
    %2445 = vmatpush1.bf16.msra.mxu0 %v754
    %2446 = vmatprep.mubr.bf16.mxu0 %v2411
    %2447 = vmatmul.mubr.bf16.gmra.mrb[0].mxu0 %v2404
    %v2448 = vpop.f32.mrb[0].mxu0
    %v2449 = vadd.f32 0.0, %v2448
    %v2450 = vpop.f32.mrb[0].mxu0
    %v2451 = vpop.f32.mrb[0].mxu0
    %v2452 = vpop.f32.mrb[0].mxu0
    %2453 = vdwg.mxu0
    %v2454 = vadd.f32 %v2386, %v2449
    %v2455 = vadd.f32 %v2454, %v817
    %vm2456 = vcmp.gt.f32.partialorder %v2455, 0.0
    %v2457 = vmul.f32 %v2455, 0.2
    %v2458 = vsel %vm2456, %v2455, %v2457
    %v2459 = vpack.c.bf16 %v2458, %v2458
    %s2460 = scalar_lea.vmem %s3, 96
    %v2461 = vld [vmem:[%s2460] sm:$0xf]
    %v2462 = vld [vmem:[%s2460 + $0x4] sm:$0xf]
    %v2463 = vld [vmem:[%s2460 + $0x8] sm:$0xf]
    %v2464 = vld [vmem:[%s2460 + $0xc] sm:$0xf]
    %v2469 = vunpack.c.l.b16 %v2461
    %v2470 = vunpack.c.l.b16 %v2462
    %v2471 = vunpack.c.l.b16 %v2463
    %v2472 = vunpack.c.l.b16 %v2464
    %v2473 = vpack.c.b16 %v2470, %v2469
    %v2474 = vpack.c.b16 %v2472, %v2471
    %v2478 = vsel %vm1066, %v2459, 0
    %2480 = vmatprep.subr.bf16.mxu0 0
    %2481 = vmatpush1.bf16.msra.mxu0 %v2473
    %2482 = vmatprep.subr.bf16.mxu0 0
    %2483 = vmatpush1.bf16.msra.mxu0 %v2474
    %2484 = vmatprep.subr.bf16.mxu0 0
    %2485 = vmatpush1.bf16.msra.mxu0 0
    %2486 = vmatprep.subr.bf16.mxu0 0
    %2487 = vmatpush1.bf16.msra.mxu0 0
    %2488 = vmatprep.subr.bf16.mxu0 0
    %2489 = vmatpush1.bf16.msra.mxu0 0
    %2490 = vmatprep.subr.bf16.mxu0 0
    %2491 = vmatpush1.bf16.msra.mxu0 0
    %2492 = vmatprep.subr.bf16.mxu0 0
    %2493 = vmatpush1.bf16.msra.mxu0 0
    %2494 = vmatprep.subr.bf16.mxu0 0
    %2495 = vmatpush1.bf16.msra.mxu0 0
    %2496 = vmatprep.subr.bf16.mxu0 0
    %2497 = vmatpush1.bf16.msra.mxu0 0
    %2498 = vmatprep.subr.bf16.mxu0 0
    %2499 = vmatpush1.bf16.msra.mxu0 0
    %2500 = vmatprep.subr.bf16.mxu0 0
    %2501 = vmatpush1.bf16.msra.mxu0 0
    %2502 = vmatprep.subr.bf16.mxu0 0
    %2503 = vmatpush1.bf16.msra.mxu0 0
    %2504 = vmatprep.subr.bf16.mxu0 0
    %2505 = vmatpush1.bf16.msra.mxu0 0
    %2506 = vmatprep.subr.bf16.mxu0 0
    %2507 = vmatpush1.bf16.msra.mxu0 0
    %2508 = vmatprep.subr.bf16.mxu0 0
    %2509 = vmatpush1.bf16.msra.mxu0 0
    %2510 = vmatprep.subr.bf16.mxu0 0
    %2511 = vmatpush1.bf16.msra.mxu0 0
    %2512 = vmatprep.mubr.bf16.mxu0 0
    %2513 = vmatmul.mubr.bf16.gmra.mrb[0].mxu0 %v2478
    %v2514 = vpop.f32.mrb[0].mxu0
    %v2515 = vadd.f32 0.0, %v2514
    %v2516 = vpop.f32.mrb[0].mxu0
    %v2517 = vpop.f32.mrb[0].mxu0
    %v2518 = vpop.f32.mrb[0].mxu0
    %2519 = vdwg.mxu0
    %v2520 = vadd.f32 %v2265, %v2515
    %2521 = vmatprep.subr.bf16.mxu0 0
    %2522 = vmatpush1.bf16.msra.mxu0 %v185
    %2523 = vmatprep.subr.bf16.mxu0 0
    %2524 = vmatpush1.bf16.msra.mxu0 %v186
    %2525 = vmatprep.subr.bf16.mxu0 0
    %2526 = vmatpush1.bf16.msra.mxu0 %v187
    %2527 = vmatprep.subr.bf16.mxu0 0
    %2528 = vmatpush1.bf16.msra.mxu0 %v188
    %2529 = vmatprep.subr.bf16.mxu0 0
    %2530 = vmatpush1.bf16.msra.mxu0 %v189
    %2531 = vmatprep.subr.bf16.mxu0 0
    %2532 = vmatpush1.bf16.msra.mxu0 %v190
    %2533 = vmatprep.subr.bf16.mxu0 0
    %2534 = vmatpush1.bf16.msra.mxu0 %v191
    %2535 = vmatprep.subr.bf16.mxu0 0
    %2536 = vmatpush1.bf16.msra.mxu0 %v192
    %2537 = vmatprep.subr.bf16.mxu0 0
    %2538 = vmatpush1.bf16.msra.mxu0 %v193
    %2539 = vmatprep.subr.bf16.mxu0 0
    %2540 = vmatpush1.bf16.msra.mxu0 %v194
    %2541 = vmatprep.subr.bf16.mxu0 0
    %2542 = vmatpush1.bf16.msra.mxu0 %v195
    %2543 = vmatprep.subr.bf16.mxu0 0
    %2544 = vmatpush1.bf16.msra.mxu0 %v196
    %2545 = vmatprep.subr.bf16.mxu0 0
    %2546 = vmatpush1.bf16.msra.mxu0 %v197
    %2547 = vmatprep.subr.bf16.mxu0 0
    %2548 = vmatpush1.bf16.msra.mxu0 %v198
    %2549 = vmatprep.subr.bf16.mxu0 0
    %2550 = vmatpush1.bf16.msra.mxu0 %v199
    %2551 = vmatprep.subr.bf16.mxu0 0
    %2552 = vmatpush1.bf16.msra.mxu0 %v200
    %2553 = vmatprep.mubr.bf16.mxu0 %v1619
    %2554 = vmatmul.mubr.bf16.gmra.mrb[0].mxu0 %v1612
    %v2555 = vpop.f32.mrb[0].mxu0
    %v2556 = vadd.f32 0.0, %v2555
    %v2557 = vpop.f32.mrb[0].mxu0
    %v2558 = vpop.f32.mrb[0].mxu0
    %v2559 = vpop.f32.mrb[0].mxu0
    %2560 = vdwg.mxu0
    %2561 = vmatprep.subr.bf16.mxu0 0
    %2562 = vmatpush1.bf16.msra.mxu0 %v346
    %2563 = vmatprep.subr.bf16.mxu0 0
    %2564 = vmatpush1.bf16.msra.mxu0 %v347
    %2565 = vmatprep.subr.bf16.mxu0 0
    %2566 = vmatpush1.bf16.msra.mxu0 %v348
    %2567 = vmatprep.subr.bf16.mxu0 0
    %2568 = vmatpush1.bf16.msra.mxu0 %v349
    %2569 = vmatprep.subr.bf16.mxu0 0
    %2570 = vmatpush1.bf16.msra.mxu0 %v350
    %2571 = vmatprep.subr.bf16.mxu0 0
    %2572 = vmatpush1.bf16.msra.mxu0 %v351
    %2573 = vmatprep.subr.bf16.mxu0 0
    %2574 = vmatpush1.bf16.msra.mxu0 %v352
    %2575 = vmatprep.subr.bf16.mxu0 0
    %2576 = vmatpush1.bf16.msra.mxu0 %v353
    %2577 = vmatprep.subr.bf16.mxu0 0
    %2578 = vmatpush1.bf16.msra.mxu0 %v354
    %2579 = vmatprep.subr.bf16.mxu0 0
    %2580 = vmatpush1.bf16.msra.mxu0 %v355
    %2581 = vmatprep.subr.bf16.mxu0 0
    %2582 = vmatpush1.bf16.msra.mxu0 %v356
    %2583 = vmatprep.subr.bf16.mxu0 0
    %2584 = vmatpush1.bf16.msra.mxu0 %v357
    %2585 = vmatprep.subr.bf16.mxu0 0
    %2586 = vmatpush1.bf16.msra.mxu0 %v358
    %2587 = vmatprep.subr.bf16.mxu0 0
    %2588 = vmatpush1.bf16.msra.mxu0 %v359
    %2589 = vmatprep.subr.bf16.mxu0 0
    %2590 = vmatpush1.bf16.msra.mxu0 %v360
    %2591 = vmatprep.subr.bf16.mxu0 0
    %2592 = vmatpush1.bf16.msra.mxu0 %v361
    %2593 = vmatprep.mubr.bf16.mxu0 %v1337
    %2594 = vmatmul.mubr.bf16.gmra.mrb[0].mxu0 %v1330
    %v2595 = vpop.f32.mrb[0].mxu0
    %v2596 = vadd.f32 %v2556, %v2595
    %v2597 = vpop.f32.mrb[0].mxu0
    %v2598 = vpop.f32.mrb[0].mxu0
    %v2599 = vpop.f32.mrb[0].mxu0
    %2600 = vdwg.mxu0
    %2601 = vmatprep.subr.bf16.mxu0 0
    %2602 = vmatpush1.bf16.msra.mxu0 %v542
    %2603 = vmatprep.subr.bf16.mxu0 0
    %2604 = vmatpush1.bf16.msra.mxu0 %v543
    %2605 = vmatprep.subr.bf16.mxu0 0
    %2606 = vmatpush1.bf16.msra.mxu0 %v544
    %2607 = vmatprep.subr.bf16.mxu0 0
    %2608 = vmatpush1.bf16.msra.mxu0 %v545
    %2609 = vmatprep.subr.bf16.mxu0 0
    %2610 = vmatpush1.bf16.msra.mxu0 %v546
    %2611 = vmatprep.subr.bf16.mxu0 0
    %2612 = vmatpush1.bf16.msra.mxu0 %v547
    %2613 = vmatprep.subr.bf16.mxu0 0
    %2614 = vmatpush1.bf16.msra.mxu0 %v548
    %2615 = vmatprep.subr.bf16.mxu0 0
    %2616 = vmatpush1.bf16.msra.mxu0 %v549
    %2617 = vmatprep.subr.bf16.mxu0 0
    %2618 = vmatpush1.bf16.msra.mxu0 %v550
    %2619 = vmatprep.subr.bf16.mxu0 0
    %2620 = vmatpush1.bf16.msra.mxu0 %v551
    %2621 = vmatprep.subr.bf16.mxu0 0
    %2622 = vmatpush1.bf16.msra.mxu0 %v552
    %2623 = vmatprep.subr.bf16.mxu0 0
    %2624 = vmatpush1.bf16.msra.mxu0 %v553
    %2625 = vmatprep.subr.bf16.mxu0 0
    %2626 = vmatpush1.bf16.msra.mxu0 %v554
    %2627 = vmatprep.subr.bf16.mxu0 0
    %2628 = vmatpush1.bf16.msra.mxu0 %v555
    %2629 = vmatprep.subr.bf16.mxu0 0
    %2630 = vmatpush1.bf16.msra.mxu0 %v556
    %2631 = vmatprep.subr.bf16.mxu0 0
    %2632 = vmatpush1.bf16.msra.mxu0 %v557
    %2633 = vmatprep.mubr.bf16.mxu0 %v2411
    %2634 = vmatmul.mubr.bf16.gmra.mrb[0].mxu0 %v2404
    %v2635 = vpop.f32.mrb[0].mxu0
    %v2636 = vadd.f32 0.0, %v2635
    %v2637 = vpop.f32.mrb[0].mxu0
    %v2638 = vpop.f32.mrb[0].mxu0
    %v2639 = vpop.f32.mrb[0].mxu0
    %2640 = vdwg.mxu0
    %v2641 = vadd.f32 %v2596, %v2636
    %s2642 = scalar_lea.vmem %s0, 28
    %v2643 = vld [vmem:[%s2642] sm:$0x3]
    %v2646 = vunpack.c.l.s4 1966171168
    %v2647 = vunpack.c.0.s8 %v2646
    %v2648 = vlaneseq
    %v2649 = vshrl.u32 %v2648, 7
    %v2650 = vsub.s32 %v2647, %v2649
    %v2651 = vrot.slane %v2643, %v2650
    %v2652 = vcombine.high %v2651, %v2651
    %v2654 = vunpack.c.l.s4 1966171168
    %v2655 = vunpack.c.0.s8 %v2654
    %v2656 = vlaneseq
    %v2657 = vshrl.u32 %v2656, 7
    %v2658 = vsub.s32 %v2655, %v2657
    %v2659 = vrot.slane %v2651, %v2658
    %v2661 = vunpack.c.l.s4 1966171168
    %v2662 = vunpack.c.0.s8 %v2661
    %v2663 = vlaneseq
    %v2664 = vshrl.u32 %v2663, 7
    %v2665 = vsub.s32 %v2662, %v2664
    %v2666 = vrot.slane %v2652, %v2665
    %2669 = vmatprep.subr.bf16.mxu0 0
    %2670 = vmatpush1.bf16.msra.mxu0 %v739
    %2671 = vmatprep.subr.bf16.mxu0 0
    %2672 = vmatpush1.bf16.msra.mxu0 %v740
    %2673 = vmatprep.subr.bf16.mxu0 0
    %2674 = vmatpush1.bf16.msra.mxu0 %v741
    %2675 = vmatprep.subr.bf16.mxu0 0
    %2676 = vmatpush1.bf16.msra.mxu0 %v742
    %2677 = vmatprep.subr.bf16.mxu0 0
    %2678 = vmatpush1.bf16.msra.mxu0 %v743
    %2679 = vmatprep.subr.bf16.mxu0 0
    %2680 = vmatpush1.bf16.msra.mxu0 %v744
    %2681 = vmatprep.subr.bf16.mxu0 0
    %2682 = vmatpush1.bf16.msra.mxu0 %v745
    %2683 = vmatprep.subr.bf16.mxu0 0
    %2684 = vmatpush1.bf16.msra.mxu0 %v746
    %2685 = vmatprep.subr.bf16.mxu0 0
    %2686 = vmatpush1.bf16.msra.mxu0 %v747
    %2687 = vmatprep.subr.bf16.mxu0 0
    %2688 = vmatpush1.bf16.msra.mxu0 %v748
    %2689 = vmatprep.subr.bf16.mxu0 0
    %2690 = vmatpush1.bf16.msra.mxu0 %v749
    %2691 = vmatprep.subr.bf16.mxu0 0
    %2692 = vmatpush1.bf16.msra.mxu0 %v750
    %2693 = vmatprep.subr.bf16.mxu0 0
    %2694 = vmatpush1.bf16.msra.mxu0 %v751
    %2695 = vmatprep.subr.bf16.mxu0 0
    %2696 = vmatpush1.bf16.msra.mxu0 %v752
    %2697 = vmatprep.subr.bf16.mxu0 0
    %2698 = vmatpush1.bf16.msra.mxu0 %v753
    %2699 = vmatprep.subr.bf16.mxu0 0
    %2700 = vmatpush1.bf16.msra.mxu0 %v754
    %2701 = vmatprep.mubr.bf16.mxu0 %v2666
    %2702 = vmatmul.mubr.bf16.gmra.mrb[0].mxu0 %v2659
    %v2703 = vpop.f32.mrb[0].mxu0
    %v2704 = vadd.f32 0.0, %v2703
    %v2705 = vpop.f32.mrb[0].mxu0
    %v2706 = vpop.f32.mrb[0].mxu0
    %v2707 = vpop.f32.mrb[0].mxu0
    %2708 = vdwg.mxu0
    %v2709 = vadd.f32 %v2641, %v2704
    %v2710 = vadd.f32 %v2709, %v817
    %vm2711 = vcmp.gt.f32.partialorder %v2710, 0.0
    %v2712 = vmul.f32 %v2710, 0.2
    %v2713 = vsel %vm2711, %v2710, %v2712
    %v2714 = vpack.c.bf16 %v2713, %v2713
    %s2715 = scalar_lea.vmem %s3, 112
    %v2716 = vld [vmem:[%s2715] sm:$0xf]
    %v2717 = vld [vmem:[%s2715 + $0x4] sm:$0xf]
    %v2718 = vld [vmem:[%s2715 + $0x8] sm:$0xf]
    %v2719 = vld [vmem:[%s2715 + $0xc] sm:$0xf]
    %v2724 = vunpack.c.l.b16 %v2716
    %v2725 = vunpack.c.l.b16 %v2717
    %v2726 = vunpack.c.l.b16 %v2718
    %v2727 = vunpack.c.l.b16 %v2719
    %v2728 = vpack.c.b16 %v2725, %v2724
    %v2729 = vpack.c.b16 %v2727, %v2726
    %v2733 = vsel %vm1066, %v2714, 0
    %2735 = vmatprep.subr.bf16.mxu0 0
    %2736 = vmatpush1.bf16.msra.mxu0 %v2728
    %2737 = vmatprep.subr.bf16.mxu0 0
    %2738 = vmatpush1.bf16.msra.mxu0 %v2729
    %2739 = vmatprep.subr.bf16.mxu0 0
    %2740 = vmatpush1.bf16.msra.mxu0 0
    %2741 = vmatprep.subr.bf16.mxu0 0
    %2742 = vmatpush1.bf16.msra.mxu0 0
    %2743 = vmatprep.subr.bf16.mxu0 0
    %2744 = vmatpush1.bf16.msra.mxu0 0
    %2745 = vmatprep.subr.bf16.mxu0 0
    %2746 = vmatpush1.bf16.msra.mxu0 0
    %2747 = vmatprep.subr.bf16.mxu0 0
    %2748 = vmatpush1.bf16.msra.mxu0 0
    %2749 = vmatprep.subr.bf16.mxu0 0
    %2750 = vmatpush1.bf16.msra.mxu0 0
    %2751 = vmatprep.subr.bf16.mxu0 0
    %2752 = vmatpush1.bf16.msra.mxu0 0
    %2753 = vmatprep.subr.bf16.mxu0 0
    %2754 = vmatpush1.bf16.msra.mxu0 0
    %2755 = vmatprep.subr.bf16.mxu0 0
    %2756 = vmatpush1.bf16.msra.mxu0 0
    %2757 = vmatprep.subr.bf16.mxu0 0
    %2758 = vmatpush1.bf16.msra.mxu0 0
    %2759 = vmatprep.subr.bf16.mxu0 0
    %2760 = vmatpush1.bf16.msra.mxu0 0
    %2761 = vmatprep.subr.bf16.mxu0 0
    %2762 = vmatpush1.bf16.msra.mxu0 0
    %2763 = vmatprep.subr.bf16.mxu0 0
    %2764 = vmatpush1.bf16.msra.mxu0 0
    %2765 = vmatprep.subr.bf16.mxu0 0
    %2766 = vmatpush1.bf16.msra.mxu0 0
    %2767 = vmatprep.mubr.bf16.mxu0 0
    %2768 = vmatmul.mubr.bf16.gmra.mrb[0].mxu0 %v2733
    %v2769 = vpop.f32.mrb[0].mxu0
    %v2770 = vadd.f32 0.0, %v2769
    %v2771 = vpop.f32.mrb[0].mxu0
    %v2772 = vpop.f32.mrb[0].mxu0
    %v2773 = vpop.f32.mrb[0].mxu0
    %2774 = vdwg.mxu0
    %v2775 = vadd.f32 %v2520, %v2770
    %2776 = vmatprep.subr.bf16.mxu0 0
    %2777 = vmatpush1.bf16.msra.mxu0 %v185
    %2778 = vmatprep.subr.bf16.mxu0 0
    %2779 = vmatpush1.bf16.msra.mxu0 %v186
    %2780 = vmatprep.subr.bf16.mxu0 0
    %2781 = vmatpush1.bf16.msra.mxu0 %v187
    %2782 = vmatprep.subr.bf16.mxu0 0
    %2783 = vmatpush1.bf16.msra.mxu0 %v188
    %2784 = vmatprep.subr.bf16.mxu0 0
    %2785 = vmatpush1.bf16.msra.mxu0 %v189
    %2786 = vmatprep.subr.bf16.mxu0 0
    %2787 = vmatpush1.bf16.msra.mxu0 %v190
    %2788 = vmatprep.subr.bf16.mxu0 0
    %2789 = vmatpush1.bf16.msra.mxu0 %v191
    %2790 = vmatprep.subr.bf16.mxu0 0
    %2791 = vmatpush1.bf16.msra.mxu0 %v192
    %2792 = vmatprep.subr.bf16.mxu0 0
    %2793 = vmatpush1.bf16.msra.mxu0 %v193
    %2794 = vmatprep.subr.bf16.mxu0 0
    %2795 = vmatpush1.bf16.msra.mxu0 %v194
    %2796 = vmatprep.subr.bf16.mxu0 0
    %2797 = vmatpush1.bf16.msra.mxu0 %v195
    %2798 = vmatprep.subr.bf16.mxu0 0
    %2799 = vmatpush1.bf16.msra.mxu0 %v196
    %2800 = vmatprep.subr.bf16.mxu0 0
    %2801 = vmatpush1.bf16.msra.mxu0 %v197
    %2802 = vmatprep.subr.bf16.mxu0 0
    %2803 = vmatpush1.bf16.msra.mxu0 %v198
    %2804 = vmatprep.subr.bf16.mxu0 0
    %2805 = vmatpush1.bf16.msra.mxu0 %v199
    %2806 = vmatprep.subr.bf16.mxu0 0
    %2807 = vmatpush1.bf16.msra.mxu0 %v200
    %2808 = vmatprep.mubr.bf16.mxu0 %v1901
    %2809 = vmatmul.mubr.bf16.gmra.mrb[0].mxu0 %v1894
    %v2810 = vpop.f32.mrb[0].mxu0
    %v2811 = vadd.f32 0.0, %v2810
    %v2812 = vpop.f32.mrb[0].mxu0
    %v2813 = vpop.f32.mrb[0].mxu0
    %v2814 = vpop.f32.mrb[0].mxu0
    %2815 = vdwg.mxu0
    %2816 = vmatprep.subr.bf16.mxu0 0
    %2817 = vmatpush1.bf16.msra.mxu0 %v346
    %2818 = vmatprep.subr.bf16.mxu0 0
    %2819 = vmatpush1.bf16.msra.mxu0 %v347
    %2820 = vmatprep.subr.bf16.mxu0 0
    %2821 = vmatpush1.bf16.msra.mxu0 %v348
    %2822 = vmatprep.subr.bf16.mxu0 0
    %2823 = vmatpush1.bf16.msra.mxu0 %v349
    %2824 = vmatprep.subr.bf16.mxu0 0
    %2825 = vmatpush1.bf16.msra.mxu0 %v350
    %2826 = vmatprep.subr.bf16.mxu0 0
    %2827 = vmatpush1.bf16.msra.mxu0 %v351
    %2828 = vmatprep.subr.bf16.mxu0 0
    %2829 = vmatpush1.bf16.msra.mxu0 %v352
    %2830 = vmatprep.subr.bf16.mxu0 0
    %2831 = vmatpush1.bf16.msra.mxu0 %v353
    %2832 = vmatprep.subr.bf16.mxu0 0
    %2833 = vmatpush1.bf16.msra.mxu0 %v354
    %2834 = vmatprep.subr.bf16.mxu0 0
    %2835 = vmatpush1.bf16.msra.mxu0 %v355
    %2836 = vmatprep.subr.bf16.mxu0 0
    %2837 = vmatpush1.bf16.msra.mxu0 %v356
    %2838 = vmatprep.subr.bf16.mxu0 0
    %2839 = vmatpush1.bf16.msra.mxu0 %v357
    %2840 = vmatprep.subr.bf16.mxu0 0
    %2841 = vmatpush1.bf16.msra.mxu0 %v358
    %2842 = vmatprep.subr.bf16.mxu0 0
    %2843 = vmatpush1.bf16.msra.mxu0 %v359
    %2844 = vmatprep.subr.bf16.mxu0 0
    %2845 = vmatpush1.bf16.msra.mxu0 %v360
    %2846 = vmatprep.subr.bf16.mxu0 0
    %2847 = vmatpush1.bf16.msra.mxu0 %v361
    %2848 = vmatprep.mubr.bf16.mxu0 %v1833
    %2849 = vmatmul.mubr.bf16.gmra.mrb[0].mxu0 %v1826
    %v2850 = vpop.f32.mrb[0].mxu0
    %v2851 = vadd.f32 %v2811, %v2850
    %v2852 = vpop.f32.mrb[0].mxu0
    %v2853 = vpop.f32.mrb[0].mxu0
    %v2854 = vpop.f32.mrb[0].mxu0
    %2855 = vdwg.mxu0
    %s2856 = scalar_lea.vmem %s0, 30
    %v2857 = vld [vmem:[%s2856] sm:$0x3]
    %v2860 = vunpack.c.l.s4 1966171168
    %v2861 = vunpack.c.0.s8 %v2860
    %v2862 = vlaneseq
    %v2863 = vshrl.u32 %v2862, 7
    %v2864 = vsub.s32 %v2861, %v2863
    %v2865 = vrot.slane %v2857, %v2864
    %v2866 = vcombine.high %v2865, %v2865
    %v2868 = vunpack.c.l.s4 1966171168
    %v2869 = vunpack.c.0.s8 %v2868
    %v2870 = vlaneseq
    %v2871 = vshrl.u32 %v2870, 7
    %v2872 = vsub.s32 %v2869, %v2871
    %v2873 = vrot.slane %v2865, %v2872
    %v2875 = vunpack.c.l.s4 1966171168
    %v2876 = vunpack.c.0.s8 %v2875
    %v2877 = vlaneseq
    %v2878 = vshrl.u32 %v2877, 7
    %v2879 = vsub.s32 %v2876, %v2878
    %v2880 = vrot.slane %v2866, %v2879
    %2883 = vmatprep.subr.bf16.mxu0 0
    %2884 = vmatpush1.bf16.msra.mxu0 %v542
    %2885 = vmatprep.subr.bf16.mxu0 0
    %2886 = vmatpush1.bf16.msra.mxu0 %v543
    %2887 = vmatprep.subr.bf16.mxu0 0
    %2888 = vmatpush1.bf16.msra.mxu0 %v544
    %2889 = vmatprep.subr.bf16.mxu0 0
    %2890 = vmatpush1.bf16.msra.mxu0 %v545
    %2891 = vmatprep.subr.bf16.mxu0 0
    %2892 = vmatpush1.bf16.msra.mxu0 %v546
    %2893 = vmatprep.subr.bf16.mxu0 0
    %2894 = vmatpush1.bf16.msra.mxu0 %v547
    %2895 = vmatprep.subr.bf16.mxu0 0
    %2896 = vmatpush1.bf16.msra.mxu0 %v548
    %2897 = vmatprep.subr.bf16.mxu0 0
    %2898 = vmatpush1.bf16.msra.mxu0 %v549
    %2899 = vmatprep.subr.bf16.mxu0 0
    %2900 = vmatpush1.bf16.msra.mxu0 %v550
    %2901 = vmatprep.subr.bf16.mxu0 0
    %2902 = vmatpush1.bf16.msra.mxu0 %v551
    %2903 = vmatprep.subr.bf16.mxu0 0
    %2904 = vmatpush1.bf16.msra.mxu0 %v552
    %2905 = vmatprep.subr.bf16.mxu0 0
    %2906 = vmatpush1.bf16.msra.mxu0 %v553
    %2907 = vmatprep.subr.bf16.mxu0 0
    %2908 = vmatpush1.bf16.msra.mxu0 %v554
    %2909 = vmatprep.subr.bf16.mxu0 0
    %2910 = vmatpush1.bf16.msra.mxu0 %v555
    %2911 = vmatprep.subr.bf16.mxu0 0
    %2912 = vmatpush1.bf16.msra.mxu0 %v556
    %2913 = vmatprep.subr.bf16.mxu0 0
    %2914 = vmatpush1.bf16.msra.mxu0 %v557
    %2915 = vmatprep.mubr.bf16.mxu0 %v2880
    %2916 = vmatmul.mubr.bf16.gmra.mrb[0].mxu0 %v2873
    %v2917 = vpop.f32.mrb[0].mxu0
    %v2918 = vadd.f32 0.0, %v2917
    %v2919 = vpop.f32.mrb[0].mxu0
    %v2920 = vpop.f32.mrb[0].mxu0
    %v2921 = vpop.f32.mrb[0].mxu0
    %2922 = vdwg.mxu0
    %v2923 = vadd.f32 %v2851, %v2918
    %s2924 = scalar_lea.vmem %s0, 32
    %v2925 = vld [vmem:[%s2924] sm:$0x3]
    %v2928 = vunpack.c.l.s4 1966171168
    %v2929 = vunpack.c.0.s8 %v2928
    %v2930 = vlaneseq
    %v2931 = vshrl.u32 %v2930, 7
    %v2932 = vsub.s32 %v2929, %v2931
    %v2933 = vrot.slane %v2925, %v2932
    %v2934 = vcombine.high %v2933, %v2933
    %v2936 = vunpack.c.l.s4 1966171168
    %v2937 = vunpack.c.0.s8 %v2936
    %v2938 = vlaneseq
    %v2939 = vshrl.u32 %v2938, 7
    %v2940 = vsub.s32 %v2937, %v2939
    %v2941 = vrot.slane %v2933, %v2940
    %v2943 = vunpack.c.l.s4 1966171168
    %v2944 = vunpack.c.0.s8 %v2943
    %v2945 = vlaneseq
    %v2946 = vshrl.u32 %v2945, 7
    %v2947 = vsub.s32 %v2944, %v2946
    %v2948 = vrot.slane %v2934, %v2947
    %2951 = vmatprep.subr.bf16.mxu0 0
    %2952 = vmatpush1.bf16.msra.mxu0 %v739
    %2953 = vmatprep.subr.bf16.mxu0 0
    %2954 = vmatpush1.bf16.msra.mxu0 %v740
    %2955 = vmatprep.subr.bf16.mxu0 0
    %2956 = vmatpush1.bf16.msra.mxu0 %v741
    %2957 = vmatprep.subr.bf16.mxu0 0
    %2958 = vmatpush1.bf16.msra.mxu0 %v742
    %2959 = vmatprep.subr.bf16.mxu0 0
    %2960 = vmatpush1.bf16.msra.mxu0 %v743
    %2961 = vmatprep.subr.bf16.mxu0 0
    %2962 = vmatpush1.bf16.msra.mxu0 %v744
    %2963 = vmatprep.subr.bf16.mxu0 0
    %2964 = vmatpush1.bf16.msra.mxu0 %v745
    %2965 = vmatprep.subr.bf16.mxu0 0
    %2966 = vmatpush1.bf16.msra.mxu0 %v746
    %2967 = vmatprep.subr.bf16.mxu0 0
    %2968 = vmatpush1.bf16.msra.mxu0 %v747
    %2969 = vmatprep.subr.bf16.mxu0 0
    %2970 = vmatpush1.bf16.msra.mxu0 %v748
    %2971 = vmatprep.subr.bf16.mxu0 0
    %2972 = vmatpush1.bf16.msra.mxu0 %v749
    %2973 = vmatprep.subr.bf16.mxu0 0
    %2974 = vmatpush1.bf16.msra.mxu0 %v750
    %2975 = vmatprep.subr.bf16.mxu0 0
    %2976 = vmatpush1.bf16.msra.mxu0 %v751
    %2977 = vmatprep.subr.bf16.mxu0 0
    %2978 = vmatpush1.bf16.msra.mxu0 %v752
    %2979 = vmatprep.subr.bf16.mxu0 0
    %2980 = vmatpush1.bf16.msra.mxu0 %v753
    %2981 = vmatprep.subr.bf16.mxu0 0
    %2982 = vmatpush1.bf16.msra.mxu0 %v754
    %2983 = vmatprep.mubr.bf16.mxu0 %v2948
    %2984 = vmatmul.mubr.bf16.gmra.mrb[0].mxu0 %v2941
    %v2985 = vpop.f32.mrb[0].mxu0
    %v2986 = vadd.f32 0.0, %v2985
    %v2987 = vpop.f32.mrb[0].mxu0
    %v2988 = vpop.f32.mrb[0].mxu0
    %v2989 = vpop.f32.mrb[0].mxu0
    %2990 = vdwg.mxu0
    %v2991 = vadd.f32 %v2923, %v2986
    %v2992 = vadd.f32 %v2991, %v817
    %vm2993 = vcmp.gt.f32.partialorder %v2992, 0.0
    %v2994 = vmul.f32 %v2992, 0.2
    %v2995 = vsel %vm2993, %v2992, %v2994
    %v2996 = vpack.c.bf16 %v2995, %v2995
    %s2997 = scalar_lea.vmem %s3, 128
    %v2998 = vld [vmem:[%s2997] sm:$0xf]
    %v2999 = vld [vmem:[%s2997 + $0x4] sm:$0xf]
    %v3000 = vld [vmem:[%s2997 + $0x8] sm:$0xf]
    %v3001 = vld [vmem:[%s2997 + $0xc] sm:$0xf]
    %v3006 = vunpack.c.l.b16 %v2998
    %v3007 = vunpack.c.l.b16 %v2999
    %v3008 = vunpack.c.l.b16 %v3000
    %v3009 = vunpack.c.l.b16 %v3001
    %v3010 = vpack.c.b16 %v3007, %v3006
    %v3011 = vpack.c.b16 %v3009, %v3008
    %v3015 = vsel %vm1066, %v2996, 0
    %3017 = vmatprep.subr.bf16.mxu0 0
    %3018 = vmatpush1.bf16.msra.mxu0 %v3010
    %3019 = vmatprep.subr.bf16.mxu0 0
    %3020 = vmatpush1.bf16.msra.mxu0 %v3011
    %3021 = vmatprep.subr.bf16.mxu0 0
    %3022 = vmatpush1.bf16.msra.mxu0 0
    %3023 = vmatprep.subr.bf16.mxu0 0
    %3024 = vmatpush1.bf16.msra.mxu0 0
    %3025 = vmatprep.subr.bf16.mxu0 0
    %3026 = vmatpush1.bf16.msra.mxu0 0
    %3027 = vmatprep.subr.bf16.mxu0 0
    %3028 = vmatpush1.bf16.msra.mxu0 0
    %3029 = vmatprep.subr.bf16.mxu0 0
    %3030 = vmatpush1.bf16.msra.mxu0 0
    %3031 = vmatprep.subr.bf16.mxu0 0
    %3032 = vmatpush1.bf16.msra.mxu0 0
    %3033 = vmatprep.subr.bf16.mxu0 0
    %3034 = vmatpush1.bf16.msra.mxu0 0
    %3035 = vmatprep.subr.bf16.mxu0 0
    %3036 = vmatpush1.bf16.msra.mxu0 0
    %3037 = vmatprep.subr.bf16.mxu0 0
    %3038 = vmatpush1.bf16.msra.mxu0 0
    %3039 = vmatprep.subr.bf16.mxu0 0
    %3040 = vmatpush1.bf16.msra.mxu0 0
    %3041 = vmatprep.subr.bf16.mxu0 0
    %3042 = vmatpush1.bf16.msra.mxu0 0
    %3043 = vmatprep.subr.bf16.mxu0 0
    %3044 = vmatpush1.bf16.msra.mxu0 0
    %3045 = vmatprep.subr.bf16.mxu0 0
    %3046 = vmatpush1.bf16.msra.mxu0 0
    %3047 = vmatprep.subr.bf16.mxu0 0
    %3048 = vmatpush1.bf16.msra.mxu0 0
    %3049 = vmatprep.mubr.bf16.mxu0 0
    %3050 = vmatmul.mubr.bf16.gmra.mrb[0].mxu0 %v3015
    %v3051 = vpop.f32.mrb[0].mxu0
    %v3052 = vadd.f32 0.0, %v3051
    %v3053 = vpop.f32.mrb[0].mxu0
    %v3054 = vpop.f32.mrb[0].mxu0
    %v3055 = vpop.f32.mrb[0].mxu0
    %3056 = vdwg.mxu0
    %v3057 = vadd.f32 %v2775, %v3052
    %3058 = vmatprep.subr.bf16.mxu0 0
    %3059 = vmatpush1.bf16.msra.mxu0 %v185
    %3060 = vmatprep.subr.bf16.mxu0 0
    %3061 = vmatpush1.bf16.msra.mxu0 %v186
    %3062 = vmatprep.subr.bf16.mxu0 0
    %3063 = vmatpush1.bf16.msra.mxu0 %v187
    %3064 = vmatprep.subr.bf16.mxu0 0
    %3065 = vmatpush1.bf16.msra.mxu0 %v188
    %3066 = vmatprep.subr.bf16.mxu0 0
    %3067 = vmatpush1.bf16.msra.mxu0 %v189
    %3068 = vmatprep.subr.bf16.mxu0 0
    %3069 = vmatpush1.bf16.msra.mxu0 %v190
    %3070 = vmatprep.subr.bf16.mxu0 0
    %3071 = vmatpush1.bf16.msra.mxu0 %v191
    %3072 = vmatprep.subr.bf16.mxu0 0
    %3073 = vmatpush1.bf16.msra.mxu0 %v192
    %3074 = vmatprep.subr.bf16.mxu0 0
    %3075 = vmatpush1.bf16.msra.mxu0 %v193
    %3076 = vmatprep.subr.bf16.mxu0 0
    %3077 = vmatpush1.bf16.msra.mxu0 %v194
    %3078 = vmatprep.subr.bf16.mxu0 0
    %3079 = vmatpush1.bf16.msra.mxu0 %v195
    %3080 = vmatprep.subr.bf16.mxu0 0
    %3081 = vmatpush1.bf16.msra.mxu0 %v196
    %3082 = vmatprep.subr.bf16.mxu0 0
    %3083 = vmatpush1.bf16.msra.mxu0 %v197
    %3084 = vmatprep.subr.bf16.mxu0 0
    %3085 = vmatpush1.bf16.msra.mxu0 %v198
    %3086 = vmatprep.subr.bf16.mxu0 0
    %3087 = vmatpush1.bf16.msra.mxu0 %v199
    %3088 = vmatprep.subr.bf16.mxu0 0
    %3089 = vmatpush1.bf16.msra.mxu0 %v200
    %3090 = vmatprep.mubr.bf16.mxu0 %v2156
    %3091 = vmatmul.mubr.bf16.gmra.mrb[0].mxu0 %v2149
    %v3092 = vpop.f32.mrb[0].mxu0
    %v3093 = vadd.f32 0.0, %v3092
    %v3094 = vpop.f32.mrb[0].mxu0
    %v3095 = vpop.f32.mrb[0].mxu0
    %v3096 = vpop.f32.mrb[0].mxu0
    %3097 = vdwg.mxu0
    %3098 = vmatprep.subr.bf16.mxu0 0
    %3099 = vmatpush1.bf16.msra.mxu0 %v346
    %3100 = vmatprep.subr.bf16.mxu0 0
    %3101 = vmatpush1.bf16.msra.mxu0 %v347
    %3102 = vmatprep.subr.bf16.mxu0 0
    %3103 = vmatpush1.bf16.msra.mxu0 %v348
    %3104 = vmatprep.subr.bf16.mxu0 0
    %3105 = vmatpush1.bf16.msra.mxu0 %v349
    %3106 = vmatprep.subr.bf16.mxu0 0
    %3107 = vmatpush1.bf16.msra.mxu0 %v350
    %3108 = vmatprep.subr.bf16.mxu0 0
    %3109 = vmatpush1.bf16.msra.mxu0 %v351
    %3110 = vmatprep.subr.bf16.mxu0 0
    %3111 = vmatpush1.bf16.msra.mxu0 %v352
    %3112 = vmatprep.subr.bf16.mxu0 0
    %3113 = vmatpush1.bf16.msra.mxu0 %v353
    %3114 = vmatprep.subr.bf16.mxu0 0
    %3115 = vmatpush1.bf16.msra.mxu0 %v354
    %3116 = vmatprep.subr.bf16.mxu0 0
    %3117 = vmatpush1.bf16.msra.mxu0 %v355
    %3118 = vmatprep.subr.bf16.mxu0 0
    %3119 = vmatpush1.bf16.msra.mxu0 %v356
    %3120 = vmatprep.subr.bf16.mxu0 0
    %3121 = vmatpush1.bf16.msra.mxu0 %v357
    %3122 = vmatprep.subr.bf16.mxu0 0
    %3123 = vmatpush1.bf16.msra.mxu0 %v358
    %3124 = vmatprep.subr.bf16.mxu0 0
    %3125 = vmatpush1.bf16.msra.mxu0 %v359
    %3126 = vmatprep.subr.bf16.mxu0 0
    %3127 = vmatpush1.bf16.msra.mxu0 %v360
    %3128 = vmatprep.subr.bf16.mxu0 0
    %3129 = vmatpush1.bf16.msra.mxu0 %v361
    %3130 = vmatprep.mubr.bf16.mxu0 %v1901
    %3131 = vmatmul.mubr.bf16.gmra.mrb[0].mxu0 %v1894
    %v3132 = vpop.f32.mrb[0].mxu0
    %v3133 = vadd.f32 %v3093, %v3132
    %v3134 = vpop.f32.mrb[0].mxu0
    %v3135 = vpop.f32.mrb[0].mxu0
    %v3136 = vpop.f32.mrb[0].mxu0
    %3137 = vdwg.mxu0
    %3138 = vmatprep.subr.bf16.mxu0 0
    %3139 = vmatpush1.bf16.msra.mxu0 %v542
    %3140 = vmatprep.subr.bf16.mxu0 0
    %3141 = vmatpush1.bf16.msra.mxu0 %v543
    %3142 = vmatprep.subr.bf16.mxu0 0
    %3143 = vmatpush1.bf16.msra.mxu0 %v544
    %3144 = vmatprep.subr.bf16.mxu0 0
    %3145 = vmatpush1.bf16.msra.mxu0 %v545
    %3146 = vmatprep.subr.bf16.mxu0 0
    %3147 = vmatpush1.bf16.msra.mxu0 %v546
    %3148 = vmatprep.subr.bf16.mxu0 0
    %3149 = vmatpush1.bf16.msra.mxu0 %v547
    %3150 = vmatprep.subr.bf16.mxu0 0
    %3151 = vmatpush1.bf16.msra.mxu0 %v548
    %3152 = vmatprep.subr.bf16.mxu0 0
    %3153 = vmatpush1.bf16.msra.mxu0 %v549
    %3154 = vmatprep.subr.bf16.mxu0 0
    %3155 = vmatpush1.bf16.msra.mxu0 %v550
    %3156 = vmatprep.subr.bf16.mxu0 0
    %3157 = vmatpush1.bf16.msra.mxu0 %v551
    %3158 = vmatprep.subr.bf16.mxu0 0
    %3159 = vmatpush1.bf16.msra.mxu0 %v552
    %3160 = vmatprep.subr.bf16.mxu0 0
    %3161 = vmatpush1.bf16.msra.mxu0 %v553
    %3162 = vmatprep.subr.bf16.mxu0 0
    %3163 = vmatpush1.bf16.msra.mxu0 %v554
    %3164 = vmatprep.subr.bf16.mxu0 0
    %3165 = vmatpush1.bf16.msra.mxu0 %v555
    %3166 = vmatprep.subr.bf16.mxu0 0
    %3167 = vmatpush1.bf16.msra.mxu0 %v556
    %3168 = vmatprep.subr.bf16.mxu0 0
    %3169 = vmatpush1.bf16.msra.mxu0 %v557
    %3170 = vmatprep.mubr.bf16.mxu0 %v2948
    %3171 = vmatmul.mubr.bf16.gmra.mrb[0].mxu0 %v2941
    %v3172 = vpop.f32.mrb[0].mxu0
    %v3173 = vadd.f32 0.0, %v3172
    %v3174 = vpop.f32.mrb[0].mxu0
    %v3175 = vpop.f32.mrb[0].mxu0
    %v3176 = vpop.f32.mrb[0].mxu0
    %3177 = vdwg.mxu0
    %v3178 = vadd.f32 %v3133, %v3173
    %s3179 = scalar_lea.vmem %s0, 34
    %v3180 = vld [vmem:[%s3179] sm:$0x3]
    %v3183 = vunpack.c.l.s4 1966171168
    %v3184 = vunpack.c.0.s8 %v3183
    %v3185 = vlaneseq
    %v3186 = vshrl.u32 %v3185, 7
    %v3187 = vsub.s32 %v3184, %v3186
    %v3188 = vrot.slane %v3180, %v3187
    %v3189 = vcombine.high %v3188, %v3188
    %v3191 = vunpack.c.l.s4 1966171168
    %v3192 = vunpack.c.0.s8 %v3191
    %v3193 = vlaneseq
    %v3194 = vshrl.u32 %v3193, 7
    %v3195 = vsub.s32 %v3192, %v3194
    %v3196 = vrot.slane %v3188, %v3195
    %v3198 = vunpack.c.l.s4 1966171168
    %v3199 = vunpack.c.0.s8 %v3198
    %v3200 = vlaneseq
    %v3201 = vshrl.u32 %v3200, 7
    %v3202 = vsub.s32 %v3199, %v3201
    %v3203 = vrot.slane %v3189, %v3202
    %3206 = vmatprep.subr.bf16.mxu0 0
    %3207 = vmatpush1.bf16.msra.mxu0 %v739
    %3208 = vmatprep.subr.bf16.mxu0 0
    %3209 = vmatpush1.bf16.msra.mxu0 %v740
    %3210 = vmatprep.subr.bf16.mxu0 0
    %3211 = vmatpush1.bf16.msra.mxu0 %v741
    %3212 = vmatprep.subr.bf16.mxu0 0
    %3213 = vmatpush1.bf16.msra.mxu0 %v742
    %3214 = vmatprep.subr.bf16.mxu0 0
    %3215 = vmatpush1.bf16.msra.mxu0 %v743
    %3216 = vmatprep.subr.bf16.mxu0 0
    %3217 = vmatpush1.bf16.msra.mxu0 %v744
    %3218 = vmatprep.subr.bf16.mxu0 0
    %3219 = vmatpush1.bf16.msra.mxu0 %v745
    %3220 = vmatprep.subr.bf16.mxu0 0
    %3221 = vmatpush1.bf16.msra.mxu0 %v746
    %3222 = vmatprep.subr.bf16.mxu0 0
    %3223 = vmatpush1.bf16.msra.mxu0 %v747
    %3224 = vmatprep.subr.bf16.mxu0 0
    %3225 = vmatpush1.bf16.msra.mxu0 %v748
    %3226 = vmatprep.subr.bf16.mxu0 0
    %3227 = vmatpush1.bf16.msra.mxu0 %v749
    %3228 = vmatprep.subr.bf16.mxu0 0
    %3229 = vmatpush1.bf16.msra.mxu0 %v750
    %3230 = vmatprep.subr.bf16.mxu0 0
    %3231 = vmatpush1.bf16.msra.mxu0 %v751
    %3232 = vmatprep.subr.bf16.mxu0 0
    %3233 = vmatpush1.bf16.msra.mxu0 %v752
    %3234 = vmatprep.subr.bf16.mxu0 0
    %3235 = vmatpush1.bf16.msra.mxu0 %v753
    %3236 = vmatprep.subr.bf16.mxu0 0
    %3237 = vmatpush1.bf16.msra.mxu0 %v754
    %3238 = vmatprep.mubr.bf16.mxu0 %v3203
    %3239 = vmatmul.mubr.bf16.gmra.mrb[0].mxu0 %v3196
    %v3240 = vpop.f32.mrb[0].mxu0
    %v3241 = vadd.f32 0.0, %v3240
    %v3242 = vpop.f32.mrb[0].mxu0
    %v3243 = vpop.f32.mrb[0].mxu0
    %v3244 = vpop.f32.mrb[0].mxu0
    %3245 = vdwg.mxu0
    %v3246 = vadd.f32 %v3178, %v3241
    %v3247 = vadd.f32 %v3246, %v817
    %vm3248 = vcmp.gt.f32.partialorder %v3247, 0.0
    %v3249 = vmul.f32 %v3247, 0.2
    %v3250 = vsel %vm3248, %v3247, %v3249
    %v3251 = vpack.c.bf16 %v3250, %v3250
    %s3252 = scalar_lea.vmem %s3, 144
    %v3253 = vld [vmem:[%s3252] sm:$0xf]
    %v3254 = vld [vmem:[%s3252 + $0x4] sm:$0xf]
    %v3255 = vld [vmem:[%s3252 + $0x8] sm:$0xf]
    %v3256 = vld [vmem:[%s3252 + $0xc] sm:$0xf]
    %v3261 = vunpack.c.l.b16 %v3253
    %v3262 = vunpack.c.l.b16 %v3254
    %v3263 = vunpack.c.l.b16 %v3255
    %v3264 = vunpack.c.l.b16 %v3256
    %v3265 = vpack.c.b16 %v3262, %v3261
    %v3266 = vpack.c.b16 %v3264, %v3263
    %v3270 = vsel %vm1066, %v3251, 0
    %3272 = vmatprep.subr.bf16.mxu0 0
    %3273 = vmatpush1.bf16.msra.mxu0 %v3265
    %3274 = vmatprep.subr.bf16.mxu0 0
    %3275 = vmatpush1.bf16.msra.mxu0 %v3266
    %3276 = vmatprep.subr.bf16.mxu0 0
    %3277 = vmatpush1.bf16.msra.mxu0 0
    %3278 = vmatprep.subr.bf16.mxu0 0
    %3279 = vmatpush1.bf16.msra.mxu0 0
    %3280 = vmatprep.subr.bf16.mxu0 0
    %3281 = vmatpush1.bf16.msra.mxu0 0
    %3282 = vmatprep.subr.bf16.mxu0 0
    %3283 = vmatpush1.bf16.msra.mxu0 0
    %3284 = vmatprep.subr.bf16.mxu0 0
    %3285 = vmatpush1.bf16.msra.mxu0 0
    %3286 = vmatprep.subr.bf16.mxu0 0
    %3287 = vmatpush1.bf16.msra.mxu0 0
    %3288 = vmatprep.subr.bf16.mxu0 0
    %3289 = vmatpush1.bf16.msra.mxu0 0
    %3290 = vmatprep.subr.bf16.mxu0 0
    %3291 = vmatpush1.bf16.msra.mxu0 0
    %3292 = vmatprep.subr.bf16.mxu0 0
    %3293 = vmatpush1.bf16.msra.mxu0 0
    %3294 = vmatprep.subr.bf16.mxu0 0
    %3295 = vmatpush1.bf16.msra.mxu0 0
    %3296 = vmatprep.subr.bf16.mxu0 0
    %3297 = vmatpush1.bf16.msra.mxu0 0
    %3298 = vmatprep.subr.bf16.mxu0 0
    %3299 = vmatpush1.bf16.msra.mxu0 0
    %3300 = vmatprep.subr.bf16.mxu0 0
    %3301 = vmatpush1.bf16.msra.mxu0 0
    %3302 = vmatprep.subr.bf16.mxu0 0
    %3303 = vmatpush1.bf16.msra.mxu0 0
    %3304 = vmatprep.mubr.bf16.mxu0 0
    %3305 = vmatmul.mubr.bf16.gmra.mrb[0].mxu0 %v3270
    %v3306 = vpop.f32.mrb[0].mxu0
    %v3307 = vadd.f32 0.0, %v3306
    %v3308 = vpop.f32.mrb[0].mxu0
    %v3309 = vpop.f32.mrb[0].mxu0
    %v3310 = vpop.f32.mrb[0].mxu0
    %3311 = vdwg.mxu0
    %v3312 = vadd.f32 %v3057, %v3307
    %3313 = vmatprep.subr.bf16.mxu0 0
    %3314 = vmatpush1.bf16.msra.mxu0 %v185
    %3315 = vmatprep.subr.bf16.mxu0 0
    %3316 = vmatpush1.bf16.msra.mxu0 %v186
    %3317 = vmatprep.subr.bf16.mxu0 0
    %3318 = vmatpush1.bf16.msra.mxu0 %v187
    %3319 = vmatprep.subr.bf16.mxu0 0
    %3320 = vmatpush1.bf16.msra.mxu0 %v188
    %3321 = vmatprep.subr.bf16.mxu0 0
    %3322 = vmatpush1.bf16.msra.mxu0 %v189
    %3323 = vmatprep.subr.bf16.mxu0 0
    %3324 = vmatpush1.bf16.msra.mxu0 %v190
    %3325 = vmatprep.subr.bf16.mxu0 0
    %3326 = vmatpush1.bf16.msra.mxu0 %v191
    %3327 = vmatprep.subr.bf16.mxu0 0
    %3328 = vmatpush1.bf16.msra.mxu0 %v192
    %3329 = vmatprep.subr.bf16.mxu0 0
    %3330 = vmatpush1.bf16.msra.mxu0 %v193
    %3331 = vmatprep.subr.bf16.mxu0 0
    %3332 = vmatpush1.bf16.msra.mxu0 %v194
    %3333 = vmatprep.subr.bf16.mxu0 0
    %3334 = vmatpush1.bf16.msra.mxu0 %v195
    %3335 = vmatprep.subr.bf16.mxu0 0
    %3336 = vmatpush1.bf16.msra.mxu0 %v196
    %3337 = vmatprep.subr.bf16.mxu0 0
    %3338 = vmatpush1.bf16.msra.mxu0 %v197
    %3339 = vmatprep.subr.bf16.mxu0 0
    %3340 = vmatpush1.bf16.msra.mxu0 %v198
    %3341 = vmatprep.subr.bf16.mxu0 0
    %3342 = vmatpush1.bf16.msra.mxu0 %v199
    %3343 = vmatprep.subr.bf16.mxu0 0
    %3344 = vmatpush1.bf16.msra.mxu0 %v200
    %3345 = vmatprep.mubr.bf16.mxu0 %v2411
    %3346 = vmatmul.mubr.bf16.gmra.mrb[0].mxu0 %v2404
    %v3347 = vpop.f32.mrb[0].mxu0
    %v3348 = vadd.f32 0.0, %v3347
    %v3349 = vpop.f32.mrb[0].mxu0
    %v3350 = vpop.f32.mrb[0].mxu0
    %v3351 = vpop.f32.mrb[0].mxu0
    %3352 = vdwg.mxu0
    %3353 = vmatprep.subr.bf16.mxu0 0
    %3354 = vmatpush1.bf16.msra.mxu0 %v346
    %3355 = vmatprep.subr.bf16.mxu0 0
    %3356 = vmatpush1.bf16.msra.mxu0 %v347
    %3357 = vmatprep.subr.bf16.mxu0 0
    %3358 = vmatpush1.bf16.msra.mxu0 %v348
    %3359 = vmatprep.subr.bf16.mxu0 0
    %3360 = vmatpush1.bf16.msra.mxu0 %v349
    %3361 = vmatprep.subr.bf16.mxu0 0
    %3362 = vmatpush1.bf16.msra.mxu0 %v350
    %3363 = vmatprep.subr.bf16.mxu0 0
    %3364 = vmatpush1.bf16.msra.mxu0 %v351
    %3365 = vmatprep.subr.bf16.mxu0 0
    %3366 = vmatpush1.bf16.msra.mxu0 %v352
    %3367 = vmatprep.subr.bf16.mxu0 0
    %3368 = vmatpush1.bf16.msra.mxu0 %v353
    %3369 = vmatprep.subr.bf16.mxu0 0
    %3370 = vmatpush1.bf16.msra.mxu0 %v354
    %3371 = vmatprep.subr.bf16.mxu0 0
    %3372 = vmatpush1.bf16.msra.mxu0 %v355
    %3373 = vmatprep.subr.bf16.mxu0 0
    %3374 = vmatpush1.bf16.msra.mxu0 %v356
    %3375 = vmatprep.subr.bf16.mxu0 0
    %3376 = vmatpush1.bf16.msra.mxu0 %v357
    %3377 = vmatprep.subr.bf16.mxu0 0
    %3378 = vmatpush1.bf16.msra.mxu0 %v358
    %3379 = vmatprep.subr.bf16.mxu0 0
    %3380 = vmatpush1.bf16.msra.mxu0 %v359
    %3381 = vmatprep.subr.bf16.mxu0 0
    %3382 = vmatpush1.bf16.msra.mxu0 %v360
    %3383 = vmatprep.subr.bf16.mxu0 0
    %3384 = vmatpush1.bf16.msra.mxu0 %v361
    %3385 = vmatprep.mubr.bf16.mxu0 %v2156
    %3386 = vmatmul.mubr.bf16.gmra.mrb[0].mxu0 %v2149
    %v3387 = vpop.f32.mrb[0].mxu0
    %v3388 = vadd.f32 %v3348, %v3387
    %v3389 = vpop.f32.mrb[0].mxu0
    %v3390 = vpop.f32.mrb[0].mxu0
    %v3391 = vpop.f32.mrb[0].mxu0
    %3392 = vdwg.mxu0
    %3393 = vmatprep.subr.bf16.mxu0 0
    %3394 = vmatpush1.bf16.msra.mxu0 %v542
    %3395 = vmatprep.subr.bf16.mxu0 0
    %3396 = vmatpush1.bf16.msra.mxu0 %v543
    %3397 = vmatprep.subr.bf16.mxu0 0
    %3398 = vmatpush1.bf16.msra.mxu0 %v544
    %3399 = vmatprep.subr.bf16.mxu0 0
    %3400 = vmatpush1.bf16.msra.mxu0 %v545
    %3401 = vmatprep.subr.bf16.mxu0 0
    %3402 = vmatpush1.bf16.msra.mxu0 %v546
    %3403 = vmatprep.subr.bf16.mxu0 0
    %3404 = vmatpush1.bf16.msra.mxu0 %v547
    %3405 = vmatprep.subr.bf16.mxu0 0
    %3406 = vmatpush1.bf16.msra.mxu0 %v548
    %3407 = vmatprep.subr.bf16.mxu0 0
    %3408 = vmatpush1.bf16.msra.mxu0 %v549
    %3409 = vmatprep.subr.bf16.mxu0 0
    %3410 = vmatpush1.bf16.msra.mxu0 %v550
    %3411 = vmatprep.subr.bf16.mxu0 0
    %3412 = vmatpush1.bf16.msra.mxu0 %v551
    %3413 = vmatprep.subr.bf16.mxu0 0
    %3414 = vmatpush1.bf16.msra.mxu0 %v552
    %3415 = vmatprep.subr.bf16.mxu0 0
    %3416 = vmatpush1.bf16.msra.mxu0 %v553
    %3417 = vmatprep.subr.bf16.mxu0 0
    %3418 = vmatpush1.bf16.msra.mxu0 %v554
    %3419 = vmatprep.subr.bf16.mxu0 0
    %3420 = vmatpush1.bf16.msra.mxu0 %v555
    %3421 = vmatprep.subr.bf16.mxu0 0
    %3422 = vmatpush1.bf16.msra.mxu0 %v556
    %3423 = vmatprep.subr.bf16.mxu0 0
    %3424 = vmatpush1.bf16.msra.mxu0 %v557
    %3425 = vmatprep.mubr.bf16.mxu0 %v3203
    %3426 = vmatmul.mubr.bf16.gmra.mrb[0].mxu0 %v3196
    %v3427 = vpop.f32.mrb[0].mxu0
    %v3428 = vadd.f32 0.0, %v3427
    %v3429 = vpop.f32.mrb[0].mxu0
    %v3430 = vpop.f32.mrb[0].mxu0
    %v3431 = vpop.f32.mrb[0].mxu0
    %3432 = vdwg.mxu0
    %v3433 = vadd.f32 %v3388, %v3428
    %s3434 = scalar_lea.vmem %s0, 36
    %v3435 = vld [vmem:[%s3434] sm:$0x3]
    %v3438 = vunpack.c.l.s4 1966171168
    %v3439 = vunpack.c.0.s8 %v3438
    %v3440 = vlaneseq
    %v3441 = vshrl.u32 %v3440, 7
    %v3442 = vsub.s32 %v3439, %v3441
    %v3443 = vrot.slane %v3435, %v3442
    %v3444 = vcombine.high %v3443, %v3443
    %v3446 = vunpack.c.l.s4 1966171168
    %v3447 = vunpack.c.0.s8 %v3446
    %v3448 = vlaneseq
    %v3449 = vshrl.u32 %v3448, 7
    %v3450 = vsub.s32 %v3447, %v3449
    %v3451 = vrot.slane %v3443, %v3450
    %v3453 = vunpack.c.l.s4 1966171168
    %v3454 = vunpack.c.0.s8 %v3453
    %v3455 = vlaneseq
    %v3456 = vshrl.u32 %v3455, 7
    %v3457 = vsub.s32 %v3454, %v3456
    %v3458 = vrot.slane %v3444, %v3457
    %3461 = vmatprep.subr.bf16.mxu0 0
    %3462 = vmatpush1.bf16.msra.mxu0 %v739
    %3463 = vmatprep.subr.bf16.mxu0 0
    %3464 = vmatpush1.bf16.msra.mxu0 %v740
    %3465 = vmatprep.subr.bf16.mxu0 0
    %3466 = vmatpush1.bf16.msra.mxu0 %v741
    %3467 = vmatprep.subr.bf16.mxu0 0
    %3468 = vmatpush1.bf16.msra.mxu0 %v742
    %3469 = vmatprep.subr.bf16.mxu0 0
    %3470 = vmatpush1.bf16.msra.mxu0 %v743
    %3471 = vmatprep.subr.bf16.mxu0 0
    %3472 = vmatpush1.bf16.msra.mxu0 %v744
    %3473 = vmatprep.subr.bf16.mxu0 0
    %3474 = vmatpush1.bf16.msra.mxu0 %v745
    %3475 = vmatprep.subr.bf16.mxu0 0
    %3476 = vmatpush1.bf16.msra.mxu0 %v746
    %3477 = vmatprep.subr.bf16.mxu0 0
    %3478 = vmatpush1.bf16.msra.mxu0 %v747
    %3479 = vmatprep.subr.bf16.mxu0 0
    %3480 = vmatpush1.bf16.msra.mxu0 %v748
    %3481 = vmatprep.subr.bf16.mxu0 0
    %3482 = vmatpush1.bf16.msra.mxu0 %v749
    %3483 = vmatprep.subr.bf16.mxu0 0
    %3484 = vmatpush1.bf16.msra.mxu0 %v750
    %3485 = vmatprep.subr.bf16.mxu0 0
    %3486 = vmatpush1.bf16.msra.mxu0 %v751
    %3487 = vmatprep.subr.bf16.mxu0 0
    %3488 = vmatpush1.bf16.msra.mxu0 %v752
    %3489 = vmatprep.subr.bf16.mxu0 0
    %3490 = vmatpush1.bf16.msra.mxu0 %v753
    %3491 = vmatprep.subr.bf16.mxu0 0
    %3492 = vmatpush1.bf16.msra.mxu0 %v754
    %3493 = vmatprep.mubr.bf16.mxu0 %v3458
    %3494 = vmatmul.mubr.bf16.gmra.mrb[0].mxu0 %v3451
    %v3495 = vpop.f32.mrb[0].mxu0
    %v3496 = vadd.f32 0.0, %v3495
    %v3497 = vpop.f32.mrb[0].mxu0
    %v3498 = vpop.f32.mrb[0].mxu0
    %v3499 = vpop.f32.mrb[0].mxu0
    %3500 = vdwg.mxu0
    %v3501 = vadd.f32 %v3433, %v3496
    %v3502 = vadd.f32 %v3501, %v817
    %vm3503 = vcmp.gt.f32.partialorder %v3502, 0.0
    %v3504 = vmul.f32 %v3502, 0.2
    %v3505 = vsel %vm3503, %v3502, %v3504
    %v3506 = vpack.c.bf16 %v3505, %v3505
    %s3507 = scalar_lea.vmem %s3, 160
    %v3508 = vld [vmem:[%s3507] sm:$0xf]
    %v3509 = vld [vmem:[%s3507 + $0x4] sm:$0xf]
    %v3510 = vld [vmem:[%s3507 + $0x8] sm:$0xf]
    %v3511 = vld [vmem:[%s3507 + $0xc] sm:$0xf]
    %v3516 = vunpack.c.l.b16 %v3508
    %v3517 = vunpack.c.l.b16 %v3509
    %v3518 = vunpack.c.l.b16 %v3510
    %v3519 = vunpack.c.l.b16 %v3511
    %v3520 = vpack.c.b16 %v3517, %v3516
    %v3521 = vpack.c.b16 %v3519, %v3518
    %v3525 = vsel %vm1066, %v3506, 0
    %3527 = vmatprep.subr.bf16.mxu0 0
    %3528 = vmatpush1.bf16.msra.mxu0 %v3520
    %3529 = vmatprep.subr.bf16.mxu0 0
    %3530 = vmatpush1.bf16.msra.mxu0 %v3521
    %3531 = vmatprep.subr.bf16.mxu0 0
    %3532 = vmatpush1.bf16.msra.mxu0 0
    %3533 = vmatprep.subr.bf16.mxu0 0
    %3534 = vmatpush1.bf16.msra.mxu0 0
    %3535 = vmatprep.subr.bf16.mxu0 0
    %3536 = vmatpush1.bf16.msra.mxu0 0
    %3537 = vmatprep.subr.bf16.mxu0 0
    %3538 = vmatpush1.bf16.msra.mxu0 0
    %3539 = vmatprep.subr.bf16.mxu0 0
    %3540 = vmatpush1.bf16.msra.mxu0 0
    %3541 = vmatprep.subr.bf16.mxu0 0
    %3542 = vmatpush1.bf16.msra.mxu0 0
    %3543 = vmatprep.subr.bf16.mxu0 0
    %3544 = vmatpush1.bf16.msra.mxu0 0
    %3545 = vmatprep.subr.bf16.mxu0 0
    %3546 = vmatpush1.bf16.msra.mxu0 0
    %3547 = vmatprep.subr.bf16.mxu0 0
    %3548 = vmatpush1.bf16.msra.mxu0 0
    %3549 = vmatprep.subr.bf16.mxu0 0
    %3550 = vmatpush1.bf16.msra.mxu0 0
    %3551 = vmatprep.subr.bf16.mxu0 0
    %3552 = vmatpush1.bf16.msra.mxu0 0
    %3553 = vmatprep.subr.bf16.mxu0 0
    %3554 = vmatpush1.bf16.msra.mxu0 0
    %3555 = vmatprep.subr.bf16.mxu0 0
    %3556 = vmatpush1.bf16.msra.mxu0 0
    %3557 = vmatprep.subr.bf16.mxu0 0
    %3558 = vmatpush1.bf16.msra.mxu0 0
    %3559 = vmatprep.mubr.bf16.mxu0 0
    %3560 = vmatmul.mubr.bf16.gmra.mrb[0].mxu0 %v3525
    %v3561 = vpop.f32.mrb[0].mxu0
    %v3562 = vadd.f32 0.0, %v3561
    %v3563 = vpop.f32.mrb[0].mxu0
    %v3564 = vpop.f32.mrb[0].mxu0
    %v3565 = vpop.f32.mrb[0].mxu0
    %3566 = vdwg.mxu0
    %v3567 = vadd.f32 %v3312, %v3562
    %3568 = vmatprep.subr.bf16.mxu0 0
    %3569 = vmatpush1.bf16.msra.mxu0 %v185
    %3570 = vmatprep.subr.bf16.mxu0 0
    %3571 = vmatpush1.bf16.msra.mxu0 %v186
    %3572 = vmatprep.subr.bf16.mxu0 0
    %3573 = vmatpush1.bf16.msra.mxu0 %v187
    %3574 = vmatprep.subr.bf16.mxu0 0
    %3575 = vmatpush1.bf16.msra.mxu0 %v188
    %3576 = vmatprep.subr.bf16.mxu0 0
    %3577 = vmatpush1.bf16.msra.mxu0 %v189
    %3578 = vmatprep.subr.bf16.mxu0 0
    %3579 = vmatpush1.bf16.msra.mxu0 %v190
    %3580 = vmatprep.subr.bf16.mxu0 0
    %3581 = vmatpush1.bf16.msra.mxu0 %v191
    %3582 = vmatprep.subr.bf16.mxu0 0
    %3583 = vmatpush1.bf16.msra.mxu0 %v192
    %3584 = vmatprep.subr.bf16.mxu0 0
    %3585 = vmatpush1.bf16.msra.mxu0 %v193
    %3586 = vmatprep.subr.bf16.mxu0 0
    %3587 = vmatpush1.bf16.msra.mxu0 %v194
    %3588 = vmatprep.subr.bf16.mxu0 0
    %3589 = vmatpush1.bf16.msra.mxu0 %v195
    %3590 = vmatprep.subr.bf16.mxu0 0
    %3591 = vmatpush1.bf16.msra.mxu0 %v196
    %3592 = vmatprep.subr.bf16.mxu0 0
    %3593 = vmatpush1.bf16.msra.mxu0 %v197
    %3594 = vmatprep.subr.bf16.mxu0 0
    %3595 = vmatpush1.bf16.msra.mxu0 %v198
    %3596 = vmatprep.subr.bf16.mxu0 0
    %3597 = vmatpush1.bf16.msra.mxu0 %v199
    %3598 = vmatprep.subr.bf16.mxu0 0
    %3599 = vmatpush1.bf16.msra.mxu0 %v200
    %3600 = vmatprep.mubr.bf16.mxu0 %v2666
    %3601 = vmatmul.mubr.bf16.gmra.mrb[0].mxu0 %v2659
    %v3602 = vpop.f32.mrb[0].mxu0
    %v3603 = vadd.f32 0.0, %v3602
    %v3604 = vpop.f32.mrb[0].mxu0
    %v3605 = vpop.f32.mrb[0].mxu0
    %v3606 = vpop.f32.mrb[0].mxu0
    %3607 = vdwg.mxu0
    %3608 = vmatprep.subr.bf16.mxu0 0
    %3609 = vmatpush1.bf16.msra.mxu0 %v346
    %3610 = vmatprep.subr.bf16.mxu0 0
    %3611 = vmatpush1.bf16.msra.mxu0 %v347
    %3612 = vmatprep.subr.bf16.mxu0 0
    %3613 = vmatpush1.bf16.msra.mxu0 %v348
    %3614 = vmatprep.subr.bf16.mxu0 0
    %3615 = vmatpush1.bf16.msra.mxu0 %v349
    %3616 = vmatprep.subr.bf16.mxu0 0
    %3617 = vmatpush1.bf16.msra.mxu0 %v350
    %3618 = vmatprep.subr.bf16.mxu0 0
    %3619 = vmatpush1.bf16.msra.mxu0 %v351
    %3620 = vmatprep.subr.bf16.mxu0 0
    %3621 = vmatpush1.bf16.msra.mxu0 %v352
    %3622 = vmatprep.subr.bf16.mxu0 0
    %3623 = vmatpush1.bf16.msra.mxu0 %v353
    %3624 = vmatprep.subr.bf16.mxu0 0
    %3625 = vmatpush1.bf16.msra.mxu0 %v354
    %3626 = vmatprep.subr.bf16.mxu0 0
    %3627 = vmatpush1.bf16.msra.mxu0 %v355
    %3628 = vmatprep.subr.bf16.mxu0 0
    %3629 = vmatpush1.bf16.msra.mxu0 %v356
    %3630 = vmatprep.subr.bf16.mxu0 0
    %3631 = vmatpush1.bf16.msra.mxu0 %v357
    %3632 = vmatprep.subr.bf16.mxu0 0
    %3633 = vmatpush1.bf16.msra.mxu0 %v358
    %3634 = vmatprep.subr.bf16.mxu0 0
    %3635 = vmatpush1.bf16.msra.mxu0 %v359
    %3636 = vmatprep.subr.bf16.mxu0 0
    %3637 = vmatpush1.bf16.msra.mxu0 %v360
    %3638 = vmatprep.subr.bf16.mxu0 0
    %3639 = vmatpush1.bf16.msra.mxu0 %v361
    %3640 = vmatprep.mubr.bf16.mxu0 %v2411
    %3641 = vmatmul.mubr.bf16.gmra.mrb[0].mxu0 %v2404
    %v3642 = vpop.f32.mrb[0].mxu0
    %v3643 = vadd.f32 %v3603, %v3642
    %v3644 = vpop.f32.mrb[0].mxu0
    %v3645 = vpop.f32.mrb[0].mxu0
    %v3646 = vpop.f32.mrb[0].mxu0
    %3647 = vdwg.mxu0
    %3648 = vmatprep.subr.bf16.mxu0 0
    %3649 = vmatpush1.bf16.msra.mxu0 %v542
    %3650 = vmatprep.subr.bf16.mxu0 0
    %3651 = vmatpush1.bf16.msra.mxu0 %v543
    %3652 = vmatprep.subr.bf16.mxu0 0
    %3653 = vmatpush1.bf16.msra.mxu0 %v544
    %3654 = vmatprep.subr.bf16.mxu0 0
    %3655 = vmatpush1.bf16.msra.mxu0 %v545
    %3656 = vmatprep.subr.bf16.mxu0 0
    %3657 = vmatpush1.bf16.msra.mxu0 %v546
    %3658 = vmatprep.subr.bf16.mxu0 0
    %3659 = vmatpush1.bf16.msra.mxu0 %v547
    %3660 = vmatprep.subr.bf16.mxu0 0
    %3661 = vmatpush1.bf16.msra.mxu0 %v548
    %3662 = vmatprep.subr.bf16.mxu0 0
    %3663 = vmatpush1.bf16.msra.mxu0 %v549
    %3664 = vmatprep.subr.bf16.mxu0 0
    %3665 = vmatpush1.bf16.msra.mxu0 %v550
    %3666 = vmatprep.subr.bf16.mxu0 0
    %3667 = vmatpush1.bf16.msra.mxu0 %v551
    %3668 = vmatprep.subr.bf16.mxu0 0
    %3669 = vmatpush1.bf16.msra.mxu0 %v552
    %3670 = vmatprep.subr.bf16.mxu0 0
    %3671 = vmatpush1.bf16.msra.mxu0 %v553
    %3672 = vmatprep.subr.bf16.mxu0 0
    %3673 = vmatpush1.bf16.msra.mxu0 %v554
    %3674 = vmatprep.subr.bf16.mxu0 0
    %3675 = vmatpush1.bf16.msra.mxu0 %v555
    %3676 = vmatprep.subr.bf16.mxu0 0
    %3677 = vmatpush1.bf16.msra.mxu0 %v556
    %3678 = vmatprep.subr.bf16.mxu0 0
    %3679 = vmatpush1.bf16.msra.mxu0 %v557
    %3680 = vmatprep.mubr.bf16.mxu0 %v3458
    %3681 = vmatmul.mubr.bf16.gmra.mrb[0].mxu0 %v3451
    %v3682 = vpop.f32.mrb[0].mxu0
    %v3683 = vadd.f32 0.0, %v3682
    %v3684 = vpop.f32.mrb[0].mxu0
    %v3685 = vpop.f32.mrb[0].mxu0
    %v3686 = vpop.f32.mrb[0].mxu0
    %3687 = vdwg.mxu0
    %v3688 = vadd.f32 %v3643, %v3683
    %s3689 = scalar_lea.vmem %s0, 38
    %v3690 = vld [vmem:[%s3689] sm:$0x3]
    %v3693 = vunpack.c.l.s4 1966171168
    %v3694 = vunpack.c.0.s8 %v3693
    %v3695 = vlaneseq
    %v3696 = vshrl.u32 %v3695, 7
    %v3697 = vsub.s32 %v3694, %v3696
    %v3698 = vrot.slane %v3690, %v3697
    %v3699 = vcombine.high %v3698, %v3698
    %v3701 = vunpack.c.l.s4 1966171168
    %v3702 = vunpack.c.0.s8 %v3701
    %v3703 = vlaneseq
    %v3704 = vshrl.u32 %v3703, 7
    %v3705 = vsub.s32 %v3702, %v3704
    %v3706 = vrot.slane %v3698, %v3705
    %v3708 = vunpack.c.l.s4 1966171168
    %v3709 = vunpack.c.0.s8 %v3708
    %v3710 = vlaneseq
    %v3711 = vshrl.u32 %v3710, 7
    %v3712 = vsub.s32 %v3709, %v3711
    %v3713 = vrot.slane %v3699, %v3712
    %3716 = vmatprep.subr.bf16.mxu0 0
    %3717 = vmatpush1.bf16.msra.mxu0 %v739
    %3718 = vmatprep.subr.bf16.mxu0 0
    %3719 = vmatpush1.bf16.msra.mxu0 %v740
    %3720 = vmatprep.subr.bf16.mxu0 0
    %3721 = vmatpush1.bf16.msra.mxu0 %v741
    %3722 = vmatprep.subr.bf16.mxu0 0
    %3723 = vmatpush1.bf16.msra.mxu0 %v742
    %3724 = vmatprep.subr.bf16.mxu0 0
    %3725 = vmatpush1.bf16.msra.mxu0 %v743
    %3726 = vmatprep.subr.bf16.mxu0 0
    %3727 = vmatpush1.bf16.msra.mxu0 %v744
    %3728 = vmatprep.subr.bf16.mxu0 0
    %3729 = vmatpush1.bf16.msra.mxu0 %v745
    %3730 = vmatprep.subr.bf16.mxu0 0
    %3731 = vmatpush1.bf16.msra.mxu0 %v746
    %3732 = vmatprep.subr.bf16.mxu0 0
    %3733 = vmatpush1.bf16.msra.mxu0 %v747
    %3734 = vmatprep.subr.bf16.mxu0 0
    %3735 = vmatpush1.bf16.msra.mxu0 %v748
    %3736 = vmatprep.subr.bf16.mxu0 0
    %3737 = vmatpush1.bf16.msra.mxu0 %v749
    %3738 = vmatprep.subr.bf16.mxu0 0
    %3739 = vmatpush1.bf16.msra.mxu0 %v750
    %3740 = vmatprep.subr.bf16.mxu0 0
    %3741 = vmatpush1.bf16.msra.mxu0 %v751
    %3742 = vmatprep.subr.bf16.mxu0 0
    %3743 = vmatpush1.bf16.msra.mxu0 %v752
    %3744 = vmatprep.subr.bf16.mxu0 0
    %3745 = vmatpush1.bf16.msra.mxu0 %v753
    %3746 = vmatprep.subr.bf16.mxu0 0
    %3747 = vmatpush1.bf16.msra.mxu0 %v754
    %3748 = vmatprep.mubr.bf16.mxu0 %v3713
    %3749 = vmatmul.mubr.bf16.gmra.mrb[0].mxu0 %v3706
    %v3750 = vpop.f32.mrb[0].mxu0
    %v3751 = vadd.f32 0.0, %v3750
    %v3752 = vpop.f32.mrb[0].mxu0
    %v3753 = vpop.f32.mrb[0].mxu0
    %v3754 = vpop.f32.mrb[0].mxu0
    %3755 = vdwg.mxu0
    %v3756 = vadd.f32 %v3688, %v3751
    %v3757 = vadd.f32 %v3756, %v817
    %vm3758 = vcmp.gt.f32.partialorder %v3757, 0.0
    %v3759 = vmul.f32 %v3757, 0.2
    %v3760 = vsel %vm3758, %v3757, %v3759
    %v3761 = vpack.c.bf16 %v3760, %v3760
    %s3762 = scalar_lea.vmem %s3, 176
    %v3763 = vld [vmem:[%s3762] sm:$0xf]
    %v3764 = vld [vmem:[%s3762 + $0x4] sm:$0xf]
    %v3765 = vld [vmem:[%s3762 + $0x8] sm:$0xf]
    %v3766 = vld [vmem:[%s3762 + $0xc] sm:$0xf]
    %v3771 = vunpack.c.l.b16 %v3763
    %v3772 = vunpack.c.l.b16 %v3764
    %v3773 = vunpack.c.l.b16 %v3765
    %v3774 = vunpack.c.l.b16 %v3766
    %v3775 = vpack.c.b16 %v3772, %v3771
    %v3776 = vpack.c.b16 %v3774, %v3773
    %v3780 = vsel %vm1066, %v3761, 0
    %3782 = vmatprep.subr.bf16.mxu0 0
    %3783 = vmatpush1.bf16.msra.mxu0 %v3775
    %3784 = vmatprep.subr.bf16.mxu0 0
    %3785 = vmatpush1.bf16.msra.mxu0 %v3776
    %3786 = vmatprep.subr.bf16.mxu0 0
    %3787 = vmatpush1.bf16.msra.mxu0 0
    %3788 = vmatprep.subr.bf16.mxu0 0
    %3789 = vmatpush1.bf16.msra.mxu0 0
    %3790 = vmatprep.subr.bf16.mxu0 0
    %3791 = vmatpush1.bf16.msra.mxu0 0
    %3792 = vmatprep.subr.bf16.mxu0 0
    %3793 = vmatpush1.bf16.msra.mxu0 0
    %3794 = vmatprep.subr.bf16.mxu0 0
    %3795 = vmatpush1.bf16.msra.mxu0 0
    %3796 = vmatprep.subr.bf16.mxu0 0
    %3797 = vmatpush1.bf16.msra.mxu0 0
    %3798 = vmatprep.subr.bf16.mxu0 0
    %3799 = vmatpush1.bf16.msra.mxu0 0
    %3800 = vmatprep.subr.bf16.mxu0 0
    %3801 = vmatpush1.bf16.msra.mxu0 0
    %3802 = vmatprep.subr.bf16.mxu0 0
    %3803 = vmatpush1.bf16.msra.mxu0 0
    %3804 = vmatprep.subr.bf16.mxu0 0
    %3805 = vmatpush1.bf16.msra.mxu0 0
    %3806 = vmatprep.subr.bf16.mxu0 0
    %3807 = vmatpush1.bf16.msra.mxu0 0
    %3808 = vmatprep.subr.bf16.mxu0 0
    %3809 = vmatpush1.bf16.msra.mxu0 0
    %3810 = vmatprep.subr.bf16.mxu0 0
    %3811 = vmatpush1.bf16.msra.mxu0 0
    %3812 = vmatprep.subr.bf16.mxu0 0
    %3813 = vmatpush1.bf16.msra.mxu0 0
    %3814 = vmatprep.mubr.bf16.mxu0 0
    %3815 = vmatmul.mubr.bf16.gmra.mrb[0].mxu0 %v3780
    %v3816 = vpop.f32.mrb[0].mxu0
    %v3817 = vadd.f32 0.0, %v3816
    %v3818 = vpop.f32.mrb[0].mxu0
    %v3819 = vpop.f32.mrb[0].mxu0
    %v3820 = vpop.f32.mrb[0].mxu0
    %3821 = vdwg.mxu0
    %v3822 = vadd.f32 %v3567, %v3817
    %3823 = vmatprep.subr.bf16.mxu0 0
    %3824 = vmatpush1.bf16.msra.mxu0 %v185
    %3825 = vmatprep.subr.bf16.mxu0 0
    %3826 = vmatpush1.bf16.msra.mxu0 %v186
    %3827 = vmatprep.subr.bf16.mxu0 0
    %3828 = vmatpush1.bf16.msra.mxu0 %v187
    %3829 = vmatprep.subr.bf16.mxu0 0
    %3830 = vmatpush1.bf16.msra.mxu0 %v188
    %3831 = vmatprep.subr.bf16.mxu0 0
    %3832 = vmatpush1.bf16.msra.mxu0 %v189
    %3833 = vmatprep.subr.bf16.mxu0 0
    %3834 = vmatpush1.bf16.msra.mxu0 %v190
    %3835 = vmatprep.subr.bf16.mxu0 0
    %3836 = vmatpush1.bf16.msra.mxu0 %v191
    %3837 = vmatprep.subr.bf16.mxu0 0
    %3838 = vmatpush1.bf16.msra.mxu0 %v192
    %3839 = vmatprep.subr.bf16.mxu0 0
    %3840 = vmatpush1.bf16.msra.mxu0 %v193
    %3841 = vmatprep.subr.bf16.mxu0 0
    %3842 = vmatpush1.bf16.msra.mxu0 %v194
    %3843 = vmatprep.subr.bf16.mxu0 0
    %3844 = vmatpush1.bf16.msra.mxu0 %v195
    %3845 = vmatprep.subr.bf16.mxu0 0
    %3846 = vmatpush1.bf16.msra.mxu0 %v196
    %3847 = vmatprep.subr.bf16.mxu0 0
    %3848 = vmatpush1.bf16.msra.mxu0 %v197
    %3849 = vmatprep.subr.bf16.mxu0 0
    %3850 = vmatpush1.bf16.msra.mxu0 %v198
    %3851 = vmatprep.subr.bf16.mxu0 0
    %3852 = vmatpush1.bf16.msra.mxu0 %v199
    %3853 = vmatprep.subr.bf16.mxu0 0
    %3854 = vmatpush1.bf16.msra.mxu0 %v200
    %3855 = vmatprep.mubr.bf16.mxu0 %v2948
    %3856 = vmatmul.mubr.bf16.gmra.mrb[0].mxu0 %v2941
    %v3857 = vpop.f32.mrb[0].mxu0
    %v3858 = vadd.f32 0.0, %v3857
    %v3859 = vpop.f32.mrb[0].mxu0
    %v3860 = vpop.f32.mrb[0].mxu0
    %v3861 = vpop.f32.mrb[0].mxu0
    %3862 = vdwg.mxu0
    %3863 = vmatprep.subr.bf16.mxu0 0
    %3864 = vmatpush1.bf16.msra.mxu0 %v346
    %3865 = vmatprep.subr.bf16.mxu0 0
    %3866 = vmatpush1.bf16.msra.mxu0 %v347
    %3867 = vmatprep.subr.bf16.mxu0 0
    %3868 = vmatpush1.bf16.msra.mxu0 %v348
    %3869 = vmatprep.subr.bf16.mxu0 0
    %3870 = vmatpush1.bf16.msra.mxu0 %v349
    %3871 = vmatprep.subr.bf16.mxu0 0
    %3872 = vmatpush1.bf16.msra.mxu0 %v350
    %3873 = vmatprep.subr.bf16.mxu0 0
    %3874 = vmatpush1.bf16.msra.mxu0 %v351
    %3875 = vmatprep.subr.bf16.mxu0 0
    %3876 = vmatpush1.bf16.msra.mxu0 %v352
    %3877 = vmatprep.subr.bf16.mxu0 0
    %3878 = vmatpush1.bf16.msra.mxu0 %v353
    %3879 = vmatprep.subr.bf16.mxu0 0
    %3880 = vmatpush1.bf16.msra.mxu0 %v354
    %3881 = vmatprep.subr.bf16.mxu0 0
    %3882 = vmatpush1.bf16.msra.mxu0 %v355
    %3883 = vmatprep.subr.bf16.mxu0 0
    %3884 = vmatpush1.bf16.msra.mxu0 %v356
    %3885 = vmatprep.subr.bf16.mxu0 0
    %3886 = vmatpush1.bf16.msra.mxu0 %v357
    %3887 = vmatprep.subr.bf16.mxu0 0
    %3888 = vmatpush1.bf16.msra.mxu0 %v358
    %3889 = vmatprep.subr.bf16.mxu0 0
    %3890 = vmatpush1.bf16.msra.mxu0 %v359
    %3891 = vmatprep.subr.bf16.mxu0 0
    %3892 = vmatpush1.bf16.msra.mxu0 %v360
    %3893 = vmatprep.subr.bf16.mxu0 0
    %3894 = vmatpush1.bf16.msra.mxu0 %v361
    %3895 = vmatprep.mubr.bf16.mxu0 %v2880
    %3896 = vmatmul.mubr.bf16.gmra.mrb[0].mxu0 %v2873
    %v3897 = vpop.f32.mrb[0].mxu0
    %v3898 = vadd.f32 %v3858, %v3897
    %v3899 = vpop.f32.mrb[0].mxu0
    %v3900 = vpop.f32.mrb[0].mxu0
    %v3901 = vpop.f32.mrb[0].mxu0
    %3902 = vdwg.mxu0
    %s3903 = scalar_lea.vmem %s0, 40
    %v3904 = vld [vmem:[%s3903] sm:$0x3]
    %v3907 = vunpack.c.l.s4 1966171168
    %v3908 = vunpack.c.0.s8 %v3907
    %v3909 = vlaneseq
    %v3910 = vshrl.u32 %v3909, 7
    %v3911 = vsub.s32 %v3908, %v3910
    %v3912 = vrot.slane %v3904, %v3911
    %v3913 = vcombine.high %v3912, %v3912
    %v3915 = vunpack.c.l.s4 1966171168
    %v3916 = vunpack.c.0.s8 %v3915
    %v3917 = vlaneseq
    %v3918 = vshrl.u32 %v3917, 7
    %v3919 = vsub.s32 %v3916, %v3918
    %v3920 = vrot.slane %v3912, %v3919
    %v3922 = vunpack.c.l.s4 1966171168
    %v3923 = vunpack.c.0.s8 %v3922
    %v3924 = vlaneseq
    %v3925 = vshrl.u32 %v3924, 7
    %v3926 = vsub.s32 %v3923, %v3925
    %v3927 = vrot.slane %v3913, %v3926
    %3930 = vmatprep.subr.bf16.mxu0 0
    %3931 = vmatpush1.bf16.msra.mxu0 %v542
    %3932 = vmatprep.subr.bf16.mxu0 0
    %3933 = vmatpush1.bf16.msra.mxu0 %v543
    %3934 = vmatprep.subr.bf16.mxu0 0
    %3935 = vmatpush1.bf16.msra.mxu0 %v544
    %3936 = vmatprep.subr.bf16.mxu0 0
    %3937 = vmatpush1.bf16.msra.mxu0 %v545
    %3938 = vmatprep.subr.bf16.mxu0 0
    %3939 = vmatpush1.bf16.msra.mxu0 %v546
    %3940 = vmatprep.subr.bf16.mxu0 0
    %3941 = vmatpush1.bf16.msra.mxu0 %v547
    %3942 = vmatprep.subr.bf16.mxu0 0
    %3943 = vmatpush1.bf16.msra.mxu0 %v548
    %3944 = vmatprep.subr.bf16.mxu0 0
    %3945 = vmatpush1.bf16.msra.mxu0 %v549
    %3946 = vmatprep.subr.bf16.mxu0 0
    %3947 = vmatpush1.bf16.msra.mxu0 %v550
    %3948 = vmatprep.subr.bf16.mxu0 0
    %3949 = vmatpush1.bf16.msra.mxu0 %v551
    %3950 = vmatprep.subr.bf16.mxu0 0
    %3951 = vmatpush1.bf16.msra.mxu0 %v552
    %3952 = vmatprep.subr.bf16.mxu0 0
    %3953 = vmatpush1.bf16.msra.mxu0 %v553
    %3954 = vmatprep.subr.bf16.mxu0 0
    %3955 = vmatpush1.bf16.msra.mxu0 %v554
    %3956 = vmatprep.subr.bf16.mxu0 0
    %3957 = vmatpush1.bf16.msra.mxu0 %v555
    %3958 = vmatprep.subr.bf16.mxu0 0
    %3959 = vmatpush1.bf16.msra.mxu0 %v556
    %3960 = vmatprep.subr.bf16.mxu0 0
    %3961 = vmatpush1.bf16.msra.mxu0 %v557
    %3962 = vmatprep.mubr.bf16.mxu0 %v3927
    %3963 = vmatmul.mubr.bf16.gmra.mrb[0].mxu0 %v3920
    %v3964 = vpop.f32.mrb[0].mxu0
    %v3965 = vadd.f32 0.0, %v3964
    %v3966 = vpop.f32.mrb[0].mxu0
    %v3967 = vpop.f32.mrb[0].mxu0
    %v3968 = vpop.f32.mrb[0].mxu0
    %3969 = vdwg.mxu0
    %v3970 = vadd.f32 %v3898, %v3965
    %s3971 = scalar_lea.vmem %s0, 42
    %v3972 = vld [vmem:[%s3971] sm:$0x3]
    %v3975 = vunpack.c.l.s4 1966171168
    %v3976 = vunpack.c.0.s8 %v3975
    %v3977 = vlaneseq
    %v3978 = vshrl.u32 %v3977, 7
    %v3979 = vsub.s32 %v3976, %v3978
    %v3980 = vrot.slane %v3972, %v3979
    %v3981 = vcombine.high %v3980, %v3980
    %v3983 = vunpack.c.l.s4 1966171168
    %v3984 = vunpack.c.0.s8 %v3983
    %v3985 = vlaneseq
    %v3986 = vshrl.u32 %v3985, 7
    %v3987 = vsub.s32 %v3984, %v3986
    %v3988 = vrot.slane %v3980, %v3987
    %v3990 = vunpack.c.l.s4 1966171168
    %v3991 = vunpack.c.0.s8 %v3990
    %v3992 = vlaneseq
    %v3993 = vshrl.u32 %v3992, 7
    %v3994 = vsub.s32 %v3991, %v3993
    %v3995 = vrot.slane %v3981, %v3994
    %3998 = vmatprep.subr.bf16.mxu0 0
    %3999 = vmatpush1.bf16.msra.mxu0 %v739
    %4000 = vmatprep.subr.bf16.mxu0 0
    %4001 = vmatpush1.bf16.msra.mxu0 %v740
    %4002 = vmatprep.subr.bf16.mxu0 0
    %4003 = vmatpush1.bf16.msra.mxu0 %v741
    %4004 = vmatprep.subr.bf16.mxu0 0
    %4005 = vmatpush1.bf16.msra.mxu0 %v742
    %4006 = vmatprep.subr.bf16.mxu0 0
    %4007 = vmatpush1.bf16.msra.mxu0 %v743
    %4008 = vmatprep.subr.bf16.mxu0 0
    %4009 = vmatpush1.bf16.msra.mxu0 %v744
    %4010 = vmatprep.subr.bf16.mxu0 0
    %4011 = vmatpush1.bf16.msra.mxu0 %v745
    %4012 = vmatprep.subr.bf16.mxu0 0
    %4013 = vmatpush1.bf16.msra.mxu0 %v746
    %4014 = vmatprep.subr.bf16.mxu0 0
    %4015 = vmatpush1.bf16.msra.mxu0 %v747
    %4016 = vmatprep.subr.bf16.mxu0 0
    %4017 = vmatpush1.bf16.msra.mxu0 %v748
    %4018 = vmatprep.subr.bf16.mxu0 0
    %4019 = vmatpush1.bf16.msra.mxu0 %v749
    %4020 = vmatprep.subr.bf16.mxu0 0
    %4021 = vmatpush1.bf16.msra.mxu0 %v750
    %4022 = vmatprep.subr.bf16.mxu0 0
    %4023 = vmatpush1.bf16.msra.mxu0 %v751
    %4024 = vmatprep.subr.bf16.mxu0 0
    %4025 = vmatpush1.bf16.msra.mxu0 %v752
    %4026 = vmatprep.subr.bf16.mxu0 0
    %4027 = vmatpush1.bf16.msra.mxu0 %v753
    %4028 = vmatprep.subr.bf16.mxu0 0
    %4029 = vmatpush1.bf16.msra.mxu0 %v754
    %4030 = vmatprep.mubr.bf16.mxu0 %v3995
    %4031 = vmatmul.mubr.bf16.gmra.mrb[0].mxu0 %v3988
    %v4032 = vpop.f32.mrb[0].mxu0
    %v4033 = vadd.f32 0.0, %v4032
    %v4034 = vpop.f32.mrb[0].mxu0
    %v4035 = vpop.f32.mrb[0].mxu0
    %v4036 = vpop.f32.mrb[0].mxu0
    %4037 = vdwg.mxu0
    %v4038 = vadd.f32 %v3970, %v4033
    %v4039 = vadd.f32 %v4038, %v817
    %vm4040 = vcmp.gt.f32.partialorder %v4039, 0.0
    %v4041 = vmul.f32 %v4039, 0.2
    %v4042 = vsel %vm4040, %v4039, %v4041
    %v4043 = vpack.c.bf16 %v4042, %v4042
    %s4044 = scalar_lea.vmem %s3, 192
    %v4045 = vld [vmem:[%s4044] sm:$0xf]
    %v4046 = vld [vmem:[%s4044 + $0x4] sm:$0xf]
    %v4047 = vld [vmem:[%s4044 + $0x8] sm:$0xf]
    %v4048 = vld [vmem:[%s4044 + $0xc] sm:$0xf]
    %v4053 = vunpack.c.l.b16 %v4045
    %v4054 = vunpack.c.l.b16 %v4046
    %v4055 = vunpack.c.l.b16 %v4047
    %v4056 = vunpack.c.l.b16 %v4048
    %v4057 = vpack.c.b16 %v4054, %v4053
    %v4058 = vpack.c.b16 %v4056, %v4055
    %v4062 = vsel %vm1066, %v4043, 0
    %4064 = vmatprep.subr.bf16.mxu0 0
    %4065 = vmatpush1.bf16.msra.mxu0 %v4057
    %4066 = vmatprep.subr.bf16.mxu0 0
    %4067 = vmatpush1.bf16.msra.mxu0 %v4058
    %4068 = vmatprep.subr.bf16.mxu0 0
    %4069 = vmatpush1.bf16.msra.mxu0 0
    %4070 = vmatprep.subr.bf16.mxu0 0
    %4071 = vmatpush1.bf16.msra.mxu0 0
    %4072 = vmatprep.subr.bf16.mxu0 0
    %4073 = vmatpush1.bf16.msra.mxu0 0
    %4074 = vmatprep.subr.bf16.mxu0 0
    %4075 = vmatpush1.bf16.msra.mxu0 0
    %4076 = vmatprep.subr.bf16.mxu0 0
    %4077 = vmatpush1.bf16.msra.mxu0 0
    %4078 = vmatprep.subr.bf16.mxu0 0
    %4079 = vmatpush1.bf16.msra.mxu0 0
    %4080 = vmatprep.subr.bf16.mxu0 0
    %4081 = vmatpush1.bf16.msra.mxu0 0
    %4082 = vmatprep.subr.bf16.mxu0 0
    %4083 = vmatpush1.bf16.msra.mxu0 0
    %4084 = vmatprep.subr.bf16.mxu0 0
    %4085 = vmatpush1.bf16.msra.mxu0 0
    %4086 = vmatprep.subr.bf16.mxu0 0
    %4087 = vmatpush1.bf16.msra.mxu0 0
    %4088 = vmatprep.subr.bf16.mxu0 0
    %4089 = vmatpush1.bf16.msra.mxu0 0
    %4090 = vmatprep.subr.bf16.mxu0 0
    %4091 = vmatpush1.bf16.msra.mxu0 0
    %4092 = vmatprep.subr.bf16.mxu0 0
    %4093 = vmatpush1.bf16.msra.mxu0 0
    %4094 = vmatprep.subr.bf16.mxu0 0
    %4095 = vmatpush1.bf16.msra.mxu0 0
    %4096 = vmatprep.mubr.bf16.mxu0 0
    %4097 = vmatmul.mubr.bf16.gmra.mrb[0].mxu0 %v4062
    %v4098 = vpop.f32.mrb[0].mxu0
    %v4099 = vadd.f32 0.0, %v4098
    %v4100 = vpop.f32.mrb[0].mxu0
    %v4101 = vpop.f32.mrb[0].mxu0
    %v4102 = vpop.f32.mrb[0].mxu0
    %4103 = vdwg.mxu0
    %v4104 = vadd.f32 %v3822, %v4099
    %4105 = vmatprep.subr.bf16.mxu0 0
    %4106 = vmatpush1.bf16.msra.mxu0 %v185
    %4107 = vmatprep.subr.bf16.mxu0 0
    %4108 = vmatpush1.bf16.msra.mxu0 %v186
    %4109 = vmatprep.subr.bf16.mxu0 0
    %4110 = vmatpush1.bf16.msra.mxu0 %v187
    %4111 = vmatprep.subr.bf16.mxu0 0
    %4112 = vmatpush1.bf16.msra.mxu0 %v188
    %4113 = vmatprep.subr.bf16.mxu0 0
    %4114 = vmatpush1.bf16.msra.mxu0 %v189
    %4115 = vmatprep.subr.bf16.mxu0 0
    %4116 = vmatpush1.bf16.msra.mxu0 %v190
    %4117 = vmatprep.subr.bf16.mxu0 0
    %4118 = vmatpush1.bf16.msra.mxu0 %v191
    %4119 = vmatprep.subr.bf16.mxu0 0
    %4120 = vmatpush1.bf16.msra.mxu0 %v192
    %4121 = vmatprep.subr.bf16.mxu0 0
    %4122 = vmatpush1.bf16.msra.mxu0 %v193
    %4123 = vmatprep.subr.bf16.mxu0 0
    %4124 = vmatpush1.bf16.msra.mxu0 %v194
    %4125 = vmatprep.subr.bf16.mxu0 0
    %4126 = vmatpush1.bf16.msra.mxu0 %v195
    %4127 = vmatprep.subr.bf16.mxu0 0
    %4128 = vmatpush1.bf16.msra.mxu0 %v196
    %4129 = vmatprep.subr.bf16.mxu0 0
    %4130 = vmatpush1.bf16.msra.mxu0 %v197
    %4131 = vmatprep.subr.bf16.mxu0 0
    %4132 = vmatpush1.bf16.msra.mxu0 %v198
    %4133 = vmatprep.subr.bf16.mxu0 0
    %4134 = vmatpush1.bf16.msra.mxu0 %v199
    %4135 = vmatprep.subr.bf16.mxu0 0
    %4136 = vmatpush1.bf16.msra.mxu0 %v200
    %4137 = vmatprep.mubr.bf16.mxu0 %v3203
    %4138 = vmatmul.mubr.bf16.gmra.mrb[0].mxu0 %v3196
    %v4139 = vpop.f32.mrb[0].mxu0
    %v4140 = vadd.f32 0.0, %v4139
    %v4141 = vpop.f32.mrb[0].mxu0
    %v4142 = vpop.f32.mrb[0].mxu0
    %v4143 = vpop.f32.mrb[0].mxu0
    %4144 = vdwg.mxu0
    %4145 = vmatprep.subr.bf16.mxu0 0
    %4146 = vmatpush1.bf16.msra.mxu0 %v346
    %4147 = vmatprep.subr.bf16.mxu0 0
    %4148 = vmatpush1.bf16.msra.mxu0 %v347
    %4149 = vmatprep.subr.bf16.mxu0 0
    %4150 = vmatpush1.bf16.msra.mxu0 %v348
    %4151 = vmatprep.subr.bf16.mxu0 0
    %4152 = vmatpush1.bf16.msra.mxu0 %v349
    %4153 = vmatprep.subr.bf16.mxu0 0
    %4154 = vmatpush1.bf16.msra.mxu0 %v350
    %4155 = vmatprep.subr.bf16.mxu0 0
    %4156 = vmatpush1.bf16.msra.mxu0 %v351
    %4157 = vmatprep.subr.bf16.mxu0 0
    %4158 = vmatpush1.bf16.msra.mxu0 %v352
    %4159 = vmatprep.subr.bf16.mxu0 0
    %4160 = vmatpush1.bf16.msra.mxu0 %v353
    %4161 = vmatprep.subr.bf16.mxu0 0
    %4162 = vmatpush1.bf16.msra.mxu0 %v354
    %4163 = vmatprep.subr.bf16.mxu0 0
    %4164 = vmatpush1.bf16.msra.mxu0 %v355
    %4165 = vmatprep.subr.bf16.mxu0 0
    %4166 = vmatpush1.bf16.msra.mxu0 %v356
    %4167 = vmatprep.subr.bf16.mxu0 0
    %4168 = vmatpush1.bf16.msra.mxu0 %v357
    %4169 = vmatprep.subr.bf16.mxu0 0
    %4170 = vmatpush1.bf16.msra.mxu0 %v358
    %4171 = vmatprep.subr.bf16.mxu0 0
    %4172 = vmatpush1.bf16.msra.mxu0 %v359
    %4173 = vmatprep.subr.bf16.mxu0 0
    %4174 = vmatpush1.bf16.msra.mxu0 %v360
    %4175 = vmatprep.subr.bf16.mxu0 0
    %4176 = vmatpush1.bf16.msra.mxu0 %v361
    %4177 = vmatprep.mubr.bf16.mxu0 %v2948
    %4178 = vmatmul.mubr.bf16.gmra.mrb[0].mxu0 %v2941
    %v4179 = vpop.f32.mrb[0].mxu0
    %v4180 = vadd.f32 %v4140, %v4179
    %v4181 = vpop.f32.mrb[0].mxu0
    %v4182 = vpop.f32.mrb[0].mxu0
    %v4183 = vpop.f32.mrb[0].mxu0
    %4184 = vdwg.mxu0
    %4185 = vmatprep.subr.bf16.mxu0 0
    %4186 = vmatpush1.bf16.msra.mxu0 %v542
    %4187 = vmatprep.subr.bf16.mxu0 0
    %4188 = vmatpush1.bf16.msra.mxu0 %v543
    %4189 = vmatprep.subr.bf16.mxu0 0
    %4190 = vmatpush1.bf16.msra.mxu0 %v544
    %4191 = vmatprep.subr.bf16.mxu0 0
    %4192 = vmatpush1.bf16.msra.mxu0 %v545
    %4193 = vmatprep.subr.bf16.mxu0 0
    %4194 = vmatpush1.bf16.msra.mxu0 %v546
    %4195 = vmatprep.subr.bf16.mxu0 0
    %4196 = vmatpush1.bf16.msra.mxu0 %v547
    %4197 = vmatprep.subr.bf16.mxu0 0
    %4198 = vmatpush1.bf16.msra.mxu0 %v548
    %4199 = vmatprep.subr.bf16.mxu0 0
    %4200 = vmatpush1.bf16.msra.mxu0 %v549
    %4201 = vmatprep.subr.bf16.mxu0 0
    %4202 = vmatpush1.bf16.msra.mxu0 %v550
    %4203 = vmatprep.subr.bf16.mxu0 0
    %4204 = vmatpush1.bf16.msra.mxu0 %v551
    %4205 = vmatprep.subr.bf16.mxu0 0
    %4206 = vmatpush1.bf16.msra.mxu0 %v552
    %4207 = vmatprep.subr.bf16.mxu0 0
    %4208 = vmatpush1.bf16.msra.mxu0 %v553
    %4209 = vmatprep.subr.bf16.mxu0 0
    %4210 = vmatpush1.bf16.msra.mxu0 %v554
    %4211 = vmatprep.subr.bf16.mxu0 0
    %4212 = vmatpush1.bf16.msra.mxu0 %v555
    %4213 = vmatprep.subr.bf16.mxu0 0
    %4214 = vmatpush1.bf16.msra.mxu0 %v556
    %4215 = vmatprep.subr.bf16.mxu0 0
    %4216 = vmatpush1.bf16.msra.mxu0 %v557
    %4217 = vmatprep.mubr.bf16.mxu0 %v3995
    %4218 = vmatmul.mubr.bf16.gmra.mrb[0].mxu0 %v3988
    %v4219 = vpop.f32.mrb[0].mxu0
    %v4220 = vadd.f32 0.0, %v4219
    %v4221 = vpop.f32.mrb[0].mxu0
    %v4222 = vpop.f32.mrb[0].mxu0
    %v4223 = vpop.f32.mrb[0].mxu0
    %4224 = vdwg.mxu0
    %v4225 = vadd.f32 %v4180, %v4220
    %s4226 = scalar_lea.vmem %s0, 44
    %v4227 = vld [vmem:[%s4226] sm:$0x3]
    %v4230 = vunpack.c.l.s4 1966171168
    %v4231 = vunpack.c.0.s8 %v4230
    %v4232 = vlaneseq
    %v4233 = vshrl.u32 %v4232, 7
    %v4234 = vsub.s32 %v4231, %v4233
    %v4235 = vrot.slane %v4227, %v4234
    %v4236 = vcombine.high %v4235, %v4235
    %v4238 = vunpack.c.l.s4 1966171168
    %v4239 = vunpack.c.0.s8 %v4238
    %v4240 = vlaneseq
    %v4241 = vshrl.u32 %v4240, 7
    %v4242 = vsub.s32 %v4239, %v4241
    %v4243 = vrot.slane %v4235, %v4242
    %v4245 = vunpack.c.l.s4 1966171168
    %v4246 = vunpack.c.0.s8 %v4245
    %v4247 = vlaneseq
    %v4248 = vshrl.u32 %v4247, 7
    %v4249 = vsub.s32 %v4246, %v4248
    %v4250 = vrot.slane %v4236, %v4249
    %4253 = vmatprep.subr.bf16.mxu0 0
    %4254 = vmatpush1.bf16.msra.mxu0 %v739
    %4255 = vmatprep.subr.bf16.mxu0 0
    %4256 = vmatpush1.bf16.msra.mxu0 %v740
    %4257 = vmatprep.subr.bf16.mxu0 0
    %4258 = vmatpush1.bf16.msra.mxu0 %v741
    %4259 = vmatprep.subr.bf16.mxu0 0
    %4260 = vmatpush1.bf16.msra.mxu0 %v742
    %4261 = vmatprep.subr.bf16.mxu0 0
    %4262 = vmatpush1.bf16.msra.mxu0 %v743
    %4263 = vmatprep.subr.bf16.mxu0 0
    %4264 = vmatpush1.bf16.msra.mxu0 %v744
    %4265 = vmatprep.subr.bf16.mxu0 0
    %4266 = vmatpush1.bf16.msra.mxu0 %v745
    %4267 = vmatprep.subr.bf16.mxu0 0
    %4268 = vmatpush1.bf16.msra.mxu0 %v746
    %4269 = vmatprep.subr.bf16.mxu0 0
    %4270 = vmatpush1.bf16.msra.mxu0 %v747
    %4271 = vmatprep.subr.bf16.mxu0 0
    %4272 = vmatpush1.bf16.msra.mxu0 %v748
    %4273 = vmatprep.subr.bf16.mxu0 0
    %4274 = vmatpush1.bf16.msra.mxu0 %v749
    %4275 = vmatprep.subr.bf16.mxu0 0
    %4276 = vmatpush1.bf16.msra.mxu0 %v750
    %4277 = vmatprep.subr.bf16.mxu0 0
    %4278 = vmatpush1.bf16.msra.mxu0 %v751
    %4279 = vmatprep.subr.bf16.mxu0 0
    %4280 = vmatpush1.bf16.msra.mxu0 %v752
    %4281 = vmatprep.subr.bf16.mxu0 0
    %4282 = vmatpush1.bf16.msra.mxu0 %v753
    %4283 = vmatprep.subr.bf16.mxu0 0
    %4284 = vmatpush1.bf16.msra.mxu0 %v754
    %4285 = vmatprep.mubr.bf16.mxu0 %v4250
    %4286 = vmatmul.mubr.bf16.gmra.mrb[0].mxu0 %v4243
    %v4287 = vpop.f32.mrb[0].mxu0
    %v4288 = vadd.f32 0.0, %v4287
    %v4289 = vpop.f32.mrb[0].mxu0
    %v4290 = vpop.f32.mrb[0].mxu0
    %v4291 = vpop.f32.mrb[0].mxu0
    %4292 = vdwg.mxu0
    %v4293 = vadd.f32 %v4225, %v4288
    %v4294 = vadd.f32 %v4293, %v817
    %vm4295 = vcmp.gt.f32.partialorder %v4294, 0.0
    %v4296 = vmul.f32 %v4294, 0.2
    %v4297 = vsel %vm4295, %v4294, %v4296
    %v4298 = vpack.c.bf16 %v4297, %v4297
    %s4299 = scalar_lea.vmem %s3, 208
    %v4300 = vld [vmem:[%s4299] sm:$0xf]
    %v4301 = vld [vmem:[%s4299 + $0x4] sm:$0xf]
    %v4302 = vld [vmem:[%s4299 + $0x8] sm:$0xf]
    %v4303 = vld [vmem:[%s4299 + $0xc] sm:$0xf]
    %v4308 = vunpack.c.l.b16 %v4300
    %v4309 = vunpack.c.l.b16 %v4301
    %v4310 = vunpack.c.l.b16 %v4302
    %v4311 = vunpack.c.l.b16 %v4303
    %v4312 = vpack.c.b16 %v4309, %v4308
    %v4313 = vpack.c.b16 %v4311, %v4310
    %v4317 = vsel %vm1066, %v4298, 0
    %4319 = vmatprep.subr.bf16.mxu0 0
    %4320 = vmatpush1.bf16.msra.mxu0 %v4312
    %4321 = vmatprep.subr.bf16.mxu0 0
    %4322 = vmatpush1.bf16.msra.mxu0 %v4313
    %4323 = vmatprep.subr.bf16.mxu0 0
    %4324 = vmatpush1.bf16.msra.mxu0 0
    %4325 = vmatprep.subr.bf16.mxu0 0
    %4326 = vmatpush1.bf16.msra.mxu0 0
    %4327 = vmatprep.subr.bf16.mxu0 0
    %4328 = vmatpush1.bf16.msra.mxu0 0
    %4329 = vmatprep.subr.bf16.mxu0 0
    %4330 = vmatpush1.bf16.msra.mxu0 0
    %4331 = vmatprep.subr.bf16.mxu0 0
    %4332 = vmatpush1.bf16.msra.mxu0 0
    %4333 = vmatprep.subr.bf16.mxu0 0
    %4334 = vmatpush1.bf16.msra.mxu0 0
    %4335 = vmatprep.subr.bf16.mxu0 0
    %4336 = vmatpush1.bf16.msra.mxu0 0
    %4337 = vmatprep.subr.bf16.mxu0 0
    %4338 = vmatpush1.bf16.msra.mxu0 0
    %4339 = vmatprep.subr.bf16.mxu0 0
    %4340 = vmatpush1.bf16.msra.mxu0 0
    %4341 = vmatprep.subr.bf16.mxu0 0
    %4342 = vmatpush1.bf16.msra.mxu0 0
    %4343 = vmatprep.subr.bf16.mxu0 0
    %4344 = vmatpush1.bf16.msra.mxu0 0
    %4345 = vmatprep.subr.bf16.mxu0 0
    %4346 = vmatpush1.bf16.msra.mxu0 0
    %4347 = vmatprep.subr.bf16.mxu0 0
    %4348 = vmatpush1.bf16.msra.mxu0 0
    %4349 = vmatprep.subr.bf16.mxu0 0
    %4350 = vmatpush1.bf16.msra.mxu0 0
    %4351 = vmatprep.mubr.bf16.mxu0 0
    %4352 = vmatmul.mubr.bf16.gmra.mrb[0].mxu0 %v4317
    %v4353 = vpop.f32.mrb[0].mxu0
    %v4354 = vadd.f32 0.0, %v4353
    %v4355 = vpop.f32.mrb[0].mxu0
    %v4356 = vpop.f32.mrb[0].mxu0
    %v4357 = vpop.f32.mrb[0].mxu0
    %4358 = vdwg.mxu0
    %v4359 = vadd.f32 %v4104, %v4354
    %4360 = vmatprep.subr.bf16.mxu0 0
    %4361 = vmatpush1.bf16.msra.mxu0 %v185
    %4362 = vmatprep.subr.bf16.mxu0 0
    %4363 = vmatpush1.bf16.msra.mxu0 %v186
    %4364 = vmatprep.subr.bf16.mxu0 0
    %4365 = vmatpush1.bf16.msra.mxu0 %v187
    %4366 = vmatprep.subr.bf16.mxu0 0
    %4367 = vmatpush1.bf16.msra.mxu0 %v188
    %4368 = vmatprep.subr.bf16.mxu0 0
    %4369 = vmatpush1.bf16.msra.mxu0 %v189
    %4370 = vmatprep.subr.bf16.mxu0 0
    %4371 = vmatpush1.bf16.msra.mxu0 %v190
    %4372 = vmatprep.subr.bf16.mxu0 0
    %4373 = vmatpush1.bf16.msra.mxu0 %v191
    %4374 = vmatprep.subr.bf16.mxu0 0
    %4375 = vmatpush1.bf16.msra.mxu0 %v192
    %4376 = vmatprep.subr.bf16.mxu0 0
    %4377 = vmatpush1.bf16.msra.mxu0 %v193
    %4378 = vmatprep.subr.bf16.mxu0 0
    %4379 = vmatpush1.bf16.msra.mxu0 %v194
    %4380 = vmatprep.subr.bf16.mxu0 0
    %4381 = vmatpush1.bf16.msra.mxu0 %v195
    %4382 = vmatprep.subr.bf16.mxu0 0
    %4383 = vmatpush1.bf16.msra.mxu0 %v196
    %4384 = vmatprep.subr.bf16.mxu0 0
    %4385 = vmatpush1.bf16.msra.mxu0 %v197
    %4386 = vmatprep.subr.bf16.mxu0 0
    %4387 = vmatpush1.bf16.msra.mxu0 %v198
    %4388 = vmatprep.subr.bf16.mxu0 0
    %4389 = vmatpush1.bf16.msra.mxu0 %v199
    %4390 = vmatprep.subr.bf16.mxu0 0
    %4391 = vmatpush1.bf16.msra.mxu0 %v200
    %4392 = vmatprep.mubr.bf16.mxu0 %v3458
    %4393 = vmatmul.mubr.bf16.gmra.mrb[0].mxu0 %v3451
    %v4394 = vpop.f32.mrb[0].mxu0
    %v4395 = vadd.f32 0.0, %v4394
    %v4396 = vpop.f32.mrb[0].mxu0
    %v4397 = vpop.f32.mrb[0].mxu0
    %v4398 = vpop.f32.mrb[0].mxu0
    %4399 = vdwg.mxu0
    %4400 = vmatprep.subr.bf16.mxu0 0
    %4401 = vmatpush1.bf16.msra.mxu0 %v346
    %4402 = vmatprep.subr.bf16.mxu0 0
    %4403 = vmatpush1.bf16.msra.mxu0 %v347
    %4404 = vmatprep.subr.bf16.mxu0 0
    %4405 = vmatpush1.bf16.msra.mxu0 %v348
    %4406 = vmatprep.subr.bf16.mxu0 0
    %4407 = vmatpush1.bf16.msra.mxu0 %v349
    %4408 = vmatprep.subr.bf16.mxu0 0
    %4409 = vmatpush1.bf16.msra.mxu0 %v350
    %4410 = vmatprep.subr.bf16.mxu0 0
    %4411 = vmatpush1.bf16.msra.mxu0 %v351
    %4412 = vmatprep.subr.bf16.mxu0 0
    %4413 = vmatpush1.bf16.msra.mxu0 %v352
    %4414 = vmatprep.subr.bf16.mxu0 0
    %4415 = vmatpush1.bf16.msra.mxu0 %v353
    %4416 = vmatprep.subr.bf16.mxu0 0
    %4417 = vmatpush1.bf16.msra.mxu0 %v354
    %4418 = vmatprep.subr.bf16.mxu0 0
    %4419 = vmatpush1.bf16.msra.mxu0 %v355
    %4420 = vmatprep.subr.bf16.mxu0 0
    %4421 = vmatpush1.bf16.msra.mxu0 %v356
    %4422 = vmatprep.subr.bf16.mxu0 0
    %4423 = vmatpush1.bf16.msra.mxu0 %v357
    %4424 = vmatprep.subr.bf16.mxu0 0
    %4425 = vmatpush1.bf16.msra.mxu0 %v358
    %4426 = vmatprep.subr.bf16.mxu0 0
    %4427 = vmatpush1.bf16.msra.mxu0 %v359
    %4428 = vmatprep.subr.bf16.mxu0 0
    %4429 = vmatpush1.bf16.msra.mxu0 %v360
    %4430 = vmatprep.subr.bf16.mxu0 0
    %4431 = vmatpush1.bf16.msra.mxu0 %v361
    %4432 = vmatprep.mubr.bf16.mxu0 %v3203
    %4433 = vmatmul.mubr.bf16.gmra.mrb[0].mxu0 %v3196
    %v4434 = vpop.f32.mrb[0].mxu0
    %v4435 = vadd.f32 %v4395, %v4434
    %v4436 = vpop.f32.mrb[0].mxu0
    %v4437 = vpop.f32.mrb[0].mxu0
    %v4438 = vpop.f32.mrb[0].mxu0
    %4439 = vdwg.mxu0
    %4440 = vmatprep.subr.bf16.mxu0 0
    %4441 = vmatpush1.bf16.msra.mxu0 %v542
    %4442 = vmatprep.subr.bf16.mxu0 0
    %4443 = vmatpush1.bf16.msra.mxu0 %v543
    %4444 = vmatprep.subr.bf16.mxu0 0
    %4445 = vmatpush1.bf16.msra.mxu0 %v544
    %4446 = vmatprep.subr.bf16.mxu0 0
    %4447 = vmatpush1.bf16.msra.mxu0 %v545
    %4448 = vmatprep.subr.bf16.mxu0 0
    %4449 = vmatpush1.bf16.msra.mxu0 %v546
    %4450 = vmatprep.subr.bf16.mxu0 0
    %4451 = vmatpush1.bf16.msra.mxu0 %v547
    %4452 = vmatprep.subr.bf16.mxu0 0
    %4453 = vmatpush1.bf16.msra.mxu0 %v548
    %4454 = vmatprep.subr.bf16.mxu0 0
    %4455 = vmatpush1.bf16.msra.mxu0 %v549
    %4456 = vmatprep.subr.bf16.mxu0 0
    %4457 = vmatpush1.bf16.msra.mxu0 %v550
    %4458 = vmatprep.subr.bf16.mxu0 0
    %4459 = vmatpush1.bf16.msra.mxu0 %v551
    %4460 = vmatprep.subr.bf16.mxu0 0
    %4461 = vmatpush1.bf16.msra.mxu0 %v552
    %4462 = vmatprep.subr.bf16.mxu0 0
    %4463 = vmatpush1.bf16.msra.mxu0 %v553
    %4464 = vmatprep.subr.bf16.mxu0 0
    %4465 = vmatpush1.bf16.msra.mxu0 %v554
    %4466 = vmatprep.subr.bf16.mxu0 0
    %4467 = vmatpush1.bf16.msra.mxu0 %v555
    %4468 = vmatprep.subr.bf16.mxu0 0
    %4469 = vmatpush1.bf16.msra.mxu0 %v556
    %4470 = vmatprep.subr.bf16.mxu0 0
    %4471 = vmatpush1.bf16.msra.mxu0 %v557
    %4472 = vmatprep.mubr.bf16.mxu0 %v4250
    %4473 = vmatmul.mubr.bf16.gmra.mrb[0].mxu0 %v4243
    %v4474 = vpop.f32.mrb[0].mxu0
    %v4475 = vadd.f32 0.0, %v4474
    %v4476 = vpop.f32.mrb[0].mxu0
    %v4477 = vpop.f32.mrb[0].mxu0
    %v4478 = vpop.f32.mrb[0].mxu0
    %4479 = vdwg.mxu0
    %v4480 = vadd.f32 %v4435, %v4475
    %s4481 = scalar_lea.vmem %s0, 46
    %v4482 = vld [vmem:[%s4481] sm:$0x3]
    %v4485 = vunpack.c.l.s4 1966171168
    %v4486 = vunpack.c.0.s8 %v4485
    %v4487 = vlaneseq
    %v4488 = vshrl.u32 %v4487, 7
    %v4489 = vsub.s32 %v4486, %v4488
    %v4490 = vrot.slane %v4482, %v4489
    %v4491 = vcombine.high %v4490, %v4490
    %v4493 = vunpack.c.l.s4 1966171168
    %v4494 = vunpack.c.0.s8 %v4493
    %v4495 = vlaneseq
    %v4496 = vshrl.u32 %v4495, 7
    %v4497 = vsub.s32 %v4494, %v4496
    %v4498 = vrot.slane %v4490, %v4497
    %v4500 = vunpack.c.l.s4 1966171168
    %v4501 = vunpack.c.0.s8 %v4500
    %v4502 = vlaneseq
    %v4503 = vshrl.u32 %v4502, 7
    %v4504 = vsub.s32 %v4501, %v4503
    %v4505 = vrot.slane %v4491, %v4504
    %4508 = vmatprep.subr.bf16.mxu0 0
    %4509 = vmatpush1.bf16.msra.mxu0 %v739
    %4510 = vmatprep.subr.bf16.mxu0 0
    %4511 = vmatpush1.bf16.msra.mxu0 %v740
    %4512 = vmatprep.subr.bf16.mxu0 0
    %4513 = vmatpush1.bf16.msra.mxu0 %v741
    %4514 = vmatprep.subr.bf16.mxu0 0
    %4515 = vmatpush1.bf16.msra.mxu0 %v742
    %4516 = vmatprep.subr.bf16.mxu0 0
    %4517 = vmatpush1.bf16.msra.mxu0 %v743
    %4518 = vmatprep.subr.bf16.mxu0 0
    %4519 = vmatpush1.bf16.msra.mxu0 %v744
    %4520 = vmatprep.subr.bf16.mxu0 0
    %4521 = vmatpush1.bf16.msra.mxu0 %v745
    %4522 = vmatprep.subr.bf16.mxu0 0
    %4523 = vmatpush1.bf16.msra.mxu0 %v746
    %4524 = vmatprep.subr.bf16.mxu0 0
    %4525 = vmatpush1.bf16.msra.mxu0 %v747
    %4526 = vmatprep.subr.bf16.mxu0 0
    %4527 = vmatpush1.bf16.msra.mxu0 %v748
    %4528 = vmatprep.subr.bf16.mxu0 0
    %4529 = vmatpush1.bf16.msra.mxu0 %v749
    %4530 = vmatprep.subr.bf16.mxu0 0
    %4531 = vmatpush1.bf16.msra.mxu0 %v750
    %4532 = vmatprep.subr.bf16.mxu0 0
    %4533 = vmatpush1.bf16.msra.mxu0 %v751
    %4534 = vmatprep.subr.bf16.mxu0 0
    %4535 = vmatpush1.bf16.msra.mxu0 %v752
    %4536 = vmatprep.subr.bf16.mxu0 0
    %4537 = vmatpush1.bf16.msra.mxu0 %v753
    %4538 = vmatprep.subr.bf16.mxu0 0
    %4539 = vmatpush1.bf16.msra.mxu0 %v754
    %4540 = vmatprep.mubr.bf16.mxu0 %v4505
    %4541 = vmatmul.mubr.bf16.gmra.mrb[0].mxu0 %v4498
    %v4542 = vpop.f32.mrb[0].mxu0
    %v4543 = vadd.f32 0.0, %v4542
    %v4544 = vpop.f32.mrb[0].mxu0
    %v4545 = vpop.f32.mrb[0].mxu0
    %v4546 = vpop.f32.mrb[0].mxu0
    %4547 = vdwg.mxu0
    %v4548 = vadd.f32 %v4480, %v4543
    %v4549 = vadd.f32 %v4548, %v817
    %vm4550 = vcmp.gt.f32.partialorder %v4549, 0.0
    %v4551 = vmul.f32 %v4549, 0.2
    %v4552 = vsel %vm4550, %v4549, %v4551
    %v4553 = vpack.c.bf16 %v4552, %v4552
    %s4554 = scalar_lea.vmem %s3, 224
    %v4555 = vld [vmem:[%s4554] sm:$0xf]
    %v4556 = vld [vmem:[%s4554 + $0x4] sm:$0xf]
    %v4557 = vld [vmem:[%s4554 + $0x8] sm:$0xf]
    %v4558 = vld [vmem:[%s4554 + $0xc] sm:$0xf]
    %v4563 = vunpack.c.l.b16 %v4555
    %v4564 = vunpack.c.l.b16 %v4556
    %v4565 = vunpack.c.l.b16 %v4557
    %v4566 = vunpack.c.l.b16 %v4558
    %v4567 = vpack.c.b16 %v4564, %v4563
    %v4568 = vpack.c.b16 %v4566, %v4565
    %v4572 = vsel %vm1066, %v4553, 0
    %4574 = vmatprep.subr.bf16.mxu0 0
    %4575 = vmatpush1.bf16.msra.mxu0 %v4567
    %4576 = vmatprep.subr.bf16.mxu0 0
    %4577 = vmatpush1.bf16.msra.mxu0 %v4568
    %4578 = vmatprep.subr.bf16.mxu0 0
    %4579 = vmatpush1.bf16.msra.mxu0 0
    %4580 = vmatprep.subr.bf16.mxu0 0
    %4581 = vmatpush1.bf16.msra.mxu0 0
    %4582 = vmatprep.subr.bf16.mxu0 0
    %4583 = vmatpush1.bf16.msra.mxu0 0
    %4584 = vmatprep.subr.bf16.mxu0 0
    %4585 = vmatpush1.bf16.msra.mxu0 0
    %4586 = vmatprep.subr.bf16.mxu0 0
    %4587 = vmatpush1.bf16.msra.mxu0 0
    %4588 = vmatprep.subr.bf16.mxu0 0
    %4589 = vmatpush1.bf16.msra.mxu0 0
    %4590 = vmatprep.subr.bf16.mxu0 0
    %4591 = vmatpush1.bf16.msra.mxu0 0
    %4592 = vmatprep.subr.bf16.mxu0 0
    %4593 = vmatpush1.bf16.msra.mxu0 0
    %4594 = vmatprep.subr.bf16.mxu0 0
    %4595 = vmatpush1.bf16.msra.mxu0 0
    %4596 = vmatprep.subr.bf16.mxu0 0
    %4597 = vmatpush1.bf16.msra.mxu0 0
    %4598 = vmatprep.subr.bf16.mxu0 0
    %4599 = vmatpush1.bf16.msra.mxu0 0
    %4600 = vmatprep.subr.bf16.mxu0 0
    %4601 = vmatpush1.bf16.msra.mxu0 0
    %4602 = vmatprep.subr.bf16.mxu0 0
    %4603 = vmatpush1.bf16.msra.mxu0 0
    %4604 = vmatprep.subr.bf16.mxu0 0
    %4605 = vmatpush1.bf16.msra.mxu0 0
    %4606 = vmatprep.mubr.bf16.mxu0 0
    %4607 = vmatmul.mubr.bf16.gmra.mrb[0].mxu0 %v4572
    %v4608 = vpop.f32.mrb[0].mxu0
    %v4609 = vadd.f32 0.0, %v4608
    %v4610 = vpop.f32.mrb[0].mxu0
    %v4611 = vpop.f32.mrb[0].mxu0
    %v4612 = vpop.f32.mrb[0].mxu0
    %4613 = vdwg.mxu0
    %v4614 = vadd.f32 %v4359, %v4609
    %4615 = vmatprep.subr.bf16.mxu0 0
    %4616 = vmatpush1.bf16.msra.mxu0 %v185
    %4617 = vmatprep.subr.bf16.mxu0 0
    %4618 = vmatpush1.bf16.msra.mxu0 %v186
    %4619 = vmatprep.subr.bf16.mxu0 0
    %4620 = vmatpush1.bf16.msra.mxu0 %v187
    %4621 = vmatprep.subr.bf16.mxu0 0
    %4622 = vmatpush1.bf16.msra.mxu0 %v188
    %4623 = vmatprep.subr.bf16.mxu0 0
    %4624 = vmatpush1.bf16.msra.mxu0 %v189
    %4625 = vmatprep.subr.bf16.mxu0 0
    %4626 = vmatpush1.bf16.msra.mxu0 %v190
    %4627 = vmatprep.subr.bf16.mxu0 0
    %4628 = vmatpush1.bf16.msra.mxu0 %v191
    %4629 = vmatprep.subr.bf16.mxu0 0
    %4630 = vmatpush1.bf16.msra.mxu0 %v192
    %4631 = vmatprep.subr.bf16.mxu0 0
    %4632 = vmatpush1.bf16.msra.mxu0 %v193
    %4633 = vmatprep.subr.bf16.mxu0 0
    %4634 = vmatpush1.bf16.msra.mxu0 %v194
    %4635 = vmatprep.subr.bf16.mxu0 0
    %4636 = vmatpush1.bf16.msra.mxu0 %v195
    %4637 = vmatprep.subr.bf16.mxu0 0
    %4638 = vmatpush1.bf16.msra.mxu0 %v196
    %4639 = vmatprep.subr.bf16.mxu0 0
    %4640 = vmatpush1.bf16.msra.mxu0 %v197
    %4641 = vmatprep.subr.bf16.mxu0 0
    %4642 = vmatpush1.bf16.msra.mxu0 %v198
    %4643 = vmatprep.subr.bf16.mxu0 0
    %4644 = vmatpush1.bf16.msra.mxu0 %v199
    %4645 = vmatprep.subr.bf16.mxu0 0
    %4646 = vmatpush1.bf16.msra.mxu0 %v200
    %4647 = vmatprep.mubr.bf16.mxu0 %v3713
    %4648 = vmatmul.mubr.bf16.gmra.mrb[0].mxu0 %v3706
    %v4649 = vpop.f32.mrb[0].mxu0
    %v4650 = vadd.f32 0.0, %v4649
    %v4651 = vpop.f32.mrb[0].mxu0
    %v4652 = vpop.f32.mrb[0].mxu0
    %v4653 = vpop.f32.mrb[0].mxu0
    %4654 = vdwg.mxu0
    %4655 = vmatprep.subr.bf16.mxu0 0
    %4656 = vmatpush1.bf16.msra.mxu0 %v346
    %4657 = vmatprep.subr.bf16.mxu0 0
    %4658 = vmatpush1.bf16.msra.mxu0 %v347
    %4659 = vmatprep.subr.bf16.mxu0 0
    %4660 = vmatpush1.bf16.msra.mxu0 %v348
    %4661 = vmatprep.subr.bf16.mxu0 0
    %4662 = vmatpush1.bf16.msra.mxu0 %v349
    %4663 = vmatprep.subr.bf16.mxu0 0
    %4664 = vmatpush1.bf16.msra.mxu0 %v350
    %4665 = vmatprep.subr.bf16.mxu0 0
    %4666 = vmatpush1.bf16.msra.mxu0 %v351
    %4667 = vmatprep.subr.bf16.mxu0 0
    %4668 = vmatpush1.bf16.msra.mxu0 %v352
    %4669 = vmatprep.subr.bf16.mxu0 0
    %4670 = vmatpush1.bf16.msra.mxu0 %v353
    %4671 = vmatprep.subr.bf16.mxu0 0
    %4672 = vmatpush1.bf16.msra.mxu0 %v354
    %4673 = vmatprep.subr.bf16.mxu0 0
    %4674 = vmatpush1.bf16.msra.mxu0 %v355
    %4675 = vmatprep.subr.bf16.mxu0 0
    %4676 = vmatpush1.bf16.msra.mxu0 %v356
    %4677 = vmatprep.subr.bf16.mxu0 0
    %4678 = vmatpush1.bf16.msra.mxu0 %v357
    %4679 = vmatprep.subr.bf16.mxu0 0
    %4680 = vmatpush1.bf16.msra.mxu0 %v358
    %4681 = vmatprep.subr.bf16.mxu0 0
    %4682 = vmatpush1.bf16.msra.mxu0 %v359
    %4683 = vmatprep.subr.bf16.mxu0 0
    %4684 = vmatpush1.bf16.msra.mxu0 %v360
    %4685 = vmatprep.subr.bf16.mxu0 0
    %4686 = vmatpush1.bf16.msra.mxu0 %v361
    %4687 = vmatprep.mubr.bf16.mxu0 %v3458
    %4688 = vmatmul.mubr.bf16.gmra.mrb[0].mxu0 %v3451
    %v4689 = vpop.f32.mrb[0].mxu0
    %v4690 = vadd.f32 %v4650, %v4689
    %v4691 = vpop.f32.mrb[0].mxu0
    %v4692 = vpop.f32.mrb[0].mxu0
    %v4693 = vpop.f32.mrb[0].mxu0
    %4694 = vdwg.mxu0
    %4695 = vmatprep.subr.bf16.mxu0 0
    %4696 = vmatpush1.bf16.msra.mxu0 %v542
    %4697 = vmatprep.subr.bf16.mxu0 0
    %4698 = vmatpush1.bf16.msra.mxu0 %v543
    %4699 = vmatprep.subr.bf16.mxu0 0
    %4700 = vmatpush1.bf16.msra.mxu0 %v544
    %4701 = vmatprep.subr.bf16.mxu0 0
    %4702 = vmatpush1.bf16.msra.mxu0 %v545
    %4703 = vmatprep.subr.bf16.mxu0 0
    %4704 = vmatpush1.bf16.msra.mxu0 %v546
    %4705 = vmatprep.subr.bf16.mxu0 0
    %4706 = vmatpush1.bf16.msra.mxu0 %v547
    %4707 = vmatprep.subr.bf16.mxu0 0
    %4708 = vmatpush1.bf16.msra.mxu0 %v548
    %4709 = vmatprep.subr.bf16.mxu0 0
    %4710 = vmatpush1.bf16.msra.mxu0 %v549
    %4711 = vmatprep.subr.bf16.mxu0 0
    %4712 = vmatpush1.bf16.msra.mxu0 %v550
    %4713 = vmatprep.subr.bf16.mxu0 0
    %4714 = vmatpush1.bf16.msra.mxu0 %v551
    %4715 = vmatprep.subr.bf16.mxu0 0
    %4716 = vmatpush1.bf16.msra.mxu0 %v552
    %4717 = vmatprep.subr.bf16.mxu0 0
    %4718 = vmatpush1.bf16.msra.mxu0 %v553
    %4719 = vmatprep.subr.bf16.mxu0 0
    %4720 = vmatpush1.bf16.msra.mxu0 %v554
    %4721 = vmatprep.subr.bf16.mxu0 0
    %4722 = vmatpush1.bf16.msra.mxu0 %v555
    %4723 = vmatprep.subr.bf16.mxu0 0
    %4724 = vmatpush1.bf16.msra.mxu0 %v556
    %4725 = vmatprep.subr.bf16.mxu0 0
    %4726 = vmatpush1.bf16.msra.mxu0 %v557
    %4727 = vmatprep.mubr.bf16.mxu0 %v4505
    %4728 = vmatmul.mubr.bf16.gmra.mrb[0].mxu0 %v4498
    %v4729 = vpop.f32.mrb[0].mxu0
    %v4730 = vadd.f32 0.0, %v4729
    %v4731 = vpop.f32.mrb[0].mxu0
    %v4732 = vpop.f32.mrb[0].mxu0
    %v4733 = vpop.f32.mrb[0].mxu0
    %4734 = vdwg.mxu0
    %v4735 = vadd.f32 %v4690, %v4730
    %s4736 = scalar_lea.vmem %s0, 48
    %v4737 = vld [vmem:[%s4736] sm:$0x3]
    %v4740 = vunpack.c.l.s4 1966171168
    %v4741 = vunpack.c.0.s8 %v4740
    %v4742 = vlaneseq
    %v4743 = vshrl.u32 %v4742, 7
    %v4744 = vsub.s32 %v4741, %v4743
    %v4745 = vrot.slane %v4737, %v4744
    %v4746 = vcombine.high %v4745, %v4745
    %v4748 = vunpack.c.l.s4 1966171168
    %v4749 = vunpack.c.0.s8 %v4748
    %v4750 = vlaneseq
    %v4751 = vshrl.u32 %v4750, 7
    %v4752 = vsub.s32 %v4749, %v4751
    %v4753 = vrot.slane %v4745, %v4752
    %v4755 = vunpack.c.l.s4 1966171168
    %v4756 = vunpack.c.0.s8 %v4755
    %v4757 = vlaneseq
    %v4758 = vshrl.u32 %v4757, 7
    %v4759 = vsub.s32 %v4756, %v4758
    %v4760 = vrot.slane %v4746, %v4759
    %4763 = vmatprep.subr.bf16.mxu0 0
    %4764 = vmatpush1.bf16.msra.mxu0 %v739
    %4765 = vmatprep.subr.bf16.mxu0 0
    %4766 = vmatpush1.bf16.msra.mxu0 %v740
    %4767 = vmatprep.subr.bf16.mxu0 0
    %4768 = vmatpush1.bf16.msra.mxu0 %v741
    %4769 = vmatprep.subr.bf16.mxu0 0
    %4770 = vmatpush1.bf16.msra.mxu0 %v742
    %4771 = vmatprep.subr.bf16.mxu0 0
    %4772 = vmatpush1.bf16.msra.mxu0 %v743
    %4773 = vmatprep.subr.bf16.mxu0 0
    %4774 = vmatpush1.bf16.msra.mxu0 %v744
    %4775 = vmatprep.subr.bf16.mxu0 0
    %4776 = vmatpush1.bf16.msra.mxu0 %v745
    %4777 = vmatprep.subr.bf16.mxu0 0
    %4778 = vmatpush1.bf16.msra.mxu0 %v746
    %4779 = vmatprep.subr.bf16.mxu0 0
    %4780 = vmatpush1.bf16.msra.mxu0 %v747
    %4781 = vmatprep.subr.bf16.mxu0 0
    %4782 = vmatpush1.bf16.msra.mxu0 %v748
    %4783 = vmatprep.subr.bf16.mxu0 0
    %4784 = vmatpush1.bf16.msra.mxu0 %v749
    %4785 = vmatprep.subr.bf16.mxu0 0
    %4786 = vmatpush1.bf16.msra.mxu0 %v750
    %4787 = vmatprep.subr.bf16.mxu0 0
    %4788 = vmatpush1.bf16.msra.mxu0 %v751
    %4789 = vmatprep.subr.bf16.mxu0 0
    %4790 = vmatpush1.bf16.msra.mxu0 %v752
    %4791 = vmatprep.subr.bf16.mxu0 0
    %4792 = vmatpush1.bf16.msra.mxu0 %v753
    %4793 = vmatprep.subr.bf16.mxu0 0
    %4794 = vmatpush1.bf16.msra.mxu0 %v754
    %4795 = vmatprep.mubr.bf16.mxu0 %v4760
    %4796 = vmatmul.mubr.bf16.gmra.mrb[0].mxu0 %v4753
    %v4797 = vpop.f32.mrb[0].mxu0
    %v4798 = vadd.f32 0.0, %v4797
    %v4799 = vpop.f32.mrb[0].mxu0
    %v4800 = vpop.f32.mrb[0].mxu0
    %v4801 = vpop.f32.mrb[0].mxu0
    %4802 = vdwg.mxu0
    %v4803 = vadd.f32 %v4735, %v4798
    %v4804 = vadd.f32 %v4803, %v817
    %vm4805 = vcmp.gt.f32.partialorder %v4804, 0.0
    %v4806 = vmul.f32 %v4804, 0.2
    %v4807 = vsel %vm4805, %v4804, %v4806
    %v4808 = vpack.c.bf16 %v4807, %v4807
    %s4809 = scalar_lea.vmem %s3, 240
    %v4810 = vld [vmem:[%s4809] sm:$0xf]
    %v4811 = vld [vmem:[%s4809 + $0x4] sm:$0xf]
    %v4812 = vld [vmem:[%s4809 + $0x8] sm:$0xf]
    %v4813 = vld [vmem:[%s4809 + $0xc] sm:$0xf]
    %v4818 = vunpack.c.l.b16 %v4810
    %v4819 = vunpack.c.l.b16 %v4811
    %v4820 = vunpack.c.l.b16 %v4812
    %v4821 = vunpack.c.l.b16 %v4813
    %v4822 = vpack.c.b16 %v4819, %v4818
    %v4823 = vpack.c.b16 %v4821, %v4820
    %v4827 = vsel %vm1066, %v4808, 0
    %4829 = vmatprep.subr.bf16.mxu0 0
    %4830 = vmatpush1.bf16.msra.mxu0 %v4822
    %4831 = vmatprep.subr.bf16.mxu0 0
    %4832 = vmatpush1.bf16.msra.mxu0 %v4823
    %4833 = vmatprep.subr.bf16.mxu0 0
    %4834 = vmatpush1.bf16.msra.mxu0 0
    %4835 = vmatprep.subr.bf16.mxu0 0
    %4836 = vmatpush1.bf16.msra.mxu0 0
    %4837 = vmatprep.subr.bf16.mxu0 0
    %4838 = vmatpush1.bf16.msra.mxu0 0
    %4839 = vmatprep.subr.bf16.mxu0 0
    %4840 = vmatpush1.bf16.msra.mxu0 0
    %4841 = vmatprep.subr.bf16.mxu0 0
    %4842 = vmatpush1.bf16.msra.mxu0 0
    %4843 = vmatprep.subr.bf16.mxu0 0
    %4844 = vmatpush1.bf16.msra.mxu0 0
    %4845 = vmatprep.subr.bf16.mxu0 0
    %4846 = vmatpush1.bf16.msra.mxu0 0
    %4847 = vmatprep.subr.bf16.mxu0 0
    %4848 = vmatpush1.bf16.msra.mxu0 0
    %4849 = vmatprep.subr.bf16.mxu0 0
    %4850 = vmatpush1.bf16.msra.mxu0 0
    %4851 = vmatprep.subr.bf16.mxu0 0
    %4852 = vmatpush1.bf16.msra.mxu0 0
    %4853 = vmatprep.subr.bf16.mxu0 0
    %4854 = vmatpush1.bf16.msra.mxu0 0
    %4855 = vmatprep.subr.bf16.mxu0 0
    %4856 = vmatpush1.bf16.msra.mxu0 0
    %4857 = vmatprep.subr.bf16.mxu0 0
    %4858 = vmatpush1.bf16.msra.mxu0 0
    %4859 = vmatprep.subr.bf16.mxu0 0
    %4860 = vmatpush1.bf16.msra.mxu0 0
    %4861 = vmatprep.mubr.bf16.mxu0 0
    %4862 = vmatmul.mubr.bf16.gmra.mrb[0].mxu0 %v4827
    %v4863 = vpop.f32.mrb[0].mxu0
    %v4864 = vadd.f32 0.0, %v4863
    %v4865 = vpop.f32.mrb[0].mxu0
    %v4866 = vpop.f32.mrb[0].mxu0
    %v4867 = vpop.f32.mrb[0].mxu0
    %4868 = vdwg.mxu0
    %v4869 = vadd.f32 %v4614, %v4864
    %v4870 = vld [vmem:[%s4] sm:$0x1]
    %v4872 = vlaneseq
    %v4873 = vshrl.u32 %v4872, 7
    %v4874 = vsub.s32 0, %v4873
    %v4875 = vrot.slane %v4870, %v4874
    %v4877 = vadd.f32 %v4869, %v4875
    %vm4878 = vcmp.gt.f32.partialorder %v4877, 0.0
    %v4879 = vmul.f32 %v4877, 0.2
    %v4880 = vsel %vm4878, %v4877, %v4879
    %v4881 = vpack.c.bf16 %v4880, %v4880
    %v4882 = vld [vmem:[%s5] sm:$0xf]
    %v4883 = vld [vmem:[%s5 + $0x4] sm:$0xf]
    %v4884 = vld [vmem:[%s5 + $0x8] sm:$0xf]
    %v4885 = vld [vmem:[%s5 + $0xc] sm:$0xf]
    %v4886 = vld [vmem:[%s5 + $0x10] sm:$0xf]
    %v4887 = vld [vmem:[%s5 + $0x14] sm:$0xf]
    %v4888 = vld [vmem:[%s5 + $0x18] sm:$0xf]
    %v4889 = vld [vmem:[%s5 + $0x1c] sm:$0xf]
    %v4890 = vld [vmem:[%s6] sm:$0x1]
    %v4892 = vlaneseq
    %v4893 = vshrl.u32 %v4892, 7
    %v4894 = vsub.s32 0, %v4893
    %v4895 = vrot.slane %v4890, %v4894
    %v4905 = vunpack.c.l.b16 %v4882
    %v4906 = vunpack.c.l.b16 %v4883
    %v4907 = vunpack.c.l.b16 %v4884
    %v4908 = vunpack.c.l.b16 %v4885
    %v4909 = vunpack.c.l.b16 %v4886
    %v4910 = vunpack.c.l.b16 %v4887
    %v4911 = vunpack.c.l.b16 %v4888
    %v4912 = vunpack.c.l.b16 %v4889
    %v4913 = vpack.c.b16 %v4906, %v4905
    %v4914 = vpack.c.b16 %v4908, %v4907
    %v4915 = vpack.c.b16 %v4910, %v4909
    %v4916 = vpack.c.b16 %v4912, %v4911
    %vm4921 = vcmask 523264
    %v4923 = vsel %vm4921, %v4881, 0
    %4925 = vmatprep.subr.bf16.mxu0 0
    %4926 = vmatpush1.bf16.msra.mxu0 %v4913
    %4927 = vmatprep.subr.bf16.mxu0 0
    %4928 = vmatpush1.bf16.msra.mxu0 %v4914
    %4929 = vmatprep.subr.bf16.mxu0 0
    %4930 = vmatpush1.bf16.msra.mxu0 %v4915
    %4931 = vmatprep.subr.bf16.mxu0 0
    %4932 = vmatpush1.bf16.msra.mxu0 %v4916
    %4933 = vmatprep.subr.bf16.mxu0 0
    %4934 = vmatpush1.bf16.msra.mxu0 0
    %4935 = vmatprep.subr.bf16.mxu0 0
    %4936 = vmatpush1.bf16.msra.mxu0 0
    %4937 = vmatprep.subr.bf16.mxu0 0
    %4938 = vmatpush1.bf16.msra.mxu0 0
    %4939 = vmatprep.subr.bf16.mxu0 0
    %4940 = vmatpush1.bf16.msra.mxu0 0
    %4941 = vmatprep.subr.bf16.mxu0 0
    %4942 = vmatpush1.bf16.msra.mxu0 0
    %4943 = vmatprep.subr.bf16.mxu0 0
    %4944 = vmatpush1.bf16.msra.mxu0 0
    %4945 = vmatprep.subr.bf16.mxu0 0
    %4946 = vmatpush1.bf16.msra.mxu0 0
    %4947 = vmatprep.subr.bf16.mxu0 0
    %4948 = vmatpush1.bf16.msra.mxu0 0
    %4949 = vmatprep.subr.bf16.mxu0 0
    %4950 = vmatpush1.bf16.msra.mxu0 0
    %4951 = vmatprep.subr.bf16.mxu0 0
    %4952 = vmatpush1.bf16.msra.mxu0 0
    %4953 = vmatprep.subr.bf16.mxu0 0
    %4954 = vmatpush1.bf16.msra.mxu0 0
    %4955 = vmatprep.subr.bf16.mxu0 0
    %4956 = vmatpush1.bf16.msra.mxu0 0
    %4957 = vmatprep.mubr.bf16.mxu0 0
    %4958 = vmatmul.mubr.bf16.gmra.mrb[0].mxu0 %v4923
    %v4959 = vpop.f32.mrb[0].mxu0
    %v4960 = vadd.f32 %v4895, %v4959
    %v4961 = vpop.f32.mrb[0].mxu0
    %v4962 = vpop.f32.mrb[0].mxu0
    %v4963 = vpop.f32.mrb[0].mxu0
    %4964 = vdwg.mxu0
    %v4965 = vsub.f32 0.0, %v4960
    %v4966 = vmul.f32 %v4965, 1.442695
    %v4967 = vpow.pop %v4966
    %v4968 = vadd.f32 %v4967, 1.0
    %v4969 = vrcp.pop %v4968
    %4970 = vst [vmem:[#allocation2] sm:$0x3] %v4969
    // Predicated region
    $region30: #{classifier_forward.3} parent=1 // pred_check
      _
    $region31: #{classifier_forward.3} parent=1 // pred_check_branch
      %4972 = sbr.rel (0) target = $region33
    $region32: #{classifier_forward.3} parent=1 // pred_region
      %s4974 = ssub.s32 32, 32
      %4975 = vsyncadd [#allocation3], %s4974
      %s4977 = sshll.u32 [#allocation2], 4
      %s4978 = int_to_ptr.vmem [resolvable:$true] %s4977
      %4980 = dma.vmem_to_hbm [thread:$0]  %s4978, 32, %s7, [#allocation3]
    $region33: #{classifier_forward.3} parent=1 // pred_fallthru
      _
    // Predicated region
    $region34: #{classifier_forward.3} parent=1 // pred_check
      _
    $region35: #{classifier_forward.3} parent=1 // pred_check_branch
      %4982 = sbr.rel (0) target = $region37
    $region36: #{classifier_forward.3} parent=1 // pred_region
      %4983 = dma.done [#allocation3], 32
    $region37: #{classifier_forward.3} parent=1 // pred_fallthru
      _
    %4984 = vsyncpa [#allocation3], 1

</llo_original>
